<compile_context>
chip_gen: v7x
topology: tpu7x:2x2x1
jax: 0.10.0
libtpu: 0.0.40
codegen_flags: <defaults>
</compile_context>

<pallas_src>
import math
from functools import partial

import jax
import jax.numpy as jnp
from jax.experimental import pallas as pl
from jax.experimental.pallas import tpu as pltpu

# ---------------- config (synthetic, deterministic) ----------------
NUM_CHANNELS = 4
SPLIT_DIM = 2
D_SPLIT = NUM_CHANNELS // SPLIT_DIM                  # 2
CONDITION_VEC = 4
L_LAYERS = 1
COND_DIM = CONDITION_VEC + L_LAYERS                  # 5
QKV_DIM = D_SPLIT + CONDITION_VEC + L_LAYERS + 1     # 8 (incl. DC column)
PROJ_K = QKV_DIM - 1                                 # 7 (DC folded into biases)
ATTN_DIM = 8                                         # cfg.conv_attn
H, W = 8, 8                                          # toy_H, toy_W
HW = H * W                                           # 64
SA_SCALE1 = 1.0
SA_SCALE2 = 1.0
EPS = 1e-3
# trans_ver = '11'  ->  transformation '1' (A = exp(A)),  operator 1 (A*x + B)

FUSED_N = 4 * ATTN_DIM + 4                           # 36: Q1|K1|Q2|K2|v1a|1|v2b|1


# ---------------- Pallas kernel ----------------
def invert_isdp_kernel(inp_ref, cond_ref, wf_ref, bf_ref, out_ref, logdet_ref):
    m = inp_ref.shape[0]                              # TB*HW rows in this block
    tb = m // HW                                      # batch elements in this block

    inp = inp_ref[...]                                # (m, 4)
    y2d = inp[:, :D_SPLIT]                            # (m, 2)
    x2d = inp[:, D_SPLIT:]                            # (m, 2)
    c2d = cond_ref[...]                               # (m, COND_DIM)

    # Fused projection: qkv = [y_tilde | cond] @ W_fused + b_fused
    # (DC column, biases, 1/sa_scale and wA/wB already folded in host-side).
    # Split the K dim into two matmuls instead of a minor-dim concat (robust lowering).
    qkv = (jnp.dot(y2d, wf_ref[0:D_SPLIT, :], preferred_element_type=jnp.float32)
           + jnp.dot(c2d, wf_ref[D_SPLIT:PROJ_K, :], preferred_element_type=jnp.float32)
           + bf_ref[...])                             # (m, 36)

    def head(q0, k0, v0):
        Q = qkv[:, q0:q0 + ATTN_DIM].reshape(tb, HW, ATTN_DIM)
        K = qkv[:, k0:k0 + ATTN_DIM].reshape(tb, HW, ATTN_DIM)
        vr = qkv[:, v0:v0 + 2].reshape(tb, HW, 2)     # [V @ w_head, 1]
        # (tb, HW, HW) scores; 1/scale already folded into Q's weights/bias.
        s = jnp.einsum('bpd,bqd->bpq', Q, K, preferred_element_type=jnp.float32)
        s = s - jnp.max(s, axis=-1, keepdims=True)    # keep: bounds exp / denominator
        p = jnp.exp(s)
        # one matmul gives both the unnormalized weighted sum and the softmax row-sum
        o = jnp.einsum('bpq,bqt->bpt', p, vr, preferred_element_type=jnp.float32)
        # exact divide on a tiny (tb, HW, 1) tensor (approx vrcp would not hold 1e-4)
        return (o[..., 0:1] / o[..., 1:2]).reshape(m, 1)

    A_raw = head(0, ATTN_DIM, 4 * ATTN_DIM)           # == SA1 @ wA   (m, 1)
    B_val = head(2 * ATTN_DIM, 3 * ATTN_DIM, 4 * ATTN_DIM + 2)  # == SA2 @ wB

    A = jnp.exp(A_raw)                                # transformation '1'
    half = A * x2d + B_val                            # operator 1

    # Final-shape outputs: [y_tilde | half] rows and logdet column.
    out_ref[:, 0:D_SPLIT] = y2d.astype(out_ref.dtype)
    out_ref[:, D_SPLIT:NUM_CHANNELS] = half.astype(out_ref.dtype)
    logdet_ref[...] = (A_raw * float(D_SPLIT)).astype(logdet_ref.dtype)  # log|exp(a)| == a


# ---------------- wrapper ----------------
@partial(jax.jit, static_argnames=("grid_steps",))
def invert_isdp_forward(inputs, cond_vec, w_fused, b_fused, *, grid_steps=1):
    m_total, c = inputs.shape
    assert c == NUM_CHANNELS
    batch = m_total // HW
    assert batch * HW == m_total and batch % grid_steps == 0
    tm = (batch // grid_steps) * HW                   # rows per grid step

    # Advisory cost hint so XLA can schedule around this tiny custom call.
    proj_flops = 2 * m_total * PROJ_K * FUSED_N
    attn_flops = 2 * batch * (2 * HW * HW * ATTN_DIM + 2 * HW * HW * 2)
    cost = pl.CostEstimate(
        flops=proj_flops + attn_flops,
        transcendentals=2 * batch * HW * HW + m_total,
        bytes_accessed=4 * (m_total * (NUM_CHANNELS + COND_DIM)
                            + (PROJ_K + 1) * FUSED_N
                            + m_total * (NUM_CHANNELS + 1)))

    out, logdet2d = pl.pallas_call(
        invert_isdp_kernel,
        out_shape=(jax.ShapeDtypeStruct((m_total, NUM_CHANNELS), jnp.float32),
                   jax.ShapeDtypeStruct((m_total, 1), jnp.float32)),
        grid_spec=pltpu.PrefetchScalarGridSpec(
            num_scalar_prefetch=0,
            grid=(grid_steps,),
            in_specs=[pl.BlockSpec((tm, NUM_CHANNELS), lambda b: (b, 0)),
                      pl.BlockSpec((tm, COND_DIM), lambda b: (b, 0)),
                      pl.BlockSpec((PROJ_K, FUSED_N), lambda b: (0, 0)),
                      pl.BlockSpec((1, FUSED_N), lambda b: (0, 0))],
            out_specs=[pl.BlockSpec((tm, NUM_CHANNELS), lambda b: (b, 0)),
                       pl.BlockSpec((tm, 1), lambda b: (b, 0))]),
        compiler_params=pltpu.CompilerParams(
            dimension_semantics=("parallel",)),
        cost_estimate=cost,
    )(inputs, cond_vec, w_fused, b_fused)

    # (m,1) -> (m,) is a metadata-only bitcast under jit; no extra fusion/launch.
    return out, logdet2d.reshape(m_total)


# ---------------- host-side weight fusion ----------------
def pack_params(params):
    """Fold DC column into biases, 1/scale into Wq, wA/wB into the V weights, and
    fuse everything into one (PROJ_K, FUSED_N) weight + (1, FUSED_N) bias."""
    def fold_dc(w, b=None):
        w_eff = w[:PROJ_K, :]
        dc = w[PROJ_K:PROJ_K + 1, :]                  # DC (last) input row
        b_eff = dc if b is None else b + dc
        return w_eff, b_eff

    wq1, bq1 = fold_dc(params['wq1'], params['bq1'])
    wq1, bq1 = wq1 / SA_SCALE1, bq1 / SA_SCALE1
    wk1, bk1 = fold_dc(params['wk1'], params['bk1'])
    wq2, bq2 = fold_dc(params['wq2'], params['bq2'])
    wq2, bq2 = wq2 / SA_SCALE2, bq2 / SA_SCALE2
    wk2, bk2 = fold_dc(params['wk2'], params['bk2'])
    wv1, bv1 = fold_dc(params['wv1'], None)           # conv2d_Wv1 has bias=False
    wv2, bv2 = fold_dc(params['wv2'], params['bv2'])

    wv1a = wv1 @ params['wA']                         # (7,1)   V1 @ wA weight
    bv1a = bv1 @ params['wA']                         # (1,1)
    wv2b = wv2 @ params['wB']
    bv2b = bv2 @ params['wB']

    zeros_col = jnp.zeros((PROJ_K, 1), jnp.float32)   # constant-1 column (row sums)
    ones_b = jnp.ones((1, 1), jnp.float32)

    w_fused = jnp.concatenate(
        [wq1, wk1, wq2, wk2, wv1a, zeros_col, wv2b, zeros_col], axis=1)   # (7, 36)
    b_fused = jnp.concatenate(
        [bq1, bk1, bq2, bk2, bv1a, ones_b, bv2b, ones_b], axis=1)         # (1, 36)
    return w_fused, b_fused


# ---------------- pure-JAX reference (faithful to the PyTorch module) ----------------
def reference_forward(inputs, cond_vec, params, batch):
    B = batch
    inp = inputs.reshape(B, HW, NUM_CHANNELS)
    y_tilde, x_tilde = inp[..., :D_SPLIT], inp[..., D_SPLIT:]
    cond = cond_vec.reshape(B, HW, COND_DIM)
    DC = jnp.ones((B, HW, 1), dtype=inp.dtype)
    y = jnp.concatenate([y_tilde, cond, DC], axis=-1)

    def proj(w, b=None):
        o = jnp.einsum('bpk,kd->bpd', y, w)
        return o + b if b is not None else o

    Q1, K1 = proj(params['wq1'], params['bq1']), proj(params['wk1'], params['bk1'])
    V1 = proj(params['wv1'])
    Q2, K2 = proj(params['wq2'], params['bq2']), proj(params['wk2'], params['bk2'])
    V2 = proj(params['wv2'], params['bv2'])

    def attn(Q, K, V, scale):
        s = jnp.einsum('bpd,bqd->bpq', Q, K) / scale
        p = jax.nn.softmax(s, axis=-1)
        return jnp.einsum('bpq,bqd->bpd', p, V)

    SA1 = attn(Q1, K1, V1, SA_SCALE1)
    SA2 = attn(Q2, K2, V2, SA_SCALE2)
    A = jnp.exp(jnp.einsum('bpd,do->bpo', SA1, params['wA']))
    Bv = jnp.einsum('bpd,do->bpo', SA2, params['wB'])
    half = A * x_tilde + Bv
    logdet = (jnp.log(jnp.abs(A)).sum(-1) * D_SPLIT).reshape(B * HW)
    out = jnp.concatenate([y_tilde, half], -1).reshape(B * HW, NUM_CHANNELS)
    return out, logdet


# ---------------- deterministic parameter init ----------------
def init_params(key):
    ks = jax.random.split(key, 10)
    bound = 1.0 / math.sqrt(QKV_DIM)

    def conv_w(k):
        return jax.random.uniform(k, (QKV_DIM, ATTN_DIM), jnp.float32, -bound, bound)

    def conv_b(k):
        return jax.random.uniform(k, (1, ATTN_DIM), jnp.float32, -bound, bound)

    params = dict(
        wq1=conv_w(ks[0]), bq1=conv_b(ks[1]),
        wk1=conv_w(ks[2]), bk1=conv_b(ks[3]),
        wq2=conv_w(ks[4]), bq2=conv_b(ks[5]),
        wk2=conv_w(ks[6]), bk2=conv_b(ks[7]),
        wv2=conv_w(ks[8]), bv2=conv_b(ks[9]),
    )
    # cfg.w_identity=True init: Wv1 = eps everywhere, weight on last input channel = 1
    wv1 = jnp.full((QKV_DIM, ATTN_DIM), EPS, jnp.float32).at[-1, :].set(1.0)
    # W_A = eps with last element 1.0; W_B = eps everywhere
    wA = jnp.full((ATTN_DIM, 1), EPS, jnp.float32).at[-1, :].set(1.0)
    wB = jnp.full((ATTN_DIM, 1), EPS, jnp.float32)
    params.update(wv1=wv1, wA=wA, wB=wB)
    return params


if __name__ == "__main__":
    key = jax.random.PRNGKey(0)
    k_in, k_cond, k_par = jax.random.split(key, 3)
    BATCH = 8                                          # B*HW = 512 rows total

    inputs = jax.random.normal(k_in, (BATCH * HW, NUM_CHANNELS), jnp.float32)
    cond_vec = jax.random.normal(k_cond, (BATCH * HW, COND_DIM), jnp.float32)
    params = init_params(k_par)
    w_fused, b_fused = pack_params(params)

    ref_out, ref_logdet = reference_forward(inputs, cond_vec, params, BATCH)

    # grid_steps=1: single fat step (best on single-TC v5e/v6e, fine on v7x at B=8).
    # grid_steps=2: one step per v7x TensorCore (use for larger real batches).
    for steps in (1, 2):
        out, logdet = invert_isdp_forward(inputs, cond_vec, w_fused, b_fused,
                                          grid_steps=steps)
        jax.block_until_ready((out, logdet))
        assert out.shape == (BATCH * HW, NUM_CHANNELS)
        assert logdet.shape == (BATCH * HW,)
        assert jnp.allclose(out, ref_out, atol=1e-4, rtol=1e-4)
        assert jnp.allclose(logdet, ref_logdet, atol=1e-4, rtol=1e-4)

    print("KERNEL_OK")
</pallas_src>

<mosaic_0001>
module attributes {stable_mosaic.version = 11 : i64} {
  func.func @invert_isdp_kernel(%arg0: i32, %arg1: memref<512x4xf32, #tpu.memory_space<vmem>>, %arg2: memref<512x5xf32, #tpu.memory_space<vmem>>, %arg3: memref<7x36xf32, #tpu.memory_space<vmem>>, %arg4: memref<1x36xf32, #tpu.memory_space<vmem>>, %arg5: memref<512x4xf32, #tpu.memory_space<vmem>>, %arg6: memref<512x1xf32, #tpu.memory_space<vmem>>) attributes {dimension_semantics = [#tpu.dimension_semantics<parallel>], iteration_bounds = array<i64: 1>, scalar_prefetch = 0 : i64, scratch_operands = 0 : i64, tpu.core_type = #tpu.core_type<tc>, window_params = [{transform_indices = @transform_0, window_bounds = array<i64: 512, 4>}, {transform_indices = @transform_1, window_bounds = array<i64: 512, 5>}, {pipeline_mode = #tpu.pipeline_mode<synchronous>, transform_indices = @transform_2, window_bounds = array<i64: 7, 36>}, {pipeline_mode = #tpu.pipeline_mode<synchronous>, transform_indices = @transform_3, window_bounds = array<i64: 1, 36>}, {transform_indices = @transform_4, window_bounds = array<i64: 512, 4>}, {transform_indices = @transform_5, window_bounds = array<i64: 512, 1>}]} {
    %c0 = arith.constant 0 : index
    %c0_0 = arith.constant 0 : index
    %0 = vector.load %arg1[%c0, %c0_0] : memref<512x4xf32, #tpu.memory_space<vmem>>, vector<512x4xf32>
    %1 = vector.extract_strided_slice %0 {offsets = [0, 0], sizes = [512, 2], strides = [1, 1]} : vector<512x4xf32> to vector<512x2xf32>
    %2 = vector.extract_strided_slice %0 {offsets = [0, 2], sizes = [512, 2], strides = [1, 1]} : vector<512x4xf32> to vector<512x2xf32>
    %c0_1 = arith.constant 0 : index
    %c0_2 = arith.constant 0 : index
    %3 = vector.load %arg2[%c0_1, %c0_2] : memref<512x5xf32, #tpu.memory_space<vmem>>, vector<512x5xf32>
    %c0_3 = arith.constant 0 : index
    %c0_4 = arith.constant 0 : index
    %4 = vector.load %arg3[%c0_3, %c0_4] : memref<7x36xf32, #tpu.memory_space<vmem>>, vector<2x36xf32>
    %cst = arith.constant dense<0.000000e+00> : vector<512x36xf32>
    %5 = tpu.matmul %1, %4, %cst {dimension_numbers = #tpu.dot_dimension_numbers<[1], [0], [0], [1], [0, 0, 1, 1], [], []>} : vector<512x2xf32>, vector<2x36xf32>, vector<512x36xf32> -> vector<512x36xf32>
    %c2 = arith.constant 2 : index
    %c0_5 = arith.constant 0 : index
    %6 = vector.load %arg3[%c2, %c0_5] : memref<7x36xf32, #tpu.memory_space<vmem>>, vector<5x36xf32>
    %cst_6 = arith.constant dense<0.000000e+00> : vector<512x36xf32>
    %7 = tpu.matmul %3, %6, %cst_6 {dimension_numbers = #tpu.dot_dimension_numbers<[1], [0], [0], [1], [0, 0, 1, 1], [], []>} : vector<512x5xf32>, vector<5x36xf32>, vector<512x36xf32> -> vector<512x36xf32>
    %8 = arith.addf %5, %7 : vector<512x36xf32>
    %c0_7 = arith.constant 0 : index
    %c0_8 = arith.constant 0 : index
    %9 = vector.load %arg4[%c0_7, %c0_8] : memref<1x36xf32, #tpu.memory_space<vmem>>, vector<1x36xf32>
    %10 = vector.broadcast %9 : vector<1x36xf32> to vector<512x36xf32>
    %11 = arith.addf %8, %10 : vector<512x36xf32>
    %12 = vector.extract_strided_slice %11 {offsets = [0, 0], sizes = [512, 8], strides = [1, 1]} : vector<512x36xf32> to vector<512x8xf32>
    %13 = vector.shape_cast %12 : vector<512x8xf32> to vector<8x64x8xf32>
    %14 = vector.extract_strided_slice %11 {offsets = [0, 8], sizes = [512, 8], strides = [1, 1]} : vector<512x36xf32> to vector<512x8xf32>
    %15 = vector.shape_cast %14 : vector<512x8xf32> to vector<8x64x8xf32>
    %16 = vector.extract_strided_slice %11 {offsets = [0, 32], sizes = [512, 2], strides = [1, 1]} : vector<512x36xf32> to vector<512x2xf32>
    %17 = vector.shape_cast %16 : vector<512x2xf32> to vector<8x64x2xf32>
    "tpu.trace_start"() <{level = 10 : i32, message = "bpd,bqd->bpq"}> : () -> ()
    %cst_9 = arith.constant dense<0.000000e+00> : vector<8x64x64xf32>
    %18 = tpu.matmul %13, %15, %cst_9 {dimension_numbers = #tpu.dot_dimension_numbers<[2], [2], [1], [1], [0, 0, 0, 1, 1, 1], [0], [0]>} : vector<8x64x8xf32>, vector<8x64x8xf32>, vector<8x64x64xf32> -> vector<8x64x64xf32>
    "tpu.trace_stop"() : () -> ()
    %cst_10 = arith.constant dense<0xFF800000> : vector<8x64xf32>
    %19 = vector.multi_reduction <maximumf>, %18, %cst_10 [2] : vector<8x64x64xf32> to vector<8x64xf32>
    %20 = vector.shape_cast %19 : vector<8x64xf32> to vector<8x64x1xf32>
    %21 = vector.broadcast %20 : vector<8x64x1xf32> to vector<8x64x64xf32>
    %22 = arith.subf %18, %21 : vector<8x64x64xf32>
    %23 = math.exp %22 : vector<8x64x64xf32>
    "tpu.trace_start"() <{level = 10 : i32, message = "bpq,bqt->bpt"}> : () -> ()
    %cst_11 = arith.constant dense<0.000000e+00> : vector<8x64x2xf32>
    %24 = tpu.matmul %23, %17, %cst_11 {dimension_numbers = #tpu.dot_dimension_numbers<[2], [1], [1], [2], [0, 0, 0, 1, 1, 2], [0], [0]>} : vector<8x64x64xf32>, vector<8x64x2xf32>, vector<8x64x2xf32> -> vector<8x64x2xf32>
    "tpu.trace_stop"() : () -> ()
    %25 = vector.extract_strided_slice %24 {offsets = [0, 0, 0], sizes = [8, 64, 1], strides = [1, 1, 1]} : vector<8x64x2xf32> to vector<8x64x1xf32>
    %26 = vector.extract_strided_slice %24 {offsets = [0, 0, 1], sizes = [8, 64, 1], strides = [1, 1, 1]} : vector<8x64x2xf32> to vector<8x64x1xf32>
    %27 = arith.divf %25, %26 : vector<8x64x1xf32>
    %28 = vector.shape_cast %27 : vector<8x64x1xf32> to vector<512x1xf32>
    %29 = vector.extract_strided_slice %11 {offsets = [0, 16], sizes = [512, 8], strides = [1, 1]} : vector<512x36xf32> to vector<512x8xf32>
    %30 = vector.shape_cast %29 : vector<512x8xf32> to vector<8x64x8xf32>
    %31 = vector.extract_strided_slice %11 {offsets = [0, 24], sizes = [512, 8], strides = [1, 1]} : vector<512x36xf32> to vector<512x8xf32>
    %32 = vector.shape_cast %31 : vector<512x8xf32> to vector<8x64x8xf32>
    %33 = vector.extract_strided_slice %11 {offsets = [0, 34], sizes = [512, 2], strides = [1, 1]} : vector<512x36xf32> to vector<512x2xf32>
    %34 = vector.shape_cast %33 : vector<512x2xf32> to vector<8x64x2xf32>
    "tpu.trace_start"() <{level = 10 : i32, message = "bpd,bqd->bpq"}> : () -> ()
    %cst_12 = arith.constant dense<0.000000e+00> : vector<8x64x64xf32>
    %35 = tpu.matmul %30, %32, %cst_12 {dimension_numbers = #tpu.dot_dimension_numbers<[2], [2], [1], [1], [0, 0, 0, 1, 1, 1], [0], [0]>} : vector<8x64x8xf32>, vector<8x64x8xf32>, vector<8x64x64xf32> -> vector<8x64x64xf32>
    "tpu.trace_stop"() : () -> ()
    %cst_13 = arith.constant dense<0xFF800000> : vector<8x64xf32>
    %36 = vector.multi_reduction <maximumf>, %35, %cst_13 [2] : vector<8x64x64xf32> to vector<8x64xf32>
    %37 = vector.shape_cast %36 : vector<8x64xf32> to vector<8x64x1xf32>
    %38 = vector.broadcast %37 : vector<8x64x1xf32> to vector<8x64x64xf32>
    %39 = arith.subf %35, %38 : vector<8x64x64xf32>
    %40 = math.exp %39 : vector<8x64x64xf32>
    "tpu.trace_start"() <{level = 10 : i32, message = "bpq,bqt->bpt"}> : () -> ()
    %cst_14 = arith.constant dense<0.000000e+00> : vector<8x64x2xf32>
    %41 = tpu.matmul %40, %34, %cst_14 {dimension_numbers = #tpu.dot_dimension_numbers<[2], [1], [1], [2], [0, 0, 0, 1, 1, 2], [0], [0]>} : vector<8x64x64xf32>, vector<8x64x2xf32>, vector<8x64x2xf32> -> vector<8x64x2xf32>
    "tpu.trace_stop"() : () -> ()
    %42 = vector.extract_strided_slice %41 {offsets = [0, 0, 0], sizes = [8, 64, 1], strides = [1, 1, 1]} : vector<8x64x2xf32> to vector<8x64x1xf32>
    %43 = vector.extract_strided_slice %41 {offsets = [0, 0, 1], sizes = [8, 64, 1], strides = [1, 1, 1]} : vector<8x64x2xf32> to vector<8x64x1xf32>
    %44 = arith.divf %42, %43 : vector<8x64x1xf32>
    %45 = vector.shape_cast %44 : vector<8x64x1xf32> to vector<512x1xf32>
    %46 = math.exp %28 : vector<512x1xf32>
    %47 = vector.broadcast %46 : vector<512x1xf32> to vector<512x2xf32>
    %48 = arith.mulf %47, %2 : vector<512x2xf32>
    %49 = vector.broadcast %45 : vector<512x1xf32> to vector<512x2xf32>
    %50 = arith.addf %48, %49 : vector<512x2xf32>
    %c0_15 = arith.constant 0 : index
    %c0_16 = arith.constant 0 : index
    %51 = vector.load %arg5[%c0_15, %c0_16] : memref<512x4xf32, #tpu.memory_space<vmem>>, vector<512x2xf32>
    tpu.vector_store %arg5[%c0_15, %c0_16], %1 {strides = array<i32>} : memref<512x4xf32, #tpu.memory_space<vmem>>, vector<512x2xf32>,
    %c0_17 = arith.constant 0 : index
    %c2_18 = arith.constant 2 : index
    %52 = vector.load %arg5[%c0_17, %c2_18] : memref<512x4xf32, #tpu.memory_space<vmem>>, vector<512x2xf32>
    tpu.vector_store %arg5[%c0_17, %c2_18], %50 {strides = array<i32>} : memref<512x4xf32, #tpu.memory_space<vmem>>, vector<512x2xf32>,
    %cst_19 = arith.constant 2.000000e+00 : f32
    %53 = vector.broadcast %cst_19 : f32 to vector<512x1xf32>
    %54 = arith.mulf %28, %53 : vector<512x1xf32>
    %c0_20 = arith.constant 0 : index
    %c0_21 = arith.constant 0 : index
    %55 = vector.load %arg6[%c0_20, %c0_21] : memref<512x1xf32, #tpu.memory_space<vmem>>, vector<512x1xf32>
    tpu.vector_store %arg6[%c0_20, %c0_21], %54 {strides = array<i32>} : memref<512x1xf32, #tpu.memory_space<vmem>>, vector<512x1xf32>,
    return
  }
  func.func @transform_0(%arg0: i32) -> (i32, i32) {
    %c0_i32 = arith.constant 0 : i32
    %c0_i32_0 = arith.constant 0 : i32
    return %arg0, %c0_i32 : i32, i32
  }
  func.func @transform_1(%arg0: i32) -> (i32, i32) {
    %c0_i32 = arith.constant 0 : i32
    %c0_i32_0 = arith.constant 0 : i32
    return %arg0, %c0_i32 : i32, i32
  }
  func.func @transform_2(%arg0: i32) -> (i32, i32) {
    %c0_i32 = arith.constant 0 : i32
    %c0_i32_0 = arith.constant 0 : i32
    %c0_i32_1 = arith.constant 0 : i32
    return %c0_i32, %c0_i32_0 : i32, i32
  }
  func.func @transform_3(%arg0: i32) -> (i32, i32) {
    %c0_i32 = arith.constant 0 : i32
    %c0_i32_0 = arith.constant 0 : i32
    %c0_i32_1 = arith.constant 0 : i32
    return %c0_i32, %c0_i32_0 : i32, i32
  }
  func.func @transform_4(%arg0: i32) -> (i32, i32) {
    %c0_i32 = arith.constant 0 : i32
    %c0_i32_0 = arith.constant 0 : i32
    return %arg0, %c0_i32 : i32, i32
  }
  func.func @transform_5(%arg0: i32) -> (i32, i32) {
    %c0_i32 = arith.constant 0 : i32
    %c0_i32_0 = arith.constant 0 : i32
    return %arg0, %c0_i32 : i32, i32
  }
}

</mosaic_0001>

<llo_original>
// kernel: invert_isdp_forward.1
$region0: #{invert_isdp_forward.1}
  #allocation0 [shape = 'u32[]', space=smem, size = 0x4, offset = 0x4, fixed_abs, tag = 'smem constant byte address 0x4 - core index']
  #allocation1 [shape = 'u32[144,128]{1,0:T(1,128)}', space=vmem, size = 0x12000, scoped, tag = 'internal scratch']
  %s0 = inlined_call_operand.vmem [shape: f32[512,4], index: 0, kind: input, shape index: {}]
  %s1 = inlined_call_operand.vmem [shape: f32[512,5], index: 1, kind: input, shape index: {}]
  %s2 = inlined_call_operand.vmem [shape: f32[7,36], index: 2, kind: input, shape index: {}]
  %s3 = inlined_call_operand.vmem [shape: f32[1,36], index: 3, kind: input, shape index: {}]
  %s4 = inlined_call_operand.vmem [shape: f32[512,4], index: 4, kind: output, shape index: {0}]
  %s5 = inlined_call_operand.vmem [shape: f32[512,1], index: 5, kind: output, shape index: {1}]
  %6 = xla_tuple %s4, %s5
  %s7 = sld [smem:[#allocation0]]
  $region34: #{invert_isdp_forward.1} parent=0
    _
  %s9 = ssub.s32 1, %s7
  %s10 = scalar_select 0, %s9, %s7
  // Predicated region
  $region2: #{invert_isdp_forward.1} parent=0 // pred_check
    _
  $region3: #{invert_isdp_forward.1} parent=0 // pred_check_branch
    %12 = sbr.rel (0) target = $region5
  $region4: #{invert_isdp_forward.1} parent=0 // pred_region
    _
  $region5: #{invert_isdp_forward.1} parent=0 // pred_fallthru
    _
  // Predicated region
  $region6: #{invert_isdp_forward.1} parent=0 // pred_check
    _
  $region7: #{invert_isdp_forward.1} parent=0 // pred_check_branch
    %14 = sbr.rel (0) target = $region9
  $region8: #{invert_isdp_forward.1} parent=0 // pred_region
    _
  $region9: #{invert_isdp_forward.1} parent=0 // pred_fallthru
    _
  // Predicated region
  $region10: #{invert_isdp_forward.1} parent=0 // pred_check
    _
  $region11: #{invert_isdp_forward.1} parent=0 // pred_check_branch
    %16 = sbr.rel (0) target = $region13
  $region12: #{invert_isdp_forward.1} parent=0 // pred_region
    _
  $region13: #{invert_isdp_forward.1} parent=0 // pred_fallthru
    _
  // Predicated region
  $region14: #{invert_isdp_forward.1} parent=0 // pred_check
    _
  $region15: #{invert_isdp_forward.1} parent=0 // pred_check_branch
    %18 = sbr.rel (0) target = $region17
  $region16: #{invert_isdp_forward.1} parent=0 // pred_region
    _
  $region17: #{invert_isdp_forward.1} parent=0 // pred_fallthru
    _
  %v19 = vld [vmem:[%s0] sm:$0xff]
  %v20 = vld [vmem:[%s0 + $0x8] sm:$0xff]
  %v21 = vld [vmem:[%s0 + $0x10] sm:$0xff]
  %v22 = vld [vmem:[%s0 + $0x18] sm:$0xff]
  %v23 = vld [vmem:[%s0 + $0x20] sm:$0xff]
  %v24 = vld [vmem:[%s0 + $0x28] sm:$0xff]
  %v25 = vld [vmem:[%s0 + $0x30] sm:$0xff]
  %v26 = vld [vmem:[%s0 + $0x38] sm:$0xff]
  %v27 = vld [vmem:[%s0 + $0x40] sm:$0xff]
  %v28 = vld [vmem:[%s0 + $0x48] sm:$0xff]
  %v29 = vld [vmem:[%s0 + $0x50] sm:$0xff]
  %v30 = vld [vmem:[%s0 + $0x58] sm:$0xff]
  %v31 = vld [vmem:[%s0 + $0x60] sm:$0xff]
  %v32 = vld [vmem:[%s0 + $0x68] sm:$0xff]
  %v33 = vld [vmem:[%s0 + $0x70] sm:$0xff]
  %v34 = vld [vmem:[%s0 + $0x78] sm:$0xff]
  %v35 = vld [vmem:[%s0 + $0x80] sm:$0xff]
  %v36 = vld [vmem:[%s0 + $0x88] sm:$0xff]
  %v37 = vld [vmem:[%s0 + $0x90] sm:$0xff]
  %v38 = vld [vmem:[%s0 + $0x98] sm:$0xff]
  %v39 = vld [vmem:[%s0 + $0xa0] sm:$0xff]
  %v40 = vld [vmem:[%s0 + $0xa8] sm:$0xff]
  %v41 = vld [vmem:[%s0 + $0xb0] sm:$0xff]
  %v42 = vld [vmem:[%s0 + $0xb8] sm:$0xff]
  %v43 = vld [vmem:[%s0 + $0xc0] sm:$0xff]
  %v44 = vld [vmem:[%s0 + $0xc8] sm:$0xff]
  %v45 = vld [vmem:[%s0 + $0xd0] sm:$0xff]
  %v46 = vld [vmem:[%s0 + $0xd8] sm:$0xff]
  %v47 = vld [vmem:[%s0 + $0xe0] sm:$0xff]
  %v48 = vld [vmem:[%s0 + $0xe8] sm:$0xff]
  %v49 = vld [vmem:[%s0 + $0xf0] sm:$0xff]
  %v50 = vld [vmem:[%s0 + $0xf8] sm:$0xff]
  %v51 = vld [vmem:[%s0 + $0x100] sm:$0xff]
  %v52 = vld [vmem:[%s0 + $0x108] sm:$0xff]
  %v53 = vld [vmem:[%s0 + $0x110] sm:$0xff]
  %v54 = vld [vmem:[%s0 + $0x118] sm:$0xff]
  %v55 = vld [vmem:[%s0 + $0x120] sm:$0xff]
  %v56 = vld [vmem:[%s0 + $0x128] sm:$0xff]
  %v57 = vld [vmem:[%s0 + $0x130] sm:$0xff]
  %v58 = vld [vmem:[%s0 + $0x138] sm:$0xff]
  %v59 = vld [vmem:[%s0 + $0x140] sm:$0xff]
  %v60 = vld [vmem:[%s0 + $0x148] sm:$0xff]
  %v61 = vld [vmem:[%s0 + $0x150] sm:$0xff]
  %v62 = vld [vmem:[%s0 + $0x158] sm:$0xff]
  %v63 = vld [vmem:[%s0 + $0x160] sm:$0xff]
  %v64 = vld [vmem:[%s0 + $0x168] sm:$0xff]
  %v65 = vld [vmem:[%s0 + $0x170] sm:$0xff]
  %v66 = vld [vmem:[%s0 + $0x178] sm:$0xff]
  %v67 = vld [vmem:[%s0 + $0x180] sm:$0xff]
  %v68 = vld [vmem:[%s0 + $0x188] sm:$0xff]
  %v69 = vld [vmem:[%s0 + $0x190] sm:$0xff]
  %v70 = vld [vmem:[%s0 + $0x198] sm:$0xff]
  %v71 = vld [vmem:[%s0 + $0x1a0] sm:$0xff]
  %v72 = vld [vmem:[%s0 + $0x1a8] sm:$0xff]
  %v73 = vld [vmem:[%s0 + $0x1b0] sm:$0xff]
  %v74 = vld [vmem:[%s0 + $0x1b8] sm:$0xff]
  %v75 = vld [vmem:[%s0 + $0x1c0] sm:$0xff]
  %v76 = vld [vmem:[%s0 + $0x1c8] sm:$0xff]
  %v77 = vld [vmem:[%s0 + $0x1d0] sm:$0xff]
  %v78 = vld [vmem:[%s0 + $0x1d8] sm:$0xff]
  %v79 = vld [vmem:[%s0 + $0x1e0] sm:$0xff]
  %v80 = vld [vmem:[%s0 + $0x1e8] sm:$0xff]
  %v81 = vld [vmem:[%s0 + $0x1f0] sm:$0xff]
  %v82 = vld [vmem:[%s0 + $0x1f8] sm:$0xff]
  %v83 = vld [vmem:[%s1] sm:$0xff]
  %v84 = vld [vmem:[%s1 + $0x8] sm:$0xff]
  %v85 = vld [vmem:[%s1 + $0x10] sm:$0xff]
  %v86 = vld [vmem:[%s1 + $0x18] sm:$0xff]
  %v87 = vld [vmem:[%s1 + $0x20] sm:$0xff]
  %v88 = vld [vmem:[%s1 + $0x28] sm:$0xff]
  %v89 = vld [vmem:[%s1 + $0x30] sm:$0xff]
  %v90 = vld [vmem:[%s1 + $0x38] sm:$0xff]
  %v91 = vld [vmem:[%s1 + $0x40] sm:$0xff]
  %v92 = vld [vmem:[%s1 + $0x48] sm:$0xff]
  %v93 = vld [vmem:[%s1 + $0x50] sm:$0xff]
  %v94 = vld [vmem:[%s1 + $0x58] sm:$0xff]
  %v95 = vld [vmem:[%s1 + $0x60] sm:$0xff]
  %v96 = vld [vmem:[%s1 + $0x68] sm:$0xff]
  %v97 = vld [vmem:[%s1 + $0x70] sm:$0xff]
  %v98 = vld [vmem:[%s1 + $0x78] sm:$0xff]
  %v99 = vld [vmem:[%s1 + $0x80] sm:$0xff]
  %v100 = vld [vmem:[%s1 + $0x88] sm:$0xff]
  %v101 = vld [vmem:[%s1 + $0x90] sm:$0xff]
  %v102 = vld [vmem:[%s1 + $0x98] sm:$0xff]
  %v103 = vld [vmem:[%s1 + $0xa0] sm:$0xff]
  %v104 = vld [vmem:[%s1 + $0xa8] sm:$0xff]
  %v105 = vld [vmem:[%s1 + $0xb0] sm:$0xff]
  %v106 = vld [vmem:[%s1 + $0xb8] sm:$0xff]
  %v107 = vld [vmem:[%s1 + $0xc0] sm:$0xff]
  %v108 = vld [vmem:[%s1 + $0xc8] sm:$0xff]
  %v109 = vld [vmem:[%s1 + $0xd0] sm:$0xff]
  %v110 = vld [vmem:[%s1 + $0xd8] sm:$0xff]
  %v111 = vld [vmem:[%s1 + $0xe0] sm:$0xff]
  %v112 = vld [vmem:[%s1 + $0xe8] sm:$0xff]
  %v113 = vld [vmem:[%s1 + $0xf0] sm:$0xff]
  %v114 = vld [vmem:[%s1 + $0xf8] sm:$0xff]
  %v115 = vld [vmem:[%s1 + $0x100] sm:$0xff]
  %v116 = vld [vmem:[%s1 + $0x108] sm:$0xff]
  %v117 = vld [vmem:[%s1 + $0x110] sm:$0xff]
  %v118 = vld [vmem:[%s1 + $0x118] sm:$0xff]
  %v119 = vld [vmem:[%s1 + $0x120] sm:$0xff]
  %v120 = vld [vmem:[%s1 + $0x128] sm:$0xff]
  %v121 = vld [vmem:[%s1 + $0x130] sm:$0xff]
  %v122 = vld [vmem:[%s1 + $0x138] sm:$0xff]
  %v123 = vld [vmem:[%s1 + $0x140] sm:$0xff]
  %v124 = vld [vmem:[%s1 + $0x148] sm:$0xff]
  %v125 = vld [vmem:[%s1 + $0x150] sm:$0xff]
  %v126 = vld [vmem:[%s1 + $0x158] sm:$0xff]
  %v127 = vld [vmem:[%s1 + $0x160] sm:$0xff]
  %v128 = vld [vmem:[%s1 + $0x168] sm:$0xff]
  %v129 = vld [vmem:[%s1 + $0x170] sm:$0xff]
  %v130 = vld [vmem:[%s1 + $0x178] sm:$0xff]
  %v131 = vld [vmem:[%s1 + $0x180] sm:$0xff]
  %v132 = vld [vmem:[%s1 + $0x188] sm:$0xff]
  %v133 = vld [vmem:[%s1 + $0x190] sm:$0xff]
  %v134 = vld [vmem:[%s1 + $0x198] sm:$0xff]
  %v135 = vld [vmem:[%s1 + $0x1a0] sm:$0xff]
  %v136 = vld [vmem:[%s1 + $0x1a8] sm:$0xff]
  %v137 = vld [vmem:[%s1 + $0x1b0] sm:$0xff]
  %v138 = vld [vmem:[%s1 + $0x1b8] sm:$0xff]
  %v139 = vld [vmem:[%s1 + $0x1c0] sm:$0xff]
  %v140 = vld [vmem:[%s1 + $0x1c8] sm:$0xff]
  %v141 = vld [vmem:[%s1 + $0x1d0] sm:$0xff]
  %v142 = vld [vmem:[%s1 + $0x1d8] sm:$0xff]
  %v143 = vld [vmem:[%s1 + $0x1e0] sm:$0xff]
  %v144 = vld [vmem:[%s1 + $0x1e8] sm:$0xff]
  %v145 = vld [vmem:[%s1 + $0x1f0] sm:$0xff]
  %v146 = vld [vmem:[%s1 + $0x1f8] sm:$0xff]
  %v147 = vld [vmem:[%s2] sm:$0x3]
  %v148 = vld [vmem:[%s2 + $0x2] sm:$0x1f]
  %vm149 = vcmask 39936
  %v151 = vsel %vm149, %v83, 0
  %v154 = vsel %vm149, %v84, 0
  %v157 = vsel %vm149, %v85, 0
  %v160 = vsel %vm149, %v86, 0
  %v163 = vsel %vm149, %v87, 0
  %v166 = vsel %vm149, %v88, 0
  %v169 = vsel %vm149, %v89, 0
  %v172 = vsel %vm149, %v90, 0
  %v175 = vsel %vm149, %v91, 0
  %v178 = vsel %vm149, %v92, 0
  %v181 = vsel %vm149, %v93, 0
  %v184 = vsel %vm149, %v94, 0
  %v187 = vsel %vm149, %v95, 0
  %v190 = vsel %vm149, %v96, 0
  %v193 = vsel %vm149, %v97, 0
  %v196 = vsel %vm149, %v98, 0
  %v199 = vsel %vm149, %v99, 0
  %v202 = vsel %vm149, %v100, 0
  %v205 = vsel %vm149, %v101, 0
  %v208 = vsel %vm149, %v102, 0
  %v211 = vsel %vm149, %v103, 0
  %v214 = vsel %vm149, %v104, 0
  %v217 = vsel %vm149, %v105, 0
  %v220 = vsel %vm149, %v106, 0
  %v223 = vsel %vm149, %v107, 0
  %v226 = vsel %vm149, %v108, 0
  %v229 = vsel %vm149, %v109, 0
  %v232 = vsel %vm149, %v110, 0
  %v235 = vsel %vm149, %v111, 0
  %v238 = vsel %vm149, %v112, 0
  %v241 = vsel %vm149, %v113, 0
  %v244 = vsel %vm149, %v114, 0
  %v247 = vsel %vm149, %v115, 0
  %v250 = vsel %vm149, %v116, 0
  %v253 = vsel %vm149, %v117, 0
  %v256 = vsel %vm149, %v118, 0
  %v259 = vsel %vm149, %v119, 0
  %v262 = vsel %vm149, %v120, 0
  %v265 = vsel %vm149, %v121, 0
  %v268 = vsel %vm149, %v122, 0
  %v271 = vsel %vm149, %v123, 0
  %v274 = vsel %vm149, %v124, 0
  %v277 = vsel %vm149, %v125, 0
  %v280 = vsel %vm149, %v126, 0
  %v283 = vsel %vm149, %v127, 0
  %v286 = vsel %vm149, %v128, 0
  %v289 = vsel %vm149, %v129, 0
  %v292 = vsel %vm149, %v130, 0
  %v295 = vsel %vm149, %v131, 0
  %v298 = vsel %vm149, %v132, 0
  %v301 = vsel %vm149, %v133, 0
  %v304 = vsel %vm149, %v134, 0
  %v307 = vsel %vm149, %v135, 0
  %v310 = vsel %vm149, %v136, 0
  %v313 = vsel %vm149, %v137, 0
  %v316 = vsel %vm149, %v138, 0
  %v319 = vsel %vm149, %v139, 0
  %v322 = vsel %vm149, %v140, 0
  %v325 = vsel %vm149, %v141, 0
  %v328 = vsel %vm149, %v142, 0
  %v331 = vsel %vm149, %v143, 0
  %v334 = vsel %vm149, %v144, 0
  %v337 = vsel %vm149, %v145, 0
  %v340 = vsel %vm149, %v146, 0
  %vm342 = vcmask 1044480
  %v344 = vsel %vm342, %v148, 0
  %346 = vmatprep.subr.mxu0 0.0
  %347 = vmatpush1.msra.mxu0 %v344
  %348 = vmatprep.subr.mxu0 0.0
  %349 = vmatpush1.msra.mxu0 0.0
  %350 = vmatprep.subr.mxu0 0.0
  %351 = vmatpush1.msra.mxu0 0.0
  %352 = vmatprep.subr.mxu0 0.0
  %353 = vmatpush1.msra.mxu0 0.0
  %354 = vmatprep.subr.mxu0 0.0
  %355 = vmatpush1.msra.mxu0 0.0
  %356 = vmatprep.subr.mxu0 0.0
  %357 = vmatpush1.msra.mxu0 0.0
  %358 = vmatprep.subr.mxu0 0.0
  %359 = vmatpush1.msra.mxu0 0.0
  %360 = vmatprep.subr.mxu0 0.0
  %361 = vmatpush1.msra.mxu0 0.0
  %362 = vmatprep.subr.mxu0 0.0
  %363 = vmatpush1.msra.mxu0 0.0
  %364 = vmatprep.subr.mxu0 0.0
  %365 = vmatpush1.msra.mxu0 0.0
  %366 = vmatprep.subr.mxu0 0.0
  %367 = vmatpush1.msra.mxu0 0.0
  %368 = vmatprep.subr.mxu0 0.0
  %369 = vmatpush1.msra.mxu0 0.0
  %370 = vmatprep.subr.mxu0 0.0
  %371 = vmatpush1.msra.mxu0 0.0
  %372 = vmatprep.subr.mxu0 0.0
  %373 = vmatpush1.msra.mxu0 0.0
  %374 = vmatprep.subr.mxu0 0.0
  %375 = vmatpush1.msra.mxu0 0.0
  %376 = vmatprep.subr.mxu0 0.0
  %377 = vmatpush1.msra.mxu0 0.0
  %378 = vmatprep.subr.mxu0 0.0
  %379 = vmatpush1.msra.mxu0 0.0
  %380 = vmatprep.subr.mxu0 0.0
  %381 = vmatpush1.msra.mxu0 0.0
  %382 = vmatprep.subr.mxu0 0.0
  %383 = vmatpush1.msra.mxu0 0.0
  %384 = vmatprep.subr.mxu0 0.0
  %385 = vmatpush1.msra.mxu0 0.0
  %386 = vmatprep.subr.mxu0 0.0
  %387 = vmatpush1.msra.mxu0 0.0
  %388 = vmatprep.subr.mxu0 0.0
  %389 = vmatpush1.msra.mxu0 0.0
  %390 = vmatprep.subr.mxu0 0.0
  %391 = vmatpush1.msra.mxu0 0.0
  %392 = vmatprep.subr.mxu0 0.0
  %393 = vmatpush1.msra.mxu0 0.0
  %394 = vmatprep.subr.mxu0 0.0
  %395 = vmatpush1.msra.mxu0 0.0
  %396 = vmatprep.subr.mxu0 0.0
  %397 = vmatpush1.msra.mxu0 0.0
  %398 = vmatprep.subr.mxu0 0.0
  %399 = vmatpush1.msra.mxu0 0.0
  %400 = vmatprep.subr.mxu0 0.0
  %401 = vmatpush1.msra.mxu0 0.0
  %402 = vmatprep.subr.mxu0 0.0
  %403 = vmatpush1.msra.mxu0 0.0
  %404 = vmatprep.subr.mxu0 0.0
  %405 = vmatpush1.msra.mxu0 0.0
  %406 = vmatprep.subr.mxu0 0.0
  %407 = vmatpush1.msra.mxu0 0.0
  %408 = vmatprep.subr.mxu0 0.0
  %409 = vmatpush1.msra.mxu0 0.0
  %410 = vmatprep.mubr.f32.mxu0 0.0
  %411 = vmatmul.mubr.f32.gmra.mrb[0].mxu0 %v151
  %v412 = vpop.f32.mrb[0].mxu0
  %v413 = vadd.f32 0.0, %v412
  %v414 = vpop.f32.mrb[0].mxu0
  %415 = vmatprep.mubr.f32.mxu0 0.0
  %416 = vmatmul.mubr.f32.gmra.mrb[0].mxu0 %v154
  %v417 = vpop.f32.mrb[0].mxu0
  %v418 = vadd.f32 0.0, %v417
  %v419 = vpop.f32.mrb[0].mxu0
  %420 = vmatprep.mubr.f32.mxu0 0.0
  %421 = vmatmul.mubr.f32.gmra.mrb[0].mxu0 %v157
  %v422 = vpop.f32.mrb[0].mxu0
  %v423 = vadd.f32 0.0, %v422
  %v424 = vpop.f32.mrb[0].mxu0
  %425 = vmatprep.mubr.f32.mxu0 0.0
  %426 = vmatmul.mubr.f32.gmra.mrb[0].mxu0 %v160
  %v427 = vpop.f32.mrb[0].mxu0
  %v428 = vadd.f32 0.0, %v427
  %v429 = vpop.f32.mrb[0].mxu0
  %430 = vmatprep.mubr.f32.mxu0 0.0
  %431 = vmatmul.mubr.f32.gmra.mrb[0].mxu0 %v163
  %v432 = vpop.f32.mrb[0].mxu0
  %v433 = vadd.f32 0.0, %v432
  %v434 = vpop.f32.mrb[0].mxu0
  %435 = vmatprep.mubr.f32.mxu0 0.0
  %436 = vmatmul.mubr.f32.gmra.mrb[0].mxu0 %v166
  %v437 = vpop.f32.mrb[0].mxu0
  %v438 = vadd.f32 0.0, %v437
  %v439 = vpop.f32.mrb[0].mxu0
  %440 = vmatprep.mubr.f32.mxu0 0.0
  %441 = vmatmul.mubr.f32.gmra.mrb[0].mxu0 %v169
  %v442 = vpop.f32.mrb[0].mxu0
  %v443 = vadd.f32 0.0, %v442
  %v444 = vpop.f32.mrb[0].mxu0
  %445 = vmatprep.mubr.f32.mxu0 0.0
  %446 = vmatmul.mubr.f32.gmra.mrb[0].mxu0 %v172
  %v447 = vpop.f32.mrb[0].mxu0
  %v448 = vadd.f32 0.0, %v447
  %v449 = vpop.f32.mrb[0].mxu0
  %450 = vmatprep.mubr.f32.mxu0 0.0
  %451 = vmatmul.mubr.f32.gmra.mrb[0].mxu0 %v175
  %v452 = vpop.f32.mrb[0].mxu0
  %v453 = vadd.f32 0.0, %v452
  %v454 = vpop.f32.mrb[0].mxu0
  %455 = vmatprep.mubr.f32.mxu0 0.0
  %456 = vmatmul.mubr.f32.gmra.mrb[0].mxu0 %v178
  %v457 = vpop.f32.mrb[0].mxu0
  %v458 = vadd.f32 0.0, %v457
  %v459 = vpop.f32.mrb[0].mxu0
  %460 = vmatprep.mubr.f32.mxu0 0.0
  %461 = vmatmul.mubr.f32.gmra.mrb[0].mxu0 %v181
  %v462 = vpop.f32.mrb[0].mxu0
  %v463 = vadd.f32 0.0, %v462
  %v464 = vpop.f32.mrb[0].mxu0
  %465 = vmatprep.mubr.f32.mxu0 0.0
  %466 = vmatmul.mubr.f32.gmra.mrb[0].mxu0 %v184
  %v467 = vpop.f32.mrb[0].mxu0
  %v468 = vadd.f32 0.0, %v467
  %v469 = vpop.f32.mrb[0].mxu0
  %470 = vmatprep.mubr.f32.mxu0 0.0
  %471 = vmatmul.mubr.f32.gmra.mrb[0].mxu0 %v187
  %v472 = vpop.f32.mrb[0].mxu0
  %v473 = vadd.f32 0.0, %v472
  %v474 = vpop.f32.mrb[0].mxu0
  %475 = vmatprep.mubr.f32.mxu0 0.0
  %476 = vmatmul.mubr.f32.gmra.mrb[0].mxu0 %v190
  %v477 = vpop.f32.mrb[0].mxu0
  %v478 = vadd.f32 0.0, %v477
  %v479 = vpop.f32.mrb[0].mxu0
  %480 = vmatprep.mubr.f32.mxu0 0.0
  %481 = vmatmul.mubr.f32.gmra.mrb[0].mxu0 %v193
  %v482 = vpop.f32.mrb[0].mxu0
  %v483 = vadd.f32 0.0, %v482
  %v484 = vpop.f32.mrb[0].mxu0
  %485 = vmatprep.mubr.f32.mxu0 0.0
  %486 = vmatmul.mubr.f32.gmra.mrb[0].mxu0 %v196
  %v487 = vpop.f32.mrb[0].mxu0
  %v488 = vadd.f32 0.0, %v487
  %v489 = vpop.f32.mrb[0].mxu0
  %490 = vmatprep.mubr.f32.mxu0 0.0
  %491 = vmatmul.mubr.f32.gmra.mrb[0].mxu0 %v199
  %v492 = vpop.f32.mrb[0].mxu0
  %v493 = vadd.f32 0.0, %v492
  %v494 = vpop.f32.mrb[0].mxu0
  %495 = vmatprep.mubr.f32.mxu0 0.0
  %496 = vmatmul.mubr.f32.gmra.mrb[0].mxu0 %v202
  %v497 = vpop.f32.mrb[0].mxu0
  %v498 = vadd.f32 0.0, %v497
  %v499 = vpop.f32.mrb[0].mxu0
  %500 = vmatprep.mubr.f32.mxu0 0.0
  %501 = vmatmul.mubr.f32.gmra.mrb[0].mxu0 %v205
  %v502 = vpop.f32.mrb[0].mxu0
  %v503 = vadd.f32 0.0, %v502
  %v504 = vpop.f32.mrb[0].mxu0
  %505 = vmatprep.mubr.f32.mxu0 0.0
  %506 = vmatmul.mubr.f32.gmra.mrb[0].mxu0 %v208
  %v507 = vpop.f32.mrb[0].mxu0
  %v508 = vadd.f32 0.0, %v507
  %v509 = vpop.f32.mrb[0].mxu0
  %510 = vmatprep.mubr.f32.mxu0 0.0
  %511 = vmatmul.mubr.f32.gmra.mrb[0].mxu0 %v211
  %v512 = vpop.f32.mrb[0].mxu0
  %v513 = vadd.f32 0.0, %v512
  %v514 = vpop.f32.mrb[0].mxu0
  %515 = vmatprep.mubr.f32.mxu0 0.0
  %516 = vmatmul.mubr.f32.gmra.mrb[0].mxu0 %v214
  %v517 = vpop.f32.mrb[0].mxu0
  %v518 = vadd.f32 0.0, %v517
  %v519 = vpop.f32.mrb[0].mxu0
  %520 = vmatprep.mubr.f32.mxu0 0.0
  %521 = vmatmul.mubr.f32.gmra.mrb[0].mxu0 %v217
  %v522 = vpop.f32.mrb[0].mxu0
  %v523 = vadd.f32 0.0, %v522
  %v524 = vpop.f32.mrb[0].mxu0
  %525 = vmatprep.mubr.f32.mxu0 0.0
  %526 = vmatmul.mubr.f32.gmra.mrb[0].mxu0 %v220
  %v527 = vpop.f32.mrb[0].mxu0
  %v528 = vadd.f32 0.0, %v527
  %v529 = vpop.f32.mrb[0].mxu0
  %530 = vmatprep.mubr.f32.mxu0 0.0
  %531 = vmatmul.mubr.f32.gmra.mrb[0].mxu0 %v223
  %v532 = vpop.f32.mrb[0].mxu0
  %v533 = vadd.f32 0.0, %v532
  %v534 = vpop.f32.mrb[0].mxu0
  %535 = vmatprep.mubr.f32.mxu0 0.0
  %536 = vmatmul.mubr.f32.gmra.mrb[0].mxu0 %v226
  %v537 = vpop.f32.mrb[0].mxu0
  %v538 = vadd.f32 0.0, %v537
  %v539 = vpop.f32.mrb[0].mxu0
  %540 = vmatprep.mubr.f32.mxu0 0.0
  %541 = vmatmul.mubr.f32.gmra.mrb[0].mxu0 %v229
  %v542 = vpop.f32.mrb[0].mxu0
  %v543 = vadd.f32 0.0, %v542
  %v544 = vpop.f32.mrb[0].mxu0
  %545 = vmatprep.mubr.f32.mxu0 0.0
  %546 = vmatmul.mubr.f32.gmra.mrb[0].mxu0 %v232
  %v547 = vpop.f32.mrb[0].mxu0
  %v548 = vadd.f32 0.0, %v547
  %v549 = vpop.f32.mrb[0].mxu0
  %550 = vmatprep.mubr.f32.mxu0 0.0
  %551 = vmatmul.mubr.f32.gmra.mrb[0].mxu0 %v235
  %v552 = vpop.f32.mrb[0].mxu0
  %v553 = vadd.f32 0.0, %v552
  %v554 = vpop.f32.mrb[0].mxu0
  %555 = vmatprep.mubr.f32.mxu0 0.0
  %556 = vmatmul.mubr.f32.gmra.mrb[0].mxu0 %v238
  %v557 = vpop.f32.mrb[0].mxu0
  %v558 = vadd.f32 0.0, %v557
  %v559 = vpop.f32.mrb[0].mxu0
  %560 = vmatprep.mubr.f32.mxu0 0.0
  %561 = vmatmul.mubr.f32.gmra.mrb[0].mxu0 %v241
  %v562 = vpop.f32.mrb[0].mxu0
  %v563 = vadd.f32 0.0, %v562
  %v564 = vpop.f32.mrb[0].mxu0
  %565 = vmatprep.mubr.f32.mxu0 0.0
  %566 = vmatmul.mubr.f32.gmra.mrb[0].mxu0 %v244
  %v567 = vpop.f32.mrb[0].mxu0
  %v568 = vadd.f32 0.0, %v567
  %v569 = vpop.f32.mrb[0].mxu0
  %570 = vmatprep.mubr.f32.mxu0 0.0
  %571 = vmatmul.mubr.f32.gmra.mrb[0].mxu0 %v247
  %v572 = vpop.f32.mrb[0].mxu0
  %v573 = vadd.f32 0.0, %v572
  %v574 = vpop.f32.mrb[0].mxu0
  %575 = vmatprep.mubr.f32.mxu0 0.0
  %576 = vmatmul.mubr.f32.gmra.mrb[0].mxu0 %v250
  %v577 = vpop.f32.mrb[0].mxu0
  %v578 = vadd.f32 0.0, %v577
  %v579 = vpop.f32.mrb[0].mxu0
  %580 = vmatprep.mubr.f32.mxu0 0.0
  %581 = vmatmul.mubr.f32.gmra.mrb[0].mxu0 %v253
  %v582 = vpop.f32.mrb[0].mxu0
  %v583 = vadd.f32 0.0, %v582
  %v584 = vpop.f32.mrb[0].mxu0
  %585 = vmatprep.mubr.f32.mxu0 0.0
  %586 = vmatmul.mubr.f32.gmra.mrb[0].mxu0 %v256
  %v587 = vpop.f32.mrb[0].mxu0
  %v588 = vadd.f32 0.0, %v587
  %v589 = vpop.f32.mrb[0].mxu0
  %590 = vmatprep.mubr.f32.mxu0 0.0
  %591 = vmatmul.mubr.f32.gmra.mrb[0].mxu0 %v259
  %v592 = vpop.f32.mrb[0].mxu0
  %v593 = vadd.f32 0.0, %v592
  %v594 = vpop.f32.mrb[0].mxu0
  %595 = vmatprep.mubr.f32.mxu0 0.0
  %596 = vmatmul.mubr.f32.gmra.mrb[0].mxu0 %v262
  %v597 = vpop.f32.mrb[0].mxu0
  %v598 = vadd.f32 0.0, %v597
  %v599 = vpop.f32.mrb[0].mxu0
  %600 = vmatprep.mubr.f32.mxu0 0.0
  %601 = vmatmul.mubr.f32.gmra.mrb[0].mxu0 %v265
  %v602 = vpop.f32.mrb[0].mxu0
  %v603 = vadd.f32 0.0, %v602
  %v604 = vpop.f32.mrb[0].mxu0
  %605 = vmatprep.mubr.f32.mxu0 0.0
  %606 = vmatmul.mubr.f32.gmra.mrb[0].mxu0 %v268
  %v607 = vpop.f32.mrb[0].mxu0
  %v608 = vadd.f32 0.0, %v607
  %v609 = vpop.f32.mrb[0].mxu0
  %610 = vmatprep.mubr.f32.mxu0 0.0
  %611 = vmatmul.mubr.f32.gmra.mrb[0].mxu0 %v271
  %v612 = vpop.f32.mrb[0].mxu0
  %v613 = vadd.f32 0.0, %v612
  %v614 = vpop.f32.mrb[0].mxu0
  %615 = vmatprep.mubr.f32.mxu0 0.0
  %616 = vmatmul.mubr.f32.gmra.mrb[0].mxu0 %v274
  %v617 = vpop.f32.mrb[0].mxu0
  %v618 = vadd.f32 0.0, %v617
  %v619 = vpop.f32.mrb[0].mxu0
  %620 = vmatprep.mubr.f32.mxu0 0.0
  %621 = vmatmul.mubr.f32.gmra.mrb[0].mxu0 %v277
  %v622 = vpop.f32.mrb[0].mxu0
  %v623 = vadd.f32 0.0, %v622
  %v624 = vpop.f32.mrb[0].mxu0
  %625 = vmatprep.mubr.f32.mxu0 0.0
  %626 = vmatmul.mubr.f32.gmra.mrb[0].mxu0 %v280
  %v627 = vpop.f32.mrb[0].mxu0
  %v628 = vadd.f32 0.0, %v627
  %v629 = vpop.f32.mrb[0].mxu0
  %630 = vmatprep.mubr.f32.mxu0 0.0
  %631 = vmatmul.mubr.f32.gmra.mrb[0].mxu0 %v283
  %v632 = vpop.f32.mrb[0].mxu0
  %v633 = vadd.f32 0.0, %v632
  %v634 = vpop.f32.mrb[0].mxu0
  %635 = vmatprep.mubr.f32.mxu0 0.0
  %636 = vmatmul.mubr.f32.gmra.mrb[0].mxu0 %v286
  %v637 = vpop.f32.mrb[0].mxu0
  %v638 = vadd.f32 0.0, %v637
  %v639 = vpop.f32.mrb[0].mxu0
  %640 = vmatprep.mubr.f32.mxu0 0.0
  %641 = vmatmul.mubr.f32.gmra.mrb[0].mxu0 %v289
  %v642 = vpop.f32.mrb[0].mxu0
  %v643 = vadd.f32 0.0, %v642
  %v644 = vpop.f32.mrb[0].mxu0
  %645 = vmatprep.mubr.f32.mxu0 0.0
  %646 = vmatmul.mubr.f32.gmra.mrb[0].mxu0 %v292
  %v647 = vpop.f32.mrb[0].mxu0
  %v648 = vadd.f32 0.0, %v647
  %v649 = vpop.f32.mrb[0].mxu0
  %650 = vmatprep.mubr.f32.mxu0 0.0
  %651 = vmatmul.mubr.f32.gmra.mrb[0].mxu0 %v295
  %v652 = vpop.f32.mrb[0].mxu0
  %v653 = vadd.f32 0.0, %v652
  %v654 = vpop.f32.mrb[0].mxu0
  %655 = vmatprep.mubr.f32.mxu0 0.0
  %656 = vmatmul.mubr.f32.gmra.mrb[0].mxu0 %v298
  %v657 = vpop.f32.mrb[0].mxu0
  %v658 = vadd.f32 0.0, %v657
  %v659 = vpop.f32.mrb[0].mxu0
  %660 = vmatprep.mubr.f32.mxu0 0.0
  %661 = vmatmul.mubr.f32.gmra.mrb[0].mxu0 %v301
  %v662 = vpop.f32.mrb[0].mxu0
  %v663 = vadd.f32 0.0, %v662
  %v664 = vpop.f32.mrb[0].mxu0
  %665 = vmatprep.mubr.f32.mxu0 0.0
  %666 = vmatmul.mubr.f32.gmra.mrb[0].mxu0 %v304
  %v667 = vpop.f32.mrb[0].mxu0
  %v668 = vadd.f32 0.0, %v667
  %v669 = vpop.f32.mrb[0].mxu0
  %670 = vmatprep.mubr.f32.mxu0 0.0
  %671 = vmatmul.mubr.f32.gmra.mrb[0].mxu0 %v307
  %v672 = vpop.f32.mrb[0].mxu0
  %v673 = vadd.f32 0.0, %v672
  %v674 = vpop.f32.mrb[0].mxu0
  %675 = vmatprep.mubr.f32.mxu0 0.0
  %676 = vmatmul.mubr.f32.gmra.mrb[0].mxu0 %v310
  %v677 = vpop.f32.mrb[0].mxu0
  %v678 = vadd.f32 0.0, %v677
  %v679 = vpop.f32.mrb[0].mxu0
  %680 = vmatprep.mubr.f32.mxu0 0.0
  %681 = vmatmul.mubr.f32.gmra.mrb[0].mxu0 %v313
  %v682 = vpop.f32.mrb[0].mxu0
  %v683 = vadd.f32 0.0, %v682
  %v684 = vpop.f32.mrb[0].mxu0
  %685 = vmatprep.mubr.f32.mxu0 0.0
  %686 = vmatmul.mubr.f32.gmra.mrb[0].mxu0 %v316
  %v687 = vpop.f32.mrb[0].mxu0
  %v688 = vadd.f32 0.0, %v687
  %v689 = vpop.f32.mrb[0].mxu0
  %690 = vmatprep.mubr.f32.mxu0 0.0
  %691 = vmatmul.mubr.f32.gmra.mrb[0].mxu0 %v319
  %v692 = vpop.f32.mrb[0].mxu0
  %v693 = vadd.f32 0.0, %v692
  %v694 = vpop.f32.mrb[0].mxu0
  %695 = vmatprep.mubr.f32.mxu0 0.0
  %696 = vmatmul.mubr.f32.gmra.mrb[0].mxu0 %v322
  %v697 = vpop.f32.mrb[0].mxu0
  %v698 = vadd.f32 0.0, %v697
  %v699 = vpop.f32.mrb[0].mxu0
  %700 = vmatprep.mubr.f32.mxu0 0.0
  %701 = vmatmul.mubr.f32.gmra.mrb[0].mxu0 %v325
  %v702 = vpop.f32.mrb[0].mxu0
  %v703 = vadd.f32 0.0, %v702
  %v704 = vpop.f32.mrb[0].mxu0
  %705 = vmatprep.mubr.f32.mxu0 0.0
  %706 = vmatmul.mubr.f32.gmra.mrb[0].mxu0 %v328
  %v707 = vpop.f32.mrb[0].mxu0
  %v708 = vadd.f32 0.0, %v707
  %v709 = vpop.f32.mrb[0].mxu0
  %710 = vmatprep.mubr.f32.mxu0 0.0
  %711 = vmatmul.mubr.f32.gmra.mrb[0].mxu0 %v331
  %v712 = vpop.f32.mrb[0].mxu0
  %v713 = vadd.f32 0.0, %v712
  %v714 = vpop.f32.mrb[0].mxu0
  %715 = vmatprep.mubr.f32.mxu0 0.0
  %716 = vmatmul.mubr.f32.gmra.mrb[0].mxu0 %v334
  %v717 = vpop.f32.mrb[0].mxu0
  %v718 = vadd.f32 0.0, %v717
  %v719 = vpop.f32.mrb[0].mxu0
  %720 = vmatprep.mubr.f32.mxu0 0.0
  %721 = vmatmul.mubr.f32.gmra.mrb[0].mxu0 %v337
  %v722 = vpop.f32.mrb[0].mxu0
  %v723 = vadd.f32 0.0, %v722
  %v724 = vpop.f32.mrb[0].mxu0
  %725 = vmatprep.mubr.f32.mxu0 0.0
  %726 = vmatmul.mubr.f32.gmra.mrb[0].mxu0 %v340
  %v727 = vpop.f32.mrb[0].mxu0
  %v728 = vadd.f32 0.0, %v727
  %v729 = vpop.f32.mrb[0].mxu0
  %730 = vdwg.mxu0
  %vm731 = vcmask 15360
  %v733 = vsel %vm731, %v19, 0
  %v736 = vsel %vm731, %v20, 0
  %v739 = vsel %vm731, %v21, 0
  %v742 = vsel %vm731, %v22, 0
  %v745 = vsel %vm731, %v23, 0
  %v748 = vsel %vm731, %v24, 0
  %v751 = vsel %vm731, %v25, 0
  %v754 = vsel %vm731, %v26, 0
  %v757 = vsel %vm731, %v27, 0
  %v760 = vsel %vm731, %v28, 0
  %v763 = vsel %vm731, %v29, 0
  %v766 = vsel %vm731, %v30, 0
  %v769 = vsel %vm731, %v31, 0
  %v772 = vsel %vm731, %v32, 0
  %v775 = vsel %vm731, %v33, 0
  %v778 = vsel %vm731, %v34, 0
  %v781 = vsel %vm731, %v35, 0
  %v784 = vsel %vm731, %v36, 0
  %v787 = vsel %vm731, %v37, 0
  %v790 = vsel %vm731, %v38, 0
  %v793 = vsel %vm731, %v39, 0
  %v796 = vsel %vm731, %v40, 0
  %v799 = vsel %vm731, %v41, 0
  %v802 = vsel %vm731, %v42, 0
  %v805 = vsel %vm731, %v43, 0
  %v808 = vsel %vm731, %v44, 0
  %v811 = vsel %vm731, %v45, 0
  %v814 = vsel %vm731, %v46, 0
  %v817 = vsel %vm731, %v47, 0
  %v820 = vsel %vm731, %v48, 0
  %v823 = vsel %vm731, %v49, 0
  %v826 = vsel %vm731, %v50, 0
  %v829 = vsel %vm731, %v51, 0
  %v832 = vsel %vm731, %v52, 0
  %v835 = vsel %vm731, %v53, 0
  %v838 = vsel %vm731, %v54, 0
  %v841 = vsel %vm731, %v55, 0
  %v844 = vsel %vm731, %v56, 0
  %v847 = vsel %vm731, %v57, 0
  %v850 = vsel %vm731, %v58, 0
  %v853 = vsel %vm731, %v59, 0
  %v856 = vsel %vm731, %v60, 0
  %v859 = vsel %vm731, %v61, 0
  %v862 = vsel %vm731, %v62, 0
  %v865 = vsel %vm731, %v63, 0
  %v868 = vsel %vm731, %v64, 0
  %v871 = vsel %vm731, %v65, 0
  %v874 = vsel %vm731, %v66, 0
  %v877 = vsel %vm731, %v67, 0
  %v880 = vsel %vm731, %v68, 0
  %v883 = vsel %vm731, %v69, 0
  %v886 = vsel %vm731, %v70, 0
  %v889 = vsel %vm731, %v71, 0
  %v892 = vsel %vm731, %v72, 0
  %v895 = vsel %vm731, %v73, 0
  %v898 = vsel %vm731, %v74, 0
  %v901 = vsel %vm731, %v75, 0
  %v904 = vsel %vm731, %v76, 0
  %v907 = vsel %vm731, %v77, 0
  %v910 = vsel %vm731, %v78, 0
  %v913 = vsel %vm731, %v79, 0
  %v916 = vsel %vm731, %v80, 0
  %v919 = vsel %vm731, %v81, 0
  %v922 = vsel %vm731, %v82, 0
  %vm924 = vcmask 1041408
  %v926 = vsel %vm924, %v147, 0
  %928 = vmatprep.subr.mxu0 0.0
  %929 = vmatpush1.msra.mxu0 %v926
  %930 = vmatprep.subr.mxu0 0.0
  %931 = vmatpush1.msra.mxu0 0.0
  %932 = vmatprep.subr.mxu0 0.0
  %933 = vmatpush1.msra.mxu0 0.0
  %934 = vmatprep.subr.mxu0 0.0
  %935 = vmatpush1.msra.mxu0 0.0
  %936 = vmatprep.subr.mxu0 0.0
  %937 = vmatpush1.msra.mxu0 0.0
  %938 = vmatprep.subr.mxu0 0.0
  %939 = vmatpush1.msra.mxu0 0.0
  %940 = vmatprep.subr.mxu0 0.0
  %941 = vmatpush1.msra.mxu0 0.0
  %942 = vmatprep.subr.mxu0 0.0
  %943 = vmatpush1.msra.mxu0 0.0
  %944 = vmatprep.subr.mxu0 0.0
  %945 = vmatpush1.msra.mxu0 0.0
  %946 = vmatprep.subr.mxu0 0.0
  %947 = vmatpush1.msra.mxu0 0.0
  %948 = vmatprep.subr.mxu0 0.0
  %949 = vmatpush1.msra.mxu0 0.0
  %950 = vmatprep.subr.mxu0 0.0
  %951 = vmatpush1.msra.mxu0 0.0
  %952 = vmatprep.subr.mxu0 0.0
  %953 = vmatpush1.msra.mxu0 0.0
  %954 = vmatprep.subr.mxu0 0.0
  %955 = vmatpush1.msra.mxu0 0.0
  %956 = vmatprep.subr.mxu0 0.0
  %957 = vmatpush1.msra.mxu0 0.0
  %958 = vmatprep.subr.mxu0 0.0
  %959 = vmatpush1.msra.mxu0 0.0
  %960 = vmatprep.subr.mxu0 0.0
  %961 = vmatpush1.msra.mxu0 0.0
  %962 = vmatprep.subr.mxu0 0.0
  %963 = vmatpush1.msra.mxu0 0.0
  %964 = vmatprep.subr.mxu0 0.0
  %965 = vmatpush1.msra.mxu0 0.0
  %966 = vmatprep.subr.mxu0 0.0
  %967 = vmatpush1.msra.mxu0 0.0
  %968 = vmatprep.subr.mxu0 0.0
  %969 = vmatpush1.msra.mxu0 0.0
  %970 = vmatprep.subr.mxu0 0.0
  %971 = vmatpush1.msra.mxu0 0.0
  %972 = vmatprep.subr.mxu0 0.0
  %973 = vmatpush1.msra.mxu0 0.0
  %974 = vmatprep.subr.mxu0 0.0
  %975 = vmatpush1.msra.mxu0 0.0
  %976 = vmatprep.subr.mxu0 0.0
  %977 = vmatpush1.msra.mxu0 0.0
  %978 = vmatprep.subr.mxu0 0.0
  %979 = vmatpush1.msra.mxu0 0.0
  %980 = vmatprep.subr.mxu0 0.0
  %981 = vmatpush1.msra.mxu0 0.0
  %982 = vmatprep.subr.mxu0 0.0
  %983 = vmatpush1.msra.mxu0 0.0
  %984 = vmatprep.subr.mxu0 0.0
  %985 = vmatpush1.msra.mxu0 0.0
  %986 = vmatprep.subr.mxu0 0.0
  %987 = vmatpush1.msra.mxu0 0.0
  %988 = vmatprep.subr.mxu0 0.0
  %989 = vmatpush1.msra.mxu0 0.0
  %990 = vmatprep.subr.mxu0 0.0
  %991 = vmatpush1.msra.mxu0 0.0
  %992 = vmatprep.mubr.f32.mxu0 0.0
  %993 = vmatmul.mubr.f32.gmra.mrb[0].mxu0 %v733
  %v994 = vpop.f32.mrb[0].mxu0
  %v995 = vadd.f32 %v413, %v994
  %v996 = vpop.f32.mrb[0].mxu0
  %997 = vmatprep.mubr.f32.mxu0 0.0
  %998 = vmatmul.mubr.f32.gmra.mrb[0].mxu0 %v736
  %v999 = vpop.f32.mrb[0].mxu0
  %v1000 = vadd.f32 %v418, %v999
  %v1001 = vpop.f32.mrb[0].mxu0
  %1002 = vmatprep.mubr.f32.mxu0 0.0
  %1003 = vmatmul.mubr.f32.gmra.mrb[0].mxu0 %v739
  %v1004 = vpop.f32.mrb[0].mxu0
  %v1005 = vadd.f32 %v423, %v1004
  %v1006 = vpop.f32.mrb[0].mxu0
  %1007 = vmatprep.mubr.f32.mxu0 0.0
  %1008 = vmatmul.mubr.f32.gmra.mrb[0].mxu0 %v742
  %v1009 = vpop.f32.mrb[0].mxu0
  %v1010 = vadd.f32 %v428, %v1009
  %v1011 = vpop.f32.mrb[0].mxu0
  %1012 = vmatprep.mubr.f32.mxu0 0.0
  %1013 = vmatmul.mubr.f32.gmra.mrb[0].mxu0 %v745
  %v1014 = vpop.f32.mrb[0].mxu0
  %v1015 = vadd.f32 %v433, %v1014
  %v1016 = vpop.f32.mrb[0].mxu0
  %1017 = vmatprep.mubr.f32.mxu0 0.0
  %1018 = vmatmul.mubr.f32.gmra.mrb[0].mxu0 %v748
  %v1019 = vpop.f32.mrb[0].mxu0
  %v1020 = vadd.f32 %v438, %v1019
  %v1021 = vpop.f32.mrb[0].mxu0
  %1022 = vmatprep.mubr.f32.mxu0 0.0
  %1023 = vmatmul.mubr.f32.gmra.mrb[0].mxu0 %v751
  %v1024 = vpop.f32.mrb[0].mxu0
  %v1025 = vadd.f32 %v443, %v1024
  %v1026 = vpop.f32.mrb[0].mxu0
  %1027 = vmatprep.mubr.f32.mxu0 0.0
  %1028 = vmatmul.mubr.f32.gmra.mrb[0].mxu0 %v754
  %v1029 = vpop.f32.mrb[0].mxu0
  %v1030 = vadd.f32 %v448, %v1029
  %v1031 = vpop.f32.mrb[0].mxu0
  %1032 = vmatprep.mubr.f32.mxu0 0.0
  %1033 = vmatmul.mubr.f32.gmra.mrb[0].mxu0 %v757
  %v1034 = vpop.f32.mrb[0].mxu0
  %v1035 = vadd.f32 %v453, %v1034
  %v1036 = vpop.f32.mrb[0].mxu0
  %1037 = vmatprep.mubr.f32.mxu0 0.0
  %1038 = vmatmul.mubr.f32.gmra.mrb[0].mxu0 %v760
  %v1039 = vpop.f32.mrb[0].mxu0
  %v1040 = vadd.f32 %v458, %v1039
  %v1041 = vpop.f32.mrb[0].mxu0
  %1042 = vmatprep.mubr.f32.mxu0 0.0
  %1043 = vmatmul.mubr.f32.gmra.mrb[0].mxu0 %v763
  %v1044 = vpop.f32.mrb[0].mxu0
  %v1045 = vadd.f32 %v463, %v1044
  %v1046 = vpop.f32.mrb[0].mxu0
  %1047 = vmatprep.mubr.f32.mxu0 0.0
  %1048 = vmatmul.mubr.f32.gmra.mrb[0].mxu0 %v766
  %v1049 = vpop.f32.mrb[0].mxu0
  %v1050 = vadd.f32 %v468, %v1049
  %v1051 = vpop.f32.mrb[0].mxu0
  %1052 = vmatprep.mubr.f32.mxu0 0.0
  %1053 = vmatmul.mubr.f32.gmra.mrb[0].mxu0 %v769
  %v1054 = vpop.f32.mrb[0].mxu0
  %v1055 = vadd.f32 %v473, %v1054
  %v1056 = vpop.f32.mrb[0].mxu0
  %1057 = vmatprep.mubr.f32.mxu0 0.0
  %1058 = vmatmul.mubr.f32.gmra.mrb[0].mxu0 %v772
  %v1059 = vpop.f32.mrb[0].mxu0
  %v1060 = vadd.f32 %v478, %v1059
  %v1061 = vpop.f32.mrb[0].mxu0
  %1062 = vmatprep.mubr.f32.mxu0 0.0
  %1063 = vmatmul.mubr.f32.gmra.mrb[0].mxu0 %v775
  %v1064 = vpop.f32.mrb[0].mxu0
  %v1065 = vadd.f32 %v483, %v1064
  %v1066 = vpop.f32.mrb[0].mxu0
  %1067 = vmatprep.mubr.f32.mxu0 0.0
  %1068 = vmatmul.mubr.f32.gmra.mrb[0].mxu0 %v778
  %v1069 = vpop.f32.mrb[0].mxu0
  %v1070 = vadd.f32 %v488, %v1069
  %v1071 = vpop.f32.mrb[0].mxu0
  %1072 = vmatprep.mubr.f32.mxu0 0.0
  %1073 = vmatmul.mubr.f32.gmra.mrb[0].mxu0 %v781
  %v1074 = vpop.f32.mrb[0].mxu0
  %v1075 = vadd.f32 %v493, %v1074
  %v1076 = vpop.f32.mrb[0].mxu0
  %1077 = vmatprep.mubr.f32.mxu0 0.0
  %1078 = vmatmul.mubr.f32.gmra.mrb[0].mxu0 %v784
  %v1079 = vpop.f32.mrb[0].mxu0
  %v1080 = vadd.f32 %v498, %v1079
  %v1081 = vpop.f32.mrb[0].mxu0
  %1082 = vmatprep.mubr.f32.mxu0 0.0
  %1083 = vmatmul.mubr.f32.gmra.mrb[0].mxu0 %v787
  %v1084 = vpop.f32.mrb[0].mxu0
  %v1085 = vadd.f32 %v503, %v1084
  %v1086 = vpop.f32.mrb[0].mxu0
  %1087 = vmatprep.mubr.f32.mxu0 0.0
  %1088 = vmatmul.mubr.f32.gmra.mrb[0].mxu0 %v790
  %v1089 = vpop.f32.mrb[0].mxu0
  %v1090 = vadd.f32 %v508, %v1089
  %v1091 = vpop.f32.mrb[0].mxu0
  %1092 = vmatprep.mubr.f32.mxu0 0.0
  %1093 = vmatmul.mubr.f32.gmra.mrb[0].mxu0 %v793
  %v1094 = vpop.f32.mrb[0].mxu0
  %v1095 = vadd.f32 %v513, %v1094
  %v1096 = vpop.f32.mrb[0].mxu0
  %1097 = vmatprep.mubr.f32.mxu0 0.0
  %1098 = vmatmul.mubr.f32.gmra.mrb[0].mxu0 %v796
  %v1099 = vpop.f32.mrb[0].mxu0
  %v1100 = vadd.f32 %v518, %v1099
  %v1101 = vpop.f32.mrb[0].mxu0
  %1102 = vmatprep.mubr.f32.mxu0 0.0
  %1103 = vmatmul.mubr.f32.gmra.mrb[0].mxu0 %v799
  %v1104 = vpop.f32.mrb[0].mxu0
  %v1105 = vadd.f32 %v523, %v1104
  %v1106 = vpop.f32.mrb[0].mxu0
  %1107 = vmatprep.mubr.f32.mxu0 0.0
  %1108 = vmatmul.mubr.f32.gmra.mrb[0].mxu0 %v802
  %v1109 = vpop.f32.mrb[0].mxu0
  %v1110 = vadd.f32 %v528, %v1109
  %v1111 = vpop.f32.mrb[0].mxu0
  %1112 = vmatprep.mubr.f32.mxu0 0.0
  %1113 = vmatmul.mubr.f32.gmra.mrb[0].mxu0 %v805
  %v1114 = vpop.f32.mrb[0].mxu0
  %v1115 = vadd.f32 %v533, %v1114
  %v1116 = vpop.f32.mrb[0].mxu0
  %1117 = vmatprep.mubr.f32.mxu0 0.0
  %1118 = vmatmul.mubr.f32.gmra.mrb[0].mxu0 %v808
  %v1119 = vpop.f32.mrb[0].mxu0
  %v1120 = vadd.f32 %v538, %v1119
  %v1121 = vpop.f32.mrb[0].mxu0
  %1122 = vmatprep.mubr.f32.mxu0 0.0
  %1123 = vmatmul.mubr.f32.gmra.mrb[0].mxu0 %v811
  %v1124 = vpop.f32.mrb[0].mxu0
  %v1125 = vadd.f32 %v543, %v1124
  %v1126 = vpop.f32.mrb[0].mxu0
  %1127 = vmatprep.mubr.f32.mxu0 0.0
  %1128 = vmatmul.mubr.f32.gmra.mrb[0].mxu0 %v814
  %v1129 = vpop.f32.mrb[0].mxu0
  %v1130 = vadd.f32 %v548, %v1129
  %v1131 = vpop.f32.mrb[0].mxu0
  %1132 = vmatprep.mubr.f32.mxu0 0.0
  %1133 = vmatmul.mubr.f32.gmra.mrb[0].mxu0 %v817
  %v1134 = vpop.f32.mrb[0].mxu0
  %v1135 = vadd.f32 %v553, %v1134
  %v1136 = vpop.f32.mrb[0].mxu0
  %1137 = vmatprep.mubr.f32.mxu0 0.0
  %1138 = vmatmul.mubr.f32.gmra.mrb[0].mxu0 %v820
  %v1139 = vpop.f32.mrb[0].mxu0
  %v1140 = vadd.f32 %v558, %v1139
  %v1141 = vpop.f32.mrb[0].mxu0
  %1142 = vmatprep.mubr.f32.mxu0 0.0
  %1143 = vmatmul.mubr.f32.gmra.mrb[0].mxu0 %v823
  %v1144 = vpop.f32.mrb[0].mxu0
  %v1145 = vadd.f32 %v563, %v1144
  %v1146 = vpop.f32.mrb[0].mxu0
  %1147 = vmatprep.mubr.f32.mxu0 0.0
  %1148 = vmatmul.mubr.f32.gmra.mrb[0].mxu0 %v826
  %v1149 = vpop.f32.mrb[0].mxu0
  %v1150 = vadd.f32 %v568, %v1149
  %v1151 = vpop.f32.mrb[0].mxu0
  %1152 = vmatprep.mubr.f32.mxu0 0.0
  %1153 = vmatmul.mubr.f32.gmra.mrb[0].mxu0 %v829
  %v1154 = vpop.f32.mrb[0].mxu0
  %v1155 = vadd.f32 %v573, %v1154
  %v1156 = vpop.f32.mrb[0].mxu0
  %1157 = vmatprep.mubr.f32.mxu0 0.0
  %1158 = vmatmul.mubr.f32.gmra.mrb[0].mxu0 %v832
  %v1159 = vpop.f32.mrb[0].mxu0
  %v1160 = vadd.f32 %v578, %v1159
  %v1161 = vpop.f32.mrb[0].mxu0
  %1162 = vmatprep.mubr.f32.mxu0 0.0
  %1163 = vmatmul.mubr.f32.gmra.mrb[0].mxu0 %v835
  %v1164 = vpop.f32.mrb[0].mxu0
  %v1165 = vadd.f32 %v583, %v1164
  %v1166 = vpop.f32.mrb[0].mxu0
  %1167 = vmatprep.mubr.f32.mxu0 0.0
  %1168 = vmatmul.mubr.f32.gmra.mrb[0].mxu0 %v838
  %v1169 = vpop.f32.mrb[0].mxu0
  %v1170 = vadd.f32 %v588, %v1169
  %v1171 = vpop.f32.mrb[0].mxu0
  %1172 = vmatprep.mubr.f32.mxu0 0.0
  %1173 = vmatmul.mubr.f32.gmra.mrb[0].mxu0 %v841
  %v1174 = vpop.f32.mrb[0].mxu0
  %v1175 = vadd.f32 %v593, %v1174
  %v1176 = vpop.f32.mrb[0].mxu0
  %1177 = vmatprep.mubr.f32.mxu0 0.0
  %1178 = vmatmul.mubr.f32.gmra.mrb[0].mxu0 %v844
  %v1179 = vpop.f32.mrb[0].mxu0
  %v1180 = vadd.f32 %v598, %v1179
  %v1181 = vpop.f32.mrb[0].mxu0
  %1182 = vmatprep.mubr.f32.mxu0 0.0
  %1183 = vmatmul.mubr.f32.gmra.mrb[0].mxu0 %v847
  %v1184 = vpop.f32.mrb[0].mxu0
  %v1185 = vadd.f32 %v603, %v1184
  %v1186 = vpop.f32.mrb[0].mxu0
  %1187 = vmatprep.mubr.f32.mxu0 0.0
  %1188 = vmatmul.mubr.f32.gmra.mrb[0].mxu0 %v850
  %v1189 = vpop.f32.mrb[0].mxu0
  %v1190 = vadd.f32 %v608, %v1189
  %v1191 = vpop.f32.mrb[0].mxu0
  %1192 = vmatprep.mubr.f32.mxu0 0.0
  %1193 = vmatmul.mubr.f32.gmra.mrb[0].mxu0 %v853
  %v1194 = vpop.f32.mrb[0].mxu0
  %v1195 = vadd.f32 %v613, %v1194
  %v1196 = vpop.f32.mrb[0].mxu0
  %1197 = vmatprep.mubr.f32.mxu0 0.0
  %1198 = vmatmul.mubr.f32.gmra.mrb[0].mxu0 %v856
  %v1199 = vpop.f32.mrb[0].mxu0
  %v1200 = vadd.f32 %v618, %v1199
  %v1201 = vpop.f32.mrb[0].mxu0
  %1202 = vmatprep.mubr.f32.mxu0 0.0
  %1203 = vmatmul.mubr.f32.gmra.mrb[0].mxu0 %v859
  %v1204 = vpop.f32.mrb[0].mxu0
  %v1205 = vadd.f32 %v623, %v1204
  %v1206 = vpop.f32.mrb[0].mxu0
  %1207 = vmatprep.mubr.f32.mxu0 0.0
  %1208 = vmatmul.mubr.f32.gmra.mrb[0].mxu0 %v862
  %v1209 = vpop.f32.mrb[0].mxu0
  %v1210 = vadd.f32 %v628, %v1209
  %v1211 = vpop.f32.mrb[0].mxu0
  %1212 = vmatprep.mubr.f32.mxu0 0.0
  %1213 = vmatmul.mubr.f32.gmra.mrb[0].mxu0 %v865
  %v1214 = vpop.f32.mrb[0].mxu0
  %v1215 = vadd.f32 %v633, %v1214
  %v1216 = vpop.f32.mrb[0].mxu0
  %1217 = vmatprep.mubr.f32.mxu0 0.0
  %1218 = vmatmul.mubr.f32.gmra.mrb[0].mxu0 %v868
  %v1219 = vpop.f32.mrb[0].mxu0
  %v1220 = vadd.f32 %v638, %v1219
  %v1221 = vpop.f32.mrb[0].mxu0
  %1222 = vmatprep.mubr.f32.mxu0 0.0
  %1223 = vmatmul.mubr.f32.gmra.mrb[0].mxu0 %v871
  %v1224 = vpop.f32.mrb[0].mxu0
  %v1225 = vadd.f32 %v643, %v1224
  %v1226 = vpop.f32.mrb[0].mxu0
  %1227 = vmatprep.mubr.f32.mxu0 0.0
  %1228 = vmatmul.mubr.f32.gmra.mrb[0].mxu0 %v874
  %v1229 = vpop.f32.mrb[0].mxu0
  %v1230 = vadd.f32 %v648, %v1229
  %v1231 = vpop.f32.mrb[0].mxu0
  %1232 = vmatprep.mubr.f32.mxu0 0.0
  %1233 = vmatmul.mubr.f32.gmra.mrb[0].mxu0 %v877
  %v1234 = vpop.f32.mrb[0].mxu0
  %v1235 = vadd.f32 %v653, %v1234
  %v1236 = vpop.f32.mrb[0].mxu0
  %1237 = vmatprep.mubr.f32.mxu0 0.0
  %1238 = vmatmul.mubr.f32.gmra.mrb[0].mxu0 %v880
  %v1239 = vpop.f32.mrb[0].mxu0
  %v1240 = vadd.f32 %v658, %v1239
  %v1241 = vpop.f32.mrb[0].mxu0
  %1242 = vmatprep.mubr.f32.mxu0 0.0
  %1243 = vmatmul.mubr.f32.gmra.mrb[0].mxu0 %v883
  %v1244 = vpop.f32.mrb[0].mxu0
  %v1245 = vadd.f32 %v663, %v1244
  %v1246 = vpop.f32.mrb[0].mxu0
  %1247 = vmatprep.mubr.f32.mxu0 0.0
  %1248 = vmatmul.mubr.f32.gmra.mrb[0].mxu0 %v886
  %v1249 = vpop.f32.mrb[0].mxu0
  %v1250 = vadd.f32 %v668, %v1249
  %v1251 = vpop.f32.mrb[0].mxu0
  %1252 = vmatprep.mubr.f32.mxu0 0.0
  %1253 = vmatmul.mubr.f32.gmra.mrb[0].mxu0 %v889
  %v1254 = vpop.f32.mrb[0].mxu0
  %v1255 = vadd.f32 %v673, %v1254
  %v1256 = vpop.f32.mrb[0].mxu0
  %1257 = vmatprep.mubr.f32.mxu0 0.0
  %1258 = vmatmul.mubr.f32.gmra.mrb[0].mxu0 %v892
  %v1259 = vpop.f32.mrb[0].mxu0
  %v1260 = vadd.f32 %v678, %v1259
  %v1261 = vpop.f32.mrb[0].mxu0
  %1262 = vmatprep.mubr.f32.mxu0 0.0
  %1263 = vmatmul.mubr.f32.gmra.mrb[0].mxu0 %v895
  %v1264 = vpop.f32.mrb[0].mxu0
  %v1265 = vadd.f32 %v683, %v1264
  %v1266 = vpop.f32.mrb[0].mxu0
  %1267 = vmatprep.mubr.f32.mxu0 0.0
  %1268 = vmatmul.mubr.f32.gmra.mrb[0].mxu0 %v898
  %v1269 = vpop.f32.mrb[0].mxu0
  %v1270 = vadd.f32 %v688, %v1269
  %v1271 = vpop.f32.mrb[0].mxu0
  %1272 = vmatprep.mubr.f32.mxu0 0.0
  %1273 = vmatmul.mubr.f32.gmra.mrb[0].mxu0 %v901
  %v1274 = vpop.f32.mrb[0].mxu0
  %v1275 = vadd.f32 %v693, %v1274
  %v1276 = vpop.f32.mrb[0].mxu0
  %1277 = vmatprep.mubr.f32.mxu0 0.0
  %1278 = vmatmul.mubr.f32.gmra.mrb[0].mxu0 %v904
  %v1279 = vpop.f32.mrb[0].mxu0
  %v1280 = vadd.f32 %v698, %v1279
  %v1281 = vpop.f32.mrb[0].mxu0
  %1282 = vmatprep.mubr.f32.mxu0 0.0
  %1283 = vmatmul.mubr.f32.gmra.mrb[0].mxu0 %v907
  %v1284 = vpop.f32.mrb[0].mxu0
  %v1285 = vadd.f32 %v703, %v1284
  %v1286 = vpop.f32.mrb[0].mxu0
  %1287 = vmatprep.mubr.f32.mxu0 0.0
  %1288 = vmatmul.mubr.f32.gmra.mrb[0].mxu0 %v910
  %v1289 = vpop.f32.mrb[0].mxu0
  %v1290 = vadd.f32 %v708, %v1289
  %v1291 = vpop.f32.mrb[0].mxu0
  %1292 = vmatprep.mubr.f32.mxu0 0.0
  %1293 = vmatmul.mubr.f32.gmra.mrb[0].mxu0 %v913
  %v1294 = vpop.f32.mrb[0].mxu0
  %v1295 = vadd.f32 %v713, %v1294
  %v1296 = vpop.f32.mrb[0].mxu0
  %1297 = vmatprep.mubr.f32.mxu0 0.0
  %1298 = vmatmul.mubr.f32.gmra.mrb[0].mxu0 %v916
  %v1299 = vpop.f32.mrb[0].mxu0
  %v1300 = vadd.f32 %v718, %v1299
  %v1301 = vpop.f32.mrb[0].mxu0
  %1302 = vmatprep.mubr.f32.mxu0 0.0
  %1303 = vmatmul.mubr.f32.gmra.mrb[0].mxu0 %v919
  %v1304 = vpop.f32.mrb[0].mxu0
  %v1305 = vadd.f32 %v723, %v1304
  %v1306 = vpop.f32.mrb[0].mxu0
  %1307 = vmatprep.mubr.f32.mxu0 0.0
  %1308 = vmatmul.mubr.f32.gmra.mrb[0].mxu0 %v922
  %v1309 = vpop.f32.mrb[0].mxu0
  %v1310 = vadd.f32 %v728, %v1309
  %v1311 = vpop.f32.mrb[0].mxu0
  %1312 = vdwg.mxu0
  %v1313 = vld [vmem:[%s3] sm:$0x1]
  %v1315 = vlaneseq
  %v1316 = vshrl.u32 %v1315, 7
  %v1317 = vsub.s32 0, %v1316
  %v1318 = vrot.slane %v1313, %v1317
  %v1320 = vadd.f32 %v995, %v1318
  %v1321 = vadd.f32 %v1000, %v1318
  %v1322 = vadd.f32 %v1005, %v1318
  %v1323 = vadd.f32 %v1010, %v1318
  %v1324 = vadd.f32 %v1015, %v1318
  %v1325 = vadd.f32 %v1020, %v1318
  %v1326 = vadd.f32 %v1025, %v1318
  %v1327 = vadd.f32 %v1030, %v1318
  %v1328 = vadd.f32 %v1035, %v1318
  %v1329 = vadd.f32 %v1040, %v1318
  %v1330 = vadd.f32 %v1045, %v1318
  %v1331 = vadd.f32 %v1050, %v1318
  %v1332 = vadd.f32 %v1055, %v1318
  %v1333 = vadd.f32 %v1060, %v1318
  %v1334 = vadd.f32 %v1065, %v1318
  %v1335 = vadd.f32 %v1070, %v1318
  %v1336 = vadd.f32 %v1075, %v1318
  %v1337 = vadd.f32 %v1080, %v1318
  %v1338 = vadd.f32 %v1085, %v1318
  %v1339 = vadd.f32 %v1090, %v1318
  %v1340 = vadd.f32 %v1095, %v1318
  %v1341 = vadd.f32 %v1100, %v1318
  %v1342 = vadd.f32 %v1105, %v1318
  %v1343 = vadd.f32 %v1110, %v1318
  %v1344 = vadd.f32 %v1115, %v1318
  %v1345 = vadd.f32 %v1120, %v1318
  %v1346 = vadd.f32 %v1125, %v1318
  %v1347 = vadd.f32 %v1130, %v1318
  %v1348 = vadd.f32 %v1135, %v1318
  %v1349 = vadd.f32 %v1140, %v1318
  %v1350 = vadd.f32 %v1145, %v1318
  %v1351 = vadd.f32 %v1150, %v1318
  %v1352 = vadd.f32 %v1155, %v1318
  %v1353 = vadd.f32 %v1160, %v1318
  %v1354 = vadd.f32 %v1165, %v1318
  %v1355 = vadd.f32 %v1170, %v1318
  %v1356 = vadd.f32 %v1175, %v1318
  %v1357 = vadd.f32 %v1180, %v1318
  %v1358 = vadd.f32 %v1185, %v1318
  %v1359 = vadd.f32 %v1190, %v1318
  %v1360 = vadd.f32 %v1195, %v1318
  %v1361 = vadd.f32 %v1200, %v1318
  %v1362 = vadd.f32 %v1205, %v1318
  %v1363 = vadd.f32 %v1210, %v1318
  %v1364 = vadd.f32 %v1215, %v1318
  %v1365 = vadd.f32 %v1220, %v1318
  %v1366 = vadd.f32 %v1225, %v1318
  %v1367 = vadd.f32 %v1230, %v1318
  %v1368 = vadd.f32 %v1235, %v1318
  %v1369 = vadd.f32 %v1240, %v1318
  %v1370 = vadd.f32 %v1245, %v1318
  %v1371 = vadd.f32 %v1250, %v1318
  %v1372 = vadd.f32 %v1255, %v1318
  %v1373 = vadd.f32 %v1260, %v1318
  %v1374 = vadd.f32 %v1265, %v1318
  %v1375 = vadd.f32 %v1270, %v1318
  %v1376 = vadd.f32 %v1275, %v1318
  %v1377 = vadd.f32 %v1280, %v1318
  %v1378 = vadd.f32 %v1285, %v1318
  %v1379 = vadd.f32 %v1290, %v1318
  %v1380 = vadd.f32 %v1295, %v1318
  %v1381 = vadd.f32 %v1300, %v1318
  %v1382 = vadd.f32 %v1305, %v1318
  %v1383 = vadd.f32 %v1310, %v1318
  %1392 = vrot.lane.b32.xlu0 %v1320, 120
  %v1393 = vpop.permute.xlu0 %1392
  %1394 = vrot.lane.b32.xlu0 %v1321, 120
  %v1395 = vpop.permute.xlu0 %1394
  %1396 = vrot.lane.b32.xlu0 %v1322, 120
  %v1397 = vpop.permute.xlu0 %1396
  %1398 = vrot.lane.b32.xlu0 %v1323, 120
  %v1399 = vpop.permute.xlu0 %1398
  %1400 = vrot.lane.b32.xlu0 %v1324, 120
  %v1401 = vpop.permute.xlu0 %1400
  %1402 = vrot.lane.b32.xlu0 %v1325, 120
  %v1403 = vpop.permute.xlu0 %1402
  %1404 = vrot.lane.b32.xlu0 %v1326, 120
  %v1405 = vpop.permute.xlu0 %1404
  %1406 = vrot.lane.b32.xlu0 %v1327, 120
  %v1407 = vpop.permute.xlu0 %1406
  %vm1408 = vcmask 64512
  %v1409 = vsel %vm1408, %v1320, 0
  %v1411 = vsel %vm1408, %v1321, 0
  %v1413 = vsel %vm1408, %v1322, 0
  %v1415 = vsel %vm1408, %v1323, 0
  %v1417 = vsel %vm1408, %v1324, 0
  %v1419 = vsel %vm1408, %v1325, 0
  %v1421 = vsel %vm1408, %v1326, 0
  %v1423 = vsel %vm1408, %v1327, 0
  %v1425 = vsel %vm1408, %v1393, 0
  %v1427 = vsel %vm1408, %v1395, 0
  %v1429 = vsel %vm1408, %v1397, 0
  %v1431 = vsel %vm1408, %v1399, 0
  %v1433 = vsel %vm1408, %v1401, 0
  %v1435 = vsel %vm1408, %v1403, 0
  %v1437 = vsel %vm1408, %v1405, 0
  %v1439 = vsel %vm1408, %v1407, 0
  %1441 = vmatprep.subr.mxu0 0.0
  %1442 = vmatpush1.xpose.msra.mxu0 %v1425
  %1443 = vmatprep.subr.mxu0 0.0
  %1444 = vmatpush1.xpose.msra.mxu0 %v1427
  %1445 = vmatprep.subr.mxu0 0.0
  %1446 = vmatpush1.xpose.msra.mxu0 %v1429
  %1447 = vmatprep.subr.mxu0 0.0
  %1448 = vmatpush1.xpose.msra.mxu0 %v1431
  %1449 = vmatprep.subr.mxu0 0.0
  %1450 = vmatpush1.xpose.msra.mxu0 %v1433
  %1451 = vmatprep.subr.mxu0 0.0
  %1452 = vmatpush1.xpose.msra.mxu0 %v1435
  %1453 = vmatprep.subr.mxu0 0.0
  %1454 = vmatpush1.xpose.msra.mxu0 %v1437
  %1455 = vmatprep.subr.mxu0 0.0
  %1456 = vmatpush1.xpose.msra.mxu0 %v1439
  %1457 = vmatprep.subr.mxu0 0.0
  %1458 = vmatpush1.xpose.msra.mxu0 0.0
  %1459 = vmatprep.subr.mxu0 0.0
  %1460 = vmatpush1.xpose.msra.mxu0 0.0
  %1461 = vmatprep.subr.mxu0 0.0
  %1462 = vmatpush1.xpose.msra.mxu0 0.0
  %1463 = vmatprep.subr.mxu0 0.0
  %1464 = vmatpush1.xpose.msra.mxu0 0.0
  %1465 = vmatprep.subr.mxu0 0.0
  %1466 = vmatpush1.xpose.msra.mxu0 0.0
  %1467 = vmatprep.subr.mxu0 0.0
  %1468 = vmatpush1.xpose.msra.mxu0 0.0
  %1469 = vmatprep.subr.mxu0 0.0
  %1470 = vmatpush1.xpose.msra.mxu0 0.0
  %1471 = vmatprep.subr.mxu0 0.0
  %1472 = vmatpush1.xpose.msra.mxu0 0.0
  %1473 = vmatprep.subr.mxu0 0.0
  %1474 = vmatpush1.xpose.msra.mxu0 0.0
  %1475 = vmatprep.subr.mxu0 0.0
  %1476 = vmatpush1.xpose.msra.mxu0 0.0
  %1477 = vmatprep.subr.mxu0 0.0
  %1478 = vmatpush1.xpose.msra.mxu0 0.0
  %1479 = vmatprep.subr.mxu0 0.0
  %1480 = vmatpush1.xpose.msra.mxu0 0.0
  %1481 = vmatprep.subr.mxu0 0.0
  %1482 = vmatpush1.xpose.msra.mxu0 0.0
  %1483 = vmatprep.subr.mxu0 0.0
  %1484 = vmatpush1.xpose.msra.mxu0 0.0
  %1485 = vmatprep.subr.mxu0 0.0
  %1486 = vmatpush1.xpose.msra.mxu0 0.0
  %1487 = vmatprep.subr.mxu0 0.0
  %1488 = vmatpush1.xpose.msra.mxu0 0.0
  %1489 = vmatprep.subr.mxu0 0.0
  %1490 = vmatpush1.xpose.msra.mxu0 0.0
  %1491 = vmatprep.subr.mxu0 0.0
  %1492 = vmatpush1.xpose.msra.mxu0 0.0
  %1493 = vmatprep.subr.mxu0 0.0
  %1494 = vmatpush1.xpose.msra.mxu0 0.0
  %1495 = vmatprep.subr.mxu0 0.0
  %1496 = vmatpush1.xpose.msra.mxu0 0.0
  %1497 = vmatprep.subr.mxu0 0.0
  %1498 = vmatpush1.xpose.msra.mxu0 0.0
  %1499 = vmatprep.subr.mxu0 0.0
  %1500 = vmatpush1.xpose.msra.mxu0 0.0
  %1501 = vmatprep.subr.mxu0 0.0
  %1502 = vmatpush1.xpose.msra.mxu0 0.0
  %1503 = vmatprep.subr.mxu0 0.0
  %1504 = vmatpush1.xpose.msra.mxu0 0.0
  %1505 = vmatprep.mubr.f32.mxu0 0.0
  %1506 = vmatmul.mubr.f32.gmra.mrb[0].mxu0 %v1409
  %v1507 = vpop.f32.mrb[0].mxu0
  %v1508 = vadd.f32 0.0, %v1507
  %v1509 = vpop.f32.mrb[0].mxu0
  %1510 = vmatprep.mubr.f32.mxu0 0.0
  %1511 = vmatmul.mubr.f32.gmra.mrb[0].mxu0 %v1411
  %v1512 = vpop.f32.mrb[0].mxu0
  %v1513 = vadd.f32 0.0, %v1512
  %v1514 = vpop.f32.mrb[0].mxu0
  %1515 = vmatprep.mubr.f32.mxu0 0.0
  %1516 = vmatmul.mubr.f32.gmra.mrb[0].mxu0 %v1413
  %v1517 = vpop.f32.mrb[0].mxu0
  %v1518 = vadd.f32 0.0, %v1517
  %v1519 = vpop.f32.mrb[0].mxu0
  %1520 = vmatprep.mubr.f32.mxu0 0.0
  %1521 = vmatmul.mubr.f32.gmra.mrb[0].mxu0 %v1415
  %v1522 = vpop.f32.mrb[0].mxu0
  %v1523 = vadd.f32 0.0, %v1522
  %v1524 = vpop.f32.mrb[0].mxu0
  %1525 = vmatprep.mubr.f32.mxu0 0.0
  %1526 = vmatmul.mubr.f32.gmra.mrb[0].mxu0 %v1417
  %v1527 = vpop.f32.mrb[0].mxu0
  %v1528 = vadd.f32 0.0, %v1527
  %v1529 = vpop.f32.mrb[0].mxu0
  %1530 = vmatprep.mubr.f32.mxu0 0.0
  %1531 = vmatmul.mubr.f32.gmra.mrb[0].mxu0 %v1419
  %v1532 = vpop.f32.mrb[0].mxu0
  %v1533 = vadd.f32 0.0, %v1532
  %v1534 = vpop.f32.mrb[0].mxu0
  %1535 = vmatprep.mubr.f32.mxu0 0.0
  %1536 = vmatmul.mubr.f32.gmra.mrb[0].mxu0 %v1421
  %v1537 = vpop.f32.mrb[0].mxu0
  %v1538 = vadd.f32 0.0, %v1537
  %v1539 = vpop.f32.mrb[0].mxu0
  %1540 = vmatprep.mubr.f32.mxu0 0.0
  %1541 = vmatmul.mubr.f32.gmra.mrb[0].mxu0 %v1423
  %v1542 = vpop.f32.mrb[0].mxu0
  %v1543 = vadd.f32 0.0, %v1542
  %v1544 = vpop.f32.mrb[0].mxu0
  %1545 = vdwg.mxu0
  %1554 = vrot.lane.b32.xlu0 %v1328, 120
  %v1555 = vpop.permute.xlu0 %1554
  %1556 = vrot.lane.b32.xlu0 %v1329, 120
  %v1557 = vpop.permute.xlu0 %1556
  %1558 = vrot.lane.b32.xlu0 %v1330, 120
  %v1559 = vpop.permute.xlu0 %1558
  %1560 = vrot.lane.b32.xlu0 %v1331, 120
  %v1561 = vpop.permute.xlu0 %1560
  %1562 = vrot.lane.b32.xlu0 %v1332, 120
  %v1563 = vpop.permute.xlu0 %1562
  %1564 = vrot.lane.b32.xlu0 %v1333, 120
  %v1565 = vpop.permute.xlu0 %1564
  %1566 = vrot.lane.b32.xlu0 %v1334, 120
  %v1567 = vpop.permute.xlu0 %1566
  %1568 = vrot.lane.b32.xlu0 %v1335, 120
  %v1569 = vpop.permute.xlu0 %1568
  %v1570 = vsel %vm1408, %v1328, 0
  %v1572 = vsel %vm1408, %v1329, 0
  %v1574 = vsel %vm1408, %v1330, 0
  %v1576 = vsel %vm1408, %v1331, 0
  %v1578 = vsel %vm1408, %v1332, 0
  %v1580 = vsel %vm1408, %v1333, 0
  %v1582 = vsel %vm1408, %v1334, 0
  %v1584 = vsel %vm1408, %v1335, 0
  %v1586 = vsel %vm1408, %v1555, 0
  %v1588 = vsel %vm1408, %v1557, 0
  %v1590 = vsel %vm1408, %v1559, 0
  %v1592 = vsel %vm1408, %v1561, 0
  %v1594 = vsel %vm1408, %v1563, 0
  %v1596 = vsel %vm1408, %v1565, 0
  %v1598 = vsel %vm1408, %v1567, 0
  %v1600 = vsel %vm1408, %v1569, 0
  %1602 = vmatprep.subr.mxu0 0.0
  %1603 = vmatpush1.xpose.msra.mxu0 %v1586
  %1604 = vmatprep.subr.mxu0 0.0
  %1605 = vmatpush1.xpose.msra.mxu0 %v1588
  %1606 = vmatprep.subr.mxu0 0.0
  %1607 = vmatpush1.xpose.msra.mxu0 %v1590
  %1608 = vmatprep.subr.mxu0 0.0
  %1609 = vmatpush1.xpose.msra.mxu0 %v1592
  %1610 = vmatprep.subr.mxu0 0.0
  %1611 = vmatpush1.xpose.msra.mxu0 %v1594
  %1612 = vmatprep.subr.mxu0 0.0
  %1613 = vmatpush1.xpose.msra.mxu0 %v1596
  %1614 = vmatprep.subr.mxu0 0.0
  %1615 = vmatpush1.xpose.msra.mxu0 %v1598
  %1616 = vmatprep.subr.mxu0 0.0
  %1617 = vmatpush1.xpose.msra.mxu0 %v1600
  %1618 = vmatprep.subr.mxu0 0.0
  %1619 = vmatpush1.xpose.msra.mxu0 0.0
  %1620 = vmatprep.subr.mxu0 0.0
  %1621 = vmatpush1.xpose.msra.mxu0 0.0
  %1622 = vmatprep.subr.mxu0 0.0
  %1623 = vmatpush1.xpose.msra.mxu0 0.0
  %1624 = vmatprep.subr.mxu0 0.0
  %1625 = vmatpush1.xpose.msra.mxu0 0.0
  %1626 = vmatprep.subr.mxu0 0.0
  %1627 = vmatpush1.xpose.msra.mxu0 0.0
  %1628 = vmatprep.subr.mxu0 0.0
  %1629 = vmatpush1.xpose.msra.mxu0 0.0
  %1630 = vmatprep.subr.mxu0 0.0
  %1631 = vmatpush1.xpose.msra.mxu0 0.0
  %1632 = vmatprep.subr.mxu0 0.0
  %1633 = vmatpush1.xpose.msra.mxu0 0.0
  %1634 = vmatprep.subr.mxu0 0.0
  %1635 = vmatpush1.xpose.msra.mxu0 0.0
  %1636 = vmatprep.subr.mxu0 0.0
  %1637 = vmatpush1.xpose.msra.mxu0 0.0
  %1638 = vmatprep.subr.mxu0 0.0
  %1639 = vmatpush1.xpose.msra.mxu0 0.0
  %1640 = vmatprep.subr.mxu0 0.0
  %1641 = vmatpush1.xpose.msra.mxu0 0.0
  %1642 = vmatprep.subr.mxu0 0.0
  %1643 = vmatpush1.xpose.msra.mxu0 0.0
  %1644 = vmatprep.subr.mxu0 0.0
  %1645 = vmatpush1.xpose.msra.mxu0 0.0
  %1646 = vmatprep.subr.mxu0 0.0
  %1647 = vmatpush1.xpose.msra.mxu0 0.0
  %1648 = vmatprep.subr.mxu0 0.0
  %1649 = vmatpush1.xpose.msra.mxu0 0.0
  %1650 = vmatprep.subr.mxu0 0.0
  %1651 = vmatpush1.xpose.msra.mxu0 0.0
  %1652 = vmatprep.subr.mxu0 0.0
  %1653 = vmatpush1.xpose.msra.mxu0 0.0
  %1654 = vmatprep.subr.mxu0 0.0
  %1655 = vmatpush1.xpose.msra.mxu0 0.0
  %1656 = vmatprep.subr.mxu0 0.0
  %1657 = vmatpush1.xpose.msra.mxu0 0.0
  %1658 = vmatprep.subr.mxu0 0.0
  %1659 = vmatpush1.xpose.msra.mxu0 0.0
  %1660 = vmatprep.subr.mxu0 0.0
  %1661 = vmatpush1.xpose.msra.mxu0 0.0
  %1662 = vmatprep.subr.mxu0 0.0
  %1663 = vmatpush1.xpose.msra.mxu0 0.0
  %1664 = vmatprep.subr.mxu0 0.0
  %1665 = vmatpush1.xpose.msra.mxu0 0.0
  %1666 = vmatprep.mubr.f32.mxu0 0.0
  %1667 = vmatmul.mubr.f32.gmra.mrb[0].mxu0 %v1570
  %v1668 = vpop.f32.mrb[0].mxu0
  %v1669 = vadd.f32 0.0, %v1668
  %v1670 = vpop.f32.mrb[0].mxu0
  %1671 = vmatprep.mubr.f32.mxu0 0.0
  %1672 = vmatmul.mubr.f32.gmra.mrb[0].mxu0 %v1572
  %v1673 = vpop.f32.mrb[0].mxu0
  %v1674 = vadd.f32 0.0, %v1673
  %v1675 = vpop.f32.mrb[0].mxu0
  %1676 = vmatprep.mubr.f32.mxu0 0.0
  %1677 = vmatmul.mubr.f32.gmra.mrb[0].mxu0 %v1574
  %v1678 = vpop.f32.mrb[0].mxu0
  %v1679 = vadd.f32 0.0, %v1678
  %v1680 = vpop.f32.mrb[0].mxu0
  %1681 = vmatprep.mubr.f32.mxu0 0.0
  %1682 = vmatmul.mubr.f32.gmra.mrb[0].mxu0 %v1576
  %v1683 = vpop.f32.mrb[0].mxu0
  %v1684 = vadd.f32 0.0, %v1683
  %v1685 = vpop.f32.mrb[0].mxu0
  %1686 = vmatprep.mubr.f32.mxu0 0.0
  %1687 = vmatmul.mubr.f32.gmra.mrb[0].mxu0 %v1578
  %v1688 = vpop.f32.mrb[0].mxu0
  %v1689 = vadd.f32 0.0, %v1688
  %v1690 = vpop.f32.mrb[0].mxu0
  %1691 = vmatprep.mubr.f32.mxu0 0.0
  %1692 = vmatmul.mubr.f32.gmra.mrb[0].mxu0 %v1580
  %v1693 = vpop.f32.mrb[0].mxu0
  %v1694 = vadd.f32 0.0, %v1693
  %v1695 = vpop.f32.mrb[0].mxu0
  %1696 = vmatprep.mubr.f32.mxu0 0.0
  %1697 = vmatmul.mubr.f32.gmra.mrb[0].mxu0 %v1582
  %v1698 = vpop.f32.mrb[0].mxu0
  %v1699 = vadd.f32 0.0, %v1698
  %v1700 = vpop.f32.mrb[0].mxu0
  %1701 = vmatprep.mubr.f32.mxu0 0.0
  %1702 = vmatmul.mubr.f32.gmra.mrb[0].mxu0 %v1584
  %v1703 = vpop.f32.mrb[0].mxu0
  %v1704 = vadd.f32 0.0, %v1703
  %v1705 = vpop.f32.mrb[0].mxu0
  %1706 = vdwg.mxu0
  %1715 = vrot.lane.b32.xlu0 %v1336, 120
  %v1716 = vpop.permute.xlu0 %1715
  %1717 = vrot.lane.b32.xlu0 %v1337, 120
  %v1718 = vpop.permute.xlu0 %1717
  %1719 = vrot.lane.b32.xlu0 %v1338, 120
  %v1720 = vpop.permute.xlu0 %1719
  %1721 = vrot.lane.b32.xlu0 %v1339, 120
  %v1722 = vpop.permute.xlu0 %1721
  %1723 = vrot.lane.b32.xlu0 %v1340, 120
  %v1724 = vpop.permute.xlu0 %1723
  %1725 = vrot.lane.b32.xlu0 %v1341, 120
  %v1726 = vpop.permute.xlu0 %1725
  %1727 = vrot.lane.b32.xlu0 %v1342, 120
  %v1728 = vpop.permute.xlu0 %1727
  %1729 = vrot.lane.b32.xlu0 %v1343, 120
  %v1730 = vpop.permute.xlu0 %1729
  %v1731 = vsel %vm1408, %v1336, 0
  %v1733 = vsel %vm1408, %v1337, 0
  %v1735 = vsel %vm1408, %v1338, 0
  %v1737 = vsel %vm1408, %v1339, 0
  %v1739 = vsel %vm1408, %v1340, 0
  %v1741 = vsel %vm1408, %v1341, 0
  %v1743 = vsel %vm1408, %v1342, 0
  %v1745 = vsel %vm1408, %v1343, 0
  %v1747 = vsel %vm1408, %v1716, 0
  %v1749 = vsel %vm1408, %v1718, 0
  %v1751 = vsel %vm1408, %v1720, 0
  %v1753 = vsel %vm1408, %v1722, 0
  %v1755 = vsel %vm1408, %v1724, 0
  %v1757 = vsel %vm1408, %v1726, 0
  %v1759 = vsel %vm1408, %v1728, 0
  %v1761 = vsel %vm1408, %v1730, 0
  %1763 = vmatprep.subr.mxu0 0.0
  %1764 = vmatpush1.xpose.msra.mxu0 %v1747
  %1765 = vmatprep.subr.mxu0 0.0
  %1766 = vmatpush1.xpose.msra.mxu0 %v1749
  %1767 = vmatprep.subr.mxu0 0.0
  %1768 = vmatpush1.xpose.msra.mxu0 %v1751
  %1769 = vmatprep.subr.mxu0 0.0
  %1770 = vmatpush1.xpose.msra.mxu0 %v1753
  %1771 = vmatprep.subr.mxu0 0.0
  %1772 = vmatpush1.xpose.msra.mxu0 %v1755
  %1773 = vmatprep.subr.mxu0 0.0
  %1774 = vmatpush1.xpose.msra.mxu0 %v1757
  %1775 = vmatprep.subr.mxu0 0.0
  %1776 = vmatpush1.xpose.msra.mxu0 %v1759
  %1777 = vmatprep.subr.mxu0 0.0
  %1778 = vmatpush1.xpose.msra.mxu0 %v1761
  %1779 = vmatprep.subr.mxu0 0.0
  %1780 = vmatpush1.xpose.msra.mxu0 0.0
  %1781 = vmatprep.subr.mxu0 0.0
  %1782 = vmatpush1.xpose.msra.mxu0 0.0
  %1783 = vmatprep.subr.mxu0 0.0
  %1784 = vmatpush1.xpose.msra.mxu0 0.0
  %1785 = vmatprep.subr.mxu0 0.0
  %1786 = vmatpush1.xpose.msra.mxu0 0.0
  %1787 = vmatprep.subr.mxu0 0.0
  %1788 = vmatpush1.xpose.msra.mxu0 0.0
  %1789 = vmatprep.subr.mxu0 0.0
  %1790 = vmatpush1.xpose.msra.mxu0 0.0
  %1791 = vmatprep.subr.mxu0 0.0
  %1792 = vmatpush1.xpose.msra.mxu0 0.0
  %1793 = vmatprep.subr.mxu0 0.0
  %1794 = vmatpush1.xpose.msra.mxu0 0.0
  %1795 = vmatprep.subr.mxu0 0.0
  %1796 = vmatpush1.xpose.msra.mxu0 0.0
  %1797 = vmatprep.subr.mxu0 0.0
  %1798 = vmatpush1.xpose.msra.mxu0 0.0
  %1799 = vmatprep.subr.mxu0 0.0
  %1800 = vmatpush1.xpose.msra.mxu0 0.0
  %1801 = vmatprep.subr.mxu0 0.0
  %1802 = vmatpush1.xpose.msra.mxu0 0.0
  %1803 = vmatprep.subr.mxu0 0.0
  %1804 = vmatpush1.xpose.msra.mxu0 0.0
  %1805 = vmatprep.subr.mxu0 0.0
  %1806 = vmatpush1.xpose.msra.mxu0 0.0
  %1807 = vmatprep.subr.mxu0 0.0
  %1808 = vmatpush1.xpose.msra.mxu0 0.0
  %1809 = vmatprep.subr.mxu0 0.0
  %1810 = vmatpush1.xpose.msra.mxu0 0.0
  %1811 = vmatprep.subr.mxu0 0.0
  %1812 = vmatpush1.xpose.msra.mxu0 0.0
  %1813 = vmatprep.subr.mxu0 0.0
  %1814 = vmatpush1.xpose.msra.mxu0 0.0
  %1815 = vmatprep.subr.mxu0 0.0
  %1816 = vmatpush1.xpose.msra.mxu0 0.0
  %1817 = vmatprep.subr.mxu0 0.0
  %1818 = vmatpush1.xpose.msra.mxu0 0.0
  %1819 = vmatprep.subr.mxu0 0.0
  %1820 = vmatpush1.xpose.msra.mxu0 0.0
  %1821 = vmatprep.subr.mxu0 0.0
  %1822 = vmatpush1.xpose.msra.mxu0 0.0
  %1823 = vmatprep.subr.mxu0 0.0
  %1824 = vmatpush1.xpose.msra.mxu0 0.0
  %1825 = vmatprep.subr.mxu0 0.0
  %1826 = vmatpush1.xpose.msra.mxu0 0.0
  %1827 = vmatprep.mubr.f32.mxu0 0.0
  %1828 = vmatmul.mubr.f32.gmra.mrb[0].mxu0 %v1731
  %v1829 = vpop.f32.mrb[0].mxu0
  %v1830 = vadd.f32 0.0, %v1829
  %v1831 = vpop.f32.mrb[0].mxu0
  %1832 = vmatprep.mubr.f32.mxu0 0.0
  %1833 = vmatmul.mubr.f32.gmra.mrb[0].mxu0 %v1733
  %v1834 = vpop.f32.mrb[0].mxu0
  %v1835 = vadd.f32 0.0, %v1834
  %v1836 = vpop.f32.mrb[0].mxu0
  %1837 = vmatprep.mubr.f32.mxu0 0.0
  %1838 = vmatmul.mubr.f32.gmra.mrb[0].mxu0 %v1735
  %v1839 = vpop.f32.mrb[0].mxu0
  %v1840 = vadd.f32 0.0, %v1839
  %v1841 = vpop.f32.mrb[0].mxu0
  %1842 = vmatprep.mubr.f32.mxu0 0.0
  %1843 = vmatmul.mubr.f32.gmra.mrb[0].mxu0 %v1737
  %v1844 = vpop.f32.mrb[0].mxu0
  %v1845 = vadd.f32 0.0, %v1844
  %v1846 = vpop.f32.mrb[0].mxu0
  %1847 = vmatprep.mubr.f32.mxu0 0.0
  %1848 = vmatmul.mubr.f32.gmra.mrb[0].mxu0 %v1739
  %v1849 = vpop.f32.mrb[0].mxu0
  %v1850 = vadd.f32 0.0, %v1849
  %v1851 = vpop.f32.mrb[0].mxu0
  %1852 = vmatprep.mubr.f32.mxu0 0.0
  %1853 = vmatmul.mubr.f32.gmra.mrb[0].mxu0 %v1741
  %v1854 = vpop.f32.mrb[0].mxu0
  %v1855 = vadd.f32 0.0, %v1854
  %v1856 = vpop.f32.mrb[0].mxu0
  %1857 = vmatprep.mubr.f32.mxu0 0.0
  %1858 = vmatmul.mubr.f32.gmra.mrb[0].mxu0 %v1743
  %v1859 = vpop.f32.mrb[0].mxu0
  %v1860 = vadd.f32 0.0, %v1859
  %v1861 = vpop.f32.mrb[0].mxu0
  %1862 = vmatprep.mubr.f32.mxu0 0.0
  %1863 = vmatmul.mubr.f32.gmra.mrb[0].mxu0 %v1745
  %v1864 = vpop.f32.mrb[0].mxu0
  %v1865 = vadd.f32 0.0, %v1864
  %v1866 = vpop.f32.mrb[0].mxu0
  %1867 = vdwg.mxu0
  %1876 = vrot.lane.b32.xlu0 %v1344, 120
  %v1877 = vpop.permute.xlu0 %1876
  %1878 = vrot.lane.b32.xlu0 %v1345, 120
  %v1879 = vpop.permute.xlu0 %1878
  %1880 = vrot.lane.b32.xlu0 %v1346, 120
  %v1881 = vpop.permute.xlu0 %1880
  %1882 = vrot.lane.b32.xlu0 %v1347, 120
  %v1883 = vpop.permute.xlu0 %1882
  %1884 = vrot.lane.b32.xlu0 %v1348, 120
  %v1885 = vpop.permute.xlu0 %1884
  %1886 = vrot.lane.b32.xlu0 %v1349, 120
  %v1887 = vpop.permute.xlu0 %1886
  %1888 = vrot.lane.b32.xlu0 %v1350, 120
  %v1889 = vpop.permute.xlu0 %1888
  %1890 = vrot.lane.b32.xlu0 %v1351, 120
  %v1891 = vpop.permute.xlu0 %1890
  %v1892 = vsel %vm1408, %v1344, 0
  %v1894 = vsel %vm1408, %v1345, 0
  %v1896 = vsel %vm1408, %v1346, 0
  %v1898 = vsel %vm1408, %v1347, 0
  %v1900 = vsel %vm1408, %v1348, 0
  %v1902 = vsel %vm1408, %v1349, 0
  %v1904 = vsel %vm1408, %v1350, 0
  %v1906 = vsel %vm1408, %v1351, 0
  %v1908 = vsel %vm1408, %v1877, 0
  %v1910 = vsel %vm1408, %v1879, 0
  %v1912 = vsel %vm1408, %v1881, 0
  %v1914 = vsel %vm1408, %v1883, 0
  %v1916 = vsel %vm1408, %v1885, 0
  %v1918 = vsel %vm1408, %v1887, 0
  %v1920 = vsel %vm1408, %v1889, 0
  %v1922 = vsel %vm1408, %v1891, 0
  %1924 = vmatprep.subr.mxu0 0.0
  %1925 = vmatpush1.xpose.msra.mxu0 %v1908
  %1926 = vmatprep.subr.mxu0 0.0
  %1927 = vmatpush1.xpose.msra.mxu0 %v1910
  %1928 = vmatprep.subr.mxu0 0.0
  %1929 = vmatpush1.xpose.msra.mxu0 %v1912
  %1930 = vmatprep.subr.mxu0 0.0
  %1931 = vmatpush1.xpose.msra.mxu0 %v1914
  %1932 = vmatprep.subr.mxu0 0.0
  %1933 = vmatpush1.xpose.msra.mxu0 %v1916
  %1934 = vmatprep.subr.mxu0 0.0
  %1935 = vmatpush1.xpose.msra.mxu0 %v1918
  %1936 = vmatprep.subr.mxu0 0.0
  %1937 = vmatpush1.xpose.msra.mxu0 %v1920
  %1938 = vmatprep.subr.mxu0 0.0
  %1939 = vmatpush1.xpose.msra.mxu0 %v1922
  %1940 = vmatprep.subr.mxu0 0.0
  %1941 = vmatpush1.xpose.msra.mxu0 0.0
  %1942 = vmatprep.subr.mxu0 0.0
  %1943 = vmatpush1.xpose.msra.mxu0 0.0
  %1944 = vmatprep.subr.mxu0 0.0
  %1945 = vmatpush1.xpose.msra.mxu0 0.0
  %1946 = vmatprep.subr.mxu0 0.0
  %1947 = vmatpush1.xpose.msra.mxu0 0.0
  %1948 = vmatprep.subr.mxu0 0.0
  %1949 = vmatpush1.xpose.msra.mxu0 0.0
  %1950 = vmatprep.subr.mxu0 0.0
  %1951 = vmatpush1.xpose.msra.mxu0 0.0
  %1952 = vmatprep.subr.mxu0 0.0
  %1953 = vmatpush1.xpose.msra.mxu0 0.0
  %1954 = vmatprep.subr.mxu0 0.0
  %1955 = vmatpush1.xpose.msra.mxu0 0.0
  %1956 = vmatprep.subr.mxu0 0.0
  %1957 = vmatpush1.xpose.msra.mxu0 0.0
  %1958 = vmatprep.subr.mxu0 0.0
  %1959 = vmatpush1.xpose.msra.mxu0 0.0
  %1960 = vmatprep.subr.mxu0 0.0
  %1961 = vmatpush1.xpose.msra.mxu0 0.0
  %1962 = vmatprep.subr.mxu0 0.0
  %1963 = vmatpush1.xpose.msra.mxu0 0.0
  %1964 = vmatprep.subr.mxu0 0.0
  %1965 = vmatpush1.xpose.msra.mxu0 0.0
  %1966 = vmatprep.subr.mxu0 0.0
  %1967 = vmatpush1.xpose.msra.mxu0 0.0
  %1968 = vmatprep.subr.mxu0 0.0
  %1969 = vmatpush1.xpose.msra.mxu0 0.0
  %1970 = vmatprep.subr.mxu0 0.0
  %1971 = vmatpush1.xpose.msra.mxu0 0.0
  %1972 = vmatprep.subr.mxu0 0.0
  %1973 = vmatpush1.xpose.msra.mxu0 0.0
  %1974 = vmatprep.subr.mxu0 0.0
  %1975 = vmatpush1.xpose.msra.mxu0 0.0
  %1976 = vmatprep.subr.mxu0 0.0
  %1977 = vmatpush1.xpose.msra.mxu0 0.0
  %1978 = vmatprep.subr.mxu0 0.0
  %1979 = vmatpush1.xpose.msra.mxu0 0.0
  %1980 = vmatprep.subr.mxu0 0.0
  %1981 = vmatpush1.xpose.msra.mxu0 0.0
  %1982 = vmatprep.subr.mxu0 0.0
  %1983 = vmatpush1.xpose.msra.mxu0 0.0
  %1984 = vmatprep.subr.mxu0 0.0
  %1985 = vmatpush1.xpose.msra.mxu0 0.0
  %1986 = vmatprep.subr.mxu0 0.0
  %1987 = vmatpush1.xpose.msra.mxu0 0.0
  %1988 = vmatprep.mubr.f32.mxu0 0.0
  %1989 = vmatmul.mubr.f32.gmra.mrb[0].mxu0 %v1892
  %v1990 = vpop.f32.mrb[0].mxu0
  %v1991 = vadd.f32 0.0, %v1990
  %v1992 = vpop.f32.mrb[0].mxu0
  %1993 = vmatprep.mubr.f32.mxu0 0.0
  %1994 = vmatmul.mubr.f32.gmra.mrb[0].mxu0 %v1894
  %v1995 = vpop.f32.mrb[0].mxu0
  %v1996 = vadd.f32 0.0, %v1995
  %v1997 = vpop.f32.mrb[0].mxu0
  %1998 = vmatprep.mubr.f32.mxu0 0.0
  %1999 = vmatmul.mubr.f32.gmra.mrb[0].mxu0 %v1896
  %v2000 = vpop.f32.mrb[0].mxu0
  %v2001 = vadd.f32 0.0, %v2000
  %v2002 = vpop.f32.mrb[0].mxu0
  %2003 = vmatprep.mubr.f32.mxu0 0.0
  %2004 = vmatmul.mubr.f32.gmra.mrb[0].mxu0 %v1898
  %v2005 = vpop.f32.mrb[0].mxu0
  %v2006 = vadd.f32 0.0, %v2005
  %v2007 = vpop.f32.mrb[0].mxu0
  %2008 = vmatprep.mubr.f32.mxu0 0.0
  %2009 = vmatmul.mubr.f32.gmra.mrb[0].mxu0 %v1900
  %v2010 = vpop.f32.mrb[0].mxu0
  %v2011 = vadd.f32 0.0, %v2010
  %v2012 = vpop.f32.mrb[0].mxu0
  %2013 = vmatprep.mubr.f32.mxu0 0.0
  %2014 = vmatmul.mubr.f32.gmra.mrb[0].mxu0 %v1902
  %v2015 = vpop.f32.mrb[0].mxu0
  %v2016 = vadd.f32 0.0, %v2015
  %v2017 = vpop.f32.mrb[0].mxu0
  %2018 = vmatprep.mubr.f32.mxu0 0.0
  %2019 = vmatmul.mubr.f32.gmra.mrb[0].mxu0 %v1904
  %v2020 = vpop.f32.mrb[0].mxu0
  %v2021 = vadd.f32 0.0, %v2020
  %v2022 = vpop.f32.mrb[0].mxu0
  %2023 = vmatprep.mubr.f32.mxu0 0.0
  %2024 = vmatmul.mubr.f32.gmra.mrb[0].mxu0 %v1906
  %v2025 = vpop.f32.mrb[0].mxu0
  %v2026 = vadd.f32 0.0, %v2025
  %v2027 = vpop.f32.mrb[0].mxu0
  %2028 = vdwg.mxu0
  %2037 = vrot.lane.b32.xlu0 %v1352, 120
  %v2038 = vpop.permute.xlu0 %2037
  %2039 = vrot.lane.b32.xlu0 %v1353, 120
  %v2040 = vpop.permute.xlu0 %2039
  %2041 = vrot.lane.b32.xlu0 %v1354, 120
  %v2042 = vpop.permute.xlu0 %2041
  %2043 = vrot.lane.b32.xlu0 %v1355, 120
  %v2044 = vpop.permute.xlu0 %2043
  %2045 = vrot.lane.b32.xlu0 %v1356, 120
  %v2046 = vpop.permute.xlu0 %2045
  %2047 = vrot.lane.b32.xlu0 %v1357, 120
  %v2048 = vpop.permute.xlu0 %2047
  %2049 = vrot.lane.b32.xlu0 %v1358, 120
  %v2050 = vpop.permute.xlu0 %2049
  %2051 = vrot.lane.b32.xlu0 %v1359, 120
  %v2052 = vpop.permute.xlu0 %2051
  %v2053 = vsel %vm1408, %v1352, 0
  %v2055 = vsel %vm1408, %v1353, 0
  %v2057 = vsel %vm1408, %v1354, 0
  %v2059 = vsel %vm1408, %v1355, 0
  %v2061 = vsel %vm1408, %v1356, 0
  %v2063 = vsel %vm1408, %v1357, 0
  %v2065 = vsel %vm1408, %v1358, 0
  %v2067 = vsel %vm1408, %v1359, 0
  %v2069 = vsel %vm1408, %v2038, 0
  %v2071 = vsel %vm1408, %v2040, 0
  %v2073 = vsel %vm1408, %v2042, 0
  %v2075 = vsel %vm1408, %v2044, 0
  %v2077 = vsel %vm1408, %v2046, 0
  %v2079 = vsel %vm1408, %v2048, 0
  %v2081 = vsel %vm1408, %v2050, 0
  %v2083 = vsel %vm1408, %v2052, 0
  %2085 = vmatprep.subr.mxu0 0.0
  %2086 = vmatpush1.xpose.msra.mxu0 %v2069
  %2087 = vmatprep.subr.mxu0 0.0
  %2088 = vmatpush1.xpose.msra.mxu0 %v2071
  %2089 = vmatprep.subr.mxu0 0.0
  %2090 = vmatpush1.xpose.msra.mxu0 %v2073
  %2091 = vmatprep.subr.mxu0 0.0
  %2092 = vmatpush1.xpose.msra.mxu0 %v2075
  %2093 = vmatprep.subr.mxu0 0.0
  %2094 = vmatpush1.xpose.msra.mxu0 %v2077
  %2095 = vmatprep.subr.mxu0 0.0
  %2096 = vmatpush1.xpose.msra.mxu0 %v2079
  %2097 = vmatprep.subr.mxu0 0.0
  %2098 = vmatpush1.xpose.msra.mxu0 %v2081
  %2099 = vmatprep.subr.mxu0 0.0
  %2100 = vmatpush1.xpose.msra.mxu0 %v2083
  %2101 = vmatprep.subr.mxu0 0.0
  %2102 = vmatpush1.xpose.msra.mxu0 0.0
  %2103 = vmatprep.subr.mxu0 0.0
  %2104 = vmatpush1.xpose.msra.mxu0 0.0
  %2105 = vmatprep.subr.mxu0 0.0
  %2106 = vmatpush1.xpose.msra.mxu0 0.0
  %2107 = vmatprep.subr.mxu0 0.0
  %2108 = vmatpush1.xpose.msra.mxu0 0.0
  %2109 = vmatprep.subr.mxu0 0.0
  %2110 = vmatpush1.xpose.msra.mxu0 0.0
  %2111 = vmatprep.subr.mxu0 0.0
  %2112 = vmatpush1.xpose.msra.mxu0 0.0
  %2113 = vmatprep.subr.mxu0 0.0
  %2114 = vmatpush1.xpose.msra.mxu0 0.0
  %2115 = vmatprep.subr.mxu0 0.0
  %2116 = vmatpush1.xpose.msra.mxu0 0.0
  %2117 = vmatprep.subr.mxu0 0.0
  %2118 = vmatpush1.xpose.msra.mxu0 0.0
  %2119 = vmatprep.subr.mxu0 0.0
  %2120 = vmatpush1.xpose.msra.mxu0 0.0
  %2121 = vmatprep.subr.mxu0 0.0
  %2122 = vmatpush1.xpose.msra.mxu0 0.0
  %2123 = vmatprep.subr.mxu0 0.0
  %2124 = vmatpush1.xpose.msra.mxu0 0.0
  %2125 = vmatprep.subr.mxu0 0.0
  %2126 = vmatpush1.xpose.msra.mxu0 0.0
  %2127 = vmatprep.subr.mxu0 0.0
  %2128 = vmatpush1.xpose.msra.mxu0 0.0
  %2129 = vmatprep.subr.mxu0 0.0
  %2130 = vmatpush1.xpose.msra.mxu0 0.0
  %2131 = vmatprep.subr.mxu0 0.0
  %2132 = vmatpush1.xpose.msra.mxu0 0.0
  %2133 = vmatprep.subr.mxu0 0.0
  %2134 = vmatpush1.xpose.msra.mxu0 0.0
  %2135 = vmatprep.subr.mxu0 0.0
  %2136 = vmatpush1.xpose.msra.mxu0 0.0
  %2137 = vmatprep.subr.mxu0 0.0
  %2138 = vmatpush1.xpose.msra.mxu0 0.0
  %2139 = vmatprep.subr.mxu0 0.0
  %2140 = vmatpush1.xpose.msra.mxu0 0.0
  %2141 = vmatprep.subr.mxu0 0.0
  %2142 = vmatpush1.xpose.msra.mxu0 0.0
  %2143 = vmatprep.subr.mxu0 0.0
  %2144 = vmatpush1.xpose.msra.mxu0 0.0
  %2145 = vmatprep.subr.mxu0 0.0
  %2146 = vmatpush1.xpose.msra.mxu0 0.0
  %2147 = vmatprep.subr.mxu0 0.0
  %2148 = vmatpush1.xpose.msra.mxu0 0.0
  %2149 = vmatprep.mubr.f32.mxu0 0.0
  %2150 = vmatmul.mubr.f32.gmra.mrb[0].mxu0 %v2053
  %v2151 = vpop.f32.mrb[0].mxu0
  %v2152 = vadd.f32 0.0, %v2151
  %v2153 = vpop.f32.mrb[0].mxu0
  %2154 = vmatprep.mubr.f32.mxu0 0.0
  %2155 = vmatmul.mubr.f32.gmra.mrb[0].mxu0 %v2055
  %v2156 = vpop.f32.mrb[0].mxu0
  %v2157 = vadd.f32 0.0, %v2156
  %v2158 = vpop.f32.mrb[0].mxu0
  %2159 = vmatprep.mubr.f32.mxu0 0.0
  %2160 = vmatmul.mubr.f32.gmra.mrb[0].mxu0 %v2057
  %v2161 = vpop.f32.mrb[0].mxu0
  %v2162 = vadd.f32 0.0, %v2161
  %v2163 = vpop.f32.mrb[0].mxu0
  %2164 = vmatprep.mubr.f32.mxu0 0.0
  %2165 = vmatmul.mubr.f32.gmra.mrb[0].mxu0 %v2059
  %v2166 = vpop.f32.mrb[0].mxu0
  %v2167 = vadd.f32 0.0, %v2166
  %v2168 = vpop.f32.mrb[0].mxu0
  %2169 = vmatprep.mubr.f32.mxu0 0.0
  %2170 = vmatmul.mubr.f32.gmra.mrb[0].mxu0 %v2061
  %v2171 = vpop.f32.mrb[0].mxu0
  %v2172 = vadd.f32 0.0, %v2171
  %v2173 = vpop.f32.mrb[0].mxu0
  %2174 = vmatprep.mubr.f32.mxu0 0.0
  %2175 = vmatmul.mubr.f32.gmra.mrb[0].mxu0 %v2063
  %v2176 = vpop.f32.mrb[0].mxu0
  %v2177 = vadd.f32 0.0, %v2176
  %v2178 = vpop.f32.mrb[0].mxu0
  %2179 = vmatprep.mubr.f32.mxu0 0.0
  %2180 = vmatmul.mubr.f32.gmra.mrb[0].mxu0 %v2065
  %v2181 = vpop.f32.mrb[0].mxu0
  %v2182 = vadd.f32 0.0, %v2181
  %v2183 = vpop.f32.mrb[0].mxu0
  %2184 = vmatprep.mubr.f32.mxu0 0.0
  %2185 = vmatmul.mubr.f32.gmra.mrb[0].mxu0 %v2067
  %v2186 = vpop.f32.mrb[0].mxu0
  %v2187 = vadd.f32 0.0, %v2186
  %v2188 = vpop.f32.mrb[0].mxu0
  %2189 = vdwg.mxu0
  %2198 = vrot.lane.b32.xlu0 %v1360, 120
  %v2199 = vpop.permute.xlu0 %2198
  %2200 = vrot.lane.b32.xlu0 %v1361, 120
  %v2201 = vpop.permute.xlu0 %2200
  %2202 = vrot.lane.b32.xlu0 %v1362, 120
  %v2203 = vpop.permute.xlu0 %2202
  %2204 = vrot.lane.b32.xlu0 %v1363, 120
  %v2205 = vpop.permute.xlu0 %2204
  %2206 = vrot.lane.b32.xlu0 %v1364, 120
  %v2207 = vpop.permute.xlu0 %2206
  %2208 = vrot.lane.b32.xlu0 %v1365, 120
  %v2209 = vpop.permute.xlu0 %2208
  %2210 = vrot.lane.b32.xlu0 %v1366, 120
  %v2211 = vpop.permute.xlu0 %2210
  %2212 = vrot.lane.b32.xlu0 %v1367, 120
  %v2213 = vpop.permute.xlu0 %2212
  %v2214 = vsel %vm1408, %v1360, 0
  %v2216 = vsel %vm1408, %v1361, 0
  %v2218 = vsel %vm1408, %v1362, 0
  %v2220 = vsel %vm1408, %v1363, 0
  %v2222 = vsel %vm1408, %v1364, 0
  %v2224 = vsel %vm1408, %v1365, 0
  %v2226 = vsel %vm1408, %v1366, 0
  %v2228 = vsel %vm1408, %v1367, 0
  %v2230 = vsel %vm1408, %v2199, 0
  %v2232 = vsel %vm1408, %v2201, 0
  %v2234 = vsel %vm1408, %v2203, 0
  %v2236 = vsel %vm1408, %v2205, 0
  %v2238 = vsel %vm1408, %v2207, 0
  %v2240 = vsel %vm1408, %v2209, 0
  %v2242 = vsel %vm1408, %v2211, 0
  %v2244 = vsel %vm1408, %v2213, 0
  %2246 = vmatprep.subr.mxu0 0.0
  %2247 = vmatpush1.xpose.msra.mxu0 %v2230
  %2248 = vmatprep.subr.mxu0 0.0
  %2249 = vmatpush1.xpose.msra.mxu0 %v2232
  %2250 = vmatprep.subr.mxu0 0.0
  %2251 = vmatpush1.xpose.msra.mxu0 %v2234
  %2252 = vmatprep.subr.mxu0 0.0
  %2253 = vmatpush1.xpose.msra.mxu0 %v2236
  %2254 = vmatprep.subr.mxu0 0.0
  %2255 = vmatpush1.xpose.msra.mxu0 %v2238
  %2256 = vmatprep.subr.mxu0 0.0
  %2257 = vmatpush1.xpose.msra.mxu0 %v2240
  %2258 = vmatprep.subr.mxu0 0.0
  %2259 = vmatpush1.xpose.msra.mxu0 %v2242
  %2260 = vmatprep.subr.mxu0 0.0
  %2261 = vmatpush1.xpose.msra.mxu0 %v2244
  %2262 = vmatprep.subr.mxu0 0.0
  %2263 = vmatpush1.xpose.msra.mxu0 0.0
  %2264 = vmatprep.subr.mxu0 0.0
  %2265 = vmatpush1.xpose.msra.mxu0 0.0
  %2266 = vmatprep.subr.mxu0 0.0
  %2267 = vmatpush1.xpose.msra.mxu0 0.0
  %2268 = vmatprep.subr.mxu0 0.0
  %2269 = vmatpush1.xpose.msra.mxu0 0.0
  %2270 = vmatprep.subr.mxu0 0.0
  %2271 = vmatpush1.xpose.msra.mxu0 0.0
  %2272 = vmatprep.subr.mxu0 0.0
  %2273 = vmatpush1.xpose.msra.mxu0 0.0
  %2274 = vmatprep.subr.mxu0 0.0
  %2275 = vmatpush1.xpose.msra.mxu0 0.0
  %2276 = vmatprep.subr.mxu0 0.0
  %2277 = vmatpush1.xpose.msra.mxu0 0.0
  %2278 = vmatprep.subr.mxu0 0.0
  %2279 = vmatpush1.xpose.msra.mxu0 0.0
  %2280 = vmatprep.subr.mxu0 0.0
  %2281 = vmatpush1.xpose.msra.mxu0 0.0
  %2282 = vmatprep.subr.mxu0 0.0
  %2283 = vmatpush1.xpose.msra.mxu0 0.0
  %2284 = vmatprep.subr.mxu0 0.0
  %2285 = vmatpush1.xpose.msra.mxu0 0.0
  %2286 = vmatprep.subr.mxu0 0.0
  %2287 = vmatpush1.xpose.msra.mxu0 0.0
  %2288 = vmatprep.subr.mxu0 0.0
  %2289 = vmatpush1.xpose.msra.mxu0 0.0
  %2290 = vmatprep.subr.mxu0 0.0
  %2291 = vmatpush1.xpose.msra.mxu0 0.0
  %2292 = vmatprep.subr.mxu0 0.0
  %2293 = vmatpush1.xpose.msra.mxu0 0.0
  %2294 = vmatprep.subr.mxu0 0.0
  %2295 = vmatpush1.xpose.msra.mxu0 0.0
  %2296 = vmatprep.subr.mxu0 0.0
  %2297 = vmatpush1.xpose.msra.mxu0 0.0
  %2298 = vmatprep.subr.mxu0 0.0
  %2299 = vmatpush1.xpose.msra.mxu0 0.0
  %2300 = vmatprep.subr.mxu0 0.0
  %2301 = vmatpush1.xpose.msra.mxu0 0.0
  %2302 = vmatprep.subr.mxu0 0.0
  %2303 = vmatpush1.xpose.msra.mxu0 0.0
  %2304 = vmatprep.subr.mxu0 0.0
  %2305 = vmatpush1.xpose.msra.mxu0 0.0
  %2306 = vmatprep.subr.mxu0 0.0
  %2307 = vmatpush1.xpose.msra.mxu0 0.0
  %2308 = vmatprep.subr.mxu0 0.0
  %2309 = vmatpush1.xpose.msra.mxu0 0.0
  %2310 = vmatprep.mubr.f32.mxu0 0.0
  %2311 = vmatmul.mubr.f32.gmra.mrb[0].mxu0 %v2214
  %v2312 = vpop.f32.mrb[0].mxu0
  %v2313 = vadd.f32 0.0, %v2312
  %v2314 = vpop.f32.mrb[0].mxu0
  %2315 = vmatprep.mubr.f32.mxu0 0.0
  %2316 = vmatmul.mubr.f32.gmra.mrb[0].mxu0 %v2216
  %v2317 = vpop.f32.mrb[0].mxu0
  %v2318 = vadd.f32 0.0, %v2317
  %v2319 = vpop.f32.mrb[0].mxu0
  %2320 = vmatprep.mubr.f32.mxu0 0.0
  %2321 = vmatmul.mubr.f32.gmra.mrb[0].mxu0 %v2218
  %v2322 = vpop.f32.mrb[0].mxu0
  %v2323 = vadd.f32 0.0, %v2322
  %v2324 = vpop.f32.mrb[0].mxu0
  %2325 = vmatprep.mubr.f32.mxu0 0.0
  %2326 = vmatmul.mubr.f32.gmra.mrb[0].mxu0 %v2220
  %v2327 = vpop.f32.mrb[0].mxu0
  %v2328 = vadd.f32 0.0, %v2327
  %v2329 = vpop.f32.mrb[0].mxu0
  %2330 = vmatprep.mubr.f32.mxu0 0.0
  %2331 = vmatmul.mubr.f32.gmra.mrb[0].mxu0 %v2222
  %v2332 = vpop.f32.mrb[0].mxu0
  %v2333 = vadd.f32 0.0, %v2332
  %v2334 = vpop.f32.mrb[0].mxu0
  %2335 = vmatprep.mubr.f32.mxu0 0.0
  %2336 = vmatmul.mubr.f32.gmra.mrb[0].mxu0 %v2224
  %v2337 = vpop.f32.mrb[0].mxu0
  %v2338 = vadd.f32 0.0, %v2337
  %v2339 = vpop.f32.mrb[0].mxu0
  %2340 = vmatprep.mubr.f32.mxu0 0.0
  %2341 = vmatmul.mubr.f32.gmra.mrb[0].mxu0 %v2226
  %v2342 = vpop.f32.mrb[0].mxu0
  %v2343 = vadd.f32 0.0, %v2342
  %v2344 = vpop.f32.mrb[0].mxu0
  %2345 = vmatprep.mubr.f32.mxu0 0.0
  %2346 = vmatmul.mubr.f32.gmra.mrb[0].mxu0 %v2228
  %v2347 = vpop.f32.mrb[0].mxu0
  %v2348 = vadd.f32 0.0, %v2347
  %v2349 = vpop.f32.mrb[0].mxu0
  %2350 = vdwg.mxu0
  %2359 = vrot.lane.b32.xlu0 %v1368, 120
  %v2360 = vpop.permute.xlu0 %2359
  %2361 = vrot.lane.b32.xlu0 %v1369, 120
  %v2362 = vpop.permute.xlu0 %2361
  %2363 = vrot.lane.b32.xlu0 %v1370, 120
  %v2364 = vpop.permute.xlu0 %2363
  %2365 = vrot.lane.b32.xlu0 %v1371, 120
  %v2366 = vpop.permute.xlu0 %2365
  %2367 = vrot.lane.b32.xlu0 %v1372, 120
  %v2368 = vpop.permute.xlu0 %2367
  %2369 = vrot.lane.b32.xlu0 %v1373, 120
  %v2370 = vpop.permute.xlu0 %2369
  %2371 = vrot.lane.b32.xlu0 %v1374, 120
  %v2372 = vpop.permute.xlu0 %2371
  %2373 = vrot.lane.b32.xlu0 %v1375, 120
  %v2374 = vpop.permute.xlu0 %2373
  %v2375 = vsel %vm1408, %v1368, 0
  %v2377 = vsel %vm1408, %v1369, 0
  %v2379 = vsel %vm1408, %v1370, 0
  %v2381 = vsel %vm1408, %v1371, 0
  %v2383 = vsel %vm1408, %v1372, 0
  %v2385 = vsel %vm1408, %v1373, 0
  %v2387 = vsel %vm1408, %v1374, 0
  %v2389 = vsel %vm1408, %v1375, 0
  %v2391 = vsel %vm1408, %v2360, 0
  %v2393 = vsel %vm1408, %v2362, 0
  %v2395 = vsel %vm1408, %v2364, 0
  %v2397 = vsel %vm1408, %v2366, 0
  %v2399 = vsel %vm1408, %v2368, 0
  %v2401 = vsel %vm1408, %v2370, 0
  %v2403 = vsel %vm1408, %v2372, 0
  %v2405 = vsel %vm1408, %v2374, 0
  %2407 = vmatprep.subr.mxu0 0.0
  %2408 = vmatpush1.xpose.msra.mxu0 %v2391
  %2409 = vmatprep.subr.mxu0 0.0
  %2410 = vmatpush1.xpose.msra.mxu0 %v2393
  %2411 = vmatprep.subr.mxu0 0.0
  %2412 = vmatpush1.xpose.msra.mxu0 %v2395
  %2413 = vmatprep.subr.mxu0 0.0
  %2414 = vmatpush1.xpose.msra.mxu0 %v2397
  %2415 = vmatprep.subr.mxu0 0.0
  %2416 = vmatpush1.xpose.msra.mxu0 %v2399
  %2417 = vmatprep.subr.mxu0 0.0
  %2418 = vmatpush1.xpose.msra.mxu0 %v2401
  %2419 = vmatprep.subr.mxu0 0.0
  %2420 = vmatpush1.xpose.msra.mxu0 %v2403
  %2421 = vmatprep.subr.mxu0 0.0
  %2422 = vmatpush1.xpose.msra.mxu0 %v2405
  %2423 = vmatprep.subr.mxu0 0.0
  %2424 = vmatpush1.xpose.msra.mxu0 0.0
  %2425 = vmatprep.subr.mxu0 0.0
  %2426 = vmatpush1.xpose.msra.mxu0 0.0
  %2427 = vmatprep.subr.mxu0 0.0
  %2428 = vmatpush1.xpose.msra.mxu0 0.0
  %2429 = vmatprep.subr.mxu0 0.0
  %2430 = vmatpush1.xpose.msra.mxu0 0.0
  %2431 = vmatprep.subr.mxu0 0.0
  %2432 = vmatpush1.xpose.msra.mxu0 0.0
  %2433 = vmatprep.subr.mxu0 0.0
  %2434 = vmatpush1.xpose.msra.mxu0 0.0
  %2435 = vmatprep.subr.mxu0 0.0
  %2436 = vmatpush1.xpose.msra.mxu0 0.0
  %2437 = vmatprep.subr.mxu0 0.0
  %2438 = vmatpush1.xpose.msra.mxu0 0.0
  %2439 = vmatprep.subr.mxu0 0.0
  %2440 = vmatpush1.xpose.msra.mxu0 0.0
  %2441 = vmatprep.subr.mxu0 0.0
  %2442 = vmatpush1.xpose.msra.mxu0 0.0
  %2443 = vmatprep.subr.mxu0 0.0
  %2444 = vmatpush1.xpose.msra.mxu0 0.0
  %2445 = vmatprep.subr.mxu0 0.0
  %2446 = vmatpush1.xpose.msra.mxu0 0.0
  %2447 = vmatprep.subr.mxu0 0.0
  %2448 = vmatpush1.xpose.msra.mxu0 0.0
  %2449 = vmatprep.subr.mxu0 0.0
  %2450 = vmatpush1.xpose.msra.mxu0 0.0
  %2451 = vmatprep.subr.mxu0 0.0
  %2452 = vmatpush1.xpose.msra.mxu0 0.0
  %2453 = vmatprep.subr.mxu0 0.0
  %2454 = vmatpush1.xpose.msra.mxu0 0.0
  %2455 = vmatprep.subr.mxu0 0.0
  %2456 = vmatpush1.xpose.msra.mxu0 0.0
  %2457 = vmatprep.subr.mxu0 0.0
  %2458 = vmatpush1.xpose.msra.mxu0 0.0
  %2459 = vmatprep.subr.mxu0 0.0
  %2460 = vmatpush1.xpose.msra.mxu0 0.0
  %2461 = vmatprep.subr.mxu0 0.0
  %2462 = vmatpush1.xpose.msra.mxu0 0.0
  %2463 = vmatprep.subr.mxu0 0.0
  %2464 = vmatpush1.xpose.msra.mxu0 0.0
  %2465 = vmatprep.subr.mxu0 0.0
  %2466 = vmatpush1.xpose.msra.mxu0 0.0
  %2467 = vmatprep.subr.mxu0 0.0
  %2468 = vmatpush1.xpose.msra.mxu0 0.0
  %2469 = vmatprep.subr.mxu0 0.0
  %2470 = vmatpush1.xpose.msra.mxu0 0.0
  %2471 = vmatprep.mubr.f32.mxu0 0.0
  %2472 = vmatmul.mubr.f32.gmra.mrb[0].mxu0 %v2375
  %v2473 = vpop.f32.mrb[0].mxu0
  %v2474 = vadd.f32 0.0, %v2473
  %v2475 = vpop.f32.mrb[0].mxu0
  %2476 = vmatprep.mubr.f32.mxu0 0.0
  %2477 = vmatmul.mubr.f32.gmra.mrb[0].mxu0 %v2377
  %v2478 = vpop.f32.mrb[0].mxu0
  %v2479 = vadd.f32 0.0, %v2478
  %v2480 = vpop.f32.mrb[0].mxu0
  %2481 = vmatprep.mubr.f32.mxu0 0.0
  %2482 = vmatmul.mubr.f32.gmra.mrb[0].mxu0 %v2379
  %v2483 = vpop.f32.mrb[0].mxu0
  %v2484 = vadd.f32 0.0, %v2483
  %v2485 = vpop.f32.mrb[0].mxu0
  %2486 = vmatprep.mubr.f32.mxu0 0.0
  %2487 = vmatmul.mubr.f32.gmra.mrb[0].mxu0 %v2381
  %v2488 = vpop.f32.mrb[0].mxu0
  %v2489 = vadd.f32 0.0, %v2488
  %v2490 = vpop.f32.mrb[0].mxu0
  %2491 = vmatprep.mubr.f32.mxu0 0.0
  %2492 = vmatmul.mubr.f32.gmra.mrb[0].mxu0 %v2383
  %v2493 = vpop.f32.mrb[0].mxu0
  %v2494 = vadd.f32 0.0, %v2493
  %v2495 = vpop.f32.mrb[0].mxu0
  %2496 = vmatprep.mubr.f32.mxu0 0.0
  %2497 = vmatmul.mubr.f32.gmra.mrb[0].mxu0 %v2385
  %v2498 = vpop.f32.mrb[0].mxu0
  %v2499 = vadd.f32 0.0, %v2498
  %v2500 = vpop.f32.mrb[0].mxu0
  %2501 = vmatprep.mubr.f32.mxu0 0.0
  %2502 = vmatmul.mubr.f32.gmra.mrb[0].mxu0 %v2387
  %v2503 = vpop.f32.mrb[0].mxu0
  %v2504 = vadd.f32 0.0, %v2503
  %v2505 = vpop.f32.mrb[0].mxu0
  %2506 = vmatprep.mubr.f32.mxu0 0.0
  %2507 = vmatmul.mubr.f32.gmra.mrb[0].mxu0 %v2389
  %v2508 = vpop.f32.mrb[0].mxu0
  %v2509 = vadd.f32 0.0, %v2508
  %v2510 = vpop.f32.mrb[0].mxu0
  %2511 = vdwg.mxu0
  %2520 = vrot.lane.b32.xlu0 %v1376, 120
  %v2521 = vpop.permute.xlu0 %2520
  %2522 = vrot.lane.b32.xlu0 %v1377, 120
  %v2523 = vpop.permute.xlu0 %2522
  %2524 = vrot.lane.b32.xlu0 %v1378, 120
  %v2525 = vpop.permute.xlu0 %2524
  %2526 = vrot.lane.b32.xlu0 %v1379, 120
  %v2527 = vpop.permute.xlu0 %2526
  %2528 = vrot.lane.b32.xlu0 %v1380, 120
  %v2529 = vpop.permute.xlu0 %2528
  %2530 = vrot.lane.b32.xlu0 %v1381, 120
  %v2531 = vpop.permute.xlu0 %2530
  %2532 = vrot.lane.b32.xlu0 %v1382, 120
  %v2533 = vpop.permute.xlu0 %2532
  %2534 = vrot.lane.b32.xlu0 %v1383, 120
  %v2535 = vpop.permute.xlu0 %2534
  %v2536 = vsel %vm1408, %v1376, 0
  %v2538 = vsel %vm1408, %v1377, 0
  %v2540 = vsel %vm1408, %v1378, 0
  %v2542 = vsel %vm1408, %v1379, 0
  %v2544 = vsel %vm1408, %v1380, 0
  %v2546 = vsel %vm1408, %v1381, 0
  %v2548 = vsel %vm1408, %v1382, 0
  %v2550 = vsel %vm1408, %v1383, 0
  %v2552 = vsel %vm1408, %v2521, 0
  %v2554 = vsel %vm1408, %v2523, 0
  %v2556 = vsel %vm1408, %v2525, 0
  %v2558 = vsel %vm1408, %v2527, 0
  %v2560 = vsel %vm1408, %v2529, 0
  %v2562 = vsel %vm1408, %v2531, 0
  %v2564 = vsel %vm1408, %v2533, 0
  %v2566 = vsel %vm1408, %v2535, 0
  %2568 = vmatprep.subr.mxu0 0.0
  %2569 = vmatpush1.xpose.msra.mxu0 %v2552
  %2570 = vmatprep.subr.mxu0 0.0
  %2571 = vmatpush1.xpose.msra.mxu0 %v2554
  %2572 = vmatprep.subr.mxu0 0.0
  %2573 = vmatpush1.xpose.msra.mxu0 %v2556
  %2574 = vmatprep.subr.mxu0 0.0
  %2575 = vmatpush1.xpose.msra.mxu0 %v2558
  %2576 = vmatprep.subr.mxu0 0.0
  %2577 = vmatpush1.xpose.msra.mxu0 %v2560
  %2578 = vmatprep.subr.mxu0 0.0
  %2579 = vmatpush1.xpose.msra.mxu0 %v2562
  %2580 = vmatprep.subr.mxu0 0.0
  %2581 = vmatpush1.xpose.msra.mxu0 %v2564
  %2582 = vmatprep.subr.mxu0 0.0
  %2583 = vmatpush1.xpose.msra.mxu0 %v2566
  %2584 = vmatprep.subr.mxu0 0.0
  %2585 = vmatpush1.xpose.msra.mxu0 0.0
  %2586 = vmatprep.subr.mxu0 0.0
  %2587 = vmatpush1.xpose.msra.mxu0 0.0
  %2588 = vmatprep.subr.mxu0 0.0
  %2589 = vmatpush1.xpose.msra.mxu0 0.0
  %2590 = vmatprep.subr.mxu0 0.0
  %2591 = vmatpush1.xpose.msra.mxu0 0.0
  %2592 = vmatprep.subr.mxu0 0.0
  %2593 = vmatpush1.xpose.msra.mxu0 0.0
  %2594 = vmatprep.subr.mxu0 0.0
  %2595 = vmatpush1.xpose.msra.mxu0 0.0
  %2596 = vmatprep.subr.mxu0 0.0
  %2597 = vmatpush1.xpose.msra.mxu0 0.0
  %2598 = vmatprep.subr.mxu0 0.0
  %2599 = vmatpush1.xpose.msra.mxu0 0.0
  %2600 = vmatprep.subr.mxu0 0.0
  %2601 = vmatpush1.xpose.msra.mxu0 0.0
  %2602 = vmatprep.subr.mxu0 0.0
  %2603 = vmatpush1.xpose.msra.mxu0 0.0
  %2604 = vmatprep.subr.mxu0 0.0
  %2605 = vmatpush1.xpose.msra.mxu0 0.0
  %2606 = vmatprep.subr.mxu0 0.0
  %2607 = vmatpush1.xpose.msra.mxu0 0.0
  %2608 = vmatprep.subr.mxu0 0.0
  %2609 = vmatpush1.xpose.msra.mxu0 0.0
  %2610 = vmatprep.subr.mxu0 0.0
  %2611 = vmatpush1.xpose.msra.mxu0 0.0
  %2612 = vmatprep.subr.mxu0 0.0
  %2613 = vmatpush1.xpose.msra.mxu0 0.0
  %2614 = vmatprep.subr.mxu0 0.0
  %2615 = vmatpush1.xpose.msra.mxu0 0.0
  %2616 = vmatprep.subr.mxu0 0.0
  %2617 = vmatpush1.xpose.msra.mxu0 0.0
  %2618 = vmatprep.subr.mxu0 0.0
  %2619 = vmatpush1.xpose.msra.mxu0 0.0
  %2620 = vmatprep.subr.mxu0 0.0
  %2621 = vmatpush1.xpose.msra.mxu0 0.0
  %2622 = vmatprep.subr.mxu0 0.0
  %2623 = vmatpush1.xpose.msra.mxu0 0.0
  %2624 = vmatprep.subr.mxu0 0.0
  %2625 = vmatpush1.xpose.msra.mxu0 0.0
  %2626 = vmatprep.subr.mxu0 0.0
  %2627 = vmatpush1.xpose.msra.mxu0 0.0
  %2628 = vmatprep.subr.mxu0 0.0
  %2629 = vmatpush1.xpose.msra.mxu0 0.0
  %2630 = vmatprep.subr.mxu0 0.0
  %2631 = vmatpush1.xpose.msra.mxu0 0.0
  %2632 = vmatprep.mubr.f32.mxu0 0.0
  %2633 = vmatmul.mubr.f32.gmra.mrb[0].mxu0 %v2536
  %v2634 = vpop.f32.mrb[0].mxu0
  %v2635 = vadd.f32 0.0, %v2634
  %v2636 = vpop.f32.mrb[0].mxu0
  %2637 = vmatprep.mubr.f32.mxu0 0.0
  %2638 = vmatmul.mubr.f32.gmra.mrb[0].mxu0 %v2538
  %v2639 = vpop.f32.mrb[0].mxu0
  %v2640 = vadd.f32 0.0, %v2639
  %v2641 = vpop.f32.mrb[0].mxu0
  %2642 = vmatprep.mubr.f32.mxu0 0.0
  %2643 = vmatmul.mubr.f32.gmra.mrb[0].mxu0 %v2540
  %v2644 = vpop.f32.mrb[0].mxu0
  %v2645 = vadd.f32 0.0, %v2644
  %v2646 = vpop.f32.mrb[0].mxu0
  %2647 = vmatprep.mubr.f32.mxu0 0.0
  %2648 = vmatmul.mubr.f32.gmra.mrb[0].mxu0 %v2542
  %v2649 = vpop.f32.mrb[0].mxu0
  %v2650 = vadd.f32 0.0, %v2649
  %v2651 = vpop.f32.mrb[0].mxu0
  %2652 = vmatprep.mubr.f32.mxu0 0.0
  %2653 = vmatmul.mubr.f32.gmra.mrb[0].mxu0 %v2544
  %v2654 = vpop.f32.mrb[0].mxu0
  %v2655 = vadd.f32 0.0, %v2654
  %v2656 = vpop.f32.mrb[0].mxu0
  %2657 = vmatprep.mubr.f32.mxu0 0.0
  %2658 = vmatmul.mubr.f32.gmra.mrb[0].mxu0 %v2546
  %v2659 = vpop.f32.mrb[0].mxu0
  %v2660 = vadd.f32 0.0, %v2659
  %v2661 = vpop.f32.mrb[0].mxu0
  %2662 = vmatprep.mubr.f32.mxu0 0.0
  %2663 = vmatmul.mubr.f32.gmra.mrb[0].mxu0 %v2548
  %v2664 = vpop.f32.mrb[0].mxu0
  %v2665 = vadd.f32 0.0, %v2664
  %v2666 = vpop.f32.mrb[0].mxu0
  %2667 = vmatprep.mubr.f32.mxu0 0.0
  %2668 = vmatmul.mubr.f32.gmra.mrb[0].mxu0 %v2550
  %v2669 = vpop.f32.mrb[0].mxu0
  %v2670 = vadd.f32 0.0, %v2669
  %v2671 = vpop.f32.mrb[0].mxu0
  %2672 = vdwg.mxu0
  %vm2673 = vcmask 523264
  %v2674 = vsel %vm2673, %v1508, -inf
  %2675 = vmax.xlane.f32.xlu0 %v2674
  %v2676 = vpop.xlane.xlu0 %2675
  %v2677 = vsel %vm2673, %v1513, -inf
  %2678 = vmax.xlane.f32.xlu0 %v2677
  %v2679 = vpop.xlane.xlu0 %2678
  %v2680 = vsel %vm2673, %v1518, -inf
  %2681 = vmax.xlane.f32.xlu0 %v2680
  %v2682 = vpop.xlane.xlu0 %2681
  %v2683 = vsel %vm2673, %v1523, -inf
  %2684 = vmax.xlane.f32.xlu0 %v2683
  %v2685 = vpop.xlane.xlu0 %2684
  %v2686 = vsel %vm2673, %v1528, -inf
  %2687 = vmax.xlane.f32.xlu0 %v2686
  %v2688 = vpop.xlane.xlu0 %2687
  %v2689 = vsel %vm2673, %v1533, -inf
  %2690 = vmax.xlane.f32.xlu0 %v2689
  %v2691 = vpop.xlane.xlu0 %2690
  %v2692 = vsel %vm2673, %v1538, -inf
  %2693 = vmax.xlane.f32.xlu0 %v2692
  %v2694 = vpop.xlane.xlu0 %2693
  %v2695 = vsel %vm2673, %v1543, -inf
  %2696 = vmax.xlane.f32.xlu0 %v2695
  %v2697 = vpop.xlane.xlu0 %2696
  %v2698 = vsel %vm2673, %v1669, -inf
  %2699 = vmax.xlane.f32.xlu0 %v2698
  %v2700 = vpop.xlane.xlu0 %2699
  %v2701 = vsel %vm2673, %v1674, -inf
  %2702 = vmax.xlane.f32.xlu0 %v2701
  %v2703 = vpop.xlane.xlu0 %2702
  %v2704 = vsel %vm2673, %v1679, -inf
  %2705 = vmax.xlane.f32.xlu0 %v2704
  %v2706 = vpop.xlane.xlu0 %2705
  %v2707 = vsel %vm2673, %v1684, -inf
  %2708 = vmax.xlane.f32.xlu0 %v2707
  %v2709 = vpop.xlane.xlu0 %2708
  %v2710 = vsel %vm2673, %v1689, -inf
  %2711 = vmax.xlane.f32.xlu0 %v2710
  %v2712 = vpop.xlane.xlu0 %2711
  %v2713 = vsel %vm2673, %v1694, -inf
  %2714 = vmax.xlane.f32.xlu0 %v2713
  %v2715 = vpop.xlane.xlu0 %2714
  %v2716 = vsel %vm2673, %v1699, -inf
  %2717 = vmax.xlane.f32.xlu0 %v2716
  %v2718 = vpop.xlane.xlu0 %2717
  %v2719 = vsel %vm2673, %v1704, -inf
  %2720 = vmax.xlane.f32.xlu0 %v2719
  %v2721 = vpop.xlane.xlu0 %2720
  %v2722 = vsel %vm2673, %v1830, -inf
  %2723 = vmax.xlane.f32.xlu0 %v2722
  %v2724 = vpop.xlane.xlu0 %2723
  %v2725 = vsel %vm2673, %v1835, -inf
  %2726 = vmax.xlane.f32.xlu0 %v2725
  %v2727 = vpop.xlane.xlu0 %2726
  %v2728 = vsel %vm2673, %v1840, -inf
  %2729 = vmax.xlane.f32.xlu0 %v2728
  %v2730 = vpop.xlane.xlu0 %2729
  %v2731 = vsel %vm2673, %v1845, -inf
  %2732 = vmax.xlane.f32.xlu0 %v2731
  %v2733 = vpop.xlane.xlu0 %2732
  %v2734 = vsel %vm2673, %v1850, -inf
  %2735 = vmax.xlane.f32.xlu0 %v2734
  %v2736 = vpop.xlane.xlu0 %2735
  %v2737 = vsel %vm2673, %v1855, -inf
  %2738 = vmax.xlane.f32.xlu0 %v2737
  %v2739 = vpop.xlane.xlu0 %2738
  %v2740 = vsel %vm2673, %v1860, -inf
  %2741 = vmax.xlane.f32.xlu0 %v2740
  %v2742 = vpop.xlane.xlu0 %2741
  %v2743 = vsel %vm2673, %v1865, -inf
  %2744 = vmax.xlane.f32.xlu0 %v2743
  %v2745 = vpop.xlane.xlu0 %2744
  %v2746 = vsel %vm2673, %v1991, -inf
  %2747 = vmax.xlane.f32.xlu0 %v2746
  %v2748 = vpop.xlane.xlu0 %2747
  %v2749 = vsel %vm2673, %v1996, -inf
  %2750 = vmax.xlane.f32.xlu0 %v2749
  %v2751 = vpop.xlane.xlu0 %2750
  %v2752 = vsel %vm2673, %v2001, -inf
  %2753 = vmax.xlane.f32.xlu0 %v2752
  %v2754 = vpop.xlane.xlu0 %2753
  %v2755 = vsel %vm2673, %v2006, -inf
  %2756 = vmax.xlane.f32.xlu0 %v2755
  %v2757 = vpop.xlane.xlu0 %2756
  %v2758 = vsel %vm2673, %v2011, -inf
  %2759 = vmax.xlane.f32.xlu0 %v2758
  %v2760 = vpop.xlane.xlu0 %2759
  %v2761 = vsel %vm2673, %v2016, -inf
  %2762 = vmax.xlane.f32.xlu0 %v2761
  %v2763 = vpop.xlane.xlu0 %2762
  %v2764 = vsel %vm2673, %v2021, -inf
  %2765 = vmax.xlane.f32.xlu0 %v2764
  %v2766 = vpop.xlane.xlu0 %2765
  %v2767 = vsel %vm2673, %v2026, -inf
  %2768 = vmax.xlane.f32.xlu0 %v2767
  %v2769 = vpop.xlane.xlu0 %2768
  %v2770 = vsel %vm2673, %v2152, -inf
  %2771 = vmax.xlane.f32.xlu0 %v2770
  %v2772 = vpop.xlane.xlu0 %2771
  %v2773 = vsel %vm2673, %v2157, -inf
  %2774 = vmax.xlane.f32.xlu0 %v2773
  %v2775 = vpop.xlane.xlu0 %2774
  %v2776 = vsel %vm2673, %v2162, -inf
  %2777 = vmax.xlane.f32.xlu0 %v2776
  %v2778 = vpop.xlane.xlu0 %2777
  %v2779 = vsel %vm2673, %v2167, -inf
  %2780 = vmax.xlane.f32.xlu0 %v2779
  %v2781 = vpop.xlane.xlu0 %2780
  %v2782 = vsel %vm2673, %v2172, -inf
  %2783 = vmax.xlane.f32.xlu0 %v2782
  %v2784 = vpop.xlane.xlu0 %2783
  %v2785 = vsel %vm2673, %v2177, -inf
  %2786 = vmax.xlane.f32.xlu0 %v2785
  %v2787 = vpop.xlane.xlu0 %2786
  %v2788 = vsel %vm2673, %v2182, -inf
  %2789 = vmax.xlane.f32.xlu0 %v2788
  %v2790 = vpop.xlane.xlu0 %2789
  %v2791 = vsel %vm2673, %v2187, -inf
  %2792 = vmax.xlane.f32.xlu0 %v2791
  %v2793 = vpop.xlane.xlu0 %2792
  %v2794 = vsel %vm2673, %v2313, -inf
  %2795 = vmax.xlane.f32.xlu0 %v2794
  %v2796 = vpop.xlane.xlu0 %2795
  %v2797 = vsel %vm2673, %v2318, -inf
  %2798 = vmax.xlane.f32.xlu0 %v2797
  %v2799 = vpop.xlane.xlu0 %2798
  %v2800 = vsel %vm2673, %v2323, -inf
  %2801 = vmax.xlane.f32.xlu0 %v2800
  %v2802 = vpop.xlane.xlu0 %2801
  %v2803 = vsel %vm2673, %v2328, -inf
  %2804 = vmax.xlane.f32.xlu0 %v2803
  %v2805 = vpop.xlane.xlu0 %2804
  %v2806 = vsel %vm2673, %v2333, -inf
  %2807 = vmax.xlane.f32.xlu0 %v2806
  %v2808 = vpop.xlane.xlu0 %2807
  %v2809 = vsel %vm2673, %v2338, -inf
  %2810 = vmax.xlane.f32.xlu0 %v2809
  %v2811 = vpop.xlane.xlu0 %2810
  %v2812 = vsel %vm2673, %v2343, -inf
  %2813 = vmax.xlane.f32.xlu0 %v2812
  %v2814 = vpop.xlane.xlu0 %2813
  %v2815 = vsel %vm2673, %v2348, -inf
  %2816 = vmax.xlane.f32.xlu0 %v2815
  %v2817 = vpop.xlane.xlu0 %2816
  %v2818 = vsel %vm2673, %v2474, -inf
  %2819 = vmax.xlane.f32.xlu0 %v2818
  %v2820 = vpop.xlane.xlu0 %2819
  %v2821 = vsel %vm2673, %v2479, -inf
  %2822 = vmax.xlane.f32.xlu0 %v2821
  %v2823 = vpop.xlane.xlu0 %2822
  %v2824 = vsel %vm2673, %v2484, -inf
  %2825 = vmax.xlane.f32.xlu0 %v2824
  %v2826 = vpop.xlane.xlu0 %2825
  %v2827 = vsel %vm2673, %v2489, -inf
  %2828 = vmax.xlane.f32.xlu0 %v2827
  %v2829 = vpop.xlane.xlu0 %2828
  %v2830 = vsel %vm2673, %v2494, -inf
  %2831 = vmax.xlane.f32.xlu0 %v2830
  %v2832 = vpop.xlane.xlu0 %2831
  %v2833 = vsel %vm2673, %v2499, -inf
  %2834 = vmax.xlane.f32.xlu0 %v2833
  %v2835 = vpop.xlane.xlu0 %2834
  %v2836 = vsel %vm2673, %v2504, -inf
  %2837 = vmax.xlane.f32.xlu0 %v2836
  %v2838 = vpop.xlane.xlu0 %2837
  %v2839 = vsel %vm2673, %v2509, -inf
  %2840 = vmax.xlane.f32.xlu0 %v2839
  %v2841 = vpop.xlane.xlu0 %2840
  %v2842 = vsel %vm2673, %v2635, -inf
  %2843 = vmax.xlane.f32.xlu0 %v2842
  %v2844 = vpop.xlane.xlu0 %2843
  %v2845 = vsel %vm2673, %v2640, -inf
  %2846 = vmax.xlane.f32.xlu0 %v2845
  %v2847 = vpop.xlane.xlu0 %2846
  %v2848 = vsel %vm2673, %v2645, -inf
  %2849 = vmax.xlane.f32.xlu0 %v2848
  %v2850 = vpop.xlane.xlu0 %2849
  %v2851 = vsel %vm2673, %v2650, -inf
  %2852 = vmax.xlane.f32.xlu0 %v2851
  %v2853 = vpop.xlane.xlu0 %2852
  %v2854 = vsel %vm2673, %v2655, -inf
  %2855 = vmax.xlane.f32.xlu0 %v2854
  %v2856 = vpop.xlane.xlu0 %2855
  %v2857 = vsel %vm2673, %v2660, -inf
  %2858 = vmax.xlane.f32.xlu0 %v2857
  %v2859 = vpop.xlane.xlu0 %2858
  %v2860 = vsel %vm2673, %v2665, -inf
  %2861 = vmax.xlane.f32.xlu0 %v2860
  %v2862 = vpop.xlane.xlu0 %2861
  %v2863 = vsel %vm2673, %v2670, -inf
  %2864 = vmax.xlane.f32.xlu0 %v2863
  %v2865 = vpop.xlane.xlu0 %2864
  %v2866 = vsub.f32 %v1508, %v2676
  %v2867 = vsub.f32 %v1513, %v2679
  %v2868 = vsub.f32 %v1518, %v2682
  %v2869 = vsub.f32 %v1523, %v2685
  %v2870 = vsub.f32 %v1528, %v2688
  %v2871 = vsub.f32 %v1533, %v2691
  %v2872 = vsub.f32 %v1538, %v2694
  %v2873 = vsub.f32 %v1543, %v2697
  %v2874 = vsub.f32 %v1669, %v2700
  %v2875 = vsub.f32 %v1674, %v2703
  %v2876 = vsub.f32 %v1679, %v2706
  %v2877 = vsub.f32 %v1684, %v2709
  %v2878 = vsub.f32 %v1689, %v2712
  %v2879 = vsub.f32 %v1694, %v2715
  %v2880 = vsub.f32 %v1699, %v2718
  %v2881 = vsub.f32 %v1704, %v2721
  %v2882 = vsub.f32 %v1830, %v2724
  %v2883 = vsub.f32 %v1835, %v2727
  %v2884 = vsub.f32 %v1840, %v2730
  %v2885 = vsub.f32 %v1845, %v2733
  %v2886 = vsub.f32 %v1850, %v2736
  %v2887 = vsub.f32 %v1855, %v2739
  %v2888 = vsub.f32 %v1860, %v2742
  %v2889 = vsub.f32 %v1865, %v2745
  %v2890 = vsub.f32 %v1991, %v2748
  %v2891 = vsub.f32 %v1996, %v2751
  %v2892 = vsub.f32 %v2001, %v2754
  %v2893 = vsub.f32 %v2006, %v2757
  %v2894 = vsub.f32 %v2011, %v2760
  %v2895 = vsub.f32 %v2016, %v2763
  %v2896 = vsub.f32 %v2021, %v2766
  %v2897 = vsub.f32 %v2026, %v2769
  %v2898 = vsub.f32 %v2152, %v2772
  %v2899 = vsub.f32 %v2157, %v2775
  %v2900 = vsub.f32 %v2162, %v2778
  %v2901 = vsub.f32 %v2167, %v2781
  %v2902 = vsub.f32 %v2172, %v2784
  %v2903 = vsub.f32 %v2177, %v2787
  %v2904 = vsub.f32 %v2182, %v2790
  %v2905 = vsub.f32 %v2187, %v2793
  %v2906 = vsub.f32 %v2313, %v2796
  %v2907 = vsub.f32 %v2318, %v2799
  %v2908 = vsub.f32 %v2323, %v2802
  %v2909 = vsub.f32 %v2328, %v2805
  %v2910 = vsub.f32 %v2333, %v2808
  %v2911 = vsub.f32 %v2338, %v2811
  %v2912 = vsub.f32 %v2343, %v2814
  %v2913 = vsub.f32 %v2348, %v2817
  %v2914 = vsub.f32 %v2474, %v2820
  %v2915 = vsub.f32 %v2479, %v2823
  %v2916 = vsub.f32 %v2484, %v2826
  %v2917 = vsub.f32 %v2489, %v2829
  %v2918 = vsub.f32 %v2494, %v2832
  %v2919 = vsub.f32 %v2499, %v2835
  %v2920 = vsub.f32 %v2504, %v2838
  %v2921 = vsub.f32 %v2509, %v2841
  %v2922 = vsub.f32 %v2635, %v2844
  %v2923 = vsub.f32 %v2640, %v2847
  %v2924 = vsub.f32 %v2645, %v2850
  %v2925 = vsub.f32 %v2650, %v2853
  %v2926 = vsub.f32 %v2655, %v2856
  %v2927 = vsub.f32 %v2660, %v2859
  %v2928 = vsub.f32 %v2665, %v2862
  %v2929 = vsub.f32 %v2670, %v2865
  %v2930 = vmul.f32 %v2866, 1.442695
  %v2931 = vpow.pop %v2930
  %v2932 = vmul.f32 %v2867, 1.442695
  %v2933 = vpow.pop %v2932
  %v2934 = vmul.f32 %v2868, 1.442695
  %v2935 = vpow.pop %v2934
  %v2936 = vmul.f32 %v2869, 1.442695
  %v2937 = vpow.pop %v2936
  %v2938 = vmul.f32 %v2870, 1.442695
  %v2939 = vpow.pop %v2938
  %v2940 = vmul.f32 %v2871, 1.442695
  %v2941 = vpow.pop %v2940
  %v2942 = vmul.f32 %v2872, 1.442695
  %v2943 = vpow.pop %v2942
  %v2944 = vmul.f32 %v2873, 1.442695
  %v2945 = vpow.pop %v2944
  %v2946 = vmul.f32 %v2874, 1.442695
  %v2947 = vpow.pop %v2946
  %v2948 = vmul.f32 %v2875, 1.442695
  %v2949 = vpow.pop %v2948
  %v2950 = vmul.f32 %v2876, 1.442695
  %v2951 = vpow.pop %v2950
  %v2952 = vmul.f32 %v2877, 1.442695
  %v2953 = vpow.pop %v2952
  %v2954 = vmul.f32 %v2878, 1.442695
  %v2955 = vpow.pop %v2954
  %v2956 = vmul.f32 %v2879, 1.442695
  %v2957 = vpow.pop %v2956
  %v2958 = vmul.f32 %v2880, 1.442695
  %v2959 = vpow.pop %v2958
  %v2960 = vmul.f32 %v2881, 1.442695
  %v2961 = vpow.pop %v2960
  %v2962 = vmul.f32 %v2882, 1.442695
  %v2963 = vpow.pop %v2962
  %v2964 = vmul.f32 %v2883, 1.442695
  %v2965 = vpow.pop %v2964
  %v2966 = vmul.f32 %v2884, 1.442695
  %v2967 = vpow.pop %v2966
  %v2968 = vmul.f32 %v2885, 1.442695
  %v2969 = vpow.pop %v2968
  %v2970 = vmul.f32 %v2886, 1.442695
  %v2971 = vpow.pop %v2970
  %v2972 = vmul.f32 %v2887, 1.442695
  %v2973 = vpow.pop %v2972
  %v2974 = vmul.f32 %v2888, 1.442695
  %v2975 = vpow.pop %v2974
  %v2976 = vmul.f32 %v2889, 1.442695
  %v2977 = vpow.pop %v2976
  %v2978 = vmul.f32 %v2890, 1.442695
  %v2979 = vpow.pop %v2978
  %v2980 = vmul.f32 %v2891, 1.442695
  %v2981 = vpow.pop %v2980
  %v2982 = vmul.f32 %v2892, 1.442695
  %v2983 = vpow.pop %v2982
  %v2984 = vmul.f32 %v2893, 1.442695
  %v2985 = vpow.pop %v2984
  %v2986 = vmul.f32 %v2894, 1.442695
  %v2987 = vpow.pop %v2986
  %v2988 = vmul.f32 %v2895, 1.442695
  %v2989 = vpow.pop %v2988
  %v2990 = vmul.f32 %v2896, 1.442695
  %v2991 = vpow.pop %v2990
  %v2992 = vmul.f32 %v2897, 1.442695
  %v2993 = vpow.pop %v2992
  %v2994 = vmul.f32 %v2898, 1.442695
  %v2995 = vpow.pop %v2994
  %v2996 = vmul.f32 %v2899, 1.442695
  %v2997 = vpow.pop %v2996
  %v2998 = vmul.f32 %v2900, 1.442695
  %v2999 = vpow.pop %v2998
  %v3000 = vmul.f32 %v2901, 1.442695
  %v3001 = vpow.pop %v3000
  %v3002 = vmul.f32 %v2902, 1.442695
  %v3003 = vpow.pop %v3002
  %v3004 = vmul.f32 %v2903, 1.442695
  %v3005 = vpow.pop %v3004
  %v3006 = vmul.f32 %v2904, 1.442695
  %v3007 = vpow.pop %v3006
  %v3008 = vmul.f32 %v2905, 1.442695
  %v3009 = vpow.pop %v3008
  %v3010 = vmul.f32 %v2906, 1.442695
  %v3011 = vpow.pop %v3010
  %v3012 = vmul.f32 %v2907, 1.442695
  %v3013 = vpow.pop %v3012
  %v3014 = vmul.f32 %v2908, 1.442695
  %v3015 = vpow.pop %v3014
  %v3016 = vmul.f32 %v2909, 1.442695
  %v3017 = vpow.pop %v3016
  %v3018 = vmul.f32 %v2910, 1.442695
  %v3019 = vpow.pop %v3018
  %v3020 = vmul.f32 %v2911, 1.442695
  %v3021 = vpow.pop %v3020
  %v3022 = vmul.f32 %v2912, 1.442695
  %v3023 = vpow.pop %v3022
  %v3024 = vmul.f32 %v2913, 1.442695
  %v3025 = vpow.pop %v3024
  %v3026 = vmul.f32 %v2914, 1.442695
  %v3027 = vpow.pop %v3026
  %v3028 = vmul.f32 %v2915, 1.442695
  %v3029 = vpow.pop %v3028
  %v3030 = vmul.f32 %v2916, 1.442695
  %v3031 = vpow.pop %v3030
  %v3032 = vmul.f32 %v2917, 1.442695
  %v3033 = vpow.pop %v3032
  %v3034 = vmul.f32 %v2918, 1.442695
  %v3035 = vpow.pop %v3034
  %v3036 = vmul.f32 %v2919, 1.442695
  %v3037 = vpow.pop %v3036
  %v3038 = vmul.f32 %v2920, 1.442695
  %v3039 = vpow.pop %v3038
  %v3040 = vmul.f32 %v2921, 1.442695
  %v3041 = vpow.pop %v3040
  %v3042 = vmul.f32 %v2922, 1.442695
  %v3043 = vpow.pop %v3042
  %v3044 = vmul.f32 %v2923, 1.442695
  %v3045 = vpow.pop %v3044
  %v3046 = vmul.f32 %v2924, 1.442695
  %v3047 = vpow.pop %v3046
  %v3048 = vmul.f32 %v2925, 1.442695
  %v3049 = vpow.pop %v3048
  %v3050 = vmul.f32 %v2926, 1.442695
  %v3051 = vpow.pop %v3050
  %v3052 = vmul.f32 %v2927, 1.442695
  %v3053 = vpow.pop %v3052
  %v3054 = vmul.f32 %v2928, 1.442695
  %v3055 = vpow.pop %v3054
  %v3056 = vmul.f32 %v2929, 1.442695
  %v3057 = vpow.pop %v3056
  %3058 = vrot.lane.b32.xlu0 %v1320, 96
  %v3059 = vpop.permute.xlu0 %3058
  %3060 = vrot.lane.b32.xlu0 %v1321, 96
  %v3061 = vpop.permute.xlu0 %3060
  %3062 = vrot.lane.b32.xlu0 %v1322, 96
  %v3063 = vpop.permute.xlu0 %3062
  %3064 = vrot.lane.b32.xlu0 %v1323, 96
  %v3065 = vpop.permute.xlu0 %3064
  %3066 = vrot.lane.b32.xlu0 %v1324, 96
  %v3067 = vpop.permute.xlu0 %3066
  %3068 = vrot.lane.b32.xlu0 %v1325, 96
  %v3069 = vpop.permute.xlu0 %3068
  %3070 = vrot.lane.b32.xlu0 %v1326, 96
  %v3071 = vpop.permute.xlu0 %3070
  %3072 = vrot.lane.b32.xlu0 %v1327, 96
  %v3073 = vpop.permute.xlu0 %3072
  %v3083 = vsel %vm2673, %v2931, 0
  %v3086 = vsel %vm2673, %v2933, 0
  %v3089 = vsel %vm2673, %v2935, 0
  %v3092 = vsel %vm2673, %v2937, 0
  %v3095 = vsel %vm2673, %v2939, 0
  %v3098 = vsel %vm2673, %v2941, 0
  %v3101 = vsel %vm2673, %v2943, 0
  %v3104 = vsel %vm2673, %v2945, 0
  %3106 = vmatprep.subr.mxu0 0.0
  %3107 = vmatpush1.msra.mxu0 %v3059
  %3108 = vmatprep.subr.mxu0 0.0
  %3109 = vmatpush1.msra.mxu0 %v3061
  %3110 = vmatprep.subr.mxu0 0.0
  %3111 = vmatpush1.msra.mxu0 %v3063
  %3112 = vmatprep.subr.mxu0 0.0
  %3113 = vmatpush1.msra.mxu0 %v3065
  %3114 = vmatprep.subr.mxu0 0.0
  %3115 = vmatpush1.msra.mxu0 %v3067
  %3116 = vmatprep.subr.mxu0 0.0
  %3117 = vmatpush1.msra.mxu0 %v3069
  %3118 = vmatprep.subr.mxu0 0.0
  %3119 = vmatpush1.msra.mxu0 %v3071
  %3120 = vmatprep.subr.mxu0 0.0
  %3121 = vmatpush1.msra.mxu0 %v3073
  %3122 = vmatprep.subr.mxu0 0.0
  %3123 = vmatpush1.msra.mxu0 0.0
  %3124 = vmatprep.subr.mxu0 0.0
  %3125 = vmatpush1.msra.mxu0 0.0
  %3126 = vmatprep.subr.mxu0 0.0
  %3127 = vmatpush1.msra.mxu0 0.0
  %3128 = vmatprep.subr.mxu0 0.0
  %3129 = vmatpush1.msra.mxu0 0.0
  %3130 = vmatprep.subr.mxu0 0.0
  %3131 = vmatpush1.msra.mxu0 0.0
  %3132 = vmatprep.subr.mxu0 0.0
  %3133 = vmatpush1.msra.mxu0 0.0
  %3134 = vmatprep.subr.mxu0 0.0
  %3135 = vmatpush1.msra.mxu0 0.0
  %3136 = vmatprep.subr.mxu0 0.0
  %3137 = vmatpush1.msra.mxu0 0.0
  %3138 = vmatprep.subr.mxu0 0.0
  %3139 = vmatpush1.msra.mxu0 0.0
  %3140 = vmatprep.subr.mxu0 0.0
  %3141 = vmatpush1.msra.mxu0 0.0
  %3142 = vmatprep.subr.mxu0 0.0
  %3143 = vmatpush1.msra.mxu0 0.0
  %3144 = vmatprep.subr.mxu0 0.0
  %3145 = vmatpush1.msra.mxu0 0.0
  %3146 = vmatprep.subr.mxu0 0.0
  %3147 = vmatpush1.msra.mxu0 0.0
  %3148 = vmatprep.subr.mxu0 0.0
  %3149 = vmatpush1.msra.mxu0 0.0
  %3150 = vmatprep.subr.mxu0 0.0
  %3151 = vmatpush1.msra.mxu0 0.0
  %3152 = vmatprep.subr.mxu0 0.0
  %3153 = vmatpush1.msra.mxu0 0.0
  %3154 = vmatprep.subr.mxu0 0.0
  %3155 = vmatpush1.msra.mxu0 0.0
  %3156 = vmatprep.subr.mxu0 0.0
  %3157 = vmatpush1.msra.mxu0 0.0
  %3158 = vmatprep.subr.mxu0 0.0
  %3159 = vmatpush1.msra.mxu0 0.0
  %3160 = vmatprep.subr.mxu0 0.0
  %3161 = vmatpush1.msra.mxu0 0.0
  %3162 = vmatprep.subr.mxu0 0.0
  %3163 = vmatpush1.msra.mxu0 0.0
  %3164 = vmatprep.subr.mxu0 0.0
  %3165 = vmatpush1.msra.mxu0 0.0
  %3166 = vmatprep.subr.mxu0 0.0
  %3167 = vmatpush1.msra.mxu0 0.0
  %3168 = vmatprep.subr.mxu0 0.0
  %3169 = vmatpush1.msra.mxu0 0.0
  %3170 = vmatprep.mubr.f32.mxu0 0.0
  %3171 = vmatmul.mubr.f32.gmra.mrb[0].mxu0 %v3083
  %v3172 = vpop.f32.mrb[0].mxu0
  %v3173 = vadd.f32 0.0, %v3172
  %v3174 = vpop.f32.mrb[0].mxu0
  %3175 = vmatprep.mubr.f32.mxu0 0.0
  %3176 = vmatmul.mubr.f32.gmra.mrb[0].mxu0 %v3086
  %v3177 = vpop.f32.mrb[0].mxu0
  %v3178 = vadd.f32 0.0, %v3177
  %v3179 = vpop.f32.mrb[0].mxu0
  %3180 = vmatprep.mubr.f32.mxu0 0.0
  %3181 = vmatmul.mubr.f32.gmra.mrb[0].mxu0 %v3089
  %v3182 = vpop.f32.mrb[0].mxu0
  %v3183 = vadd.f32 0.0, %v3182
  %v3184 = vpop.f32.mrb[0].mxu0
  %3185 = vmatprep.mubr.f32.mxu0 0.0
  %3186 = vmatmul.mubr.f32.gmra.mrb[0].mxu0 %v3092
  %v3187 = vpop.f32.mrb[0].mxu0
  %v3188 = vadd.f32 0.0, %v3187
  %v3189 = vpop.f32.mrb[0].mxu0
  %3190 = vmatprep.mubr.f32.mxu0 0.0
  %3191 = vmatmul.mubr.f32.gmra.mrb[0].mxu0 %v3095
  %v3192 = vpop.f32.mrb[0].mxu0
  %v3193 = vadd.f32 0.0, %v3192
  %v3194 = vpop.f32.mrb[0].mxu0
  %3195 = vmatprep.mubr.f32.mxu0 0.0
  %3196 = vmatmul.mubr.f32.gmra.mrb[0].mxu0 %v3098
  %v3197 = vpop.f32.mrb[0].mxu0
  %v3198 = vadd.f32 0.0, %v3197
  %v3199 = vpop.f32.mrb[0].mxu0
  %3200 = vmatprep.mubr.f32.mxu0 0.0
  %3201 = vmatmul.mubr.f32.gmra.mrb[0].mxu0 %v3101
  %v3202 = vpop.f32.mrb[0].mxu0
  %v3203 = vadd.f32 0.0, %v3202
  %v3204 = vpop.f32.mrb[0].mxu0
  %3205 = vmatprep.mubr.f32.mxu0 0.0
  %3206 = vmatmul.mubr.f32.gmra.mrb[0].mxu0 %v3104
  %v3207 = vpop.f32.mrb[0].mxu0
  %v3208 = vadd.f32 0.0, %v3207
  %v3209 = vpop.f32.mrb[0].mxu0
  %3210 = vdwg.mxu0
  %3211 = vrot.lane.b32.xlu0 %v1328, 96
  %v3212 = vpop.permute.xlu0 %3211
  %3213 = vrot.lane.b32.xlu0 %v1329, 96
  %v3214 = vpop.permute.xlu0 %3213
  %3215 = vrot.lane.b32.xlu0 %v1330, 96
  %v3216 = vpop.permute.xlu0 %3215
  %3217 = vrot.lane.b32.xlu0 %v1331, 96
  %v3218 = vpop.permute.xlu0 %3217
  %3219 = vrot.lane.b32.xlu0 %v1332, 96
  %v3220 = vpop.permute.xlu0 %3219
  %3221 = vrot.lane.b32.xlu0 %v1333, 96
  %v3222 = vpop.permute.xlu0 %3221
  %3223 = vrot.lane.b32.xlu0 %v1334, 96
  %v3224 = vpop.permute.xlu0 %3223
  %3225 = vrot.lane.b32.xlu0 %v1335, 96
  %v3226 = vpop.permute.xlu0 %3225
  %v3236 = vsel %vm2673, %v2947, 0
  %v3239 = vsel %vm2673, %v2949, 0
  %v3242 = vsel %vm2673, %v2951, 0
  %v3245 = vsel %vm2673, %v2953, 0
  %v3248 = vsel %vm2673, %v2955, 0
  %v3251 = vsel %vm2673, %v2957, 0
  %v3254 = vsel %vm2673, %v2959, 0
  %v3257 = vsel %vm2673, %v2961, 0
  %3259 = vmatprep.subr.mxu0 0.0
  %3260 = vmatpush1.msra.mxu0 %v3212
  %3261 = vmatprep.subr.mxu0 0.0
  %3262 = vmatpush1.msra.mxu0 %v3214
  %3263 = vmatprep.subr.mxu0 0.0
  %3264 = vmatpush1.msra.mxu0 %v3216
  %3265 = vmatprep.subr.mxu0 0.0
  %3266 = vmatpush1.msra.mxu0 %v3218
  %3267 = vmatprep.subr.mxu0 0.0
  %3268 = vmatpush1.msra.mxu0 %v3220
  %3269 = vmatprep.subr.mxu0 0.0
  %3270 = vmatpush1.msra.mxu0 %v3222
  %3271 = vmatprep.subr.mxu0 0.0
  %3272 = vmatpush1.msra.mxu0 %v3224
  %3273 = vmatprep.subr.mxu0 0.0
  %3274 = vmatpush1.msra.mxu0 %v3226
  %3275 = vmatprep.subr.mxu0 0.0
  %3276 = vmatpush1.msra.mxu0 0.0
  %3277 = vmatprep.subr.mxu0 0.0
  %3278 = vmatpush1.msra.mxu0 0.0
  %3279 = vmatprep.subr.mxu0 0.0
  %3280 = vmatpush1.msra.mxu0 0.0
  %3281 = vmatprep.subr.mxu0 0.0
  %3282 = vmatpush1.msra.mxu0 0.0
  %3283 = vmatprep.subr.mxu0 0.0
  %3284 = vmatpush1.msra.mxu0 0.0
  %3285 = vmatprep.subr.mxu0 0.0
  %3286 = vmatpush1.msra.mxu0 0.0
  %3287 = vmatprep.subr.mxu0 0.0
  %3288 = vmatpush1.msra.mxu0 0.0
  %3289 = vmatprep.subr.mxu0 0.0
  %3290 = vmatpush1.msra.mxu0 0.0
  %3291 = vmatprep.subr.mxu0 0.0
  %3292 = vmatpush1.msra.mxu0 0.0
  %3293 = vmatprep.subr.mxu0 0.0
  %3294 = vmatpush1.msra.mxu0 0.0
  %3295 = vmatprep.subr.mxu0 0.0
  %3296 = vmatpush1.msra.mxu0 0.0
  %3297 = vmatprep.subr.mxu0 0.0
  %3298 = vmatpush1.msra.mxu0 0.0
  %3299 = vmatprep.subr.mxu0 0.0
  %3300 = vmatpush1.msra.mxu0 0.0
  %3301 = vmatprep.subr.mxu0 0.0
  %3302 = vmatpush1.msra.mxu0 0.0
  %3303 = vmatprep.subr.mxu0 0.0
  %3304 = vmatpush1.msra.mxu0 0.0
  %3305 = vmatprep.subr.mxu0 0.0
  %3306 = vmatpush1.msra.mxu0 0.0
  %3307 = vmatprep.subr.mxu0 0.0
  %3308 = vmatpush1.msra.mxu0 0.0
  %3309 = vmatprep.subr.mxu0 0.0
  %3310 = vmatpush1.msra.mxu0 0.0
  %3311 = vmatprep.subr.mxu0 0.0
  %3312 = vmatpush1.msra.mxu0 0.0
  %3313 = vmatprep.subr.mxu0 0.0
  %3314 = vmatpush1.msra.mxu0 0.0
  %3315 = vmatprep.subr.mxu0 0.0
  %3316 = vmatpush1.msra.mxu0 0.0
  %3317 = vmatprep.subr.mxu0 0.0
  %3318 = vmatpush1.msra.mxu0 0.0
  %3319 = vmatprep.subr.mxu0 0.0
  %3320 = vmatpush1.msra.mxu0 0.0
  %3321 = vmatprep.subr.mxu0 0.0
  %3322 = vmatpush1.msra.mxu0 0.0
  %3323 = vmatprep.mubr.f32.mxu0 0.0
  %3324 = vmatmul.mubr.f32.gmra.mrb[0].mxu0 %v3236
  %v3325 = vpop.f32.mrb[0].mxu0
  %v3326 = vadd.f32 0.0, %v3325
  %v3327 = vpop.f32.mrb[0].mxu0
  %3328 = vmatprep.mubr.f32.mxu0 0.0
  %3329 = vmatmul.mubr.f32.gmra.mrb[0].mxu0 %v3239
  %v3330 = vpop.f32.mrb[0].mxu0
  %v3331 = vadd.f32 0.0, %v3330
  %v3332 = vpop.f32.mrb[0].mxu0
  %3333 = vmatprep.mubr.f32.mxu0 0.0
  %3334 = vmatmul.mubr.f32.gmra.mrb[0].mxu0 %v3242
  %v3335 = vpop.f32.mrb[0].mxu0
  %v3336 = vadd.f32 0.0, %v3335
  %v3337 = vpop.f32.mrb[0].mxu0
  %3338 = vmatprep.mubr.f32.mxu0 0.0
  %3339 = vmatmul.mubr.f32.gmra.mrb[0].mxu0 %v3245
  %v3340 = vpop.f32.mrb[0].mxu0
  %v3341 = vadd.f32 0.0, %v3340
  %v3342 = vpop.f32.mrb[0].mxu0
  %3343 = vmatprep.mubr.f32.mxu0 0.0
  %3344 = vmatmul.mubr.f32.gmra.mrb[0].mxu0 %v3248
  %v3345 = vpop.f32.mrb[0].mxu0
  %v3346 = vadd.f32 0.0, %v3345
  %v3347 = vpop.f32.mrb[0].mxu0
  %3348 = vmatprep.mubr.f32.mxu0 0.0
  %3349 = vmatmul.mubr.f32.gmra.mrb[0].mxu0 %v3251
  %v3350 = vpop.f32.mrb[0].mxu0
  %v3351 = vadd.f32 0.0, %v3350
  %v3352 = vpop.f32.mrb[0].mxu0
  %3353 = vmatprep.mubr.f32.mxu0 0.0
  %3354 = vmatmul.mubr.f32.gmra.mrb[0].mxu0 %v3254
  %v3355 = vpop.f32.mrb[0].mxu0
  %v3356 = vadd.f32 0.0, %v3355
  %v3357 = vpop.f32.mrb[0].mxu0
  %3358 = vmatprep.mubr.f32.mxu0 0.0
  %3359 = vmatmul.mubr.f32.gmra.mrb[0].mxu0 %v3257
  %v3360 = vpop.f32.mrb[0].mxu0
  %v3361 = vadd.f32 0.0, %v3360
  %v3362 = vpop.f32.mrb[0].mxu0
  %3363 = vdwg.mxu0
  %3364 = vrot.lane.b32.xlu0 %v1336, 96
  %v3365 = vpop.permute.xlu0 %3364
  %3366 = vrot.lane.b32.xlu0 %v1337, 96
  %v3367 = vpop.permute.xlu0 %3366
  %3368 = vrot.lane.b32.xlu0 %v1338, 96
  %v3369 = vpop.permute.xlu0 %3368
  %3370 = vrot.lane.b32.xlu0 %v1339, 96
  %v3371 = vpop.permute.xlu0 %3370
  %3372 = vrot.lane.b32.xlu0 %v1340, 96
  %v3373 = vpop.permute.xlu0 %3372
  %3374 = vrot.lane.b32.xlu0 %v1341, 96
  %v3375 = vpop.permute.xlu0 %3374
  %3376 = vrot.lane.b32.xlu0 %v1342, 96
  %v3377 = vpop.permute.xlu0 %3376
  %3378 = vrot.lane.b32.xlu0 %v1343, 96
  %v3379 = vpop.permute.xlu0 %3378
  %v3389 = vsel %vm2673, %v2963, 0
  %v3392 = vsel %vm2673, %v2965, 0
  %v3395 = vsel %vm2673, %v2967, 0
  %v3398 = vsel %vm2673, %v2969, 0
  %v3401 = vsel %vm2673, %v2971, 0
  %v3404 = vsel %vm2673, %v2973, 0
  %v3407 = vsel %vm2673, %v2975, 0
  %v3410 = vsel %vm2673, %v2977, 0
  %3412 = vmatprep.subr.mxu0 0.0
  %3413 = vmatpush1.msra.mxu0 %v3365
  %3414 = vmatprep.subr.mxu0 0.0
  %3415 = vmatpush1.msra.mxu0 %v3367
  %3416 = vmatprep.subr.mxu0 0.0
  %3417 = vmatpush1.msra.mxu0 %v3369
  %3418 = vmatprep.subr.mxu0 0.0
  %3419 = vmatpush1.msra.mxu0 %v3371
  %3420 = vmatprep.subr.mxu0 0.0
  %3421 = vmatpush1.msra.mxu0 %v3373
  %3422 = vmatprep.subr.mxu0 0.0
  %3423 = vmatpush1.msra.mxu0 %v3375
  %3424 = vmatprep.subr.mxu0 0.0
  %3425 = vmatpush1.msra.mxu0 %v3377
  %3426 = vmatprep.subr.mxu0 0.0
  %3427 = vmatpush1.msra.mxu0 %v3379
  %3428 = vmatprep.subr.mxu0 0.0
  %3429 = vmatpush1.msra.mxu0 0.0
  %3430 = vmatprep.subr.mxu0 0.0
  %3431 = vmatpush1.msra.mxu0 0.0
  %3432 = vmatprep.subr.mxu0 0.0
  %3433 = vmatpush1.msra.mxu0 0.0
  %3434 = vmatprep.subr.mxu0 0.0
  %3435 = vmatpush1.msra.mxu0 0.0
  %3436 = vmatprep.subr.mxu0 0.0
  %3437 = vmatpush1.msra.mxu0 0.0
  %3438 = vmatprep.subr.mxu0 0.0
  %3439 = vmatpush1.msra.mxu0 0.0
  %3440 = vmatprep.subr.mxu0 0.0
  %3441 = vmatpush1.msra.mxu0 0.0
  %3442 = vmatprep.subr.mxu0 0.0
  %3443 = vmatpush1.msra.mxu0 0.0
  %3444 = vmatprep.subr.mxu0 0.0
  %3445 = vmatpush1.msra.mxu0 0.0
  %3446 = vmatprep.subr.mxu0 0.0
  %3447 = vmatpush1.msra.mxu0 0.0
  %3448 = vmatprep.subr.mxu0 0.0
  %3449 = vmatpush1.msra.mxu0 0.0
  %3450 = vmatprep.subr.mxu0 0.0
  %3451 = vmatpush1.msra.mxu0 0.0
  %3452 = vmatprep.subr.mxu0 0.0
  %3453 = vmatpush1.msra.mxu0 0.0
  %3454 = vmatprep.subr.mxu0 0.0
  %3455 = vmatpush1.msra.mxu0 0.0
  %3456 = vmatprep.subr.mxu0 0.0
  %3457 = vmatpush1.msra.mxu0 0.0
  %3458 = vmatprep.subr.mxu0 0.0
  %3459 = vmatpush1.msra.mxu0 0.0
  %3460 = vmatprep.subr.mxu0 0.0
  %3461 = vmatpush1.msra.mxu0 0.0
  %3462 = vmatprep.subr.mxu0 0.0
  %3463 = vmatpush1.msra.mxu0 0.0
  %3464 = vmatprep.subr.mxu0 0.0
  %3465 = vmatpush1.msra.mxu0 0.0
  %3466 = vmatprep.subr.mxu0 0.0
  %3467 = vmatpush1.msra.mxu0 0.0
  %3468 = vmatprep.subr.mxu0 0.0
  %3469 = vmatpush1.msra.mxu0 0.0
  %3470 = vmatprep.subr.mxu0 0.0
  %3471 = vmatpush1.msra.mxu0 0.0
  %3472 = vmatprep.subr.mxu0 0.0
  %3473 = vmatpush1.msra.mxu0 0.0
  %3474 = vmatprep.subr.mxu0 0.0
  %3475 = vmatpush1.msra.mxu0 0.0
  %3476 = vmatprep.mubr.f32.mxu0 0.0
  %3477 = vmatmul.mubr.f32.gmra.mrb[0].mxu0 %v3389
  %v3478 = vpop.f32.mrb[0].mxu0
  %v3479 = vadd.f32 0.0, %v3478
  %v3480 = vpop.f32.mrb[0].mxu0
  %3481 = vmatprep.mubr.f32.mxu0 0.0
  %3482 = vmatmul.mubr.f32.gmra.mrb[0].mxu0 %v3392
  %v3483 = vpop.f32.mrb[0].mxu0
  %v3484 = vadd.f32 0.0, %v3483
  %v3485 = vpop.f32.mrb[0].mxu0
  %3486 = vmatprep.mubr.f32.mxu0 0.0
  %3487 = vmatmul.mubr.f32.gmra.mrb[0].mxu0 %v3395
  %v3488 = vpop.f32.mrb[0].mxu0
  %v3489 = vadd.f32 0.0, %v3488
  %v3490 = vpop.f32.mrb[0].mxu0
  %3491 = vmatprep.mubr.f32.mxu0 0.0
  %3492 = vmatmul.mubr.f32.gmra.mrb[0].mxu0 %v3398
  %v3493 = vpop.f32.mrb[0].mxu0
  %v3494 = vadd.f32 0.0, %v3493
  %v3495 = vpop.f32.mrb[0].mxu0
  %3496 = vmatprep.mubr.f32.mxu0 0.0
  %3497 = vmatmul.mubr.f32.gmra.mrb[0].mxu0 %v3401
  %v3498 = vpop.f32.mrb[0].mxu0
  %v3499 = vadd.f32 0.0, %v3498
  %v3500 = vpop.f32.mrb[0].mxu0
  %3501 = vmatprep.mubr.f32.mxu0 0.0
  %3502 = vmatmul.mubr.f32.gmra.mrb[0].mxu0 %v3404
  %v3503 = vpop.f32.mrb[0].mxu0
  %v3504 = vadd.f32 0.0, %v3503
  %v3505 = vpop.f32.mrb[0].mxu0
  %3506 = vmatprep.mubr.f32.mxu0 0.0
  %3507 = vmatmul.mubr.f32.gmra.mrb[0].mxu0 %v3407
  %v3508 = vpop.f32.mrb[0].mxu0
  %v3509 = vadd.f32 0.0, %v3508
  %v3510 = vpop.f32.mrb[0].mxu0
  %3511 = vmatprep.mubr.f32.mxu0 0.0
  %3512 = vmatmul.mubr.f32.gmra.mrb[0].mxu0 %v3410
  %v3513 = vpop.f32.mrb[0].mxu0
  %v3514 = vadd.f32 0.0, %v3513
  %v3515 = vpop.f32.mrb[0].mxu0
  %3516 = vdwg.mxu0
  %3517 = vrot.lane.b32.xlu0 %v1344, 96
  %v3518 = vpop.permute.xlu0 %3517
  %3519 = vrot.lane.b32.xlu0 %v1345, 96
  %v3520 = vpop.permute.xlu0 %3519
  %3521 = vrot.lane.b32.xlu0 %v1346, 96
  %v3522 = vpop.permute.xlu0 %3521
  %3523 = vrot.lane.b32.xlu0 %v1347, 96
  %v3524 = vpop.permute.xlu0 %3523
  %3525 = vrot.lane.b32.xlu0 %v1348, 96
  %v3526 = vpop.permute.xlu0 %3525
  %3527 = vrot.lane.b32.xlu0 %v1349, 96
  %v3528 = vpop.permute.xlu0 %3527
  %3529 = vrot.lane.b32.xlu0 %v1350, 96
  %v3530 = vpop.permute.xlu0 %3529
  %3531 = vrot.lane.b32.xlu0 %v1351, 96
  %v3532 = vpop.permute.xlu0 %3531
  %v3542 = vsel %vm2673, %v2979, 0
  %v3545 = vsel %vm2673, %v2981, 0
  %v3548 = vsel %vm2673, %v2983, 0
  %v3551 = vsel %vm2673, %v2985, 0
  %v3554 = vsel %vm2673, %v2987, 0
  %v3557 = vsel %vm2673, %v2989, 0
  %v3560 = vsel %vm2673, %v2991, 0
  %v3563 = vsel %vm2673, %v2993, 0
  %3565 = vmatprep.subr.mxu0 0.0
  %3566 = vmatpush1.msra.mxu0 %v3518
  %3567 = vmatprep.subr.mxu0 0.0
  %3568 = vmatpush1.msra.mxu0 %v3520
  %3569 = vmatprep.subr.mxu0 0.0
  %3570 = vmatpush1.msra.mxu0 %v3522
  %3571 = vmatprep.subr.mxu0 0.0
  %3572 = vmatpush1.msra.mxu0 %v3524
  %3573 = vmatprep.subr.mxu0 0.0
  %3574 = vmatpush1.msra.mxu0 %v3526
  %3575 = vmatprep.subr.mxu0 0.0
  %3576 = vmatpush1.msra.mxu0 %v3528
  %3577 = vmatprep.subr.mxu0 0.0
  %3578 = vmatpush1.msra.mxu0 %v3530
  %3579 = vmatprep.subr.mxu0 0.0
  %3580 = vmatpush1.msra.mxu0 %v3532
  %3581 = vmatprep.subr.mxu0 0.0
  %3582 = vmatpush1.msra.mxu0 0.0
  %3583 = vmatprep.subr.mxu0 0.0
  %3584 = vmatpush1.msra.mxu0 0.0
  %3585 = vmatprep.subr.mxu0 0.0
  %3586 = vmatpush1.msra.mxu0 0.0
  %3587 = vmatprep.subr.mxu0 0.0
  %3588 = vmatpush1.msra.mxu0 0.0
  %3589 = vmatprep.subr.mxu0 0.0
  %3590 = vmatpush1.msra.mxu0 0.0
  %3591 = vmatprep.subr.mxu0 0.0
  %3592 = vmatpush1.msra.mxu0 0.0
  %3593 = vmatprep.subr.mxu0 0.0
  %3594 = vmatpush1.msra.mxu0 0.0
  %3595 = vmatprep.subr.mxu0 0.0
  %3596 = vmatpush1.msra.mxu0 0.0
  %3597 = vmatprep.subr.mxu0 0.0
  %3598 = vmatpush1.msra.mxu0 0.0
  %3599 = vmatprep.subr.mxu0 0.0
  %3600 = vmatpush1.msra.mxu0 0.0
  %3601 = vmatprep.subr.mxu0 0.0
  %3602 = vmatpush1.msra.mxu0 0.0
  %3603 = vmatprep.subr.mxu0 0.0
  %3604 = vmatpush1.msra.mxu0 0.0
  %3605 = vmatprep.subr.mxu0 0.0
  %3606 = vmatpush1.msra.mxu0 0.0
  %3607 = vmatprep.subr.mxu0 0.0
  %3608 = vmatpush1.msra.mxu0 0.0
  %3609 = vmatprep.subr.mxu0 0.0
  %3610 = vmatpush1.msra.mxu0 0.0
  %3611 = vmatprep.subr.mxu0 0.0
  %3612 = vmatpush1.msra.mxu0 0.0
  %3613 = vmatprep.subr.mxu0 0.0
  %3614 = vmatpush1.msra.mxu0 0.0
  %3615 = vmatprep.subr.mxu0 0.0
  %3616 = vmatpush1.msra.mxu0 0.0
  %3617 = vmatprep.subr.mxu0 0.0
  %3618 = vmatpush1.msra.mxu0 0.0
  %3619 = vmatprep.subr.mxu0 0.0
  %3620 = vmatpush1.msra.mxu0 0.0
  %3621 = vmatprep.subr.mxu0 0.0
  %3622 = vmatpush1.msra.mxu0 0.0
  %3623 = vmatprep.subr.mxu0 0.0
  %3624 = vmatpush1.msra.mxu0 0.0
  %3625 = vmatprep.subr.mxu0 0.0
  %3626 = vmatpush1.msra.mxu0 0.0
  %3627 = vmatprep.subr.mxu0 0.0
  %3628 = vmatpush1.msra.mxu0 0.0
  %3629 = vmatprep.mubr.f32.mxu0 0.0
  %3630 = vmatmul.mubr.f32.gmra.mrb[0].mxu0 %v3542
  %v3631 = vpop.f32.mrb[0].mxu0
  %v3632 = vadd.f32 0.0, %v3631
  %v3633 = vpop.f32.mrb[0].mxu0
  %3634 = vmatprep.mubr.f32.mxu0 0.0
  %3635 = vmatmul.mubr.f32.gmra.mrb[0].mxu0 %v3545
  %v3636 = vpop.f32.mrb[0].mxu0
  %v3637 = vadd.f32 0.0, %v3636
  %v3638 = vpop.f32.mrb[0].mxu0
  %3639 = vmatprep.mubr.f32.mxu0 0.0
  %3640 = vmatmul.mubr.f32.gmra.mrb[0].mxu0 %v3548
  %v3641 = vpop.f32.mrb[0].mxu0
  %v3642 = vadd.f32 0.0, %v3641
  %v3643 = vpop.f32.mrb[0].mxu0
  %3644 = vmatprep.mubr.f32.mxu0 0.0
  %3645 = vmatmul.mubr.f32.gmra.mrb[0].mxu0 %v3551
  %v3646 = vpop.f32.mrb[0].mxu0
  %v3647 = vadd.f32 0.0, %v3646
  %v3648 = vpop.f32.mrb[0].mxu0
  %3649 = vmatprep.mubr.f32.mxu0 0.0
  %3650 = vmatmul.mubr.f32.gmra.mrb[0].mxu0 %v3554
  %v3651 = vpop.f32.mrb[0].mxu0
  %v3652 = vadd.f32 0.0, %v3651
  %v3653 = vpop.f32.mrb[0].mxu0
  %3654 = vmatprep.mubr.f32.mxu0 0.0
  %3655 = vmatmul.mubr.f32.gmra.mrb[0].mxu0 %v3557
  %v3656 = vpop.f32.mrb[0].mxu0
  %v3657 = vadd.f32 0.0, %v3656
  %v3658 = vpop.f32.mrb[0].mxu0
  %3659 = vmatprep.mubr.f32.mxu0 0.0
  %3660 = vmatmul.mubr.f32.gmra.mrb[0].mxu0 %v3560
  %v3661 = vpop.f32.mrb[0].mxu0
  %v3662 = vadd.f32 0.0, %v3661
  %v3663 = vpop.f32.mrb[0].mxu0
  %3664 = vmatprep.mubr.f32.mxu0 0.0
  %3665 = vmatmul.mubr.f32.gmra.mrb[0].mxu0 %v3563
  %v3666 = vpop.f32.mrb[0].mxu0
  %v3667 = vadd.f32 0.0, %v3666
  %v3668 = vpop.f32.mrb[0].mxu0
  %3669 = vdwg.mxu0
  %3670 = vrot.lane.b32.xlu0 %v1352, 96
  %v3671 = vpop.permute.xlu0 %3670
  %3672 = vrot.lane.b32.xlu0 %v1353, 96
  %v3673 = vpop.permute.xlu0 %3672
  %3674 = vrot.lane.b32.xlu0 %v1354, 96
  %v3675 = vpop.permute.xlu0 %3674
  %3676 = vrot.lane.b32.xlu0 %v1355, 96
  %v3677 = vpop.permute.xlu0 %3676
  %3678 = vrot.lane.b32.xlu0 %v1356, 96
  %v3679 = vpop.permute.xlu0 %3678
  %3680 = vrot.lane.b32.xlu0 %v1357, 96
  %v3681 = vpop.permute.xlu0 %3680
  %3682 = vrot.lane.b32.xlu0 %v1358, 96
  %v3683 = vpop.permute.xlu0 %3682
  %3684 = vrot.lane.b32.xlu0 %v1359, 96
  %v3685 = vpop.permute.xlu0 %3684
  %v3695 = vsel %vm2673, %v2995, 0
  %v3698 = vsel %vm2673, %v2997, 0
  %v3701 = vsel %vm2673, %v2999, 0
  %v3704 = vsel %vm2673, %v3001, 0
  %v3707 = vsel %vm2673, %v3003, 0
  %v3710 = vsel %vm2673, %v3005, 0
  %v3713 = vsel %vm2673, %v3007, 0
  %v3716 = vsel %vm2673, %v3009, 0
  %3718 = vmatprep.subr.mxu0 0.0
  %3719 = vmatpush1.msra.mxu0 %v3671
  %3720 = vmatprep.subr.mxu0 0.0
  %3721 = vmatpush1.msra.mxu0 %v3673
  %3722 = vmatprep.subr.mxu0 0.0
  %3723 = vmatpush1.msra.mxu0 %v3675
  %3724 = vmatprep.subr.mxu0 0.0
  %3725 = vmatpush1.msra.mxu0 %v3677
  %3726 = vmatprep.subr.mxu0 0.0
  %3727 = vmatpush1.msra.mxu0 %v3679
  %3728 = vmatprep.subr.mxu0 0.0
  %3729 = vmatpush1.msra.mxu0 %v3681
  %3730 = vmatprep.subr.mxu0 0.0
  %3731 = vmatpush1.msra.mxu0 %v3683
  %3732 = vmatprep.subr.mxu0 0.0
  %3733 = vmatpush1.msra.mxu0 %v3685
  %3734 = vmatprep.subr.mxu0 0.0
  %3735 = vmatpush1.msra.mxu0 0.0
  %3736 = vmatprep.subr.mxu0 0.0
  %3737 = vmatpush1.msra.mxu0 0.0
  %3738 = vmatprep.subr.mxu0 0.0
  %3739 = vmatpush1.msra.mxu0 0.0
  %3740 = vmatprep.subr.mxu0 0.0
  %3741 = vmatpush1.msra.mxu0 0.0
  %3742 = vmatprep.subr.mxu0 0.0
  %3743 = vmatpush1.msra.mxu0 0.0
  %3744 = vmatprep.subr.mxu0 0.0
  %3745 = vmatpush1.msra.mxu0 0.0
  %3746 = vmatprep.subr.mxu0 0.0
  %3747 = vmatpush1.msra.mxu0 0.0
  %3748 = vmatprep.subr.mxu0 0.0
  %3749 = vmatpush1.msra.mxu0 0.0
  %3750 = vmatprep.subr.mxu0 0.0
  %3751 = vmatpush1.msra.mxu0 0.0
  %3752 = vmatprep.subr.mxu0 0.0
  %3753 = vmatpush1.msra.mxu0 0.0
  %3754 = vmatprep.subr.mxu0 0.0
  %3755 = vmatpush1.msra.mxu0 0.0
  %3756 = vmatprep.subr.mxu0 0.0
  %3757 = vmatpush1.msra.mxu0 0.0
  %3758 = vmatprep.subr.mxu0 0.0
  %3759 = vmatpush1.msra.mxu0 0.0
  %3760 = vmatprep.subr.mxu0 0.0
  %3761 = vmatpush1.msra.mxu0 0.0
  %3762 = vmatprep.subr.mxu0 0.0
  %3763 = vmatpush1.msra.mxu0 0.0
  %3764 = vmatprep.subr.mxu0 0.0
  %3765 = vmatpush1.msra.mxu0 0.0
  %3766 = vmatprep.subr.mxu0 0.0
  %3767 = vmatpush1.msra.mxu0 0.0
  %3768 = vmatprep.subr.mxu0 0.0
  %3769 = vmatpush1.msra.mxu0 0.0
  %3770 = vmatprep.subr.mxu0 0.0
  %3771 = vmatpush1.msra.mxu0 0.0
  %3772 = vmatprep.subr.mxu0 0.0
  %3773 = vmatpush1.msra.mxu0 0.0
  %3774 = vmatprep.subr.mxu0 0.0
  %3775 = vmatpush1.msra.mxu0 0.0
  %3776 = vmatprep.subr.mxu0 0.0
  %3777 = vmatpush1.msra.mxu0 0.0
  %3778 = vmatprep.subr.mxu0 0.0
  %3779 = vmatpush1.msra.mxu0 0.0
  %3780 = vmatprep.subr.mxu0 0.0
  %3781 = vmatpush1.msra.mxu0 0.0
  %3782 = vmatprep.mubr.f32.mxu0 0.0
  %3783 = vmatmul.mubr.f32.gmra.mrb[0].mxu0 %v3695
  %v3784 = vpop.f32.mrb[0].mxu0
  %v3785 = vadd.f32 0.0, %v3784
  %v3786 = vpop.f32.mrb[0].mxu0
  %3787 = vmatprep.mubr.f32.mxu0 0.0
  %3788 = vmatmul.mubr.f32.gmra.mrb[0].mxu0 %v3698
  %v3789 = vpop.f32.mrb[0].mxu0
  %v3790 = vadd.f32 0.0, %v3789
  %v3791 = vpop.f32.mrb[0].mxu0
  %3792 = vmatprep.mubr.f32.mxu0 0.0
  %3793 = vmatmul.mubr.f32.gmra.mrb[0].mxu0 %v3701
  %v3794 = vpop.f32.mrb[0].mxu0
  %v3795 = vadd.f32 0.0, %v3794
  %v3796 = vpop.f32.mrb[0].mxu0
  %3797 = vmatprep.mubr.f32.mxu0 0.0
  %3798 = vmatmul.mubr.f32.gmra.mrb[0].mxu0 %v3704
  %v3799 = vpop.f32.mrb[0].mxu0
  %v3800 = vadd.f32 0.0, %v3799
  %v3801 = vpop.f32.mrb[0].mxu0
  %3802 = vmatprep.mubr.f32.mxu0 0.0
  %3803 = vmatmul.mubr.f32.gmra.mrb[0].mxu0 %v3707
  %v3804 = vpop.f32.mrb[0].mxu0
  %v3805 = vadd.f32 0.0, %v3804
  %v3806 = vpop.f32.mrb[0].mxu0
  %3807 = vmatprep.mubr.f32.mxu0 0.0
  %3808 = vmatmul.mubr.f32.gmra.mrb[0].mxu0 %v3710
  %v3809 = vpop.f32.mrb[0].mxu0
  %v3810 = vadd.f32 0.0, %v3809
  %v3811 = vpop.f32.mrb[0].mxu0
  %3812 = vmatprep.mubr.f32.mxu0 0.0
  %3813 = vmatmul.mubr.f32.gmra.mrb[0].mxu0 %v3713
  %v3814 = vpop.f32.mrb[0].mxu0
  %v3815 = vadd.f32 0.0, %v3814
  %v3816 = vpop.f32.mrb[0].mxu0
  %3817 = vmatprep.mubr.f32.mxu0 0.0
  %3818 = vmatmul.mubr.f32.gmra.mrb[0].mxu0 %v3716
  %v3819 = vpop.f32.mrb[0].mxu0
  %v3820 = vadd.f32 0.0, %v3819
  %v3821 = vpop.f32.mrb[0].mxu0
  %3822 = vdwg.mxu0
  %3823 = vrot.lane.b32.xlu0 %v1360, 96
  %v3824 = vpop.permute.xlu0 %3823
  %3825 = vrot.lane.b32.xlu0 %v1361, 96
  %v3826 = vpop.permute.xlu0 %3825
  %3827 = vrot.lane.b32.xlu0 %v1362, 96
  %v3828 = vpop.permute.xlu0 %3827
  %3829 = vrot.lane.b32.xlu0 %v1363, 96
  %v3830 = vpop.permute.xlu0 %3829
  %3831 = vrot.lane.b32.xlu0 %v1364, 96
  %v3832 = vpop.permute.xlu0 %3831
  %3833 = vrot.lane.b32.xlu0 %v1365, 96
  %v3834 = vpop.permute.xlu0 %3833
  %3835 = vrot.lane.b32.xlu0 %v1366, 96
  %v3836 = vpop.permute.xlu0 %3835
  %3837 = vrot.lane.b32.xlu0 %v1367, 96
  %v3838 = vpop.permute.xlu0 %3837
  %v3848 = vsel %vm2673, %v3011, 0
  %v3851 = vsel %vm2673, %v3013, 0
  %v3854 = vsel %vm2673, %v3015, 0
  %v3857 = vsel %vm2673, %v3017, 0
  %v3860 = vsel %vm2673, %v3019, 0
  %v3863 = vsel %vm2673, %v3021, 0
  %v3866 = vsel %vm2673, %v3023, 0
  %v3869 = vsel %vm2673, %v3025, 0
  %3871 = vmatprep.subr.mxu0 0.0
  %3872 = vmatpush1.msra.mxu0 %v3824
  %3873 = vmatprep.subr.mxu0 0.0
  %3874 = vmatpush1.msra.mxu0 %v3826
  %3875 = vmatprep.subr.mxu0 0.0
  %3876 = vmatpush1.msra.mxu0 %v3828
  %3877 = vmatprep.subr.mxu0 0.0
  %3878 = vmatpush1.msra.mxu0 %v3830
  %3879 = vmatprep.subr.mxu0 0.0
  %3880 = vmatpush1.msra.mxu0 %v3832
  %3881 = vmatprep.subr.mxu0 0.0
  %3882 = vmatpush1.msra.mxu0 %v3834
  %3883 = vmatprep.subr.mxu0 0.0
  %3884 = vmatpush1.msra.mxu0 %v3836
  %3885 = vmatprep.subr.mxu0 0.0
  %3886 = vmatpush1.msra.mxu0 %v3838
  %3887 = vmatprep.subr.mxu0 0.0
  %3888 = vmatpush1.msra.mxu0 0.0
  %3889 = vmatprep.subr.mxu0 0.0
  %3890 = vmatpush1.msra.mxu0 0.0
  %3891 = vmatprep.subr.mxu0 0.0
  %3892 = vmatpush1.msra.mxu0 0.0
  %3893 = vmatprep.subr.mxu0 0.0
  %3894 = vmatpush1.msra.mxu0 0.0
  %3895 = vmatprep.subr.mxu0 0.0
  %3896 = vmatpush1.msra.mxu0 0.0
  %3897 = vmatprep.subr.mxu0 0.0
  %3898 = vmatpush1.msra.mxu0 0.0
  %3899 = vmatprep.subr.mxu0 0.0
  %3900 = vmatpush1.msra.mxu0 0.0
  %3901 = vmatprep.subr.mxu0 0.0
  %3902 = vmatpush1.msra.mxu0 0.0
  %3903 = vmatprep.subr.mxu0 0.0
  %3904 = vmatpush1.msra.mxu0 0.0
  %3905 = vmatprep.subr.mxu0 0.0
  %3906 = vmatpush1.msra.mxu0 0.0
  %3907 = vmatprep.subr.mxu0 0.0
  %3908 = vmatpush1.msra.mxu0 0.0
  %3909 = vmatprep.subr.mxu0 0.0
  %3910 = vmatpush1.msra.mxu0 0.0
  %3911 = vmatprep.subr.mxu0 0.0
  %3912 = vmatpush1.msra.mxu0 0.0
  %3913 = vmatprep.subr.mxu0 0.0
  %3914 = vmatpush1.msra.mxu0 0.0
  %3915 = vmatprep.subr.mxu0 0.0
  %3916 = vmatpush1.msra.mxu0 0.0
  %3917 = vmatprep.subr.mxu0 0.0
  %3918 = vmatpush1.msra.mxu0 0.0
  %3919 = vmatprep.subr.mxu0 0.0
  %3920 = vmatpush1.msra.mxu0 0.0
  %3921 = vmatprep.subr.mxu0 0.0
  %3922 = vmatpush1.msra.mxu0 0.0
  %3923 = vmatprep.subr.mxu0 0.0
  %3924 = vmatpush1.msra.mxu0 0.0
  %3925 = vmatprep.subr.mxu0 0.0
  %3926 = vmatpush1.msra.mxu0 0.0
  %3927 = vmatprep.subr.mxu0 0.0
  %3928 = vmatpush1.msra.mxu0 0.0
  %3929 = vmatprep.subr.mxu0 0.0
  %3930 = vmatpush1.msra.mxu0 0.0
  %3931 = vmatprep.subr.mxu0 0.0
  %3932 = vmatpush1.msra.mxu0 0.0
  %3933 = vmatprep.subr.mxu0 0.0
  %3934 = vmatpush1.msra.mxu0 0.0
  %3935 = vmatprep.mubr.f32.mxu0 0.0
  %3936 = vmatmul.mubr.f32.gmra.mrb[0].mxu0 %v3848
  %v3937 = vpop.f32.mrb[0].mxu0
  %v3938 = vadd.f32 0.0, %v3937
  %v3939 = vpop.f32.mrb[0].mxu0
  %3940 = vmatprep.mubr.f32.mxu0 0.0
  %3941 = vmatmul.mubr.f32.gmra.mrb[0].mxu0 %v3851
  %v3942 = vpop.f32.mrb[0].mxu0
  %v3943 = vadd.f32 0.0, %v3942
  %v3944 = vpop.f32.mrb[0].mxu0
  %3945 = vmatprep.mubr.f32.mxu0 0.0
  %3946 = vmatmul.mubr.f32.gmra.mrb[0].mxu0 %v3854
  %v3947 = vpop.f32.mrb[0].mxu0
  %v3948 = vadd.f32 0.0, %v3947
  %v3949 = vpop.f32.mrb[0].mxu0
  %3950 = vmatprep.mubr.f32.mxu0 0.0
  %3951 = vmatmul.mubr.f32.gmra.mrb[0].mxu0 %v3857
  %v3952 = vpop.f32.mrb[0].mxu0
  %v3953 = vadd.f32 0.0, %v3952
  %v3954 = vpop.f32.mrb[0].mxu0
  %3955 = vmatprep.mubr.f32.mxu0 0.0
  %3956 = vmatmul.mubr.f32.gmra.mrb[0].mxu0 %v3860
  %v3957 = vpop.f32.mrb[0].mxu0
  %v3958 = vadd.f32 0.0, %v3957
  %v3959 = vpop.f32.mrb[0].mxu0
  %3960 = vmatprep.mubr.f32.mxu0 0.0
  %3961 = vmatmul.mubr.f32.gmra.mrb[0].mxu0 %v3863
  %v3962 = vpop.f32.mrb[0].mxu0
  %v3963 = vadd.f32 0.0, %v3962
  %v3964 = vpop.f32.mrb[0].mxu0
  %3965 = vmatprep.mubr.f32.mxu0 0.0
  %3966 = vmatmul.mubr.f32.gmra.mrb[0].mxu0 %v3866
  %v3967 = vpop.f32.mrb[0].mxu0
  %v3968 = vadd.f32 0.0, %v3967
  %v3969 = vpop.f32.mrb[0].mxu0
  %3970 = vmatprep.mubr.f32.mxu0 0.0
  %3971 = vmatmul.mubr.f32.gmra.mrb[0].mxu0 %v3869
  %v3972 = vpop.f32.mrb[0].mxu0
  %v3973 = vadd.f32 0.0, %v3972
  %v3974 = vpop.f32.mrb[0].mxu0
  %3975 = vdwg.mxu0
  %3976 = vrot.lane.b32.xlu0 %v1368, 96
  %v3977 = vpop.permute.xlu0 %3976
  %3978 = vrot.lane.b32.xlu0 %v1369, 96
  %v3979 = vpop.permute.xlu0 %3978
  %3980 = vrot.lane.b32.xlu0 %v1370, 96
  %v3981 = vpop.permute.xlu0 %3980
  %3982 = vrot.lane.b32.xlu0 %v1371, 96
  %v3983 = vpop.permute.xlu0 %3982
  %3984 = vrot.lane.b32.xlu0 %v1372, 96
  %v3985 = vpop.permute.xlu0 %3984
  %3986 = vrot.lane.b32.xlu0 %v1373, 96
  %v3987 = vpop.permute.xlu0 %3986
  %3988 = vrot.lane.b32.xlu0 %v1374, 96
  %v3989 = vpop.permute.xlu0 %3988
  %3990 = vrot.lane.b32.xlu0 %v1375, 96
  %v3991 = vpop.permute.xlu0 %3990
  %v4001 = vsel %vm2673, %v3027, 0
  %v4004 = vsel %vm2673, %v3029, 0
  %v4007 = vsel %vm2673, %v3031, 0
  %v4010 = vsel %vm2673, %v3033, 0
  %v4013 = vsel %vm2673, %v3035, 0
  %v4016 = vsel %vm2673, %v3037, 0
  %v4019 = vsel %vm2673, %v3039, 0
  %v4022 = vsel %vm2673, %v3041, 0
  %4024 = vmatprep.subr.mxu0 0.0
  %4025 = vmatpush1.msra.mxu0 %v3977
  %4026 = vmatprep.subr.mxu0 0.0
  %4027 = vmatpush1.msra.mxu0 %v3979
  %4028 = vmatprep.subr.mxu0 0.0
  %4029 = vmatpush1.msra.mxu0 %v3981
  %4030 = vmatprep.subr.mxu0 0.0
  %4031 = vmatpush1.msra.mxu0 %v3983
  %4032 = vmatprep.subr.mxu0 0.0
  %4033 = vmatpush1.msra.mxu0 %v3985
  %4034 = vmatprep.subr.mxu0 0.0
  %4035 = vmatpush1.msra.mxu0 %v3987
  %4036 = vmatprep.subr.mxu0 0.0
  %4037 = vmatpush1.msra.mxu0 %v3989
  %4038 = vmatprep.subr.mxu0 0.0
  %4039 = vmatpush1.msra.mxu0 %v3991
  %4040 = vmatprep.subr.mxu0 0.0
  %4041 = vmatpush1.msra.mxu0 0.0
  %4042 = vmatprep.subr.mxu0 0.0
  %4043 = vmatpush1.msra.mxu0 0.0
  %4044 = vmatprep.subr.mxu0 0.0
  %4045 = vmatpush1.msra.mxu0 0.0
  %4046 = vmatprep.subr.mxu0 0.0
  %4047 = vmatpush1.msra.mxu0 0.0
  %4048 = vmatprep.subr.mxu0 0.0
  %4049 = vmatpush1.msra.mxu0 0.0
  %4050 = vmatprep.subr.mxu0 0.0
  %4051 = vmatpush1.msra.mxu0 0.0
  %4052 = vmatprep.subr.mxu0 0.0
  %4053 = vmatpush1.msra.mxu0 0.0
  %4054 = vmatprep.subr.mxu0 0.0
  %4055 = vmatpush1.msra.mxu0 0.0
  %4056 = vmatprep.subr.mxu0 0.0
  %4057 = vmatpush1.msra.mxu0 0.0
  %4058 = vmatprep.subr.mxu0 0.0
  %4059 = vmatpush1.msra.mxu0 0.0
  %4060 = vmatprep.subr.mxu0 0.0
  %4061 = vmatpush1.msra.mxu0 0.0
  %4062 = vmatprep.subr.mxu0 0.0
  %4063 = vmatpush1.msra.mxu0 0.0
  %4064 = vmatprep.subr.mxu0 0.0
  %4065 = vmatpush1.msra.mxu0 0.0
  %4066 = vmatprep.subr.mxu0 0.0
  %4067 = vmatpush1.msra.mxu0 0.0
  %4068 = vmatprep.subr.mxu0 0.0
  %4069 = vmatpush1.msra.mxu0 0.0
  %4070 = vmatprep.subr.mxu0 0.0
  %4071 = vmatpush1.msra.mxu0 0.0
  %4072 = vmatprep.subr.mxu0 0.0
  %4073 = vmatpush1.msra.mxu0 0.0
  %4074 = vmatprep.subr.mxu0 0.0
  %4075 = vmatpush1.msra.mxu0 0.0
  %4076 = vmatprep.subr.mxu0 0.0
  %4077 = vmatpush1.msra.mxu0 0.0
  %4078 = vmatprep.subr.mxu0 0.0
  %4079 = vmatpush1.msra.mxu0 0.0
  %4080 = vmatprep.subr.mxu0 0.0
  %4081 = vmatpush1.msra.mxu0 0.0
  %4082 = vmatprep.subr.mxu0 0.0
  %4083 = vmatpush1.msra.mxu0 0.0
  %4084 = vmatprep.subr.mxu0 0.0
  %4085 = vmatpush1.msra.mxu0 0.0
  %4086 = vmatprep.subr.mxu0 0.0
  %4087 = vmatpush1.msra.mxu0 0.0
  %4088 = vmatprep.mubr.f32.mxu0 0.0
  %4089 = vmatmul.mubr.f32.gmra.mrb[0].mxu0 %v4001
  %v4090 = vpop.f32.mrb[0].mxu0
  %v4091 = vadd.f32 0.0, %v4090
  %v4092 = vpop.f32.mrb[0].mxu0
  %4093 = vmatprep.mubr.f32.mxu0 0.0
  %4094 = vmatmul.mubr.f32.gmra.mrb[0].mxu0 %v4004
  %v4095 = vpop.f32.mrb[0].mxu0
  %v4096 = vadd.f32 0.0, %v4095
  %v4097 = vpop.f32.mrb[0].mxu0
  %4098 = vmatprep.mubr.f32.mxu0 0.0
  %4099 = vmatmul.mubr.f32.gmra.mrb[0].mxu0 %v4007
  %v4100 = vpop.f32.mrb[0].mxu0
  %v4101 = vadd.f32 0.0, %v4100
  %v4102 = vpop.f32.mrb[0].mxu0
  %4103 = vmatprep.mubr.f32.mxu0 0.0
  %4104 = vmatmul.mubr.f32.gmra.mrb[0].mxu0 %v4010
  %v4105 = vpop.f32.mrb[0].mxu0
  %v4106 = vadd.f32 0.0, %v4105
  %v4107 = vpop.f32.mrb[0].mxu0
  %4108 = vmatprep.mubr.f32.mxu0 0.0
  %4109 = vmatmul.mubr.f32.gmra.mrb[0].mxu0 %v4013
  %v4110 = vpop.f32.mrb[0].mxu0
  %v4111 = vadd.f32 0.0, %v4110
  %v4112 = vpop.f32.mrb[0].mxu0
  %4113 = vmatprep.mubr.f32.mxu0 0.0
  %4114 = vmatmul.mubr.f32.gmra.mrb[0].mxu0 %v4016
  %v4115 = vpop.f32.mrb[0].mxu0
  %v4116 = vadd.f32 0.0, %v4115
  %v4117 = vpop.f32.mrb[0].mxu0
  %4118 = vmatprep.mubr.f32.mxu0 0.0
  %4119 = vmatmul.mubr.f32.gmra.mrb[0].mxu0 %v4019
  %v4120 = vpop.f32.mrb[0].mxu0
  %v4121 = vadd.f32 0.0, %v4120
  %v4122 = vpop.f32.mrb[0].mxu0
  %4123 = vmatprep.mubr.f32.mxu0 0.0
  %4124 = vmatmul.mubr.f32.gmra.mrb[0].mxu0 %v4022
  %v4125 = vpop.f32.mrb[0].mxu0
  %v4126 = vadd.f32 0.0, %v4125
  %v4127 = vpop.f32.mrb[0].mxu0
  %4128 = vdwg.mxu0
  %4129 = vrot.lane.b32.xlu0 %v1376, 96
  %v4130 = vpop.permute.xlu0 %4129
  %4131 = vrot.lane.b32.xlu0 %v1377, 96
  %v4132 = vpop.permute.xlu0 %4131
  %4133 = vrot.lane.b32.xlu0 %v1378, 96
  %v4134 = vpop.permute.xlu0 %4133
  %4135 = vrot.lane.b32.xlu0 %v1379, 96
  %v4136 = vpop.permute.xlu0 %4135
  %4137 = vrot.lane.b32.xlu0 %v1380, 96
  %v4138 = vpop.permute.xlu0 %4137
  %4139 = vrot.lane.b32.xlu0 %v1381, 96
  %v4140 = vpop.permute.xlu0 %4139
  %4141 = vrot.lane.b32.xlu0 %v1382, 96
  %v4142 = vpop.permute.xlu0 %4141
  %4143 = vrot.lane.b32.xlu0 %v1383, 96
  %v4144 = vpop.permute.xlu0 %4143
  %v4154 = vsel %vm2673, %v3043, 0
  %v4157 = vsel %vm2673, %v3045, 0
  %v4160 = vsel %vm2673, %v3047, 0
  %v4163 = vsel %vm2673, %v3049, 0
  %v4166 = vsel %vm2673, %v3051, 0
  %v4169 = vsel %vm2673, %v3053, 0
  %v4172 = vsel %vm2673, %v3055, 0
  %v4175 = vsel %vm2673, %v3057, 0
  %4177 = vmatprep.subr.mxu0 0.0
  %4178 = vmatpush1.msra.mxu0 %v4130
  %4179 = vmatprep.subr.mxu0 0.0
  %4180 = vmatpush1.msra.mxu0 %v4132
  %4181 = vmatprep.subr.mxu0 0.0
  %4182 = vmatpush1.msra.mxu0 %v4134
  %4183 = vmatprep.subr.mxu0 0.0
  %4184 = vmatpush1.msra.mxu0 %v4136
  %4185 = vmatprep.subr.mxu0 0.0
  %4186 = vmatpush1.msra.mxu0 %v4138
  %4187 = vmatprep.subr.mxu0 0.0
  %4188 = vmatpush1.msra.mxu0 %v4140
  %4189 = vmatprep.subr.mxu0 0.0
  %4190 = vmatpush1.msra.mxu0 %v4142
  %4191 = vmatprep.subr.mxu0 0.0
  %4192 = vmatpush1.msra.mxu0 %v4144
  %4193 = vmatprep.subr.mxu0 0.0
  %4194 = vmatpush1.msra.mxu0 0.0
  %4195 = vmatprep.subr.mxu0 0.0
  %4196 = vmatpush1.msra.mxu0 0.0
  %4197 = vmatprep.subr.mxu0 0.0
  %4198 = vmatpush1.msra.mxu0 0.0
  %4199 = vmatprep.subr.mxu0 0.0
  %4200 = vmatpush1.msra.mxu0 0.0
  %4201 = vmatprep.subr.mxu0 0.0
  %4202 = vmatpush1.msra.mxu0 0.0
  %4203 = vmatprep.subr.mxu0 0.0
  %4204 = vmatpush1.msra.mxu0 0.0
  %4205 = vmatprep.subr.mxu0 0.0
  %4206 = vmatpush1.msra.mxu0 0.0
  %4207 = vmatprep.subr.mxu0 0.0
  %4208 = vmatpush1.msra.mxu0 0.0
  %4209 = vmatprep.subr.mxu0 0.0
  %4210 = vmatpush1.msra.mxu0 0.0
  %4211 = vmatprep.subr.mxu0 0.0
  %4212 = vmatpush1.msra.mxu0 0.0
  %4213 = vmatprep.subr.mxu0 0.0
  %4214 = vmatpush1.msra.mxu0 0.0
  %4215 = vmatprep.subr.mxu0 0.0
  %4216 = vmatpush1.msra.mxu0 0.0
  %4217 = vmatprep.subr.mxu0 0.0
  %4218 = vmatpush1.msra.mxu0 0.0
  %4219 = vmatprep.subr.mxu0 0.0
  %4220 = vmatpush1.msra.mxu0 0.0
  %4221 = vmatprep.subr.mxu0 0.0
  %4222 = vmatpush1.msra.mxu0 0.0
  %4223 = vmatprep.subr.mxu0 0.0
  %4224 = vmatpush1.msra.mxu0 0.0
  %4225 = vmatprep.subr.mxu0 0.0
  %4226 = vmatpush1.msra.mxu0 0.0
  %4227 = vmatprep.subr.mxu0 0.0
  %4228 = vmatpush1.msra.mxu0 0.0
  %4229 = vmatprep.subr.mxu0 0.0
  %4230 = vmatpush1.msra.mxu0 0.0
  %4231 = vmatprep.subr.mxu0 0.0
  %4232 = vmatpush1.msra.mxu0 0.0
  %4233 = vmatprep.subr.mxu0 0.0
  %4234 = vmatpush1.msra.mxu0 0.0
  %4235 = vmatprep.subr.mxu0 0.0
  %4236 = vmatpush1.msra.mxu0 0.0
  %4237 = vmatprep.subr.mxu0 0.0
  %4238 = vmatpush1.msra.mxu0 0.0
  %4239 = vmatprep.subr.mxu0 0.0
  %4240 = vmatpush1.msra.mxu0 0.0
  %4241 = vmatprep.mubr.f32.mxu0 0.0
  %4242 = vmatmul.mubr.f32.gmra.mrb[0].mxu0 %v4154
  %v4243 = vpop.f32.mrb[0].mxu0
  %v4244 = vadd.f32 0.0, %v4243
  %v4245 = vpop.f32.mrb[0].mxu0
  %4246 = vmatprep.mubr.f32.mxu0 0.0
  %4247 = vmatmul.mubr.f32.gmra.mrb[0].mxu0 %v4157
  %v4248 = vpop.f32.mrb[0].mxu0
  %v4249 = vadd.f32 0.0, %v4248
  %v4250 = vpop.f32.mrb[0].mxu0
  %4251 = vmatprep.mubr.f32.mxu0 0.0
  %4252 = vmatmul.mubr.f32.gmra.mrb[0].mxu0 %v4160
  %v4253 = vpop.f32.mrb[0].mxu0
  %v4254 = vadd.f32 0.0, %v4253
  %v4255 = vpop.f32.mrb[0].mxu0
  %4256 = vmatprep.mubr.f32.mxu0 0.0
  %4257 = vmatmul.mubr.f32.gmra.mrb[0].mxu0 %v4163
  %v4258 = vpop.f32.mrb[0].mxu0
  %v4259 = vadd.f32 0.0, %v4258
  %v4260 = vpop.f32.mrb[0].mxu0
  %4261 = vmatprep.mubr.f32.mxu0 0.0
  %4262 = vmatmul.mubr.f32.gmra.mrb[0].mxu0 %v4166
  %v4263 = vpop.f32.mrb[0].mxu0
  %v4264 = vadd.f32 0.0, %v4263
  %v4265 = vpop.f32.mrb[0].mxu0
  %4266 = vmatprep.mubr.f32.mxu0 0.0
  %4267 = vmatmul.mubr.f32.gmra.mrb[0].mxu0 %v4169
  %v4268 = vpop.f32.mrb[0].mxu0
  %v4269 = vadd.f32 0.0, %v4268
  %v4270 = vpop.f32.mrb[0].mxu0
  %4271 = vmatprep.mubr.f32.mxu0 0.0
  %4272 = vmatmul.mubr.f32.gmra.mrb[0].mxu0 %v4172
  %v4273 = vpop.f32.mrb[0].mxu0
  %v4274 = vadd.f32 0.0, %v4273
  %v4275 = vpop.f32.mrb[0].mxu0
  %4276 = vmatprep.mubr.f32.mxu0 0.0
  %4277 = vmatmul.mubr.f32.gmra.mrb[0].mxu0 %v4175
  %v4278 = vpop.f32.mrb[0].mxu0
  %v4279 = vadd.f32 0.0, %v4278
  %v4280 = vpop.f32.mrb[0].mxu0
  %4281 = vdwg.mxu0
  %4346 = vrot.lane.b32.xlu0 %v3173, 127
  %v4347 = vpop.permute.xlu0 %4346
  %4348 = vrot.lane.b32.xlu0 %v3178, 127
  %v4349 = vpop.permute.xlu0 %4348
  %4350 = vrot.lane.b32.xlu0 %v3183, 127
  %v4351 = vpop.permute.xlu0 %4350
  %4352 = vrot.lane.b32.xlu0 %v3188, 127
  %v4353 = vpop.permute.xlu0 %4352
  %4354 = vrot.lane.b32.xlu0 %v3193, 127
  %v4355 = vpop.permute.xlu0 %4354
  %4356 = vrot.lane.b32.xlu0 %v3198, 127
  %v4357 = vpop.permute.xlu0 %4356
  %4358 = vrot.lane.b32.xlu0 %v3203, 127
  %v4359 = vpop.permute.xlu0 %4358
  %4360 = vrot.lane.b32.xlu0 %v3208, 127
  %v4361 = vpop.permute.xlu0 %4360
  %4362 = vrot.lane.b32.xlu0 %v3326, 127
  %v4363 = vpop.permute.xlu0 %4362
  %4364 = vrot.lane.b32.xlu0 %v3331, 127
  %v4365 = vpop.permute.xlu0 %4364
  %4366 = vrot.lane.b32.xlu0 %v3336, 127
  %v4367 = vpop.permute.xlu0 %4366
  %4368 = vrot.lane.b32.xlu0 %v3341, 127
  %v4369 = vpop.permute.xlu0 %4368
  %4370 = vrot.lane.b32.xlu0 %v3346, 127
  %v4371 = vpop.permute.xlu0 %4370
  %4372 = vrot.lane.b32.xlu0 %v3351, 127
  %v4373 = vpop.permute.xlu0 %4372
  %4374 = vrot.lane.b32.xlu0 %v3356, 127
  %v4375 = vpop.permute.xlu0 %4374
  %4376 = vrot.lane.b32.xlu0 %v3361, 127
  %v4377 = vpop.permute.xlu0 %4376
  %4378 = vrot.lane.b32.xlu0 %v3479, 127
  %v4379 = vpop.permute.xlu0 %4378
  %4380 = vrot.lane.b32.xlu0 %v3484, 127
  %v4381 = vpop.permute.xlu0 %4380
  %4382 = vrot.lane.b32.xlu0 %v3489, 127
  %v4383 = vpop.permute.xlu0 %4382
  %4384 = vrot.lane.b32.xlu0 %v3494, 127
  %v4385 = vpop.permute.xlu0 %4384
  %4386 = vrot.lane.b32.xlu0 %v3499, 127
  %v4387 = vpop.permute.xlu0 %4386
  %4388 = vrot.lane.b32.xlu0 %v3504, 127
  %v4389 = vpop.permute.xlu0 %4388
  %4390 = vrot.lane.b32.xlu0 %v3509, 127
  %v4391 = vpop.permute.xlu0 %4390
  %4392 = vrot.lane.b32.xlu0 %v3514, 127
  %v4393 = vpop.permute.xlu0 %4392
  %4394 = vrot.lane.b32.xlu0 %v3632, 127
  %v4395 = vpop.permute.xlu0 %4394
  %4396 = vrot.lane.b32.xlu0 %v3637, 127
  %v4397 = vpop.permute.xlu0 %4396
  %4398 = vrot.lane.b32.xlu0 %v3642, 127
  %v4399 = vpop.permute.xlu0 %4398
  %4400 = vrot.lane.b32.xlu0 %v3647, 127
  %v4401 = vpop.permute.xlu0 %4400
  %4402 = vrot.lane.b32.xlu0 %v3652, 127
  %v4403 = vpop.permute.xlu0 %4402
  %4404 = vrot.lane.b32.xlu0 %v3657, 127
  %v4405 = vpop.permute.xlu0 %4404
  %4406 = vrot.lane.b32.xlu0 %v3662, 127
  %v4407 = vpop.permute.xlu0 %4406
  %4408 = vrot.lane.b32.xlu0 %v3667, 127
  %v4409 = vpop.permute.xlu0 %4408
  %4410 = vrot.lane.b32.xlu0 %v3785, 127
  %v4411 = vpop.permute.xlu0 %4410
  %4412 = vrot.lane.b32.xlu0 %v3790, 127
  %v4413 = vpop.permute.xlu0 %4412
  %4414 = vrot.lane.b32.xlu0 %v3795, 127
  %v4415 = vpop.permute.xlu0 %4414
  %4416 = vrot.lane.b32.xlu0 %v3800, 127
  %v4417 = vpop.permute.xlu0 %4416
  %4418 = vrot.lane.b32.xlu0 %v3805, 127
  %v4419 = vpop.permute.xlu0 %4418
  %4420 = vrot.lane.b32.xlu0 %v3810, 127
  %v4421 = vpop.permute.xlu0 %4420
  %4422 = vrot.lane.b32.xlu0 %v3815, 127
  %v4423 = vpop.permute.xlu0 %4422
  %4424 = vrot.lane.b32.xlu0 %v3820, 127
  %v4425 = vpop.permute.xlu0 %4424
  %4426 = vrot.lane.b32.xlu0 %v3938, 127
  %v4427 = vpop.permute.xlu0 %4426
  %4428 = vrot.lane.b32.xlu0 %v3943, 127
  %v4429 = vpop.permute.xlu0 %4428
  %4430 = vrot.lane.b32.xlu0 %v3948, 127
  %v4431 = vpop.permute.xlu0 %4430
  %4432 = vrot.lane.b32.xlu0 %v3953, 127
  %v4433 = vpop.permute.xlu0 %4432
  %4434 = vrot.lane.b32.xlu0 %v3958, 127
  %v4435 = vpop.permute.xlu0 %4434
  %4436 = vrot.lane.b32.xlu0 %v3963, 127
  %v4437 = vpop.permute.xlu0 %4436
  %4438 = vrot.lane.b32.xlu0 %v3968, 127
  %v4439 = vpop.permute.xlu0 %4438
  %4440 = vrot.lane.b32.xlu0 %v3973, 127
  %v4441 = vpop.permute.xlu0 %4440
  %4442 = vrot.lane.b32.xlu0 %v4091, 127
  %v4443 = vpop.permute.xlu0 %4442
  %4444 = vrot.lane.b32.xlu0 %v4096, 127
  %v4445 = vpop.permute.xlu0 %4444
  %4446 = vrot.lane.b32.xlu0 %v4101, 127
  %v4447 = vpop.permute.xlu0 %4446
  %4448 = vrot.lane.b32.xlu0 %v4106, 127
  %v4449 = vpop.permute.xlu0 %4448
  %4450 = vrot.lane.b32.xlu0 %v4111, 127
  %v4451 = vpop.permute.xlu0 %4450
  %4452 = vrot.lane.b32.xlu0 %v4116, 127
  %v4453 = vpop.permute.xlu0 %4452
  %4454 = vrot.lane.b32.xlu0 %v4121, 127
  %v4455 = vpop.permute.xlu0 %4454
  %4456 = vrot.lane.b32.xlu0 %v4126, 127
  %v4457 = vpop.permute.xlu0 %4456
  %4458 = vrot.lane.b32.xlu0 %v4244, 127
  %v4459 = vpop.permute.xlu0 %4458
  %4460 = vrot.lane.b32.xlu0 %v4249, 127
  %v4461 = vpop.permute.xlu0 %4460
  %4462 = vrot.lane.b32.xlu0 %v4254, 127
  %v4463 = vpop.permute.xlu0 %4462
  %4464 = vrot.lane.b32.xlu0 %v4259, 127
  %v4465 = vpop.permute.xlu0 %4464
  %4466 = vrot.lane.b32.xlu0 %v4264, 127
  %v4467 = vpop.permute.xlu0 %4466
  %4468 = vrot.lane.b32.xlu0 %v4269, 127
  %v4469 = vpop.permute.xlu0 %4468
  %4470 = vrot.lane.b32.xlu0 %v4274, 127
  %v4471 = vpop.permute.xlu0 %4470
  %4472 = vrot.lane.b32.xlu0 %v4279, 127
  %v4473 = vpop.permute.xlu0 %4472
  %v4538 = vrcp.pop %v4347
  %v4539 = vmul.f32 %v3173, %v4538
  %v4540 = vrcp.pop %v4349
  %v4541 = vmul.f32 %v3178, %v4540
  %v4542 = vrcp.pop %v4351
  %v4543 = vmul.f32 %v3183, %v4542
  %v4544 = vrcp.pop %v4353
  %v4545 = vmul.f32 %v3188, %v4544
  %v4546 = vrcp.pop %v4355
  %v4547 = vmul.f32 %v3193, %v4546
  %v4548 = vrcp.pop %v4357
  %v4549 = vmul.f32 %v3198, %v4548
  %v4550 = vrcp.pop %v4359
  %v4551 = vmul.f32 %v3203, %v4550
  %v4552 = vrcp.pop %v4361
  %v4553 = vmul.f32 %v3208, %v4552
  %v4554 = vrcp.pop %v4363
  %v4555 = vmul.f32 %v3326, %v4554
  %v4556 = vrcp.pop %v4365
  %v4557 = vmul.f32 %v3331, %v4556
  %v4558 = vrcp.pop %v4367
  %v4559 = vmul.f32 %v3336, %v4558
  %v4560 = vrcp.pop %v4369
  %v4561 = vmul.f32 %v3341, %v4560
  %v4562 = vrcp.pop %v4371
  %v4563 = vmul.f32 %v3346, %v4562
  %v4564 = vrcp.pop %v4373
  %v4565 = vmul.f32 %v3351, %v4564
  %v4566 = vrcp.pop %v4375
  %v4567 = vmul.f32 %v3356, %v4566
  %v4568 = vrcp.pop %v4377
  %v4569 = vmul.f32 %v3361, %v4568
  %v4570 = vrcp.pop %v4379
  %v4571 = vmul.f32 %v3479, %v4570
  %v4572 = vrcp.pop %v4381
  %v4573 = vmul.f32 %v3484, %v4572
  %v4574 = vrcp.pop %v4383
  %v4575 = vmul.f32 %v3489, %v4574
  %v4576 = vrcp.pop %v4385
  %v4577 = vmul.f32 %v3494, %v4576
  %v4578 = vrcp.pop %v4387
  %v4579 = vmul.f32 %v3499, %v4578
  %v4580 = vrcp.pop %v4389
  %v4581 = vmul.f32 %v3504, %v4580
  %v4582 = vrcp.pop %v4391
  %v4583 = vmul.f32 %v3509, %v4582
  %v4584 = vrcp.pop %v4393
  %v4585 = vmul.f32 %v3514, %v4584
  %v4586 = vrcp.pop %v4395
  %v4587 = vmul.f32 %v3632, %v4586
  %v4588 = vrcp.pop %v4397
  %v4589 = vmul.f32 %v3637, %v4588
  %v4590 = vrcp.pop %v4399
  %v4591 = vmul.f32 %v3642, %v4590
  %v4592 = vrcp.pop %v4401
  %v4593 = vmul.f32 %v3647, %v4592
  %v4594 = vrcp.pop %v4403
  %v4595 = vmul.f32 %v3652, %v4594
  %v4596 = vrcp.pop %v4405
  %v4597 = vmul.f32 %v3657, %v4596
  %v4598 = vrcp.pop %v4407
  %v4599 = vmul.f32 %v3662, %v4598
  %v4600 = vrcp.pop %v4409
  %v4601 = vmul.f32 %v3667, %v4600
  %v4602 = vrcp.pop %v4411
  %v4603 = vmul.f32 %v3785, %v4602
  %v4604 = vrcp.pop %v4413
  %v4605 = vmul.f32 %v3790, %v4604
  %v4606 = vrcp.pop %v4415
  %v4607 = vmul.f32 %v3795, %v4606
  %v4608 = vrcp.pop %v4417
  %v4609 = vmul.f32 %v3800, %v4608
  %v4610 = vrcp.pop %v4419
  %v4611 = vmul.f32 %v3805, %v4610
  %v4612 = vrcp.pop %v4421
  %v4613 = vmul.f32 %v3810, %v4612
  %v4614 = vrcp.pop %v4423
  %v4615 = vmul.f32 %v3815, %v4614
  %v4616 = vrcp.pop %v4425
  %v4617 = vmul.f32 %v3820, %v4616
  %v4618 = vrcp.pop %v4427
  %v4619 = vmul.f32 %v3938, %v4618
  %v4620 = vrcp.pop %v4429
  %v4621 = vmul.f32 %v3943, %v4620
  %v4622 = vrcp.pop %v4431
  %v4623 = vmul.f32 %v3948, %v4622
  %v4624 = vrcp.pop %v4433
  %v4625 = vmul.f32 %v3953, %v4624
  %v4626 = vrcp.pop %v4435
  %v4627 = vmul.f32 %v3958, %v4626
  %v4628 = vrcp.pop %v4437
  %v4629 = vmul.f32 %v3963, %v4628
  %v4630 = vrcp.pop %v4439
  %v4631 = vmul.f32 %v3968, %v4630
  %v4632 = vrcp.pop %v4441
  %v4633 = vmul.f32 %v3973, %v4632
  %v4634 = vrcp.pop %v4443
  %v4635 = vmul.f32 %v4091, %v4634
  %v4636 = vrcp.pop %v4445
  %v4637 = vmul.f32 %v4096, %v4636
  %v4638 = vrcp.pop %v4447
  %v4639 = vmul.f32 %v4101, %v4638
  %v4640 = vrcp.pop %v4449
  %v4641 = vmul.f32 %v4106, %v4640
  %v4642 = vrcp.pop %v4451
  %v4643 = vmul.f32 %v4111, %v4642
  %v4644 = vrcp.pop %v4453
  %v4645 = vmul.f32 %v4116, %v4644
  %v4646 = vrcp.pop %v4455
  %v4647 = vmul.f32 %v4121, %v4646
  %v4648 = vrcp.pop %v4457
  %v4649 = vmul.f32 %v4126, %v4648
  %v4650 = vrcp.pop %v4459
  %v4651 = vmul.f32 %v4244, %v4650
  %v4652 = vrcp.pop %v4461
  %v4653 = vmul.f32 %v4249, %v4652
  %v4654 = vrcp.pop %v4463
  %v4655 = vmul.f32 %v4254, %v4654
  %v4656 = vrcp.pop %v4465
  %v4657 = vmul.f32 %v4259, %v4656
  %v4658 = vrcp.pop %v4467
  %v4659 = vmul.f32 %v4264, %v4658
  %v4660 = vrcp.pop %v4469
  %v4661 = vmul.f32 %v4269, %v4660
  %v4662 = vrcp.pop %v4471
  %v4663 = vmul.f32 %v4274, %v4662
  %v4664 = vrcp.pop %v4473
  %v4665 = vmul.f32 %v4279, %v4664
  %4666 = vrot.lane.b32.xlu0 %v1320, 112
  %v4667 = vpop.permute.xlu0 %4666
  %4668 = vrot.lane.b32.xlu0 %v1321, 112
  %v4669 = vpop.permute.xlu0 %4668
  %4670 = vrot.lane.b32.xlu0 %v1322, 112
  %v4671 = vpop.permute.xlu0 %4670
  %4672 = vrot.lane.b32.xlu0 %v1323, 112
  %v4673 = vpop.permute.xlu0 %4672
  %4674 = vrot.lane.b32.xlu0 %v1324, 112
  %v4675 = vpop.permute.xlu0 %4674
  %4676 = vrot.lane.b32.xlu0 %v1325, 112
  %v4677 = vpop.permute.xlu0 %4676
  %4678 = vrot.lane.b32.xlu0 %v1326, 112
  %v4679 = vpop.permute.xlu0 %4678
  %4680 = vrot.lane.b32.xlu0 %v1327, 112
  %v4681 = vpop.permute.xlu0 %4680
  %4682 = vrot.lane.b32.xlu0 %v1320, 104
  %v4683 = vpop.permute.xlu0 %4682
  %4684 = vrot.lane.b32.xlu0 %v1321, 104
  %v4685 = vpop.permute.xlu0 %4684
  %4686 = vrot.lane.b32.xlu0 %v1322, 104
  %v4687 = vpop.permute.xlu0 %4686
  %4688 = vrot.lane.b32.xlu0 %v1323, 104
  %v4689 = vpop.permute.xlu0 %4688
  %4690 = vrot.lane.b32.xlu0 %v1324, 104
  %v4691 = vpop.permute.xlu0 %4690
  %4692 = vrot.lane.b32.xlu0 %v1325, 104
  %v4693 = vpop.permute.xlu0 %4692
  %4694 = vrot.lane.b32.xlu0 %v1326, 104
  %v4695 = vpop.permute.xlu0 %4694
  %4696 = vrot.lane.b32.xlu0 %v1327, 104
  %v4697 = vpop.permute.xlu0 %4696
  %v4698 = vsel %vm1408, %v4667, 0
  %v4700 = vsel %vm1408, %v4669, 0
  %v4702 = vsel %vm1408, %v4671, 0
  %v4704 = vsel %vm1408, %v4673, 0
  %v4706 = vsel %vm1408, %v4675, 0
  %v4708 = vsel %vm1408, %v4677, 0
  %v4710 = vsel %vm1408, %v4679, 0
  %v4712 = vsel %vm1408, %v4681, 0
  %v4714 = vsel %vm1408, %v4683, 0
  %v4716 = vsel %vm1408, %v4685, 0
  %v4718 = vsel %vm1408, %v4687, 0
  %v4720 = vsel %vm1408, %v4689, 0
  %v4722 = vsel %vm1408, %v4691, 0
  %v4724 = vsel %vm1408, %v4693, 0
  %v4726 = vsel %vm1408, %v4695, 0
  %v4728 = vsel %vm1408, %v4697, 0
  %4730 = vmatprep.subr.mxu0 0.0
  %4731 = vmatpush1.xpose.msra.mxu0 %v4714
  %4732 = vmatprep.subr.mxu0 0.0
  %4733 = vmatpush1.xpose.msra.mxu0 %v4716
  %4734 = vmatprep.subr.mxu0 0.0
  %4735 = vmatpush1.xpose.msra.mxu0 %v4718
  %4736 = vmatprep.subr.mxu0 0.0
  %4737 = vmatpush1.xpose.msra.mxu0 %v4720
  %4738 = vmatprep.subr.mxu0 0.0
  %4739 = vmatpush1.xpose.msra.mxu0 %v4722
  %4740 = vmatprep.subr.mxu0 0.0
  %4741 = vmatpush1.xpose.msra.mxu0 %v4724
  %4742 = vmatprep.subr.mxu0 0.0
  %4743 = vmatpush1.xpose.msra.mxu0 %v4726
  %4744 = vmatprep.subr.mxu0 0.0
  %4745 = vmatpush1.xpose.msra.mxu0 %v4728
  %4746 = vmatprep.subr.mxu0 0.0
  %4747 = vmatpush1.xpose.msra.mxu0 0.0
  %4748 = vmatprep.subr.mxu0 0.0
  %4749 = vmatpush1.xpose.msra.mxu0 0.0
  %4750 = vmatprep.subr.mxu0 0.0
  %4751 = vmatpush1.xpose.msra.mxu0 0.0
  %4752 = vmatprep.subr.mxu0 0.0
  %4753 = vmatpush1.xpose.msra.mxu0 0.0
  %4754 = vmatprep.subr.mxu0 0.0
  %4755 = vmatpush1.xpose.msra.mxu0 0.0
  %4756 = vmatprep.subr.mxu0 0.0
  %4757 = vmatpush1.xpose.msra.mxu0 0.0
  %4758 = vmatprep.subr.mxu0 0.0
  %4759 = vmatpush1.xpose.msra.mxu0 0.0
  %4760 = vmatprep.subr.mxu0 0.0
  %4761 = vmatpush1.xpose.msra.mxu0 0.0
  %4762 = vmatprep.subr.mxu0 0.0
  %4763 = vmatpush1.xpose.msra.mxu0 0.0
  %4764 = vmatprep.subr.mxu0 0.0
  %4765 = vmatpush1.xpose.msra.mxu0 0.0
  %4766 = vmatprep.subr.mxu0 0.0
  %4767 = vmatpush1.xpose.msra.mxu0 0.0
  %4768 = vmatprep.subr.mxu0 0.0
  %4769 = vmatpush1.xpose.msra.mxu0 0.0
  %4770 = vmatprep.subr.mxu0 0.0
  %4771 = vmatpush1.xpose.msra.mxu0 0.0
  %4772 = vmatprep.subr.mxu0 0.0
  %4773 = vmatpush1.xpose.msra.mxu0 0.0
  %4774 = vmatprep.subr.mxu0 0.0
  %4775 = vmatpush1.xpose.msra.mxu0 0.0
  %4776 = vmatprep.subr.mxu0 0.0
  %4777 = vmatpush1.xpose.msra.mxu0 0.0
  %4778 = vmatprep.subr.mxu0 0.0
  %4779 = vmatpush1.xpose.msra.mxu0 0.0
  %4780 = vmatprep.subr.mxu0 0.0
  %4781 = vmatpush1.xpose.msra.mxu0 0.0
  %4782 = vmatprep.subr.mxu0 0.0
  %4783 = vmatpush1.xpose.msra.mxu0 0.0
  %4784 = vmatprep.subr.mxu0 0.0
  %4785 = vmatpush1.xpose.msra.mxu0 0.0
  %4786 = vmatprep.subr.mxu0 0.0
  %4787 = vmatpush1.xpose.msra.mxu0 0.0
  %4788 = vmatprep.subr.mxu0 0.0
  %4789 = vmatpush1.xpose.msra.mxu0 0.0
  %4790 = vmatprep.subr.mxu0 0.0
  %4791 = vmatpush1.xpose.msra.mxu0 0.0
  %4792 = vmatprep.subr.mxu0 0.0
  %4793 = vmatpush1.xpose.msra.mxu0 0.0
  %4794 = vmatprep.mubr.f32.mxu0 0.0
  %4795 = vmatmul.mubr.f32.gmra.mrb[0].mxu0 %v4698
  %v4796 = vpop.f32.mrb[0].mxu0
  %v4797 = vadd.f32 0.0, %v4796
  %v4798 = vpop.f32.mrb[0].mxu0
  %4799 = vmatprep.mubr.f32.mxu0 0.0
  %4800 = vmatmul.mubr.f32.gmra.mrb[0].mxu0 %v4700
  %v4801 = vpop.f32.mrb[0].mxu0
  %v4802 = vadd.f32 0.0, %v4801
  %v4803 = vpop.f32.mrb[0].mxu0
  %4804 = vmatprep.mubr.f32.mxu0 0.0
  %4805 = vmatmul.mubr.f32.gmra.mrb[0].mxu0 %v4702
  %v4806 = vpop.f32.mrb[0].mxu0
  %v4807 = vadd.f32 0.0, %v4806
  %v4808 = vpop.f32.mrb[0].mxu0
  %4809 = vmatprep.mubr.f32.mxu0 0.0
  %4810 = vmatmul.mubr.f32.gmra.mrb[0].mxu0 %v4704
  %v4811 = vpop.f32.mrb[0].mxu0
  %v4812 = vadd.f32 0.0, %v4811
  %v4813 = vpop.f32.mrb[0].mxu0
  %4814 = vmatprep.mubr.f32.mxu0 0.0
  %4815 = vmatmul.mubr.f32.gmra.mrb[0].mxu0 %v4706
  %v4816 = vpop.f32.mrb[0].mxu0
  %v4817 = vadd.f32 0.0, %v4816
  %v4818 = vpop.f32.mrb[0].mxu0
  %4819 = vmatprep.mubr.f32.mxu0 0.0
  %4820 = vmatmul.mubr.f32.gmra.mrb[0].mxu0 %v4708
  %v4821 = vpop.f32.mrb[0].mxu0
  %v4822 = vadd.f32 0.0, %v4821
  %v4823 = vpop.f32.mrb[0].mxu0
  %4824 = vmatprep.mubr.f32.mxu0 0.0
  %4825 = vmatmul.mubr.f32.gmra.mrb[0].mxu0 %v4710
  %v4826 = vpop.f32.mrb[0].mxu0
  %v4827 = vadd.f32 0.0, %v4826
  %v4828 = vpop.f32.mrb[0].mxu0
  %4829 = vmatprep.mubr.f32.mxu0 0.0
  %4830 = vmatmul.mubr.f32.gmra.mrb[0].mxu0 %v4712
  %v4831 = vpop.f32.mrb[0].mxu0
  %v4832 = vadd.f32 0.0, %v4831
  %v4833 = vpop.f32.mrb[0].mxu0
  %4834 = vdwg.mxu0
  %4835 = vrot.lane.b32.xlu0 %v1328, 112
  %v4836 = vpop.permute.xlu0 %4835
  %4837 = vrot.lane.b32.xlu0 %v1329, 112
  %v4838 = vpop.permute.xlu0 %4837
  %4839 = vrot.lane.b32.xlu0 %v1330, 112
  %v4840 = vpop.permute.xlu0 %4839
  %4841 = vrot.lane.b32.xlu0 %v1331, 112
  %v4842 = vpop.permute.xlu0 %4841
  %4843 = vrot.lane.b32.xlu0 %v1332, 112
  %v4844 = vpop.permute.xlu0 %4843
  %4845 = vrot.lane.b32.xlu0 %v1333, 112
  %v4846 = vpop.permute.xlu0 %4845
  %4847 = vrot.lane.b32.xlu0 %v1334, 112
  %v4848 = vpop.permute.xlu0 %4847
  %4849 = vrot.lane.b32.xlu0 %v1335, 112
  %v4850 = vpop.permute.xlu0 %4849
  %4851 = vrot.lane.b32.xlu0 %v1328, 104
  %v4852 = vpop.permute.xlu0 %4851
  %4853 = vrot.lane.b32.xlu0 %v1329, 104
  %v4854 = vpop.permute.xlu0 %4853
  %4855 = vrot.lane.b32.xlu0 %v1330, 104
  %v4856 = vpop.permute.xlu0 %4855
  %4857 = vrot.lane.b32.xlu0 %v1331, 104
  %v4858 = vpop.permute.xlu0 %4857
  %4859 = vrot.lane.b32.xlu0 %v1332, 104
  %v4860 = vpop.permute.xlu0 %4859
  %4861 = vrot.lane.b32.xlu0 %v1333, 104
  %v4862 = vpop.permute.xlu0 %4861
  %4863 = vrot.lane.b32.xlu0 %v1334, 104
  %v4864 = vpop.permute.xlu0 %4863
  %4865 = vrot.lane.b32.xlu0 %v1335, 104
  %v4866 = vpop.permute.xlu0 %4865
  %v4867 = vsel %vm1408, %v4836, 0
  %v4869 = vsel %vm1408, %v4838, 0
  %v4871 = vsel %vm1408, %v4840, 0
  %v4873 = vsel %vm1408, %v4842, 0
  %v4875 = vsel %vm1408, %v4844, 0
  %v4877 = vsel %vm1408, %v4846, 0
  %v4879 = vsel %vm1408, %v4848, 0
  %v4881 = vsel %vm1408, %v4850, 0
  %v4883 = vsel %vm1408, %v4852, 0
  %v4885 = vsel %vm1408, %v4854, 0
  %v4887 = vsel %vm1408, %v4856, 0
  %v4889 = vsel %vm1408, %v4858, 0
  %v4891 = vsel %vm1408, %v4860, 0
  %v4893 = vsel %vm1408, %v4862, 0
  %v4895 = vsel %vm1408, %v4864, 0
  %v4897 = vsel %vm1408, %v4866, 0
  %4899 = vmatprep.subr.mxu0 0.0
  %4900 = vmatpush1.xpose.msra.mxu0 %v4883
  %4901 = vmatprep.subr.mxu0 0.0
  %4902 = vmatpush1.xpose.msra.mxu0 %v4885
  %4903 = vmatprep.subr.mxu0 0.0
  %4904 = vmatpush1.xpose.msra.mxu0 %v4887
  %4905 = vmatprep.subr.mxu0 0.0
  %4906 = vmatpush1.xpose.msra.mxu0 %v4889
  %4907 = vmatprep.subr.mxu0 0.0
  %4908 = vmatpush1.xpose.msra.mxu0 %v4891
  %4909 = vmatprep.subr.mxu0 0.0
  %4910 = vmatpush1.xpose.msra.mxu0 %v4893
  %4911 = vmatprep.subr.mxu0 0.0
  %4912 = vmatpush1.xpose.msra.mxu0 %v4895
  %4913 = vmatprep.subr.mxu0 0.0
  %4914 = vmatpush1.xpose.msra.mxu0 %v4897
  %4915 = vmatprep.subr.mxu0 0.0
  %4916 = vmatpush1.xpose.msra.mxu0 0.0
  %4917 = vmatprep.subr.mxu0 0.0
  %4918 = vmatpush1.xpose.msra.mxu0 0.0
  %4919 = vmatprep.subr.mxu0 0.0
  %4920 = vmatpush1.xpose.msra.mxu0 0.0
  %4921 = vmatprep.subr.mxu0 0.0
  %4922 = vmatpush1.xpose.msra.mxu0 0.0
  %4923 = vmatprep.subr.mxu0 0.0
  %4924 = vmatpush1.xpose.msra.mxu0 0.0
  %4925 = vmatprep.subr.mxu0 0.0
  %4926 = vmatpush1.xpose.msra.mxu0 0.0
  %4927 = vmatprep.subr.mxu0 0.0
  %4928 = vmatpush1.xpose.msra.mxu0 0.0
  %4929 = vmatprep.subr.mxu0 0.0
  %4930 = vmatpush1.xpose.msra.mxu0 0.0
  %4931 = vmatprep.subr.mxu0 0.0
  %4932 = vmatpush1.xpose.msra.mxu0 0.0
  %4933 = vmatprep.subr.mxu0 0.0
  %4934 = vmatpush1.xpose.msra.mxu0 0.0
  %4935 = vmatprep.subr.mxu0 0.0
  %4936 = vmatpush1.xpose.msra.mxu0 0.0
  %4937 = vmatprep.subr.mxu0 0.0
  %4938 = vmatpush1.xpose.msra.mxu0 0.0
  %4939 = vmatprep.subr.mxu0 0.0
  %4940 = vmatpush1.xpose.msra.mxu0 0.0
  %4941 = vmatprep.subr.mxu0 0.0
  %4942 = vmatpush1.xpose.msra.mxu0 0.0
  %4943 = vmatprep.subr.mxu0 0.0
  %4944 = vmatpush1.xpose.msra.mxu0 0.0
  %4945 = vmatprep.subr.mxu0 0.0
  %4946 = vmatpush1.xpose.msra.mxu0 0.0
  %4947 = vmatprep.subr.mxu0 0.0
  %4948 = vmatpush1.xpose.msra.mxu0 0.0
  %4949 = vmatprep.subr.mxu0 0.0
  %4950 = vmatpush1.xpose.msra.mxu0 0.0
  %4951 = vmatprep.subr.mxu0 0.0
  %4952 = vmatpush1.xpose.msra.mxu0 0.0
  %4953 = vmatprep.subr.mxu0 0.0
  %4954 = vmatpush1.xpose.msra.mxu0 0.0
  %4955 = vmatprep.subr.mxu0 0.0
  %4956 = vmatpush1.xpose.msra.mxu0 0.0
  %4957 = vmatprep.subr.mxu0 0.0
  %4958 = vmatpush1.xpose.msra.mxu0 0.0
  %4959 = vmatprep.subr.mxu0 0.0
  %4960 = vmatpush1.xpose.msra.mxu0 0.0
  %4961 = vmatprep.subr.mxu0 0.0
  %4962 = vmatpush1.xpose.msra.mxu0 0.0
  %4963 = vmatprep.mubr.f32.mxu0 0.0
  %4964 = vmatmul.mubr.f32.gmra.mrb[0].mxu0 %v4867
  %v4965 = vpop.f32.mrb[0].mxu0
  %v4966 = vadd.f32 0.0, %v4965
  %v4967 = vpop.f32.mrb[0].mxu0
  %4968 = vmatprep.mubr.f32.mxu0 0.0
  %4969 = vmatmul.mubr.f32.gmra.mrb[0].mxu0 %v4869
  %v4970 = vpop.f32.mrb[0].mxu0
  %v4971 = vadd.f32 0.0, %v4970
  %v4972 = vpop.f32.mrb[0].mxu0
  %4973 = vmatprep.mubr.f32.mxu0 0.0
  %4974 = vmatmul.mubr.f32.gmra.mrb[0].mxu0 %v4871
  %v4975 = vpop.f32.mrb[0].mxu0
  %v4976 = vadd.f32 0.0, %v4975
  %v4977 = vpop.f32.mrb[0].mxu0
  %4978 = vmatprep.mubr.f32.mxu0 0.0
  %4979 = vmatmul.mubr.f32.gmra.mrb[0].mxu0 %v4873
  %v4980 = vpop.f32.mrb[0].mxu0
  %v4981 = vadd.f32 0.0, %v4980
  %v4982 = vpop.f32.mrb[0].mxu0
  %4983 = vmatprep.mubr.f32.mxu0 0.0
  %4984 = vmatmul.mubr.f32.gmra.mrb[0].mxu0 %v4875
  %v4985 = vpop.f32.mrb[0].mxu0
  %v4986 = vadd.f32 0.0, %v4985
  %v4987 = vpop.f32.mrb[0].mxu0
  %4988 = vmatprep.mubr.f32.mxu0 0.0
  %4989 = vmatmul.mubr.f32.gmra.mrb[0].mxu0 %v4877
  %v4990 = vpop.f32.mrb[0].mxu0
  %v4991 = vadd.f32 0.0, %v4990
  %v4992 = vpop.f32.mrb[0].mxu0
  %4993 = vmatprep.mubr.f32.mxu0 0.0
  %4994 = vmatmul.mubr.f32.gmra.mrb[0].mxu0 %v4879
  %v4995 = vpop.f32.mrb[0].mxu0
  %v4996 = vadd.f32 0.0, %v4995
  %v4997 = vpop.f32.mrb[0].mxu0
  %4998 = vmatprep.mubr.f32.mxu0 0.0
  %4999 = vmatmul.mubr.f32.gmra.mrb[0].mxu0 %v4881
  %v5000 = vpop.f32.mrb[0].mxu0
  %v5001 = vadd.f32 0.0, %v5000
  %v5002 = vpop.f32.mrb[0].mxu0
  %5003 = vdwg.mxu0
  %5004 = vrot.lane.b32.xlu0 %v1336, 112
  %v5005 = vpop.permute.xlu0 %5004
  %5006 = vrot.lane.b32.xlu0 %v1337, 112
  %v5007 = vpop.permute.xlu0 %5006
  %5008 = vrot.lane.b32.xlu0 %v1338, 112
  %v5009 = vpop.permute.xlu0 %5008
  %5010 = vrot.lane.b32.xlu0 %v1339, 112
  %v5011 = vpop.permute.xlu0 %5010
  %5012 = vrot.lane.b32.xlu0 %v1340, 112
  %v5013 = vpop.permute.xlu0 %5012
  %5014 = vrot.lane.b32.xlu0 %v1341, 112
  %v5015 = vpop.permute.xlu0 %5014
  %5016 = vrot.lane.b32.xlu0 %v1342, 112
  %v5017 = vpop.permute.xlu0 %5016
  %5018 = vrot.lane.b32.xlu0 %v1343, 112
  %v5019 = vpop.permute.xlu0 %5018
  %5020 = vrot.lane.b32.xlu0 %v1336, 104
  %v5021 = vpop.permute.xlu0 %5020
  %5022 = vrot.lane.b32.xlu0 %v1337, 104
  %v5023 = vpop.permute.xlu0 %5022
  %5024 = vrot.lane.b32.xlu0 %v1338, 104
  %v5025 = vpop.permute.xlu0 %5024
  %5026 = vrot.lane.b32.xlu0 %v1339, 104
  %v5027 = vpop.permute.xlu0 %5026
  %5028 = vrot.lane.b32.xlu0 %v1340, 104
  %v5029 = vpop.permute.xlu0 %5028
  %5030 = vrot.lane.b32.xlu0 %v1341, 104
  %v5031 = vpop.permute.xlu0 %5030
  %5032 = vrot.lane.b32.xlu0 %v1342, 104
  %v5033 = vpop.permute.xlu0 %5032
  %5034 = vrot.lane.b32.xlu0 %v1343, 104
  %v5035 = vpop.permute.xlu0 %5034
  %v5036 = vsel %vm1408, %v5005, 0
  %v5038 = vsel %vm1408, %v5007, 0
  %v5040 = vsel %vm1408, %v5009, 0
  %v5042 = vsel %vm1408, %v5011, 0
  %v5044 = vsel %vm1408, %v5013, 0
  %v5046 = vsel %vm1408, %v5015, 0
  %v5048 = vsel %vm1408, %v5017, 0
  %v5050 = vsel %vm1408, %v5019, 0
  %v5052 = vsel %vm1408, %v5021, 0
  %v5054 = vsel %vm1408, %v5023, 0
  %v5056 = vsel %vm1408, %v5025, 0
  %v5058 = vsel %vm1408, %v5027, 0
  %v5060 = vsel %vm1408, %v5029, 0
  %v5062 = vsel %vm1408, %v5031, 0
  %v5064 = vsel %vm1408, %v5033, 0
  %v5066 = vsel %vm1408, %v5035, 0
  %5068 = vmatprep.subr.mxu0 0.0
  %5069 = vmatpush1.xpose.msra.mxu0 %v5052
  %5070 = vmatprep.subr.mxu0 0.0
  %5071 = vmatpush1.xpose.msra.mxu0 %v5054
  %5072 = vmatprep.subr.mxu0 0.0
  %5073 = vmatpush1.xpose.msra.mxu0 %v5056
  %5074 = vmatprep.subr.mxu0 0.0
  %5075 = vmatpush1.xpose.msra.mxu0 %v5058
  %5076 = vmatprep.subr.mxu0 0.0
  %5077 = vmatpush1.xpose.msra.mxu0 %v5060
  %5078 = vmatprep.subr.mxu0 0.0
  %5079 = vmatpush1.xpose.msra.mxu0 %v5062
  %5080 = vmatprep.subr.mxu0 0.0
  %5081 = vmatpush1.xpose.msra.mxu0 %v5064
  %5082 = vmatprep.subr.mxu0 0.0
  %5083 = vmatpush1.xpose.msra.mxu0 %v5066
  %5084 = vmatprep.subr.mxu0 0.0
  %5085 = vmatpush1.xpose.msra.mxu0 0.0
  %5086 = vmatprep.subr.mxu0 0.0
  %5087 = vmatpush1.xpose.msra.mxu0 0.0
  %5088 = vmatprep.subr.mxu0 0.0
  %5089 = vmatpush1.xpose.msra.mxu0 0.0
  %5090 = vmatprep.subr.mxu0 0.0
  %5091 = vmatpush1.xpose.msra.mxu0 0.0
  %5092 = vmatprep.subr.mxu0 0.0
  %5093 = vmatpush1.xpose.msra.mxu0 0.0
  %5094 = vmatprep.subr.mxu0 0.0
  %5095 = vmatpush1.xpose.msra.mxu0 0.0
  %5096 = vmatprep.subr.mxu0 0.0
  %5097 = vmatpush1.xpose.msra.mxu0 0.0
  %5098 = vmatprep.subr.mxu0 0.0
  %5099 = vmatpush1.xpose.msra.mxu0 0.0
  %5100 = vmatprep.subr.mxu0 0.0
  %5101 = vmatpush1.xpose.msra.mxu0 0.0
  %5102 = vmatprep.subr.mxu0 0.0
  %5103 = vmatpush1.xpose.msra.mxu0 0.0
  %5104 = vmatprep.subr.mxu0 0.0
  %5105 = vmatpush1.xpose.msra.mxu0 0.0
  %5106 = vmatprep.subr.mxu0 0.0
  %5107 = vmatpush1.xpose.msra.mxu0 0.0
  %5108 = vmatprep.subr.mxu0 0.0
  %5109 = vmatpush1.xpose.msra.mxu0 0.0
  %5110 = vmatprep.subr.mxu0 0.0
  %5111 = vmatpush1.xpose.msra.mxu0 0.0
  %5112 = vmatprep.subr.mxu0 0.0
  %5113 = vmatpush1.xpose.msra.mxu0 0.0
  %5114 = vmatprep.subr.mxu0 0.0
  %5115 = vmatpush1.xpose.msra.mxu0 0.0
  %5116 = vmatprep.subr.mxu0 0.0
  %5117 = vmatpush1.xpose.msra.mxu0 0.0
  %5118 = vmatprep.subr.mxu0 0.0
  %5119 = vmatpush1.xpose.msra.mxu0 0.0
  %5120 = vmatprep.subr.mxu0 0.0
  %5121 = vmatpush1.xpose.msra.mxu0 0.0
  %5122 = vmatprep.subr.mxu0 0.0
  %5123 = vmatpush1.xpose.msra.mxu0 0.0
  %5124 = vmatprep.subr.mxu0 0.0
  %5125 = vmatpush1.xpose.msra.mxu0 0.0
  %5126 = vmatprep.subr.mxu0 0.0
  %5127 = vmatpush1.xpose.msra.mxu0 0.0
  %5128 = vmatprep.subr.mxu0 0.0
  %5129 = vmatpush1.xpose.msra.mxu0 0.0
  %5130 = vmatprep.subr.mxu0 0.0
  %5131 = vmatpush1.xpose.msra.mxu0 0.0
  %5132 = vmatprep.mubr.f32.mxu0 0.0
  %5133 = vmatmul.mubr.f32.gmra.mrb[0].mxu0 %v5036
  %v5134 = vpop.f32.mrb[0].mxu0
  %v5135 = vadd.f32 0.0, %v5134
  %v5136 = vpop.f32.mrb[0].mxu0
  %5137 = vmatprep.mubr.f32.mxu0 0.0
  %5138 = vmatmul.mubr.f32.gmra.mrb[0].mxu0 %v5038
  %v5139 = vpop.f32.mrb[0].mxu0
  %v5140 = vadd.f32 0.0, %v5139
  %v5141 = vpop.f32.mrb[0].mxu0
  %5142 = vmatprep.mubr.f32.mxu0 0.0
  %5143 = vmatmul.mubr.f32.gmra.mrb[0].mxu0 %v5040
  %v5144 = vpop.f32.mrb[0].mxu0
  %v5145 = vadd.f32 0.0, %v5144
  %v5146 = vpop.f32.mrb[0].mxu0
  %5147 = vmatprep.mubr.f32.mxu0 0.0
  %5148 = vmatmul.mubr.f32.gmra.mrb[0].mxu0 %v5042
  %v5149 = vpop.f32.mrb[0].mxu0
  %v5150 = vadd.f32 0.0, %v5149
  %v5151 = vpop.f32.mrb[0].mxu0
  %5152 = vmatprep.mubr.f32.mxu0 0.0
  %5153 = vmatmul.mubr.f32.gmra.mrb[0].mxu0 %v5044
  %v5154 = vpop.f32.mrb[0].mxu0
  %v5155 = vadd.f32 0.0, %v5154
  %v5156 = vpop.f32.mrb[0].mxu0
  %5157 = vmatprep.mubr.f32.mxu0 0.0
  %5158 = vmatmul.mubr.f32.gmra.mrb[0].mxu0 %v5046
  %v5159 = vpop.f32.mrb[0].mxu0
  %v5160 = vadd.f32 0.0, %v5159
  %v5161 = vpop.f32.mrb[0].mxu0
  %5162 = vmatprep.mubr.f32.mxu0 0.0
  %5163 = vmatmul.mubr.f32.gmra.mrb[0].mxu0 %v5048
  %v5164 = vpop.f32.mrb[0].mxu0
  %v5165 = vadd.f32 0.0, %v5164
  %v5166 = vpop.f32.mrb[0].mxu0
  %5167 = vmatprep.mubr.f32.mxu0 0.0
  %5168 = vmatmul.mubr.f32.gmra.mrb[0].mxu0 %v5050
  %v5169 = vpop.f32.mrb[0].mxu0
  %v5170 = vadd.f32 0.0, %v5169
  %v5171 = vpop.f32.mrb[0].mxu0
  %5172 = vdwg.mxu0
  %5173 = vrot.lane.b32.xlu0 %v1344, 112
  %v5174 = vpop.permute.xlu0 %5173
  %5175 = vrot.lane.b32.xlu0 %v1345, 112
  %v5176 = vpop.permute.xlu0 %5175
  %5177 = vrot.lane.b32.xlu0 %v1346, 112
  %v5178 = vpop.permute.xlu0 %5177
  %5179 = vrot.lane.b32.xlu0 %v1347, 112
  %v5180 = vpop.permute.xlu0 %5179
  %5181 = vrot.lane.b32.xlu0 %v1348, 112
  %v5182 = vpop.permute.xlu0 %5181
  %5183 = vrot.lane.b32.xlu0 %v1349, 112
  %v5184 = vpop.permute.xlu0 %5183
  %5185 = vrot.lane.b32.xlu0 %v1350, 112
  %v5186 = vpop.permute.xlu0 %5185
  %5187 = vrot.lane.b32.xlu0 %v1351, 112
  %v5188 = vpop.permute.xlu0 %5187
  %5189 = vrot.lane.b32.xlu0 %v1344, 104
  %v5190 = vpop.permute.xlu0 %5189
  %5191 = vrot.lane.b32.xlu0 %v1345, 104
  %v5192 = vpop.permute.xlu0 %5191
  %5193 = vrot.lane.b32.xlu0 %v1346, 104
  %v5194 = vpop.permute.xlu0 %5193
  %5195 = vrot.lane.b32.xlu0 %v1347, 104
  %v5196 = vpop.permute.xlu0 %5195
  %5197 = vrot.lane.b32.xlu0 %v1348, 104
  %v5198 = vpop.permute.xlu0 %5197
  %5199 = vrot.lane.b32.xlu0 %v1349, 104
  %v5200 = vpop.permute.xlu0 %5199
  %5201 = vrot.lane.b32.xlu0 %v1350, 104
  %v5202 = vpop.permute.xlu0 %5201
  %5203 = vrot.lane.b32.xlu0 %v1351, 104
  %v5204 = vpop.permute.xlu0 %5203
  %v5205 = vsel %vm1408, %v5174, 0
  %v5207 = vsel %vm1408, %v5176, 0
  %v5209 = vsel %vm1408, %v5178, 0
  %v5211 = vsel %vm1408, %v5180, 0
  %v5213 = vsel %vm1408, %v5182, 0
  %v5215 = vsel %vm1408, %v5184, 0
  %v5217 = vsel %vm1408, %v5186, 0
  %v5219 = vsel %vm1408, %v5188, 0
  %v5221 = vsel %vm1408, %v5190, 0
  %v5223 = vsel %vm1408, %v5192, 0
  %v5225 = vsel %vm1408, %v5194, 0
  %v5227 = vsel %vm1408, %v5196, 0
  %v5229 = vsel %vm1408, %v5198, 0
  %v5231 = vsel %vm1408, %v5200, 0
  %v5233 = vsel %vm1408, %v5202, 0
  %v5235 = vsel %vm1408, %v5204, 0
  %5237 = vmatprep.subr.mxu0 0.0
  %5238 = vmatpush1.xpose.msra.mxu0 %v5221
  %5239 = vmatprep.subr.mxu0 0.0
  %5240 = vmatpush1.xpose.msra.mxu0 %v5223
  %5241 = vmatprep.subr.mxu0 0.0
  %5242 = vmatpush1.xpose.msra.mxu0 %v5225
  %5243 = vmatprep.subr.mxu0 0.0
  %5244 = vmatpush1.xpose.msra.mxu0 %v5227
  %5245 = vmatprep.subr.mxu0 0.0
  %5246 = vmatpush1.xpose.msra.mxu0 %v5229
  %5247 = vmatprep.subr.mxu0 0.0
  %5248 = vmatpush1.xpose.msra.mxu0 %v5231
  %5249 = vmatprep.subr.mxu0 0.0
  %5250 = vmatpush1.xpose.msra.mxu0 %v5233
  %5251 = vmatprep.subr.mxu0 0.0
  %5252 = vmatpush1.xpose.msra.mxu0 %v5235
  %5253 = vmatprep.subr.mxu0 0.0
  %5254 = vmatpush1.xpose.msra.mxu0 0.0
  %5255 = vmatprep.subr.mxu0 0.0
  %5256 = vmatpush1.xpose.msra.mxu0 0.0
  %5257 = vmatprep.subr.mxu0 0.0
  %5258 = vmatpush1.xpose.msra.mxu0 0.0
  %5259 = vmatprep.subr.mxu0 0.0
  %5260 = vmatpush1.xpose.msra.mxu0 0.0
  %5261 = vmatprep.subr.mxu0 0.0
  %5262 = vmatpush1.xpose.msra.mxu0 0.0
  %5263 = vmatprep.subr.mxu0 0.0
  %5264 = vmatpush1.xpose.msra.mxu0 0.0
  %5265 = vmatprep.subr.mxu0 0.0
  %5266 = vmatpush1.xpose.msra.mxu0 0.0
  %5267 = vmatprep.subr.mxu0 0.0
  %5268 = vmatpush1.xpose.msra.mxu0 0.0
  %5269 = vmatprep.subr.mxu0 0.0
  %5270 = vmatpush1.xpose.msra.mxu0 0.0
  %5271 = vmatprep.subr.mxu0 0.0
  %5272 = vmatpush1.xpose.msra.mxu0 0.0
  %5273 = vmatprep.subr.mxu0 0.0
  %5274 = vmatpush1.xpose.msra.mxu0 0.0
  %5275 = vmatprep.subr.mxu0 0.0
  %5276 = vmatpush1.xpose.msra.mxu0 0.0
  %5277 = vmatprep.subr.mxu0 0.0
  %5278 = vmatpush1.xpose.msra.mxu0 0.0
  %5279 = vmatprep.subr.mxu0 0.0
  %5280 = vmatpush1.xpose.msra.mxu0 0.0
  %5281 = vmatprep.subr.mxu0 0.0
  %5282 = vmatpush1.xpose.msra.mxu0 0.0
  %5283 = vmatprep.subr.mxu0 0.0
  %5284 = vmatpush1.xpose.msra.mxu0 0.0
  %5285 = vmatprep.subr.mxu0 0.0
  %5286 = vmatpush1.xpose.msra.mxu0 0.0
  %5287 = vmatprep.subr.mxu0 0.0
  %5288 = vmatpush1.xpose.msra.mxu0 0.0
  %5289 = vmatprep.subr.mxu0 0.0
  %5290 = vmatpush1.xpose.msra.mxu0 0.0
  %5291 = vmatprep.subr.mxu0 0.0
  %5292 = vmatpush1.xpose.msra.mxu0 0.0
  %5293 = vmatprep.subr.mxu0 0.0
  %5294 = vmatpush1.xpose.msra.mxu0 0.0
  %5295 = vmatprep.subr.mxu0 0.0
  %5296 = vmatpush1.xpose.msra.mxu0 0.0
  %5297 = vmatprep.subr.mxu0 0.0
  %5298 = vmatpush1.xpose.msra.mxu0 0.0
  %5299 = vmatprep.subr.mxu0 0.0
  %5300 = vmatpush1.xpose.msra.mxu0 0.0
  %5301 = vmatprep.mubr.f32.mxu0 0.0
  %5302 = vmatmul.mubr.f32.gmra.mrb[0].mxu0 %v5205
  %v5303 = vpop.f32.mrb[0].mxu0
  %v5304 = vadd.f32 0.0, %v5303
  %v5305 = vpop.f32.mrb[0].mxu0
  %5306 = vmatprep.mubr.f32.mxu0 0.0
  %5307 = vmatmul.mubr.f32.gmra.mrb[0].mxu0 %v5207
  %v5308 = vpop.f32.mrb[0].mxu0
  %v5309 = vadd.f32 0.0, %v5308
  %v5310 = vpop.f32.mrb[0].mxu0
  %5311 = vmatprep.mubr.f32.mxu0 0.0
  %5312 = vmatmul.mubr.f32.gmra.mrb[0].mxu0 %v5209
  %v5313 = vpop.f32.mrb[0].mxu0
  %v5314 = vadd.f32 0.0, %v5313
  %v5315 = vpop.f32.mrb[0].mxu0
  %5316 = vmatprep.mubr.f32.mxu0 0.0
  %5317 = vmatmul.mubr.f32.gmra.mrb[0].mxu0 %v5211
  %v5318 = vpop.f32.mrb[0].mxu0
  %v5319 = vadd.f32 0.0, %v5318
  %v5320 = vpop.f32.mrb[0].mxu0
  %5321 = vmatprep.mubr.f32.mxu0 0.0
  %5322 = vmatmul.mubr.f32.gmra.mrb[0].mxu0 %v5213
  %v5323 = vpop.f32.mrb[0].mxu0
  %v5324 = vadd.f32 0.0, %v5323
  %v5325 = vpop.f32.mrb[0].mxu0
  %5326 = vmatprep.mubr.f32.mxu0 0.0
  %5327 = vmatmul.mubr.f32.gmra.mrb[0].mxu0 %v5215
  %v5328 = vpop.f32.mrb[0].mxu0
  %v5329 = vadd.f32 0.0, %v5328
  %v5330 = vpop.f32.mrb[0].mxu0
  %5331 = vmatprep.mubr.f32.mxu0 0.0
  %5332 = vmatmul.mubr.f32.gmra.mrb[0].mxu0 %v5217
  %v5333 = vpop.f32.mrb[0].mxu0
  %v5334 = vadd.f32 0.0, %v5333
  %v5335 = vpop.f32.mrb[0].mxu0
  %5336 = vmatprep.mubr.f32.mxu0 0.0
  %5337 = vmatmul.mubr.f32.gmra.mrb[0].mxu0 %v5219
  %v5338 = vpop.f32.mrb[0].mxu0
  %v5339 = vadd.f32 0.0, %v5338
  %v5340 = vpop.f32.mrb[0].mxu0
  %5341 = vdwg.mxu0
  %5342 = vrot.lane.b32.xlu0 %v1352, 112
  %v5343 = vpop.permute.xlu0 %5342
  %5344 = vrot.lane.b32.xlu0 %v1353, 112
  %v5345 = vpop.permute.xlu0 %5344
  %5346 = vrot.lane.b32.xlu0 %v1354, 112
  %v5347 = vpop.permute.xlu0 %5346
  %5348 = vrot.lane.b32.xlu0 %v1355, 112
  %v5349 = vpop.permute.xlu0 %5348
  %5350 = vrot.lane.b32.xlu0 %v1356, 112
  %v5351 = vpop.permute.xlu0 %5350
  %5352 = vrot.lane.b32.xlu0 %v1357, 112
  %v5353 = vpop.permute.xlu0 %5352
  %5354 = vrot.lane.b32.xlu0 %v1358, 112
  %v5355 = vpop.permute.xlu0 %5354
  %5356 = vrot.lane.b32.xlu0 %v1359, 112
  %v5357 = vpop.permute.xlu0 %5356
  %5358 = vrot.lane.b32.xlu0 %v1352, 104
  %v5359 = vpop.permute.xlu0 %5358
  %5360 = vrot.lane.b32.xlu0 %v1353, 104
  %v5361 = vpop.permute.xlu0 %5360
  %5362 = vrot.lane.b32.xlu0 %v1354, 104
  %v5363 = vpop.permute.xlu0 %5362
  %5364 = vrot.lane.b32.xlu0 %v1355, 104
  %v5365 = vpop.permute.xlu0 %5364
  %5366 = vrot.lane.b32.xlu0 %v1356, 104
  %v5367 = vpop.permute.xlu0 %5366
  %5368 = vrot.lane.b32.xlu0 %v1357, 104
  %v5369 = vpop.permute.xlu0 %5368
  %5370 = vrot.lane.b32.xlu0 %v1358, 104
  %v5371 = vpop.permute.xlu0 %5370
  %5372 = vrot.lane.b32.xlu0 %v1359, 104
  %v5373 = vpop.permute.xlu0 %5372
  %v5374 = vsel %vm1408, %v5343, 0
  %v5376 = vsel %vm1408, %v5345, 0
  %v5378 = vsel %vm1408, %v5347, 0
  %v5380 = vsel %vm1408, %v5349, 0
  %v5382 = vsel %vm1408, %v5351, 0
  %v5384 = vsel %vm1408, %v5353, 0
  %v5386 = vsel %vm1408, %v5355, 0
  %v5388 = vsel %vm1408, %v5357, 0
  %v5390 = vsel %vm1408, %v5359, 0
  %v5392 = vsel %vm1408, %v5361, 0
  %v5394 = vsel %vm1408, %v5363, 0
  %v5396 = vsel %vm1408, %v5365, 0
  %v5398 = vsel %vm1408, %v5367, 0
  %v5400 = vsel %vm1408, %v5369, 0
  %v5402 = vsel %vm1408, %v5371, 0
  %v5404 = vsel %vm1408, %v5373, 0
  %5406 = vmatprep.subr.mxu0 0.0
  %5407 = vmatpush1.xpose.msra.mxu0 %v5390
  %5408 = vmatprep.subr.mxu0 0.0
  %5409 = vmatpush1.xpose.msra.mxu0 %v5392
  %5410 = vmatprep.subr.mxu0 0.0
  %5411 = vmatpush1.xpose.msra.mxu0 %v5394
  %5412 = vmatprep.subr.mxu0 0.0
  %5413 = vmatpush1.xpose.msra.mxu0 %v5396
  %5414 = vmatprep.subr.mxu0 0.0
  %5415 = vmatpush1.xpose.msra.mxu0 %v5398
  %5416 = vmatprep.subr.mxu0 0.0
  %5417 = vmatpush1.xpose.msra.mxu0 %v5400
  %5418 = vmatprep.subr.mxu0 0.0
  %5419 = vmatpush1.xpose.msra.mxu0 %v5402
  %5420 = vmatprep.subr.mxu0 0.0
  %5421 = vmatpush1.xpose.msra.mxu0 %v5404
  %5422 = vmatprep.subr.mxu0 0.0
  %5423 = vmatpush1.xpose.msra.mxu0 0.0
  %5424 = vmatprep.subr.mxu0 0.0
  %5425 = vmatpush1.xpose.msra.mxu0 0.0
  %5426 = vmatprep.subr.mxu0 0.0
  %5427 = vmatpush1.xpose.msra.mxu0 0.0
  %5428 = vmatprep.subr.mxu0 0.0
  %5429 = vmatpush1.xpose.msra.mxu0 0.0
  %5430 = vmatprep.subr.mxu0 0.0
  %5431 = vmatpush1.xpose.msra.mxu0 0.0
  %5432 = vmatprep.subr.mxu0 0.0
  %5433 = vmatpush1.xpose.msra.mxu0 0.0
  %5434 = vmatprep.subr.mxu0 0.0
  %5435 = vmatpush1.xpose.msra.mxu0 0.0
  %5436 = vmatprep.subr.mxu0 0.0
  %5437 = vmatpush1.xpose.msra.mxu0 0.0
  %5438 = vmatprep.subr.mxu0 0.0
  %5439 = vmatpush1.xpose.msra.mxu0 0.0
  %5440 = vmatprep.subr.mxu0 0.0
  %5441 = vmatpush1.xpose.msra.mxu0 0.0
  %5442 = vmatprep.subr.mxu0 0.0
  %5443 = vmatpush1.xpose.msra.mxu0 0.0
  %5444 = vmatprep.subr.mxu0 0.0
  %5445 = vmatpush1.xpose.msra.mxu0 0.0
  %5446 = vmatprep.subr.mxu0 0.0
  %5447 = vmatpush1.xpose.msra.mxu0 0.0
  %5448 = vmatprep.subr.mxu0 0.0
  %5449 = vmatpush1.xpose.msra.mxu0 0.0
  %5450 = vmatprep.subr.mxu0 0.0
  %5451 = vmatpush1.xpose.msra.mxu0 0.0
  %5452 = vmatprep.subr.mxu0 0.0
  %5453 = vmatpush1.xpose.msra.mxu0 0.0
  %5454 = vmatprep.subr.mxu0 0.0
  %5455 = vmatpush1.xpose.msra.mxu0 0.0
  %5456 = vmatprep.subr.mxu0 0.0
  %5457 = vmatpush1.xpose.msra.mxu0 0.0
  %5458 = vmatprep.subr.mxu0 0.0
  %5459 = vmatpush1.xpose.msra.mxu0 0.0
  %5460 = vmatprep.subr.mxu0 0.0
  %5461 = vmatpush1.xpose.msra.mxu0 0.0
  %5462 = vmatprep.subr.mxu0 0.0
  %5463 = vmatpush1.xpose.msra.mxu0 0.0
  %5464 = vmatprep.subr.mxu0 0.0
  %5465 = vmatpush1.xpose.msra.mxu0 0.0
  %5466 = vmatprep.subr.mxu0 0.0
  %5467 = vmatpush1.xpose.msra.mxu0 0.0
  %5468 = vmatprep.subr.mxu0 0.0
  %5469 = vmatpush1.xpose.msra.mxu0 0.0
  %5470 = vmatprep.mubr.f32.mxu0 0.0
  %5471 = vmatmul.mubr.f32.gmra.mrb[0].mxu0 %v5374
  %v5472 = vpop.f32.mrb[0].mxu0
  %v5473 = vadd.f32 0.0, %v5472
  %v5474 = vpop.f32.mrb[0].mxu0
  %5475 = vmatprep.mubr.f32.mxu0 0.0
  %5476 = vmatmul.mubr.f32.gmra.mrb[0].mxu0 %v5376
  %v5477 = vpop.f32.mrb[0].mxu0
  %v5478 = vadd.f32 0.0, %v5477
  %v5479 = vpop.f32.mrb[0].mxu0
  %5480 = vmatprep.mubr.f32.mxu0 0.0
  %5481 = vmatmul.mubr.f32.gmra.mrb[0].mxu0 %v5378
  %v5482 = vpop.f32.mrb[0].mxu0
  %v5483 = vadd.f32 0.0, %v5482
  %v5484 = vpop.f32.mrb[0].mxu0
  %5485 = vmatprep.mubr.f32.mxu0 0.0
  %5486 = vmatmul.mubr.f32.gmra.mrb[0].mxu0 %v5380
  %v5487 = vpop.f32.mrb[0].mxu0
  %v5488 = vadd.f32 0.0, %v5487
  %v5489 = vpop.f32.mrb[0].mxu0
  %5490 = vmatprep.mubr.f32.mxu0 0.0
  %5491 = vmatmul.mubr.f32.gmra.mrb[0].mxu0 %v5382
  %v5492 = vpop.f32.mrb[0].mxu0
  %v5493 = vadd.f32 0.0, %v5492
  %v5494 = vpop.f32.mrb[0].mxu0
  %5495 = vmatprep.mubr.f32.mxu0 0.0
  %5496 = vmatmul.mubr.f32.gmra.mrb[0].mxu0 %v5384
  %v5497 = vpop.f32.mrb[0].mxu0
  %v5498 = vadd.f32 0.0, %v5497
  %v5499 = vpop.f32.mrb[0].mxu0
  %5500 = vmatprep.mubr.f32.mxu0 0.0
  %5501 = vmatmul.mubr.f32.gmra.mrb[0].mxu0 %v5386
  %v5502 = vpop.f32.mrb[0].mxu0
  %v5503 = vadd.f32 0.0, %v5502
  %v5504 = vpop.f32.mrb[0].mxu0
  %5505 = vmatprep.mubr.f32.mxu0 0.0
  %5506 = vmatmul.mubr.f32.gmra.mrb[0].mxu0 %v5388
  %v5507 = vpop.f32.mrb[0].mxu0
  %v5508 = vadd.f32 0.0, %v5507
  %v5509 = vpop.f32.mrb[0].mxu0
  %5510 = vdwg.mxu0
  %5511 = vrot.lane.b32.xlu0 %v1360, 112
  %v5512 = vpop.permute.xlu0 %5511
  %5513 = vrot.lane.b32.xlu0 %v1361, 112
  %v5514 = vpop.permute.xlu0 %5513
  %5515 = vrot.lane.b32.xlu0 %v1362, 112
  %v5516 = vpop.permute.xlu0 %5515
  %5517 = vrot.lane.b32.xlu0 %v1363, 112
  %v5518 = vpop.permute.xlu0 %5517
  %5519 = vrot.lane.b32.xlu0 %v1364, 112
  %v5520 = vpop.permute.xlu0 %5519
  %5521 = vrot.lane.b32.xlu0 %v1365, 112
  %v5522 = vpop.permute.xlu0 %5521
  %5523 = vrot.lane.b32.xlu0 %v1366, 112
  %v5524 = vpop.permute.xlu0 %5523
  %5525 = vrot.lane.b32.xlu0 %v1367, 112
  %v5526 = vpop.permute.xlu0 %5525
  %5527 = vrot.lane.b32.xlu0 %v1360, 104
  %v5528 = vpop.permute.xlu0 %5527
  %5529 = vrot.lane.b32.xlu0 %v1361, 104
  %v5530 = vpop.permute.xlu0 %5529
  %5531 = vrot.lane.b32.xlu0 %v1362, 104
  %v5532 = vpop.permute.xlu0 %5531
  %5533 = vrot.lane.b32.xlu0 %v1363, 104
  %v5534 = vpop.permute.xlu0 %5533
  %5535 = vrot.lane.b32.xlu0 %v1364, 104
  %v5536 = vpop.permute.xlu0 %5535
  %5537 = vrot.lane.b32.xlu0 %v1365, 104
  %v5538 = vpop.permute.xlu0 %5537
  %5539 = vrot.lane.b32.xlu0 %v1366, 104
  %v5540 = vpop.permute.xlu0 %5539
  %5541 = vrot.lane.b32.xlu0 %v1367, 104
  %v5542 = vpop.permute.xlu0 %5541
  %v5543 = vsel %vm1408, %v5512, 0
  %v5545 = vsel %vm1408, %v5514, 0
  %v5547 = vsel %vm1408, %v5516, 0
  %v5549 = vsel %vm1408, %v5518, 0
  %v5551 = vsel %vm1408, %v5520, 0
  %v5553 = vsel %vm1408, %v5522, 0
  %v5555 = vsel %vm1408, %v5524, 0
  %v5557 = vsel %vm1408, %v5526, 0
  %v5559 = vsel %vm1408, %v5528, 0
  %v5561 = vsel %vm1408, %v5530, 0
  %v5563 = vsel %vm1408, %v5532, 0
  %v5565 = vsel %vm1408, %v5534, 0
  %v5567 = vsel %vm1408, %v5536, 0
  %v5569 = vsel %vm1408, %v5538, 0
  %v5571 = vsel %vm1408, %v5540, 0
  %v5573 = vsel %vm1408, %v5542, 0
  %5575 = vmatprep.subr.mxu0 0.0
  %5576 = vmatpush1.xpose.msra.mxu0 %v5559
  %5577 = vmatprep.subr.mxu0 0.0
  %5578 = vmatpush1.xpose.msra.mxu0 %v5561
  %5579 = vmatprep.subr.mxu0 0.0
  %5580 = vmatpush1.xpose.msra.mxu0 %v5563
  %5581 = vmatprep.subr.mxu0 0.0
  %5582 = vmatpush1.xpose.msra.mxu0 %v5565
  %5583 = vmatprep.subr.mxu0 0.0
  %5584 = vmatpush1.xpose.msra.mxu0 %v5567
  %5585 = vmatprep.subr.mxu0 0.0
  %5586 = vmatpush1.xpose.msra.mxu0 %v5569
  %5587 = vmatprep.subr.mxu0 0.0
  %5588 = vmatpush1.xpose.msra.mxu0 %v5571
  %5589 = vmatprep.subr.mxu0 0.0
  %5590 = vmatpush1.xpose.msra.mxu0 %v5573
  %5591 = vmatprep.subr.mxu0 0.0
  %5592 = vmatpush1.xpose.msra.mxu0 0.0
  %5593 = vmatprep.subr.mxu0 0.0
  %5594 = vmatpush1.xpose.msra.mxu0 0.0
  %5595 = vmatprep.subr.mxu0 0.0
  %5596 = vmatpush1.xpose.msra.mxu0 0.0
  %5597 = vmatprep.subr.mxu0 0.0
  %5598 = vmatpush1.xpose.msra.mxu0 0.0
  %5599 = vmatprep.subr.mxu0 0.0
  %5600 = vmatpush1.xpose.msra.mxu0 0.0
  %5601 = vmatprep.subr.mxu0 0.0
  %5602 = vmatpush1.xpose.msra.mxu0 0.0
  %5603 = vmatprep.subr.mxu0 0.0
  %5604 = vmatpush1.xpose.msra.mxu0 0.0
  %5605 = vmatprep.subr.mxu0 0.0
  %5606 = vmatpush1.xpose.msra.mxu0 0.0
  %5607 = vmatprep.subr.mxu0 0.0
  %5608 = vmatpush1.xpose.msra.mxu0 0.0
  %5609 = vmatprep.subr.mxu0 0.0
  %5610 = vmatpush1.xpose.msra.mxu0 0.0
  %5611 = vmatprep.subr.mxu0 0.0
  %5612 = vmatpush1.xpose.msra.mxu0 0.0
  %5613 = vmatprep.subr.mxu0 0.0
  %5614 = vmatpush1.xpose.msra.mxu0 0.0
  %5615 = vmatprep.subr.mxu0 0.0
  %5616 = vmatpush1.xpose.msra.mxu0 0.0
  %5617 = vmatprep.subr.mxu0 0.0
  %5618 = vmatpush1.xpose.msra.mxu0 0.0
  %5619 = vmatprep.subr.mxu0 0.0
  %5620 = vmatpush1.xpose.msra.mxu0 0.0
  %5621 = vmatprep.subr.mxu0 0.0
  %5622 = vmatpush1.xpose.msra.mxu0 0.0
  %5623 = vmatprep.subr.mxu0 0.0
  %5624 = vmatpush1.xpose.msra.mxu0 0.0
  %5625 = vmatprep.subr.mxu0 0.0
  %5626 = vmatpush1.xpose.msra.mxu0 0.0
  %5627 = vmatprep.subr.mxu0 0.0
  %5628 = vmatpush1.xpose.msra.mxu0 0.0
  %5629 = vmatprep.subr.mxu0 0.0
  %5630 = vmatpush1.xpose.msra.mxu0 0.0
  %5631 = vmatprep.subr.mxu0 0.0
  %5632 = vmatpush1.xpose.msra.mxu0 0.0
  %5633 = vmatprep.subr.mxu0 0.0
  %5634 = vmatpush1.xpose.msra.mxu0 0.0
  %5635 = vmatprep.subr.mxu0 0.0
  %5636 = vmatpush1.xpose.msra.mxu0 0.0
  %5637 = vmatprep.subr.mxu0 0.0
  %5638 = vmatpush1.xpose.msra.mxu0 0.0
  %5639 = vmatprep.mubr.f32.mxu0 0.0
  %5640 = vmatmul.mubr.f32.gmra.mrb[0].mxu0 %v5543
  %v5641 = vpop.f32.mrb[0].mxu0
  %v5642 = vadd.f32 0.0, %v5641
  %v5643 = vpop.f32.mrb[0].mxu0
  %5644 = vmatprep.mubr.f32.mxu0 0.0
  %5645 = vmatmul.mubr.f32.gmra.mrb[0].mxu0 %v5545
  %v5646 = vpop.f32.mrb[0].mxu0
  %v5647 = vadd.f32 0.0, %v5646
  %v5648 = vpop.f32.mrb[0].mxu0
  %5649 = vmatprep.mubr.f32.mxu0 0.0
  %5650 = vmatmul.mubr.f32.gmra.mrb[0].mxu0 %v5547
  %v5651 = vpop.f32.mrb[0].mxu0
  %v5652 = vadd.f32 0.0, %v5651
  %v5653 = vpop.f32.mrb[0].mxu0
  %5654 = vmatprep.mubr.f32.mxu0 0.0
  %5655 = vmatmul.mubr.f32.gmra.mrb[0].mxu0 %v5549
  %v5656 = vpop.f32.mrb[0].mxu0
  %v5657 = vadd.f32 0.0, %v5656
  %v5658 = vpop.f32.mrb[0].mxu0
  %5659 = vmatprep.mubr.f32.mxu0 0.0
  %5660 = vmatmul.mubr.f32.gmra.mrb[0].mxu0 %v5551
  %v5661 = vpop.f32.mrb[0].mxu0
  %v5662 = vadd.f32 0.0, %v5661
  %v5663 = vpop.f32.mrb[0].mxu0
  %5664 = vmatprep.mubr.f32.mxu0 0.0
  %5665 = vmatmul.mubr.f32.gmra.mrb[0].mxu0 %v5553
  %v5666 = vpop.f32.mrb[0].mxu0
  %v5667 = vadd.f32 0.0, %v5666
  %v5668 = vpop.f32.mrb[0].mxu0
  %5669 = vmatprep.mubr.f32.mxu0 0.0
  %5670 = vmatmul.mubr.f32.gmra.mrb[0].mxu0 %v5555
  %v5671 = vpop.f32.mrb[0].mxu0
  %v5672 = vadd.f32 0.0, %v5671
  %v5673 = vpop.f32.mrb[0].mxu0
  %5674 = vmatprep.mubr.f32.mxu0 0.0
  %5675 = vmatmul.mubr.f32.gmra.mrb[0].mxu0 %v5557
  %v5676 = vpop.f32.mrb[0].mxu0
  %v5677 = vadd.f32 0.0, %v5676
  %v5678 = vpop.f32.mrb[0].mxu0
  %5679 = vdwg.mxu0
  %5680 = vrot.lane.b32.xlu0 %v1368, 112
  %v5681 = vpop.permute.xlu0 %5680
  %5682 = vrot.lane.b32.xlu0 %v1369, 112
  %v5683 = vpop.permute.xlu0 %5682
  %5684 = vrot.lane.b32.xlu0 %v1370, 112
  %v5685 = vpop.permute.xlu0 %5684
  %5686 = vrot.lane.b32.xlu0 %v1371, 112
  %v5687 = vpop.permute.xlu0 %5686
  %5688 = vrot.lane.b32.xlu0 %v1372, 112
  %v5689 = vpop.permute.xlu0 %5688
  %5690 = vrot.lane.b32.xlu0 %v1373, 112
  %v5691 = vpop.permute.xlu0 %5690
  %5692 = vrot.lane.b32.xlu0 %v1374, 112
  %v5693 = vpop.permute.xlu0 %5692
  %5694 = vrot.lane.b32.xlu0 %v1375, 112
  %v5695 = vpop.permute.xlu0 %5694
  %5696 = vrot.lane.b32.xlu0 %v1368, 104
  %v5697 = vpop.permute.xlu0 %5696
  %5698 = vrot.lane.b32.xlu0 %v1369, 104
  %v5699 = vpop.permute.xlu0 %5698
  %5700 = vrot.lane.b32.xlu0 %v1370, 104
  %v5701 = vpop.permute.xlu0 %5700
  %5702 = vrot.lane.b32.xlu0 %v1371, 104
  %v5703 = vpop.permute.xlu0 %5702
  %5704 = vrot.lane.b32.xlu0 %v1372, 104
  %v5705 = vpop.permute.xlu0 %5704
  %5706 = vrot.lane.b32.xlu0 %v1373, 104
  %v5707 = vpop.permute.xlu0 %5706
  %5708 = vrot.lane.b32.xlu0 %v1374, 104
  %v5709 = vpop.permute.xlu0 %5708
  %5710 = vrot.lane.b32.xlu0 %v1375, 104
  %v5711 = vpop.permute.xlu0 %5710
  %v5712 = vsel %vm1408, %v5681, 0
  %v5714 = vsel %vm1408, %v5683, 0
  %v5716 = vsel %vm1408, %v5685, 0
  %v5718 = vsel %vm1408, %v5687, 0
  %v5720 = vsel %vm1408, %v5689, 0
  %v5722 = vsel %vm1408, %v5691, 0
  %v5724 = vsel %vm1408, %v5693, 0
  %v5726 = vsel %vm1408, %v5695, 0
  %v5728 = vsel %vm1408, %v5697, 0
  %v5730 = vsel %vm1408, %v5699, 0
  %v5732 = vsel %vm1408, %v5701, 0
  %v5734 = vsel %vm1408, %v5703, 0
  %v5736 = vsel %vm1408, %v5705, 0
  %v5738 = vsel %vm1408, %v5707, 0
  %v5740 = vsel %vm1408, %v5709, 0
  %v5742 = vsel %vm1408, %v5711, 0
  %5744 = vmatprep.subr.mxu0 0.0
  %5745 = vmatpush1.xpose.msra.mxu0 %v5728
  %5746 = vmatprep.subr.mxu0 0.0
  %5747 = vmatpush1.xpose.msra.mxu0 %v5730
  %5748 = vmatprep.subr.mxu0 0.0
  %5749 = vmatpush1.xpose.msra.mxu0 %v5732
  %5750 = vmatprep.subr.mxu0 0.0
  %5751 = vmatpush1.xpose.msra.mxu0 %v5734
  %5752 = vmatprep.subr.mxu0 0.0
  %5753 = vmatpush1.xpose.msra.mxu0 %v5736
  %5754 = vmatprep.subr.mxu0 0.0
  %5755 = vmatpush1.xpose.msra.mxu0 %v5738
  %5756 = vmatprep.subr.mxu0 0.0
  %5757 = vmatpush1.xpose.msra.mxu0 %v5740
  %5758 = vmatprep.subr.mxu0 0.0
  %5759 = vmatpush1.xpose.msra.mxu0 %v5742
  %5760 = vmatprep.subr.mxu0 0.0
  %5761 = vmatpush1.xpose.msra.mxu0 0.0
  %5762 = vmatprep.subr.mxu0 0.0
  %5763 = vmatpush1.xpose.msra.mxu0 0.0
  %5764 = vmatprep.subr.mxu0 0.0
  %5765 = vmatpush1.xpose.msra.mxu0 0.0
  %5766 = vmatprep.subr.mxu0 0.0
  %5767 = vmatpush1.xpose.msra.mxu0 0.0
  %5768 = vmatprep.subr.mxu0 0.0
  %5769 = vmatpush1.xpose.msra.mxu0 0.0
  %5770 = vmatprep.subr.mxu0 0.0
  %5771 = vmatpush1.xpose.msra.mxu0 0.0
  %5772 = vmatprep.subr.mxu0 0.0
  %5773 = vmatpush1.xpose.msra.mxu0 0.0
  %5774 = vmatprep.subr.mxu0 0.0
  %5775 = vmatpush1.xpose.msra.mxu0 0.0
  %5776 = vmatprep.subr.mxu0 0.0
  %5777 = vmatpush1.xpose.msra.mxu0 0.0
  %5778 = vmatprep.subr.mxu0 0.0
  %5779 = vmatpush1.xpose.msra.mxu0 0.0
  %5780 = vmatprep.subr.mxu0 0.0
  %5781 = vmatpush1.xpose.msra.mxu0 0.0
  %5782 = vmatprep.subr.mxu0 0.0
  %5783 = vmatpush1.xpose.msra.mxu0 0.0
  %5784 = vmatprep.subr.mxu0 0.0
  %5785 = vmatpush1.xpose.msra.mxu0 0.0
  %5786 = vmatprep.subr.mxu0 0.0
  %5787 = vmatpush1.xpose.msra.mxu0 0.0
  %5788 = vmatprep.subr.mxu0 0.0
  %5789 = vmatpush1.xpose.msra.mxu0 0.0
  %5790 = vmatprep.subr.mxu0 0.0
  %5791 = vmatpush1.xpose.msra.mxu0 0.0
  %5792 = vmatprep.subr.mxu0 0.0
  %5793 = vmatpush1.xpose.msra.mxu0 0.0
  %5794 = vmatprep.subr.mxu0 0.0
  %5795 = vmatpush1.xpose.msra.mxu0 0.0
  %5796 = vmatprep.subr.mxu0 0.0
  %5797 = vmatpush1.xpose.msra.mxu0 0.0
  %5798 = vmatprep.subr.mxu0 0.0
  %5799 = vmatpush1.xpose.msra.mxu0 0.0
  %5800 = vmatprep.subr.mxu0 0.0
  %5801 = vmatpush1.xpose.msra.mxu0 0.0
  %5802 = vmatprep.subr.mxu0 0.0
  %5803 = vmatpush1.xpose.msra.mxu0 0.0
  %5804 = vmatprep.subr.mxu0 0.0
  %5805 = vmatpush1.xpose.msra.mxu0 0.0
  %5806 = vmatprep.subr.mxu0 0.0
  %5807 = vmatpush1.xpose.msra.mxu0 0.0
  %5808 = vmatprep.mubr.f32.mxu0 0.0
  %5809 = vmatmul.mubr.f32.gmra.mrb[0].mxu0 %v5712
  %v5810 = vpop.f32.mrb[0].mxu0
  %v5811 = vadd.f32 0.0, %v5810
  %v5812 = vpop.f32.mrb[0].mxu0
  %5813 = vmatprep.mubr.f32.mxu0 0.0
  %5814 = vmatmul.mubr.f32.gmra.mrb[0].mxu0 %v5714
  %v5815 = vpop.f32.mrb[0].mxu0
  %v5816 = vadd.f32 0.0, %v5815
  %v5817 = vpop.f32.mrb[0].mxu0
  %5818 = vmatprep.mubr.f32.mxu0 0.0
  %5819 = vmatmul.mubr.f32.gmra.mrb[0].mxu0 %v5716
  %v5820 = vpop.f32.mrb[0].mxu0
  %v5821 = vadd.f32 0.0, %v5820
  %v5822 = vpop.f32.mrb[0].mxu0
  %5823 = vmatprep.mubr.f32.mxu0 0.0
  %5824 = vmatmul.mubr.f32.gmra.mrb[0].mxu0 %v5718
  %v5825 = vpop.f32.mrb[0].mxu0
  %v5826 = vadd.f32 0.0, %v5825
  %v5827 = vpop.f32.mrb[0].mxu0
  %5828 = vmatprep.mubr.f32.mxu0 0.0
  %5829 = vmatmul.mubr.f32.gmra.mrb[0].mxu0 %v5720
  %v5830 = vpop.f32.mrb[0].mxu0
  %v5831 = vadd.f32 0.0, %v5830
  %v5832 = vpop.f32.mrb[0].mxu0
  %5833 = vmatprep.mubr.f32.mxu0 0.0
  %5834 = vmatmul.mubr.f32.gmra.mrb[0].mxu0 %v5722
  %v5835 = vpop.f32.mrb[0].mxu0
  %v5836 = vadd.f32 0.0, %v5835
  %v5837 = vpop.f32.mrb[0].mxu0
  %5838 = vmatprep.mubr.f32.mxu0 0.0
  %5839 = vmatmul.mubr.f32.gmra.mrb[0].mxu0 %v5724
  %v5840 = vpop.f32.mrb[0].mxu0
  %v5841 = vadd.f32 0.0, %v5840
  %v5842 = vpop.f32.mrb[0].mxu0
  %5843 = vmatprep.mubr.f32.mxu0 0.0
  %5844 = vmatmul.mubr.f32.gmra.mrb[0].mxu0 %v5726
  %v5845 = vpop.f32.mrb[0].mxu0
  %v5846 = vadd.f32 0.0, %v5845
  %v5847 = vpop.f32.mrb[0].mxu0
  %5848 = vdwg.mxu0
  %5849 = vrot.lane.b32.xlu0 %v1376, 112
  %v5850 = vpop.permute.xlu0 %5849
  %5851 = vrot.lane.b32.xlu0 %v1377, 112
  %v5852 = vpop.permute.xlu0 %5851
  %5853 = vrot.lane.b32.xlu0 %v1378, 112
  %v5854 = vpop.permute.xlu0 %5853
  %5855 = vrot.lane.b32.xlu0 %v1379, 112
  %v5856 = vpop.permute.xlu0 %5855
  %5857 = vrot.lane.b32.xlu0 %v1380, 112
  %v5858 = vpop.permute.xlu0 %5857
  %5859 = vrot.lane.b32.xlu0 %v1381, 112
  %v5860 = vpop.permute.xlu0 %5859
  %5861 = vrot.lane.b32.xlu0 %v1382, 112
  %v5862 = vpop.permute.xlu0 %5861
  %5863 = vrot.lane.b32.xlu0 %v1383, 112
  %v5864 = vpop.permute.xlu0 %5863
  %5865 = vrot.lane.b32.xlu0 %v1376, 104
  %v5866 = vpop.permute.xlu0 %5865
  %5867 = vrot.lane.b32.xlu0 %v1377, 104
  %v5868 = vpop.permute.xlu0 %5867
  %5869 = vrot.lane.b32.xlu0 %v1378, 104
  %v5870 = vpop.permute.xlu0 %5869
  %5871 = vrot.lane.b32.xlu0 %v1379, 104
  %v5872 = vpop.permute.xlu0 %5871
  %5873 = vrot.lane.b32.xlu0 %v1380, 104
  %v5874 = vpop.permute.xlu0 %5873
  %5875 = vrot.lane.b32.xlu0 %v1381, 104
  %v5876 = vpop.permute.xlu0 %5875
  %5877 = vrot.lane.b32.xlu0 %v1382, 104
  %v5878 = vpop.permute.xlu0 %5877
  %5879 = vrot.lane.b32.xlu0 %v1383, 104
  %v5880 = vpop.permute.xlu0 %5879
  %v5881 = vsel %vm1408, %v5850, 0
  %v5883 = vsel %vm1408, %v5852, 0
  %v5885 = vsel %vm1408, %v5854, 0
  %v5887 = vsel %vm1408, %v5856, 0
  %v5889 = vsel %vm1408, %v5858, 0
  %v5891 = vsel %vm1408, %v5860, 0
  %v5893 = vsel %vm1408, %v5862, 0
  %v5895 = vsel %vm1408, %v5864, 0
  %v5897 = vsel %vm1408, %v5866, 0
  %v5899 = vsel %vm1408, %v5868, 0
  %v5901 = vsel %vm1408, %v5870, 0
  %v5903 = vsel %vm1408, %v5872, 0
  %v5905 = vsel %vm1408, %v5874, 0
  %v5907 = vsel %vm1408, %v5876, 0
  %v5909 = vsel %vm1408, %v5878, 0
  %v5911 = vsel %vm1408, %v5880, 0
  %5913 = vmatprep.subr.mxu0 0.0
  %5914 = vmatpush1.xpose.msra.mxu0 %v5897
  %5915 = vmatprep.subr.mxu0 0.0
  %5916 = vmatpush1.xpose.msra.mxu0 %v5899
  %5917 = vmatprep.subr.mxu0 0.0
  %5918 = vmatpush1.xpose.msra.mxu0 %v5901
  %5919 = vmatprep.subr.mxu0 0.0
  %5920 = vmatpush1.xpose.msra.mxu0 %v5903
  %5921 = vmatprep.subr.mxu0 0.0
  %5922 = vmatpush1.xpose.msra.mxu0 %v5905
  %5923 = vmatprep.subr.mxu0 0.0
  %5924 = vmatpush1.xpose.msra.mxu0 %v5907
  %5925 = vmatprep.subr.mxu0 0.0
  %5926 = vmatpush1.xpose.msra.mxu0 %v5909
  %5927 = vmatprep.subr.mxu0 0.0
  %5928 = vmatpush1.xpose.msra.mxu0 %v5911
  %5929 = vmatprep.subr.mxu0 0.0
  %5930 = vmatpush1.xpose.msra.mxu0 0.0
  %5931 = vmatprep.subr.mxu0 0.0
  %5932 = vmatpush1.xpose.msra.mxu0 0.0
  %5933 = vmatprep.subr.mxu0 0.0
  %5934 = vmatpush1.xpose.msra.mxu0 0.0
  %5935 = vmatprep.subr.mxu0 0.0
  %5936 = vmatpush1.xpose.msra.mxu0 0.0
  %5937 = vmatprep.subr.mxu0 0.0
  %5938 = vmatpush1.xpose.msra.mxu0 0.0
  %5939 = vmatprep.subr.mxu0 0.0
  %5940 = vmatpush1.xpose.msra.mxu0 0.0
  %5941 = vmatprep.subr.mxu0 0.0
  %5942 = vmatpush1.xpose.msra.mxu0 0.0
  %5943 = vmatprep.subr.mxu0 0.0
  %5944 = vmatpush1.xpose.msra.mxu0 0.0
  %5945 = vmatprep.subr.mxu0 0.0
  %5946 = vmatpush1.xpose.msra.mxu0 0.0
  %5947 = vmatprep.subr.mxu0 0.0
  %5948 = vmatpush1.xpose.msra.mxu0 0.0
  %5949 = vmatprep.subr.mxu0 0.0
  %5950 = vmatpush1.xpose.msra.mxu0 0.0
  %5951 = vmatprep.subr.mxu0 0.0
  %5952 = vmatpush1.xpose.msra.mxu0 0.0
  %5953 = vmatprep.subr.mxu0 0.0
  %5954 = vmatpush1.xpose.msra.mxu0 0.0
  %5955 = vmatprep.subr.mxu0 0.0
  %5956 = vmatpush1.xpose.msra.mxu0 0.0
  %5957 = vmatprep.subr.mxu0 0.0
  %5958 = vmatpush1.xpose.msra.mxu0 0.0
  %5959 = vmatprep.subr.mxu0 0.0
  %5960 = vmatpush1.xpose.msra.mxu0 0.0
  %5961 = vmatprep.subr.mxu0 0.0
  %5962 = vmatpush1.xpose.msra.mxu0 0.0
  %5963 = vmatprep.subr.mxu0 0.0
  %5964 = vmatpush1.xpose.msra.mxu0 0.0
  %5965 = vmatprep.subr.mxu0 0.0
  %5966 = vmatpush1.xpose.msra.mxu0 0.0
  %5967 = vmatprep.subr.mxu0 0.0
  %5968 = vmatpush1.xpose.msra.mxu0 0.0
  %5969 = vmatprep.subr.mxu0 0.0
  %5970 = vmatpush1.xpose.msra.mxu0 0.0
  %5971 = vmatprep.subr.mxu0 0.0
  %5972 = vmatpush1.xpose.msra.mxu0 0.0
  %5973 = vmatprep.subr.mxu0 0.0
  %5974 = vmatpush1.xpose.msra.mxu0 0.0
  %5975 = vmatprep.subr.mxu0 0.0
  %5976 = vmatpush1.xpose.msra.mxu0 0.0
  %5977 = vmatprep.mubr.f32.mxu0 0.0
  %5978 = vmatmul.mubr.f32.gmra.mrb[0].mxu0 %v5881
  %v5979 = vpop.f32.mrb[0].mxu0
  %v5980 = vadd.f32 0.0, %v5979
  %v5981 = vpop.f32.mrb[0].mxu0
  %5982 = vmatprep.mubr.f32.mxu0 0.0
  %5983 = vmatmul.mubr.f32.gmra.mrb[0].mxu0 %v5883
  %v5984 = vpop.f32.mrb[0].mxu0
  %v5985 = vadd.f32 0.0, %v5984
  %v5986 = vpop.f32.mrb[0].mxu0
  %5987 = vmatprep.mubr.f32.mxu0 0.0
  %5988 = vmatmul.mubr.f32.gmra.mrb[0].mxu0 %v5885
  %v5989 = vpop.f32.mrb[0].mxu0
  %v5990 = vadd.f32 0.0, %v5989
  %v5991 = vpop.f32.mrb[0].mxu0
  %5992 = vmatprep.mubr.f32.mxu0 0.0
  %5993 = vmatmul.mubr.f32.gmra.mrb[0].mxu0 %v5887
  %v5994 = vpop.f32.mrb[0].mxu0
  %v5995 = vadd.f32 0.0, %v5994
  %v5996 = vpop.f32.mrb[0].mxu0
  %5997 = vmatprep.mubr.f32.mxu0 0.0
  %5998 = vmatmul.mubr.f32.gmra.mrb[0].mxu0 %v5889
  %v5999 = vpop.f32.mrb[0].mxu0
  %v6000 = vadd.f32 0.0, %v5999
  %v6001 = vpop.f32.mrb[0].mxu0
  %6002 = vmatprep.mubr.f32.mxu0 0.0
  %6003 = vmatmul.mubr.f32.gmra.mrb[0].mxu0 %v5891
  %v6004 = vpop.f32.mrb[0].mxu0
  %v6005 = vadd.f32 0.0, %v6004
  %v6006 = vpop.f32.mrb[0].mxu0
  %6007 = vmatprep.mubr.f32.mxu0 0.0
  %6008 = vmatmul.mubr.f32.gmra.mrb[0].mxu0 %v5893
  %v6009 = vpop.f32.mrb[0].mxu0
  %v6010 = vadd.f32 0.0, %v6009
  %v6011 = vpop.f32.mrb[0].mxu0
  %6012 = vmatprep.mubr.f32.mxu0 0.0
  %6013 = vmatmul.mubr.f32.gmra.mrb[0].mxu0 %v5895
  %v6014 = vpop.f32.mrb[0].mxu0
  %v6015 = vadd.f32 0.0, %v6014
  %v6016 = vpop.f32.mrb[0].mxu0
  %6017 = vdwg.mxu0
  %v6018 = vsel %vm2673, %v4797, -inf
  %6019 = vmax.xlane.f32.xlu0 %v6018
  %v6020 = vpop.xlane.xlu0 %6019
  %v6021 = vsel %vm2673, %v4802, -inf
  %6022 = vmax.xlane.f32.xlu0 %v6021
  %v6023 = vpop.xlane.xlu0 %6022
  %v6024 = vsel %vm2673, %v4807, -inf
  %6025 = vmax.xlane.f32.xlu0 %v6024
  %v6026 = vpop.xlane.xlu0 %6025
  %v6027 = vsel %vm2673, %v4812, -inf
  %6028 = vmax.xlane.f32.xlu0 %v6027
  %v6029 = vpop.xlane.xlu0 %6028
  %v6030 = vsel %vm2673, %v4817, -inf
  %6031 = vmax.xlane.f32.xlu0 %v6030
  %v6032 = vpop.xlane.xlu0 %6031
  %v6033 = vsel %vm2673, %v4822, -inf
  %6034 = vmax.xlane.f32.xlu0 %v6033
  %v6035 = vpop.xlane.xlu0 %6034
  %v6036 = vsel %vm2673, %v4827, -inf
  %6037 = vmax.xlane.f32.xlu0 %v6036
  %v6038 = vpop.xlane.xlu0 %6037
  %v6039 = vsel %vm2673, %v4832, -inf
  %6040 = vmax.xlane.f32.xlu0 %v6039
  %v6041 = vpop.xlane.xlu0 %6040
  %v6042 = vsel %vm2673, %v4966, -inf
  %6043 = vmax.xlane.f32.xlu0 %v6042
  %v6044 = vpop.xlane.xlu0 %6043
  %v6045 = vsel %vm2673, %v4971, -inf
  %6046 = vmax.xlane.f32.xlu0 %v6045
  %v6047 = vpop.xlane.xlu0 %6046
  %v6048 = vsel %vm2673, %v4976, -inf
  %6049 = vmax.xlane.f32.xlu0 %v6048
  %v6050 = vpop.xlane.xlu0 %6049
  %v6051 = vsel %vm2673, %v4981, -inf
  %6052 = vmax.xlane.f32.xlu0 %v6051
  %v6053 = vpop.xlane.xlu0 %6052
  %v6054 = vsel %vm2673, %v4986, -inf
  %6055 = vmax.xlane.f32.xlu0 %v6054
  %v6056 = vpop.xlane.xlu0 %6055
  %v6057 = vsel %vm2673, %v4991, -inf
  %6058 = vmax.xlane.f32.xlu0 %v6057
  %v6059 = vpop.xlane.xlu0 %6058
  %v6060 = vsel %vm2673, %v4996, -inf
  %6061 = vmax.xlane.f32.xlu0 %v6060
  %v6062 = vpop.xlane.xlu0 %6061
  %v6063 = vsel %vm2673, %v5001, -inf
  %6064 = vmax.xlane.f32.xlu0 %v6063
  %v6065 = vpop.xlane.xlu0 %6064
  %v6066 = vsel %vm2673, %v5135, -inf
  %6067 = vmax.xlane.f32.xlu0 %v6066
  %v6068 = vpop.xlane.xlu0 %6067
  %v6069 = vsel %vm2673, %v5140, -inf
  %6070 = vmax.xlane.f32.xlu0 %v6069
  %v6071 = vpop.xlane.xlu0 %6070
  %v6072 = vsel %vm2673, %v5145, -inf
  %6073 = vmax.xlane.f32.xlu0 %v6072
  %v6074 = vpop.xlane.xlu0 %6073
  %v6075 = vsel %vm2673, %v5150, -inf
  %6076 = vmax.xlane.f32.xlu0 %v6075
  %v6077 = vpop.xlane.xlu0 %6076
  %v6078 = vsel %vm2673, %v5155, -inf
  %6079 = vmax.xlane.f32.xlu0 %v6078
  %v6080 = vpop.xlane.xlu0 %6079
  %v6081 = vsel %vm2673, %v5160, -inf
  %6082 = vmax.xlane.f32.xlu0 %v6081
  %v6083 = vpop.xlane.xlu0 %6082
  %v6084 = vsel %vm2673, %v5165, -inf
  %6085 = vmax.xlane.f32.xlu0 %v6084
  %v6086 = vpop.xlane.xlu0 %6085
  %v6087 = vsel %vm2673, %v5170, -inf
  %6088 = vmax.xlane.f32.xlu0 %v6087
  %v6089 = vpop.xlane.xlu0 %6088
  %v6090 = vsel %vm2673, %v5304, -inf
  %6091 = vmax.xlane.f32.xlu0 %v6090
  %v6092 = vpop.xlane.xlu0 %6091
  %v6093 = vsel %vm2673, %v5309, -inf
  %6094 = vmax.xlane.f32.xlu0 %v6093
  %v6095 = vpop.xlane.xlu0 %6094
  %v6096 = vsel %vm2673, %v5314, -inf
  %6097 = vmax.xlane.f32.xlu0 %v6096
  %v6098 = vpop.xlane.xlu0 %6097
  %v6099 = vsel %vm2673, %v5319, -inf
  %6100 = vmax.xlane.f32.xlu0 %v6099
  %v6101 = vpop.xlane.xlu0 %6100
  %v6102 = vsel %vm2673, %v5324, -inf
  %6103 = vmax.xlane.f32.xlu0 %v6102
  %v6104 = vpop.xlane.xlu0 %6103
  %v6105 = vsel %vm2673, %v5329, -inf
  %6106 = vmax.xlane.f32.xlu0 %v6105
  %v6107 = vpop.xlane.xlu0 %6106
  %v6108 = vsel %vm2673, %v5334, -inf
  %6109 = vmax.xlane.f32.xlu0 %v6108
  %v6110 = vpop.xlane.xlu0 %6109
  %v6111 = vsel %vm2673, %v5339, -inf
  %6112 = vmax.xlane.f32.xlu0 %v6111
  %v6113 = vpop.xlane.xlu0 %6112
  %v6114 = vsel %vm2673, %v5473, -inf
  %6115 = vmax.xlane.f32.xlu0 %v6114
  %v6116 = vpop.xlane.xlu0 %6115
  %v6117 = vsel %vm2673, %v5478, -inf
  %6118 = vmax.xlane.f32.xlu0 %v6117
  %v6119 = vpop.xlane.xlu0 %6118
  %v6120 = vsel %vm2673, %v5483, -inf
  %6121 = vmax.xlane.f32.xlu0 %v6120
  %v6122 = vpop.xlane.xlu0 %6121
  %v6123 = vsel %vm2673, %v5488, -inf
  %6124 = vmax.xlane.f32.xlu0 %v6123
  %v6125 = vpop.xlane.xlu0 %6124
  %v6126 = vsel %vm2673, %v5493, -inf
  %6127 = vmax.xlane.f32.xlu0 %v6126
  %v6128 = vpop.xlane.xlu0 %6127
  %v6129 = vsel %vm2673, %v5498, -inf
  %6130 = vmax.xlane.f32.xlu0 %v6129
  %v6131 = vpop.xlane.xlu0 %6130
  %v6132 = vsel %vm2673, %v5503, -inf
  %6133 = vmax.xlane.f32.xlu0 %v6132
  %v6134 = vpop.xlane.xlu0 %6133
  %v6135 = vsel %vm2673, %v5508, -inf
  %6136 = vmax.xlane.f32.xlu0 %v6135
  %v6137 = vpop.xlane.xlu0 %6136
  %v6138 = vsel %vm2673, %v5642, -inf
  %6139 = vmax.xlane.f32.xlu0 %v6138
  %v6140 = vpop.xlane.xlu0 %6139
  %v6141 = vsel %vm2673, %v5647, -inf
  %6142 = vmax.xlane.f32.xlu0 %v6141
  %v6143 = vpop.xlane.xlu0 %6142
  %v6144 = vsel %vm2673, %v5652, -inf
  %6145 = vmax.xlane.f32.xlu0 %v6144
  %v6146 = vpop.xlane.xlu0 %6145
  %v6147 = vsel %vm2673, %v5657, -inf
  %6148 = vmax.xlane.f32.xlu0 %v6147
  %v6149 = vpop.xlane.xlu0 %6148
  %v6150 = vsel %vm2673, %v5662, -inf
  %6151 = vmax.xlane.f32.xlu0 %v6150
  %v6152 = vpop.xlane.xlu0 %6151
  %v6153 = vsel %vm2673, %v5667, -inf
  %6154 = vmax.xlane.f32.xlu0 %v6153
  %v6155 = vpop.xlane.xlu0 %6154
  %v6156 = vsel %vm2673, %v5672, -inf
  %6157 = vmax.xlane.f32.xlu0 %v6156
  %v6158 = vpop.xlane.xlu0 %6157
  %v6159 = vsel %vm2673, %v5677, -inf
  %6160 = vmax.xlane.f32.xlu0 %v6159
  %v6161 = vpop.xlane.xlu0 %6160
  %v6162 = vsel %vm2673, %v5811, -inf
  %6163 = vmax.xlane.f32.xlu0 %v6162
  %v6164 = vpop.xlane.xlu0 %6163
  %v6165 = vsel %vm2673, %v5816, -inf
  %6166 = vmax.xlane.f32.xlu0 %v6165
  %v6167 = vpop.xlane.xlu0 %6166
  %v6168 = vsel %vm2673, %v5821, -inf
  %6169 = vmax.xlane.f32.xlu0 %v6168
  %v6170 = vpop.xlane.xlu0 %6169
  %v6171 = vsel %vm2673, %v5826, -inf
  %6172 = vmax.xlane.f32.xlu0 %v6171
  %v6173 = vpop.xlane.xlu0 %6172
  %v6174 = vsel %vm2673, %v5831, -inf
  %6175 = vmax.xlane.f32.xlu0 %v6174
  %v6176 = vpop.xlane.xlu0 %6175
  %v6177 = vsel %vm2673, %v5836, -inf
  %6178 = vmax.xlane.f32.xlu0 %v6177
  %v6179 = vpop.xlane.xlu0 %6178
  %v6180 = vsel %vm2673, %v5841, -inf
  %6181 = vmax.xlane.f32.xlu0 %v6180
  %v6182 = vpop.xlane.xlu0 %6181
  %v6183 = vsel %vm2673, %v5846, -inf
  %6184 = vmax.xlane.f32.xlu0 %v6183
  %v6185 = vpop.xlane.xlu0 %6184
  %v6186 = vsel %vm2673, %v5980, -inf
  %6187 = vmax.xlane.f32.xlu0 %v6186
  %v6188 = vpop.xlane.xlu0 %6187
  %v6189 = vsel %vm2673, %v5985, -inf
  %6190 = vmax.xlane.f32.xlu0 %v6189
  %v6191 = vpop.xlane.xlu0 %6190
  %v6192 = vsel %vm2673, %v5990, -inf
  %6193 = vmax.xlane.f32.xlu0 %v6192
  %v6194 = vpop.xlane.xlu0 %6193
  %v6195 = vsel %vm2673, %v5995, -inf
  %6196 = vmax.xlane.f32.xlu0 %v6195
  %v6197 = vpop.xlane.xlu0 %6196
  %v6198 = vsel %vm2673, %v6000, -inf
  %6199 = vmax.xlane.f32.xlu0 %v6198
  %v6200 = vpop.xlane.xlu0 %6199
  %v6201 = vsel %vm2673, %v6005, -inf
  %6202 = vmax.xlane.f32.xlu0 %v6201
  %v6203 = vpop.xlane.xlu0 %6202
  %v6204 = vsel %vm2673, %v6010, -inf
  %6205 = vmax.xlane.f32.xlu0 %v6204
  %v6206 = vpop.xlane.xlu0 %6205
  %v6207 = vsel %vm2673, %v6015, -inf
  %6208 = vmax.xlane.f32.xlu0 %v6207
  %v6209 = vpop.xlane.xlu0 %6208
  %v6210 = vsub.f32 %v4797, %v6020
  %v6211 = vsub.f32 %v4802, %v6023
  %v6212 = vsub.f32 %v4807, %v6026
  %v6213 = vsub.f32 %v4812, %v6029
  %v6214 = vsub.f32 %v4817, %v6032
  %v6215 = vsub.f32 %v4822, %v6035
  %v6216 = vsub.f32 %v4827, %v6038
  %v6217 = vsub.f32 %v4832, %v6041
  %v6218 = vsub.f32 %v4966, %v6044
  %v6219 = vsub.f32 %v4971, %v6047
  %v6220 = vsub.f32 %v4976, %v6050
  %v6221 = vsub.f32 %v4981, %v6053
  %v6222 = vsub.f32 %v4986, %v6056
  %v6223 = vsub.f32 %v4991, %v6059
  %v6224 = vsub.f32 %v4996, %v6062
  %v6225 = vsub.f32 %v5001, %v6065
  %v6226 = vsub.f32 %v5135, %v6068
  %v6227 = vsub.f32 %v5140, %v6071
  %v6228 = vsub.f32 %v5145, %v6074
  %v6229 = vsub.f32 %v5150, %v6077
  %v6230 = vsub.f32 %v5155, %v6080
  %v6231 = vsub.f32 %v5160, %v6083
  %v6232 = vsub.f32 %v5165, %v6086
  %v6233 = vsub.f32 %v5170, %v6089
  %v6234 = vsub.f32 %v5304, %v6092
  %v6235 = vsub.f32 %v5309, %v6095
  %v6236 = vsub.f32 %v5314, %v6098
  %v6237 = vsub.f32 %v5319, %v6101
  %v6238 = vsub.f32 %v5324, %v6104
  %v6239 = vsub.f32 %v5329, %v6107
  %v6240 = vsub.f32 %v5334, %v6110
  %v6241 = vsub.f32 %v5339, %v6113
  %v6242 = vsub.f32 %v5473, %v6116
  %v6243 = vsub.f32 %v5478, %v6119
  %v6244 = vsub.f32 %v5483, %v6122
  %v6245 = vsub.f32 %v5488, %v6125
  %v6246 = vsub.f32 %v5493, %v6128
  %v6247 = vsub.f32 %v5498, %v6131
  %v6248 = vsub.f32 %v5503, %v6134
  %v6249 = vsub.f32 %v5508, %v6137
  %v6250 = vsub.f32 %v5642, %v6140
  %v6251 = vsub.f32 %v5647, %v6143
  %v6252 = vsub.f32 %v5652, %v6146
  %v6253 = vsub.f32 %v5657, %v6149
  %v6254 = vsub.f32 %v5662, %v6152
  %v6255 = vsub.f32 %v5667, %v6155
  %v6256 = vsub.f32 %v5672, %v6158
  %v6257 = vsub.f32 %v5677, %v6161
  %v6258 = vsub.f32 %v5811, %v6164
  %v6259 = vsub.f32 %v5816, %v6167
  %v6260 = vsub.f32 %v5821, %v6170
  %v6261 = vsub.f32 %v5826, %v6173
  %v6262 = vsub.f32 %v5831, %v6176
  %v6263 = vsub.f32 %v5836, %v6179
  %v6264 = vsub.f32 %v5841, %v6182
  %v6265 = vsub.f32 %v5846, %v6185
  %v6266 = vsub.f32 %v5980, %v6188
  %v6267 = vsub.f32 %v5985, %v6191
  %v6268 = vsub.f32 %v5990, %v6194
  %v6269 = vsub.f32 %v5995, %v6197
  %v6270 = vsub.f32 %v6000, %v6200
  %v6271 = vsub.f32 %v6005, %v6203
  %v6272 = vsub.f32 %v6010, %v6206
  %v6273 = vsub.f32 %v6015, %v6209
  %v6274 = vmul.f32 %v6210, 1.442695
  %v6275 = vpow.pop %v6274
  %v6276 = vmul.f32 %v6211, 1.442695
  %v6277 = vpow.pop %v6276
  %v6278 = vmul.f32 %v6212, 1.442695
  %v6279 = vpow.pop %v6278
  %v6280 = vmul.f32 %v6213, 1.442695
  %v6281 = vpow.pop %v6280
  %v6282 = vmul.f32 %v6214, 1.442695
  %v6283 = vpow.pop %v6282
  %v6284 = vmul.f32 %v6215, 1.442695
  %v6285 = vpow.pop %v6284
  %v6286 = vmul.f32 %v6216, 1.442695
  %v6287 = vpow.pop %v6286
  %v6288 = vmul.f32 %v6217, 1.442695
  %v6289 = vpow.pop %v6288
  %v6290 = vmul.f32 %v6218, 1.442695
  %v6291 = vpow.pop %v6290
  %v6292 = vmul.f32 %v6219, 1.442695
  %v6293 = vpow.pop %v6292
  %v6294 = vmul.f32 %v6220, 1.442695
  %v6295 = vpow.pop %v6294
  %v6296 = vmul.f32 %v6221, 1.442695
  %v6297 = vpow.pop %v6296
  %v6298 = vmul.f32 %v6222, 1.442695
  %v6299 = vpow.pop %v6298
  %v6300 = vmul.f32 %v6223, 1.442695
  %v6301 = vpow.pop %v6300
  %v6302 = vmul.f32 %v6224, 1.442695
  %v6303 = vpow.pop %v6302
  %v6304 = vmul.f32 %v6225, 1.442695
  %v6305 = vpow.pop %v6304
  %v6306 = vmul.f32 %v6226, 1.442695
  %v6307 = vpow.pop %v6306
  %v6308 = vmul.f32 %v6227, 1.442695
  %v6309 = vpow.pop %v6308
  %v6310 = vmul.f32 %v6228, 1.442695
  %v6311 = vpow.pop %v6310
  %v6312 = vmul.f32 %v6229, 1.442695
  %v6313 = vpow.pop %v6312
  %v6314 = vmul.f32 %v6230, 1.442695
  %v6315 = vpow.pop %v6314
  %v6316 = vmul.f32 %v6231, 1.442695
  %v6317 = vpow.pop %v6316
  %v6318 = vmul.f32 %v6232, 1.442695
  %v6319 = vpow.pop %v6318
  %v6320 = vmul.f32 %v6233, 1.442695
  %v6321 = vpow.pop %v6320
  %v6322 = vmul.f32 %v6234, 1.442695
  %v6323 = vpow.pop %v6322
  %v6324 = vmul.f32 %v6235, 1.442695
  %v6325 = vpow.pop %v6324
  %v6326 = vmul.f32 %v6236, 1.442695
  %v6327 = vpow.pop %v6326
  %v6328 = vmul.f32 %v6237, 1.442695
  %v6329 = vpow.pop %v6328
  %v6330 = vmul.f32 %v6238, 1.442695
  %v6331 = vpow.pop %v6330
  %v6332 = vmul.f32 %v6239, 1.442695
  %v6333 = vpow.pop %v6332
  %v6334 = vmul.f32 %v6240, 1.442695
  %v6335 = vpow.pop %v6334
  %v6336 = vmul.f32 %v6241, 1.442695
  %v6337 = vpow.pop %v6336
  %v6338 = vmul.f32 %v6242, 1.442695
  %v6339 = vpow.pop %v6338
  %v6340 = vmul.f32 %v6243, 1.442695
  %v6341 = vpow.pop %v6340
  %v6342 = vmul.f32 %v6244, 1.442695
  %v6343 = vpow.pop %v6342
  %v6344 = vmul.f32 %v6245, 1.442695
  %v6345 = vpow.pop %v6344
  %v6346 = vmul.f32 %v6246, 1.442695
  %v6347 = vpow.pop %v6346
  %v6348 = vmul.f32 %v6247, 1.442695
  %v6349 = vpow.pop %v6348
  %v6350 = vmul.f32 %v6248, 1.442695
  %v6351 = vpow.pop %v6350
  %v6352 = vmul.f32 %v6249, 1.442695
  %v6353 = vpow.pop %v6352
  %v6354 = vmul.f32 %v6250, 1.442695
  %v6355 = vpow.pop %v6354
  %v6356 = vmul.f32 %v6251, 1.442695
  %v6357 = vpow.pop %v6356
  %v6358 = vmul.f32 %v6252, 1.442695
  %v6359 = vpow.pop %v6358
  %v6360 = vmul.f32 %v6253, 1.442695
  %v6361 = vpow.pop %v6360
  %v6362 = vmul.f32 %v6254, 1.442695
  %v6363 = vpow.pop %v6362
  %v6364 = vmul.f32 %v6255, 1.442695
  %v6365 = vpow.pop %v6364
  %v6366 = vmul.f32 %v6256, 1.442695
  %v6367 = vpow.pop %v6366
  %v6368 = vmul.f32 %v6257, 1.442695
  %v6369 = vpow.pop %v6368
  %v6370 = vmul.f32 %v6258, 1.442695
  %v6371 = vpow.pop %v6370
  %v6372 = vmul.f32 %v6259, 1.442695
  %v6373 = vpow.pop %v6372
  %v6374 = vmul.f32 %v6260, 1.442695
  %v6375 = vpow.pop %v6374
  %v6376 = vmul.f32 %v6261, 1.442695
  %v6377 = vpow.pop %v6376
  %v6378 = vmul.f32 %v6262, 1.442695
  %v6379 = vpow.pop %v6378
  %v6380 = vmul.f32 %v6263, 1.442695
  %v6381 = vpow.pop %v6380
  %v6382 = vmul.f32 %v6264, 1.442695
  %v6383 = vpow.pop %v6382
  %v6384 = vmul.f32 %v6265, 1.442695
  %v6385 = vpow.pop %v6384
  %v6386 = vmul.f32 %v6266, 1.442695
  %v6387 = vpow.pop %v6386
  %v6388 = vmul.f32 %v6267, 1.442695
  %v6389 = vpow.pop %v6388
  %v6390 = vmul.f32 %v6268, 1.442695
  %v6391 = vpow.pop %v6390
  %v6392 = vmul.f32 %v6269, 1.442695
  %v6393 = vpow.pop %v6392
  %v6394 = vmul.f32 %v6270, 1.442695
  %v6395 = vpow.pop %v6394
  %v6396 = vmul.f32 %v6271, 1.442695
  %v6397 = vpow.pop %v6396
  %v6398 = vmul.f32 %v6272, 1.442695
  %v6399 = vpow.pop %v6398
  %v6400 = vmul.f32 %v6273, 1.442695
  %v6401 = vpow.pop %v6400
  %6402 = vrot.lane.b32.xlu0 %v1320, 94
  %v6403 = vpop.permute.xlu0 %6402
  %6404 = vrot.lane.b32.xlu0 %v1321, 94
  %v6405 = vpop.permute.xlu0 %6404
  %6406 = vrot.lane.b32.xlu0 %v1322, 94
  %v6407 = vpop.permute.xlu0 %6406
  %6408 = vrot.lane.b32.xlu0 %v1323, 94
  %v6409 = vpop.permute.xlu0 %6408
  %6410 = vrot.lane.b32.xlu0 %v1324, 94
  %v6411 = vpop.permute.xlu0 %6410
  %6412 = vrot.lane.b32.xlu0 %v1325, 94
  %v6413 = vpop.permute.xlu0 %6412
  %6414 = vrot.lane.b32.xlu0 %v1326, 94
  %v6415 = vpop.permute.xlu0 %6414
  %6416 = vrot.lane.b32.xlu0 %v1327, 94
  %v6417 = vpop.permute.xlu0 %6416
  %v6427 = vsel %vm2673, %v6275, 0
  %v6430 = vsel %vm2673, %v6277, 0
  %v6433 = vsel %vm2673, %v6279, 0
  %v6436 = vsel %vm2673, %v6281, 0
  %v6439 = vsel %vm2673, %v6283, 0
  %v6442 = vsel %vm2673, %v6285, 0
  %v6445 = vsel %vm2673, %v6287, 0
  %v6448 = vsel %vm2673, %v6289, 0
  %6450 = vmatprep.subr.mxu0 0.0
  %6451 = vmatpush1.msra.mxu0 %v6403
  %6452 = vmatprep.subr.mxu0 0.0
  %6453 = vmatpush1.msra.mxu0 %v6405
  %6454 = vmatprep.subr.mxu0 0.0
  %6455 = vmatpush1.msra.mxu0 %v6407
  %6456 = vmatprep.subr.mxu0 0.0
  %6457 = vmatpush1.msra.mxu0 %v6409
  %6458 = vmatprep.subr.mxu0 0.0
  %6459 = vmatpush1.msra.mxu0 %v6411
  %6460 = vmatprep.subr.mxu0 0.0
  %6461 = vmatpush1.msra.mxu0 %v6413
  %6462 = vmatprep.subr.mxu0 0.0
  %6463 = vmatpush1.msra.mxu0 %v6415
  %6464 = vmatprep.subr.mxu0 0.0
  %6465 = vmatpush1.msra.mxu0 %v6417
  %6466 = vmatprep.subr.mxu0 0.0
  %6467 = vmatpush1.msra.mxu0 0.0
  %6468 = vmatprep.subr.mxu0 0.0
  %6469 = vmatpush1.msra.mxu0 0.0
  %6470 = vmatprep.subr.mxu0 0.0
  %6471 = vmatpush1.msra.mxu0 0.0
  %6472 = vmatprep.subr.mxu0 0.0
  %6473 = vmatpush1.msra.mxu0 0.0
  %6474 = vmatprep.subr.mxu0 0.0
  %6475 = vmatpush1.msra.mxu0 0.0
  %6476 = vmatprep.subr.mxu0 0.0
  %6477 = vmatpush1.msra.mxu0 0.0
  %6478 = vmatprep.subr.mxu0 0.0
  %6479 = vmatpush1.msra.mxu0 0.0
  %6480 = vmatprep.subr.mxu0 0.0
  %6481 = vmatpush1.msra.mxu0 0.0
  %6482 = vmatprep.subr.mxu0 0.0
  %6483 = vmatpush1.msra.mxu0 0.0
  %6484 = vmatprep.subr.mxu0 0.0
  %6485 = vmatpush1.msra.mxu0 0.0
  %6486 = vmatprep.subr.mxu0 0.0
  %6487 = vmatpush1.msra.mxu0 0.0
  %6488 = vmatprep.subr.mxu0 0.0
  %6489 = vmatpush1.msra.mxu0 0.0
  %6490 = vmatprep.subr.mxu0 0.0
  %6491 = vmatpush1.msra.mxu0 0.0
  %6492 = vmatprep.subr.mxu0 0.0
  %6493 = vmatpush1.msra.mxu0 0.0
  %6494 = vmatprep.subr.mxu0 0.0
  %6495 = vmatpush1.msra.mxu0 0.0
  %6496 = vmatprep.subr.mxu0 0.0
  %6497 = vmatpush1.msra.mxu0 0.0
  %6498 = vmatprep.subr.mxu0 0.0
  %6499 = vmatpush1.msra.mxu0 0.0
  %6500 = vmatprep.subr.mxu0 0.0
  %6501 = vmatpush1.msra.mxu0 0.0
  %6502 = vmatprep.subr.mxu0 0.0
  %6503 = vmatpush1.msra.mxu0 0.0
  %6504 = vmatprep.subr.mxu0 0.0
  %6505 = vmatpush1.msra.mxu0 0.0
  %6506 = vmatprep.subr.mxu0 0.0
  %6507 = vmatpush1.msra.mxu0 0.0
  %6508 = vmatprep.subr.mxu0 0.0
  %6509 = vmatpush1.msra.mxu0 0.0
  %6510 = vmatprep.subr.mxu0 0.0
  %6511 = vmatpush1.msra.mxu0 0.0
  %6512 = vmatprep.subr.mxu0 0.0
  %6513 = vmatpush1.msra.mxu0 0.0
  %6514 = vmatprep.mubr.f32.mxu0 0.0
  %6515 = vmatmul.mubr.f32.gmra.mrb[0].mxu0 %v6427
  %v6516 = vpop.f32.mrb[0].mxu0
  %v6517 = vadd.f32 0.0, %v6516
  %v6518 = vpop.f32.mrb[0].mxu0
  %6519 = vmatprep.mubr.f32.mxu0 0.0
  %6520 = vmatmul.mubr.f32.gmra.mrb[0].mxu0 %v6430
  %v6521 = vpop.f32.mrb[0].mxu0
  %v6522 = vadd.f32 0.0, %v6521
  %v6523 = vpop.f32.mrb[0].mxu0
  %6524 = vmatprep.mubr.f32.mxu0 0.0
  %6525 = vmatmul.mubr.f32.gmra.mrb[0].mxu0 %v6433
  %v6526 = vpop.f32.mrb[0].mxu0
  %v6527 = vadd.f32 0.0, %v6526
  %v6528 = vpop.f32.mrb[0].mxu0
  %6529 = vmatprep.mubr.f32.mxu0 0.0
  %6530 = vmatmul.mubr.f32.gmra.mrb[0].mxu0 %v6436
  %v6531 = vpop.f32.mrb[0].mxu0
  %v6532 = vadd.f32 0.0, %v6531
  %v6533 = vpop.f32.mrb[0].mxu0
  %6534 = vmatprep.mubr.f32.mxu0 0.0
  %6535 = vmatmul.mubr.f32.gmra.mrb[0].mxu0 %v6439
  %v6536 = vpop.f32.mrb[0].mxu0
  %v6537 = vadd.f32 0.0, %v6536
  %v6538 = vpop.f32.mrb[0].mxu0
  %6539 = vmatprep.mubr.f32.mxu0 0.0
  %6540 = vmatmul.mubr.f32.gmra.mrb[0].mxu0 %v6442
  %v6541 = vpop.f32.mrb[0].mxu0
  %v6542 = vadd.f32 0.0, %v6541
  %v6543 = vpop.f32.mrb[0].mxu0
  %6544 = vmatprep.mubr.f32.mxu0 0.0
  %6545 = vmatmul.mubr.f32.gmra.mrb[0].mxu0 %v6445
  %v6546 = vpop.f32.mrb[0].mxu0
  %v6547 = vadd.f32 0.0, %v6546
  %v6548 = vpop.f32.mrb[0].mxu0
  %6549 = vmatprep.mubr.f32.mxu0 0.0
  %6550 = vmatmul.mubr.f32.gmra.mrb[0].mxu0 %v6448
  %v6551 = vpop.f32.mrb[0].mxu0
  %v6552 = vadd.f32 0.0, %v6551
  %v6553 = vpop.f32.mrb[0].mxu0
  %6554 = vdwg.mxu0
  %6555 = vrot.lane.b32.xlu0 %v1328, 94
  %v6556 = vpop.permute.xlu0 %6555
  %6557 = vrot.lane.b32.xlu0 %v1329, 94
  %v6558 = vpop.permute.xlu0 %6557
  %6559 = vrot.lane.b32.xlu0 %v1330, 94
  %v6560 = vpop.permute.xlu0 %6559
  %6561 = vrot.lane.b32.xlu0 %v1331, 94
  %v6562 = vpop.permute.xlu0 %6561
  %6563 = vrot.lane.b32.xlu0 %v1332, 94
  %v6564 = vpop.permute.xlu0 %6563
  %6565 = vrot.lane.b32.xlu0 %v1333, 94
  %v6566 = vpop.permute.xlu0 %6565
  %6567 = vrot.lane.b32.xlu0 %v1334, 94
  %v6568 = vpop.permute.xlu0 %6567
  %6569 = vrot.lane.b32.xlu0 %v1335, 94
  %v6570 = vpop.permute.xlu0 %6569
  %v6580 = vsel %vm2673, %v6291, 0
  %v6583 = vsel %vm2673, %v6293, 0
  %v6586 = vsel %vm2673, %v6295, 0
  %v6589 = vsel %vm2673, %v6297, 0
  %v6592 = vsel %vm2673, %v6299, 0
  %v6595 = vsel %vm2673, %v6301, 0
  %v6598 = vsel %vm2673, %v6303, 0
  %v6601 = vsel %vm2673, %v6305, 0
  %6603 = vmatprep.subr.mxu0 0.0
  %6604 = vmatpush1.msra.mxu0 %v6556
  %6605 = vmatprep.subr.mxu0 0.0
  %6606 = vmatpush1.msra.mxu0 %v6558
  %6607 = vmatprep.subr.mxu0 0.0
  %6608 = vmatpush1.msra.mxu0 %v6560
  %6609 = vmatprep.subr.mxu0 0.0
  %6610 = vmatpush1.msra.mxu0 %v6562
  %6611 = vmatprep.subr.mxu0 0.0
  %6612 = vmatpush1.msra.mxu0 %v6564
  %6613 = vmatprep.subr.mxu0 0.0
  %6614 = vmatpush1.msra.mxu0 %v6566
  %6615 = vmatprep.subr.mxu0 0.0
  %6616 = vmatpush1.msra.mxu0 %v6568
  %6617 = vmatprep.subr.mxu0 0.0
  %6618 = vmatpush1.msra.mxu0 %v6570
  %6619 = vmatprep.subr.mxu0 0.0
  %6620 = vmatpush1.msra.mxu0 0.0
  %6621 = vmatprep.subr.mxu0 0.0
  %6622 = vmatpush1.msra.mxu0 0.0
  %6623 = vmatprep.subr.mxu0 0.0
  %6624 = vmatpush1.msra.mxu0 0.0
  %6625 = vmatprep.subr.mxu0 0.0
  %6626 = vmatpush1.msra.mxu0 0.0
  %6627 = vmatprep.subr.mxu0 0.0
  %6628 = vmatpush1.msra.mxu0 0.0
  %6629 = vmatprep.subr.mxu0 0.0
  %6630 = vmatpush1.msra.mxu0 0.0
  %6631 = vmatprep.subr.mxu0 0.0
  %6632 = vmatpush1.msra.mxu0 0.0
  %6633 = vmatprep.subr.mxu0 0.0
  %6634 = vmatpush1.msra.mxu0 0.0
  %6635 = vmatprep.subr.mxu0 0.0
  %6636 = vmatpush1.msra.mxu0 0.0
  %6637 = vmatprep.subr.mxu0 0.0
  %6638 = vmatpush1.msra.mxu0 0.0
  %6639 = vmatprep.subr.mxu0 0.0
  %6640 = vmatpush1.msra.mxu0 0.0
  %6641 = vmatprep.subr.mxu0 0.0
  %6642 = vmatpush1.msra.mxu0 0.0
  %6643 = vmatprep.subr.mxu0 0.0
  %6644 = vmatpush1.msra.mxu0 0.0
  %6645 = vmatprep.subr.mxu0 0.0
  %6646 = vmatpush1.msra.mxu0 0.0
  %6647 = vmatprep.subr.mxu0 0.0
  %6648 = vmatpush1.msra.mxu0 0.0
  %6649 = vmatprep.subr.mxu0 0.0
  %6650 = vmatpush1.msra.mxu0 0.0
  %6651 = vmatprep.subr.mxu0 0.0
  %6652 = vmatpush1.msra.mxu0 0.0
  %6653 = vmatprep.subr.mxu0 0.0
  %6654 = vmatpush1.msra.mxu0 0.0
  %6655 = vmatprep.subr.mxu0 0.0
  %6656 = vmatpush1.msra.mxu0 0.0
  %6657 = vmatprep.subr.mxu0 0.0
  %6658 = vmatpush1.msra.mxu0 0.0
  %6659 = vmatprep.subr.mxu0 0.0
  %6660 = vmatpush1.msra.mxu0 0.0
  %6661 = vmatprep.subr.mxu0 0.0
  %6662 = vmatpush1.msra.mxu0 0.0
  %6663 = vmatprep.subr.mxu0 0.0
  %6664 = vmatpush1.msra.mxu0 0.0
  %6665 = vmatprep.subr.mxu0 0.0
  %6666 = vmatpush1.msra.mxu0 0.0
  %6667 = vmatprep.mubr.f32.mxu0 0.0
  %6668 = vmatmul.mubr.f32.gmra.mrb[0].mxu0 %v6580
  %v6669 = vpop.f32.mrb[0].mxu0
  %v6670 = vadd.f32 0.0, %v6669
  %v6671 = vpop.f32.mrb[0].mxu0
  %6672 = vmatprep.mubr.f32.mxu0 0.0
  %6673 = vmatmul.mubr.f32.gmra.mrb[0].mxu0 %v6583
  %v6674 = vpop.f32.mrb[0].mxu0
  %v6675 = vadd.f32 0.0, %v6674
  %v6676 = vpop.f32.mrb[0].mxu0
  %6677 = vmatprep.mubr.f32.mxu0 0.0
  %6678 = vmatmul.mubr.f32.gmra.mrb[0].mxu0 %v6586
  %v6679 = vpop.f32.mrb[0].mxu0
  %v6680 = vadd.f32 0.0, %v6679
  %v6681 = vpop.f32.mrb[0].mxu0
  %6682 = vmatprep.mubr.f32.mxu0 0.0
  %6683 = vmatmul.mubr.f32.gmra.mrb[0].mxu0 %v6589
  %v6684 = vpop.f32.mrb[0].mxu0
  %v6685 = vadd.f32 0.0, %v6684
  %v6686 = vpop.f32.mrb[0].mxu0
  %6687 = vmatprep.mubr.f32.mxu0 0.0
  %6688 = vmatmul.mubr.f32.gmra.mrb[0].mxu0 %v6592
  %v6689 = vpop.f32.mrb[0].mxu0
  %v6690 = vadd.f32 0.0, %v6689
  %v6691 = vpop.f32.mrb[0].mxu0
  %6692 = vmatprep.mubr.f32.mxu0 0.0
  %6693 = vmatmul.mubr.f32.gmra.mrb[0].mxu0 %v6595
  %v6694 = vpop.f32.mrb[0].mxu0
  %v6695 = vadd.f32 0.0, %v6694
  %v6696 = vpop.f32.mrb[0].mxu0
  %6697 = vmatprep.mubr.f32.mxu0 0.0
  %6698 = vmatmul.mubr.f32.gmra.mrb[0].mxu0 %v6598
  %v6699 = vpop.f32.mrb[0].mxu0
  %v6700 = vadd.f32 0.0, %v6699
  %v6701 = vpop.f32.mrb[0].mxu0
  %6702 = vmatprep.mubr.f32.mxu0 0.0
  %6703 = vmatmul.mubr.f32.gmra.mrb[0].mxu0 %v6601
  %v6704 = vpop.f32.mrb[0].mxu0
  %v6705 = vadd.f32 0.0, %v6704
  %v6706 = vpop.f32.mrb[0].mxu0
  %6707 = vdwg.mxu0
  %6708 = vrot.lane.b32.xlu0 %v1336, 94
  %v6709 = vpop.permute.xlu0 %6708
  %6710 = vrot.lane.b32.xlu0 %v1337, 94
  %v6711 = vpop.permute.xlu0 %6710
  %6712 = vrot.lane.b32.xlu0 %v1338, 94
  %v6713 = vpop.permute.xlu0 %6712
  %6714 = vrot.lane.b32.xlu0 %v1339, 94
  %v6715 = vpop.permute.xlu0 %6714
  %6716 = vrot.lane.b32.xlu0 %v1340, 94
  %v6717 = vpop.permute.xlu0 %6716
  %6718 = vrot.lane.b32.xlu0 %v1341, 94
  %v6719 = vpop.permute.xlu0 %6718
  %6720 = vrot.lane.b32.xlu0 %v1342, 94
  %v6721 = vpop.permute.xlu0 %6720
  %6722 = vrot.lane.b32.xlu0 %v1343, 94
  %v6723 = vpop.permute.xlu0 %6722
  %v6733 = vsel %vm2673, %v6307, 0
  %v6736 = vsel %vm2673, %v6309, 0
  %v6739 = vsel %vm2673, %v6311, 0
  %v6742 = vsel %vm2673, %v6313, 0
  %v6745 = vsel %vm2673, %v6315, 0
  %v6748 = vsel %vm2673, %v6317, 0
  %v6751 = vsel %vm2673, %v6319, 0
  %v6754 = vsel %vm2673, %v6321, 0
  %6756 = vmatprep.subr.mxu0 0.0
  %6757 = vmatpush1.msra.mxu0 %v6709
  %6758 = vmatprep.subr.mxu0 0.0
  %6759 = vmatpush1.msra.mxu0 %v6711
  %6760 = vmatprep.subr.mxu0 0.0
  %6761 = vmatpush1.msra.mxu0 %v6713
  %6762 = vmatprep.subr.mxu0 0.0
  %6763 = vmatpush1.msra.mxu0 %v6715
  %6764 = vmatprep.subr.mxu0 0.0
  %6765 = vmatpush1.msra.mxu0 %v6717
  %6766 = vmatprep.subr.mxu0 0.0
  %6767 = vmatpush1.msra.mxu0 %v6719
  %6768 = vmatprep.subr.mxu0 0.0
  %6769 = vmatpush1.msra.mxu0 %v6721
  %6770 = vmatprep.subr.mxu0 0.0
  %6771 = vmatpush1.msra.mxu0 %v6723
  %6772 = vmatprep.subr.mxu0 0.0
  %6773 = vmatpush1.msra.mxu0 0.0
  %6774 = vmatprep.subr.mxu0 0.0
  %6775 = vmatpush1.msra.mxu0 0.0
  %6776 = vmatprep.subr.mxu0 0.0
  %6777 = vmatpush1.msra.mxu0 0.0
  %6778 = vmatprep.subr.mxu0 0.0
  %6779 = vmatpush1.msra.mxu0 0.0
  %6780 = vmatprep.subr.mxu0 0.0
  %6781 = vmatpush1.msra.mxu0 0.0
  %6782 = vmatprep.subr.mxu0 0.0
  %6783 = vmatpush1.msra.mxu0 0.0
  %6784 = vmatprep.subr.mxu0 0.0
  %6785 = vmatpush1.msra.mxu0 0.0
  %6786 = vmatprep.subr.mxu0 0.0
  %6787 = vmatpush1.msra.mxu0 0.0
  %6788 = vmatprep.subr.mxu0 0.0
  %6789 = vmatpush1.msra.mxu0 0.0
  %6790 = vmatprep.subr.mxu0 0.0
  %6791 = vmatpush1.msra.mxu0 0.0
  %6792 = vmatprep.subr.mxu0 0.0
  %6793 = vmatpush1.msra.mxu0 0.0
  %6794 = vmatprep.subr.mxu0 0.0
  %6795 = vmatpush1.msra.mxu0 0.0
  %6796 = vmatprep.subr.mxu0 0.0
  %6797 = vmatpush1.msra.mxu0 0.0
  %6798 = vmatprep.subr.mxu0 0.0
  %6799 = vmatpush1.msra.mxu0 0.0
  %6800 = vmatprep.subr.mxu0 0.0
  %6801 = vmatpush1.msra.mxu0 0.0
  %6802 = vmatprep.subr.mxu0 0.0
  %6803 = vmatpush1.msra.mxu0 0.0
  %6804 = vmatprep.subr.mxu0 0.0
  %6805 = vmatpush1.msra.mxu0 0.0
  %6806 = vmatprep.subr.mxu0 0.0
  %6807 = vmatpush1.msra.mxu0 0.0
  %6808 = vmatprep.subr.mxu0 0.0
  %6809 = vmatpush1.msra.mxu0 0.0
  %6810 = vmatprep.subr.mxu0 0.0
  %6811 = vmatpush1.msra.mxu0 0.0
  %6812 = vmatprep.subr.mxu0 0.0
  %6813 = vmatpush1.msra.mxu0 0.0
  %6814 = vmatprep.subr.mxu0 0.0
  %6815 = vmatpush1.msra.mxu0 0.0
  %6816 = vmatprep.subr.mxu0 0.0
  %6817 = vmatpush1.msra.mxu0 0.0
  %6818 = vmatprep.subr.mxu0 0.0
  %6819 = vmatpush1.msra.mxu0 0.0
  %6820 = vmatprep.mubr.f32.mxu0 0.0
  %6821 = vmatmul.mubr.f32.gmra.mrb[0].mxu0 %v6733
  %v6822 = vpop.f32.mrb[0].mxu0
  %v6823 = vadd.f32 0.0, %v6822
  %v6824 = vpop.f32.mrb[0].mxu0
  %6825 = vmatprep.mubr.f32.mxu0 0.0
  %6826 = vmatmul.mubr.f32.gmra.mrb[0].mxu0 %v6736
  %v6827 = vpop.f32.mrb[0].mxu0
  %v6828 = vadd.f32 0.0, %v6827
  %v6829 = vpop.f32.mrb[0].mxu0
  %6830 = vmatprep.mubr.f32.mxu0 0.0
  %6831 = vmatmul.mubr.f32.gmra.mrb[0].mxu0 %v6739
  %v6832 = vpop.f32.mrb[0].mxu0
  %v6833 = vadd.f32 0.0, %v6832
  %v6834 = vpop.f32.mrb[0].mxu0
  %6835 = vmatprep.mubr.f32.mxu0 0.0
  %6836 = vmatmul.mubr.f32.gmra.mrb[0].mxu0 %v6742
  %v6837 = vpop.f32.mrb[0].mxu0
  %v6838 = vadd.f32 0.0, %v6837
  %v6839 = vpop.f32.mrb[0].mxu0
  %6840 = vmatprep.mubr.f32.mxu0 0.0
  %6841 = vmatmul.mubr.f32.gmra.mrb[0].mxu0 %v6745
  %v6842 = vpop.f32.mrb[0].mxu0
  %v6843 = vadd.f32 0.0, %v6842
  %v6844 = vpop.f32.mrb[0].mxu0
  %6845 = vmatprep.mubr.f32.mxu0 0.0
  %6846 = vmatmul.mubr.f32.gmra.mrb[0].mxu0 %v6748
  %v6847 = vpop.f32.mrb[0].mxu0
  %v6848 = vadd.f32 0.0, %v6847
  %v6849 = vpop.f32.mrb[0].mxu0
  %6850 = vmatprep.mubr.f32.mxu0 0.0
  %6851 = vmatmul.mubr.f32.gmra.mrb[0].mxu0 %v6751
  %v6852 = vpop.f32.mrb[0].mxu0
  %v6853 = vadd.f32 0.0, %v6852
  %v6854 = vpop.f32.mrb[0].mxu0
  %6855 = vmatprep.mubr.f32.mxu0 0.0
  %6856 = vmatmul.mubr.f32.gmra.mrb[0].mxu0 %v6754
  %v6857 = vpop.f32.mrb[0].mxu0
  %v6858 = vadd.f32 0.0, %v6857
  %v6859 = vpop.f32.mrb[0].mxu0
  %6860 = vdwg.mxu0
  %6861 = vrot.lane.b32.xlu0 %v1344, 94
  %v6862 = vpop.permute.xlu0 %6861
  %6863 = vrot.lane.b32.xlu0 %v1345, 94
  %v6864 = vpop.permute.xlu0 %6863
  %6865 = vrot.lane.b32.xlu0 %v1346, 94
  %v6866 = vpop.permute.xlu0 %6865
  %6867 = vrot.lane.b32.xlu0 %v1347, 94
  %v6868 = vpop.permute.xlu0 %6867
  %6869 = vrot.lane.b32.xlu0 %v1348, 94
  %v6870 = vpop.permute.xlu0 %6869
  %6871 = vrot.lane.b32.xlu0 %v1349, 94
  %v6872 = vpop.permute.xlu0 %6871
  %6873 = vrot.lane.b32.xlu0 %v1350, 94
  %v6874 = vpop.permute.xlu0 %6873
  %6875 = vrot.lane.b32.xlu0 %v1351, 94
  %v6876 = vpop.permute.xlu0 %6875
  %v6886 = vsel %vm2673, %v6323, 0
  %v6889 = vsel %vm2673, %v6325, 0
  %v6892 = vsel %vm2673, %v6327, 0
  %v6895 = vsel %vm2673, %v6329, 0
  %v6898 = vsel %vm2673, %v6331, 0
  %v6901 = vsel %vm2673, %v6333, 0
  %v6904 = vsel %vm2673, %v6335, 0
  %v6907 = vsel %vm2673, %v6337, 0
  %6909 = vmatprep.subr.mxu0 0.0
  %6910 = vmatpush1.msra.mxu0 %v6862
  %6911 = vmatprep.subr.mxu0 0.0
  %6912 = vmatpush1.msra.mxu0 %v6864
  %6913 = vmatprep.subr.mxu0 0.0
  %6914 = vmatpush1.msra.mxu0 %v6866
  %6915 = vmatprep.subr.mxu0 0.0
  %6916 = vmatpush1.msra.mxu0 %v6868
  %6917 = vmatprep.subr.mxu0 0.0
  %6918 = vmatpush1.msra.mxu0 %v6870
  %6919 = vmatprep.subr.mxu0 0.0
  %6920 = vmatpush1.msra.mxu0 %v6872
  %6921 = vmatprep.subr.mxu0 0.0
  %6922 = vmatpush1.msra.mxu0 %v6874
  %6923 = vmatprep.subr.mxu0 0.0
  %6924 = vmatpush1.msra.mxu0 %v6876
  %6925 = vmatprep.subr.mxu0 0.0
  %6926 = vmatpush1.msra.mxu0 0.0
  %6927 = vmatprep.subr.mxu0 0.0
  %6928 = vmatpush1.msra.mxu0 0.0
  %6929 = vmatprep.subr.mxu0 0.0
  %6930 = vmatpush1.msra.mxu0 0.0
  %6931 = vmatprep.subr.mxu0 0.0
  %6932 = vmatpush1.msra.mxu0 0.0
  %6933 = vmatprep.subr.mxu0 0.0
  %6934 = vmatpush1.msra.mxu0 0.0
  %6935 = vmatprep.subr.mxu0 0.0
  %6936 = vmatpush1.msra.mxu0 0.0
  %6937 = vmatprep.subr.mxu0 0.0
  %6938 = vmatpush1.msra.mxu0 0.0
  %6939 = vmatprep.subr.mxu0 0.0
  %6940 = vmatpush1.msra.mxu0 0.0
  %6941 = vmatprep.subr.mxu0 0.0
  %6942 = vmatpush1.msra.mxu0 0.0
  %6943 = vmatprep.subr.mxu0 0.0
  %6944 = vmatpush1.msra.mxu0 0.0
  %6945 = vmatprep.subr.mxu0 0.0
  %6946 = vmatpush1.msra.mxu0 0.0
  %6947 = vmatprep.subr.mxu0 0.0
  %6948 = vmatpush1.msra.mxu0 0.0
  %6949 = vmatprep.subr.mxu0 0.0
  %6950 = vmatpush1.msra.mxu0 0.0
  %6951 = vmatprep.subr.mxu0 0.0
  %6952 = vmatpush1.msra.mxu0 0.0
  %6953 = vmatprep.subr.mxu0 0.0
  %6954 = vmatpush1.msra.mxu0 0.0
  %6955 = vmatprep.subr.mxu0 0.0
  %6956 = vmatpush1.msra.mxu0 0.0
  %6957 = vmatprep.subr.mxu0 0.0
  %6958 = vmatpush1.msra.mxu0 0.0
  %6959 = vmatprep.subr.mxu0 0.0
  %6960 = vmatpush1.msra.mxu0 0.0
  %6961 = vmatprep.subr.mxu0 0.0
  %6962 = vmatpush1.msra.mxu0 0.0
  %6963 = vmatprep.subr.mxu0 0.0
  %6964 = vmatpush1.msra.mxu0 0.0
  %6965 = vmatprep.subr.mxu0 0.0
  %6966 = vmatpush1.msra.mxu0 0.0
  %6967 = vmatprep.subr.mxu0 0.0
  %6968 = vmatpush1.msra.mxu0 0.0
  %6969 = vmatprep.subr.mxu0 0.0
  %6970 = vmatpush1.msra.mxu0 0.0
  %6971 = vmatprep.subr.mxu0 0.0
  %6972 = vmatpush1.msra.mxu0 0.0
  %6973 = vmatprep.mubr.f32.mxu0 0.0
  %6974 = vmatmul.mubr.f32.gmra.mrb[0].mxu0 %v6886
  %v6975 = vpop.f32.mrb[0].mxu0
  %v6976 = vadd.f32 0.0, %v6975
  %v6977 = vpop.f32.mrb[0].mxu0
  %6978 = vmatprep.mubr.f32.mxu0 0.0
  %6979 = vmatmul.mubr.f32.gmra.mrb[0].mxu0 %v6889
  %v6980 = vpop.f32.mrb[0].mxu0
  %v6981 = vadd.f32 0.0, %v6980
  %v6982 = vpop.f32.mrb[0].mxu0
  %6983 = vmatprep.mubr.f32.mxu0 0.0
  %6984 = vmatmul.mubr.f32.gmra.mrb[0].mxu0 %v6892
  %v6985 = vpop.f32.mrb[0].mxu0
  %v6986 = vadd.f32 0.0, %v6985
  %v6987 = vpop.f32.mrb[0].mxu0
  %6988 = vmatprep.mubr.f32.mxu0 0.0
  %6989 = vmatmul.mubr.f32.gmra.mrb[0].mxu0 %v6895
  %v6990 = vpop.f32.mrb[0].mxu0
  %v6991 = vadd.f32 0.0, %v6990
  %v6992 = vpop.f32.mrb[0].mxu0
  %6993 = vmatprep.mubr.f32.mxu0 0.0
  %6994 = vmatmul.mubr.f32.gmra.mrb[0].mxu0 %v6898
  %v6995 = vpop.f32.mrb[0].mxu0
  %v6996 = vadd.f32 0.0, %v6995
  %v6997 = vpop.f32.mrb[0].mxu0
  %6998 = vmatprep.mubr.f32.mxu0 0.0
  %6999 = vmatmul.mubr.f32.gmra.mrb[0].mxu0 %v6901
  %v7000 = vpop.f32.mrb[0].mxu0
  %v7001 = vadd.f32 0.0, %v7000
  %v7002 = vpop.f32.mrb[0].mxu0
  %7003 = vmatprep.mubr.f32.mxu0 0.0
  %7004 = vmatmul.mubr.f32.gmra.mrb[0].mxu0 %v6904
  %v7005 = vpop.f32.mrb[0].mxu0
  %v7006 = vadd.f32 0.0, %v7005
  %v7007 = vpop.f32.mrb[0].mxu0
  %7008 = vmatprep.mubr.f32.mxu0 0.0
  %7009 = vmatmul.mubr.f32.gmra.mrb[0].mxu0 %v6907
  %v7010 = vpop.f32.mrb[0].mxu0
  %v7011 = vadd.f32 0.0, %v7010
  %v7012 = vpop.f32.mrb[0].mxu0
  %7013 = vdwg.mxu0
  %7014 = vrot.lane.b32.xlu0 %v1352, 94
  %v7015 = vpop.permute.xlu0 %7014
  %7016 = vrot.lane.b32.xlu0 %v1353, 94
  %v7017 = vpop.permute.xlu0 %7016
  %7018 = vrot.lane.b32.xlu0 %v1354, 94
  %v7019 = vpop.permute.xlu0 %7018
  %7020 = vrot.lane.b32.xlu0 %v1355, 94
  %v7021 = vpop.permute.xlu0 %7020
  %7022 = vrot.lane.b32.xlu0 %v1356, 94
  %v7023 = vpop.permute.xlu0 %7022
  %7024 = vrot.lane.b32.xlu0 %v1357, 94
  %v7025 = vpop.permute.xlu0 %7024
  %7026 = vrot.lane.b32.xlu0 %v1358, 94
  %v7027 = vpop.permute.xlu0 %7026
  %7028 = vrot.lane.b32.xlu0 %v1359, 94
  %v7029 = vpop.permute.xlu0 %7028
  %v7039 = vsel %vm2673, %v6339, 0
  %v7042 = vsel %vm2673, %v6341, 0
  %v7045 = vsel %vm2673, %v6343, 0
  %v7048 = vsel %vm2673, %v6345, 0
  %v7051 = vsel %vm2673, %v6347, 0
  %v7054 = vsel %vm2673, %v6349, 0
  %v7057 = vsel %vm2673, %v6351, 0
  %v7060 = vsel %vm2673, %v6353, 0
  %7062 = vmatprep.subr.mxu0 0.0
  %7063 = vmatpush1.msra.mxu0 %v7015
  %7064 = vmatprep.subr.mxu0 0.0
  %7065 = vmatpush1.msra.mxu0 %v7017
  %7066 = vmatprep.subr.mxu0 0.0
  %7067 = vmatpush1.msra.mxu0 %v7019
  %7068 = vmatprep.subr.mxu0 0.0
  %7069 = vmatpush1.msra.mxu0 %v7021
  %7070 = vmatprep.subr.mxu0 0.0
  %7071 = vmatpush1.msra.mxu0 %v7023
  %7072 = vmatprep.subr.mxu0 0.0
  %7073 = vmatpush1.msra.mxu0 %v7025
  %7074 = vmatprep.subr.mxu0 0.0
  %7075 = vmatpush1.msra.mxu0 %v7027
  %7076 = vmatprep.subr.mxu0 0.0
  %7077 = vmatpush1.msra.mxu0 %v7029
  %7078 = vmatprep.subr.mxu0 0.0
  %7079 = vmatpush1.msra.mxu0 0.0
  %7080 = vmatprep.subr.mxu0 0.0
  %7081 = vmatpush1.msra.mxu0 0.0
  %7082 = vmatprep.subr.mxu0 0.0
  %7083 = vmatpush1.msra.mxu0 0.0
  %7084 = vmatprep.subr.mxu0 0.0
  %7085 = vmatpush1.msra.mxu0 0.0
  %7086 = vmatprep.subr.mxu0 0.0
  %7087 = vmatpush1.msra.mxu0 0.0
  %7088 = vmatprep.subr.mxu0 0.0
  %7089 = vmatpush1.msra.mxu0 0.0
  %7090 = vmatprep.subr.mxu0 0.0
  %7091 = vmatpush1.msra.mxu0 0.0
  %7092 = vmatprep.subr.mxu0 0.0
  %7093 = vmatpush1.msra.mxu0 0.0
  %7094 = vmatprep.subr.mxu0 0.0
  %7095 = vmatpush1.msra.mxu0 0.0
  %7096 = vmatprep.subr.mxu0 0.0
  %7097 = vmatpush1.msra.mxu0 0.0
  %7098 = vmatprep.subr.mxu0 0.0
  %7099 = vmatpush1.msra.mxu0 0.0
  %7100 = vmatprep.subr.mxu0 0.0
  %7101 = vmatpush1.msra.mxu0 0.0
  %7102 = vmatprep.subr.mxu0 0.0
  %7103 = vmatpush1.msra.mxu0 0.0
  %7104 = vmatprep.subr.mxu0 0.0
  %7105 = vmatpush1.msra.mxu0 0.0
  %7106 = vmatprep.subr.mxu0 0.0
  %7107 = vmatpush1.msra.mxu0 0.0
  %7108 = vmatprep.subr.mxu0 0.0
  %7109 = vmatpush1.msra.mxu0 0.0
  %7110 = vmatprep.subr.mxu0 0.0
  %7111 = vmatpush1.msra.mxu0 0.0
  %7112 = vmatprep.subr.mxu0 0.0
  %7113 = vmatpush1.msra.mxu0 0.0
  %7114 = vmatprep.subr.mxu0 0.0
  %7115 = vmatpush1.msra.mxu0 0.0
  %7116 = vmatprep.subr.mxu0 0.0
  %7117 = vmatpush1.msra.mxu0 0.0
  %7118 = vmatprep.subr.mxu0 0.0
  %7119 = vmatpush1.msra.mxu0 0.0
  %7120 = vmatprep.subr.mxu0 0.0
  %7121 = vmatpush1.msra.mxu0 0.0
  %7122 = vmatprep.subr.mxu0 0.0
  %7123 = vmatpush1.msra.mxu0 0.0
  %7124 = vmatprep.subr.mxu0 0.0
  %7125 = vmatpush1.msra.mxu0 0.0
  %7126 = vmatprep.mubr.f32.mxu0 0.0
  %7127 = vmatmul.mubr.f32.gmra.mrb[0].mxu0 %v7039
  %v7128 = vpop.f32.mrb[0].mxu0
  %v7129 = vadd.f32 0.0, %v7128
  %v7130 = vpop.f32.mrb[0].mxu0
  %7131 = vmatprep.mubr.f32.mxu0 0.0
  %7132 = vmatmul.mubr.f32.gmra.mrb[0].mxu0 %v7042
  %v7133 = vpop.f32.mrb[0].mxu0
  %v7134 = vadd.f32 0.0, %v7133
  %v7135 = vpop.f32.mrb[0].mxu0
  %7136 = vmatprep.mubr.f32.mxu0 0.0
  %7137 = vmatmul.mubr.f32.gmra.mrb[0].mxu0 %v7045
  %v7138 = vpop.f32.mrb[0].mxu0
  %v7139 = vadd.f32 0.0, %v7138
  %v7140 = vpop.f32.mrb[0].mxu0
  %7141 = vmatprep.mubr.f32.mxu0 0.0
  %7142 = vmatmul.mubr.f32.gmra.mrb[0].mxu0 %v7048
  %v7143 = vpop.f32.mrb[0].mxu0
  %v7144 = vadd.f32 0.0, %v7143
  %v7145 = vpop.f32.mrb[0].mxu0
  %7146 = vmatprep.mubr.f32.mxu0 0.0
  %7147 = vmatmul.mubr.f32.gmra.mrb[0].mxu0 %v7051
  %v7148 = vpop.f32.mrb[0].mxu0
  %v7149 = vadd.f32 0.0, %v7148
  %v7150 = vpop.f32.mrb[0].mxu0
  %7151 = vmatprep.mubr.f32.mxu0 0.0
  %7152 = vmatmul.mubr.f32.gmra.mrb[0].mxu0 %v7054
  %v7153 = vpop.f32.mrb[0].mxu0
  %v7154 = vadd.f32 0.0, %v7153
  %v7155 = vpop.f32.mrb[0].mxu0
  %7156 = vmatprep.mubr.f32.mxu0 0.0
  %7157 = vmatmul.mubr.f32.gmra.mrb[0].mxu0 %v7057
  %v7158 = vpop.f32.mrb[0].mxu0
  %v7159 = vadd.f32 0.0, %v7158
  %v7160 = vpop.f32.mrb[0].mxu0
  %7161 = vmatprep.mubr.f32.mxu0 0.0
  %7162 = vmatmul.mubr.f32.gmra.mrb[0].mxu0 %v7060
  %v7163 = vpop.f32.mrb[0].mxu0
  %v7164 = vadd.f32 0.0, %v7163
  %v7165 = vpop.f32.mrb[0].mxu0
  %7166 = vdwg.mxu0
  %7167 = vrot.lane.b32.xlu0 %v1360, 94
  %v7168 = vpop.permute.xlu0 %7167
  %7169 = vrot.lane.b32.xlu0 %v1361, 94
  %v7170 = vpop.permute.xlu0 %7169
  %7171 = vrot.lane.b32.xlu0 %v1362, 94
  %v7172 = vpop.permute.xlu0 %7171
  %7173 = vrot.lane.b32.xlu0 %v1363, 94
  %v7174 = vpop.permute.xlu0 %7173
  %7175 = vrot.lane.b32.xlu0 %v1364, 94
  %v7176 = vpop.permute.xlu0 %7175
  %7177 = vrot.lane.b32.xlu0 %v1365, 94
  %v7178 = vpop.permute.xlu0 %7177
  %7179 = vrot.lane.b32.xlu0 %v1366, 94
  %v7180 = vpop.permute.xlu0 %7179
  %7181 = vrot.lane.b32.xlu0 %v1367, 94
  %v7182 = vpop.permute.xlu0 %7181
  %v7192 = vsel %vm2673, %v6355, 0
  %v7195 = vsel %vm2673, %v6357, 0
  %v7198 = vsel %vm2673, %v6359, 0
  %v7201 = vsel %vm2673, %v6361, 0
  %v7204 = vsel %vm2673, %v6363, 0
  %v7207 = vsel %vm2673, %v6365, 0
  %v7210 = vsel %vm2673, %v6367, 0
  %v7213 = vsel %vm2673, %v6369, 0
  %7215 = vmatprep.subr.mxu0 0.0
  %7216 = vmatpush1.msra.mxu0 %v7168
  %7217 = vmatprep.subr.mxu0 0.0
  %7218 = vmatpush1.msra.mxu0 %v7170
  %7219 = vmatprep.subr.mxu0 0.0
  %7220 = vmatpush1.msra.mxu0 %v7172
  %7221 = vmatprep.subr.mxu0 0.0
  %7222 = vmatpush1.msra.mxu0 %v7174
  %7223 = vmatprep.subr.mxu0 0.0
  %7224 = vmatpush1.msra.mxu0 %v7176
  %7225 = vmatprep.subr.mxu0 0.0
  %7226 = vmatpush1.msra.mxu0 %v7178
  %7227 = vmatprep.subr.mxu0 0.0
  %7228 = vmatpush1.msra.mxu0 %v7180
  %7229 = vmatprep.subr.mxu0 0.0
  %7230 = vmatpush1.msra.mxu0 %v7182
  %7231 = vmatprep.subr.mxu0 0.0
  %7232 = vmatpush1.msra.mxu0 0.0
  %7233 = vmatprep.subr.mxu0 0.0
  %7234 = vmatpush1.msra.mxu0 0.0
  %7235 = vmatprep.subr.mxu0 0.0
  %7236 = vmatpush1.msra.mxu0 0.0
  %7237 = vmatprep.subr.mxu0 0.0
  %7238 = vmatpush1.msra.mxu0 0.0
  %7239 = vmatprep.subr.mxu0 0.0
  %7240 = vmatpush1.msra.mxu0 0.0
  %7241 = vmatprep.subr.mxu0 0.0
  %7242 = vmatpush1.msra.mxu0 0.0
  %7243 = vmatprep.subr.mxu0 0.0
  %7244 = vmatpush1.msra.mxu0 0.0
  %7245 = vmatprep.subr.mxu0 0.0
  %7246 = vmatpush1.msra.mxu0 0.0
  %7247 = vmatprep.subr.mxu0 0.0
  %7248 = vmatpush1.msra.mxu0 0.0
  %7249 = vmatprep.subr.mxu0 0.0
  %7250 = vmatpush1.msra.mxu0 0.0
  %7251 = vmatprep.subr.mxu0 0.0
  %7252 = vmatpush1.msra.mxu0 0.0
  %7253 = vmatprep.subr.mxu0 0.0
  %7254 = vmatpush1.msra.mxu0 0.0
  %7255 = vmatprep.subr.mxu0 0.0
  %7256 = vmatpush1.msra.mxu0 0.0
  %7257 = vmatprep.subr.mxu0 0.0
  %7258 = vmatpush1.msra.mxu0 0.0
  %7259 = vmatprep.subr.mxu0 0.0
  %7260 = vmatpush1.msra.mxu0 0.0
  %7261 = vmatprep.subr.mxu0 0.0
  %7262 = vmatpush1.msra.mxu0 0.0
  %7263 = vmatprep.subr.mxu0 0.0
  %7264 = vmatpush1.msra.mxu0 0.0
  %7265 = vmatprep.subr.mxu0 0.0
  %7266 = vmatpush1.msra.mxu0 0.0
  %7267 = vmatprep.subr.mxu0 0.0
  %7268 = vmatpush1.msra.mxu0 0.0
  %7269 = vmatprep.subr.mxu0 0.0
  %7270 = vmatpush1.msra.mxu0 0.0
  %7271 = vmatprep.subr.mxu0 0.0
  %7272 = vmatpush1.msra.mxu0 0.0
  %7273 = vmatprep.subr.mxu0 0.0
  %7274 = vmatpush1.msra.mxu0 0.0
  %7275 = vmatprep.subr.mxu0 0.0
  %7276 = vmatpush1.msra.mxu0 0.0
  %7277 = vmatprep.subr.mxu0 0.0
  %7278 = vmatpush1.msra.mxu0 0.0
  %7279 = vmatprep.mubr.f32.mxu0 0.0
  %7280 = vmatmul.mubr.f32.gmra.mrb[0].mxu0 %v7192
  %v7281 = vpop.f32.mrb[0].mxu0
  %v7282 = vadd.f32 0.0, %v7281
  %v7283 = vpop.f32.mrb[0].mxu0
  %7284 = vmatprep.mubr.f32.mxu0 0.0
  %7285 = vmatmul.mubr.f32.gmra.mrb[0].mxu0 %v7195
  %v7286 = vpop.f32.mrb[0].mxu0
  %v7287 = vadd.f32 0.0, %v7286
  %v7288 = vpop.f32.mrb[0].mxu0
  %7289 = vmatprep.mubr.f32.mxu0 0.0
  %7290 = vmatmul.mubr.f32.gmra.mrb[0].mxu0 %v7198
  %v7291 = vpop.f32.mrb[0].mxu0
  %v7292 = vadd.f32 0.0, %v7291
  %v7293 = vpop.f32.mrb[0].mxu0
  %7294 = vmatprep.mubr.f32.mxu0 0.0
  %7295 = vmatmul.mubr.f32.gmra.mrb[0].mxu0 %v7201
  %v7296 = vpop.f32.mrb[0].mxu0
  %v7297 = vadd.f32 0.0, %v7296
  %v7298 = vpop.f32.mrb[0].mxu0
  %7299 = vmatprep.mubr.f32.mxu0 0.0
  %7300 = vmatmul.mubr.f32.gmra.mrb[0].mxu0 %v7204
  %v7301 = vpop.f32.mrb[0].mxu0
  %v7302 = vadd.f32 0.0, %v7301
  %v7303 = vpop.f32.mrb[0].mxu0
  %7304 = vmatprep.mubr.f32.mxu0 0.0
  %7305 = vmatmul.mubr.f32.gmra.mrb[0].mxu0 %v7207
  %v7306 = vpop.f32.mrb[0].mxu0
  %v7307 = vadd.f32 0.0, %v7306
  %v7308 = vpop.f32.mrb[0].mxu0
  %7309 = vmatprep.mubr.f32.mxu0 0.0
  %7310 = vmatmul.mubr.f32.gmra.mrb[0].mxu0 %v7210
  %v7311 = vpop.f32.mrb[0].mxu0
  %v7312 = vadd.f32 0.0, %v7311
  %v7313 = vpop.f32.mrb[0].mxu0
  %7314 = vmatprep.mubr.f32.mxu0 0.0
  %7315 = vmatmul.mubr.f32.gmra.mrb[0].mxu0 %v7213
  %v7316 = vpop.f32.mrb[0].mxu0
  %v7317 = vadd.f32 0.0, %v7316
  %v7318 = vpop.f32.mrb[0].mxu0
  %7319 = vdwg.mxu0
  %7320 = vrot.lane.b32.xlu0 %v1368, 94
  %v7321 = vpop.permute.xlu0 %7320
  %7322 = vrot.lane.b32.xlu0 %v1369, 94
  %v7323 = vpop.permute.xlu0 %7322
  %7324 = vrot.lane.b32.xlu0 %v1370, 94
  %v7325 = vpop.permute.xlu0 %7324
  %7326 = vrot.lane.b32.xlu0 %v1371, 94
  %v7327 = vpop.permute.xlu0 %7326
  %7328 = vrot.lane.b32.xlu0 %v1372, 94
  %v7329 = vpop.permute.xlu0 %7328
  %7330 = vrot.lane.b32.xlu0 %v1373, 94
  %v7331 = vpop.permute.xlu0 %7330
  %7332 = vrot.lane.b32.xlu0 %v1374, 94
  %v7333 = vpop.permute.xlu0 %7332
  %7334 = vrot.lane.b32.xlu0 %v1375, 94
  %v7335 = vpop.permute.xlu0 %7334
  %v7345 = vsel %vm2673, %v6371, 0
  %v7348 = vsel %vm2673, %v6373, 0
  %v7351 = vsel %vm2673, %v6375, 0
  %v7354 = vsel %vm2673, %v6377, 0
  %v7357 = vsel %vm2673, %v6379, 0
  %v7360 = vsel %vm2673, %v6381, 0
  %v7363 = vsel %vm2673, %v6383, 0
  %v7366 = vsel %vm2673, %v6385, 0
  %7368 = vmatprep.subr.mxu0 0.0
  %7369 = vmatpush1.msra.mxu0 %v7321
  %7370 = vmatprep.subr.mxu0 0.0
  %7371 = vmatpush1.msra.mxu0 %v7323
  %7372 = vmatprep.subr.mxu0 0.0
  %7373 = vmatpush1.msra.mxu0 %v7325
  %7374 = vmatprep.subr.mxu0 0.0
  %7375 = vmatpush1.msra.mxu0 %v7327
  %7376 = vmatprep.subr.mxu0 0.0
  %7377 = vmatpush1.msra.mxu0 %v7329
  %7378 = vmatprep.subr.mxu0 0.0
  %7379 = vmatpush1.msra.mxu0 %v7331
  %7380 = vmatprep.subr.mxu0 0.0
  %7381 = vmatpush1.msra.mxu0 %v7333
  %7382 = vmatprep.subr.mxu0 0.0
  %7383 = vmatpush1.msra.mxu0 %v7335
  %7384 = vmatprep.subr.mxu0 0.0
  %7385 = vmatpush1.msra.mxu0 0.0
  %7386 = vmatprep.subr.mxu0 0.0
  %7387 = vmatpush1.msra.mxu0 0.0
  %7388 = vmatprep.subr.mxu0 0.0
  %7389 = vmatpush1.msra.mxu0 0.0
  %7390 = vmatprep.subr.mxu0 0.0
  %7391 = vmatpush1.msra.mxu0 0.0
  %7392 = vmatprep.subr.mxu0 0.0
  %7393 = vmatpush1.msra.mxu0 0.0
  %7394 = vmatprep.subr.mxu0 0.0
  %7395 = vmatpush1.msra.mxu0 0.0
  %7396 = vmatprep.subr.mxu0 0.0
  %7397 = vmatpush1.msra.mxu0 0.0
  %7398 = vmatprep.subr.mxu0 0.0
  %7399 = vmatpush1.msra.mxu0 0.0
  %7400 = vmatprep.subr.mxu0 0.0
  %7401 = vmatpush1.msra.mxu0 0.0
  %7402 = vmatprep.subr.mxu0 0.0
  %7403 = vmatpush1.msra.mxu0 0.0
  %7404 = vmatprep.subr.mxu0 0.0
  %7405 = vmatpush1.msra.mxu0 0.0
  %7406 = vmatprep.subr.mxu0 0.0
  %7407 = vmatpush1.msra.mxu0 0.0
  %7408 = vmatprep.subr.mxu0 0.0
  %7409 = vmatpush1.msra.mxu0 0.0
  %7410 = vmatprep.subr.mxu0 0.0
  %7411 = vmatpush1.msra.mxu0 0.0
  %7412 = vmatprep.subr.mxu0 0.0
  %7413 = vmatpush1.msra.mxu0 0.0
  %7414 = vmatprep.subr.mxu0 0.0
  %7415 = vmatpush1.msra.mxu0 0.0
  %7416 = vmatprep.subr.mxu0 0.0
  %7417 = vmatpush1.msra.mxu0 0.0
  %7418 = vmatprep.subr.mxu0 0.0
  %7419 = vmatpush1.msra.mxu0 0.0
  %7420 = vmatprep.subr.mxu0 0.0
  %7421 = vmatpush1.msra.mxu0 0.0
  %7422 = vmatprep.subr.mxu0 0.0
  %7423 = vmatpush1.msra.mxu0 0.0
  %7424 = vmatprep.subr.mxu0 0.0
  %7425 = vmatpush1.msra.mxu0 0.0
  %7426 = vmatprep.subr.mxu0 0.0
  %7427 = vmatpush1.msra.mxu0 0.0
  %7428 = vmatprep.subr.mxu0 0.0
  %7429 = vmatpush1.msra.mxu0 0.0
  %7430 = vmatprep.subr.mxu0 0.0
  %7431 = vmatpush1.msra.mxu0 0.0
  %7432 = vmatprep.mubr.f32.mxu0 0.0
  %7433 = vmatmul.mubr.f32.gmra.mrb[0].mxu0 %v7345
  %v7434 = vpop.f32.mrb[0].mxu0
  %v7435 = vadd.f32 0.0, %v7434
  %v7436 = vpop.f32.mrb[0].mxu0
  %7437 = vmatprep.mubr.f32.mxu0 0.0
  %7438 = vmatmul.mubr.f32.gmra.mrb[0].mxu0 %v7348
  %v7439 = vpop.f32.mrb[0].mxu0
  %v7440 = vadd.f32 0.0, %v7439
  %v7441 = vpop.f32.mrb[0].mxu0
  %7442 = vmatprep.mubr.f32.mxu0 0.0
  %7443 = vmatmul.mubr.f32.gmra.mrb[0].mxu0 %v7351
  %v7444 = vpop.f32.mrb[0].mxu0
  %v7445 = vadd.f32 0.0, %v7444
  %v7446 = vpop.f32.mrb[0].mxu0
  %7447 = vmatprep.mubr.f32.mxu0 0.0
  %7448 = vmatmul.mubr.f32.gmra.mrb[0].mxu0 %v7354
  %v7449 = vpop.f32.mrb[0].mxu0
  %v7450 = vadd.f32 0.0, %v7449
  %v7451 = vpop.f32.mrb[0].mxu0
  %7452 = vmatprep.mubr.f32.mxu0 0.0
  %7453 = vmatmul.mubr.f32.gmra.mrb[0].mxu0 %v7357
  %v7454 = vpop.f32.mrb[0].mxu0
  %v7455 = vadd.f32 0.0, %v7454
  %v7456 = vpop.f32.mrb[0].mxu0
  %7457 = vmatprep.mubr.f32.mxu0 0.0
  %7458 = vmatmul.mubr.f32.gmra.mrb[0].mxu0 %v7360
  %v7459 = vpop.f32.mrb[0].mxu0
  %v7460 = vadd.f32 0.0, %v7459
  %v7461 = vpop.f32.mrb[0].mxu0
  %7462 = vmatprep.mubr.f32.mxu0 0.0
  %7463 = vmatmul.mubr.f32.gmra.mrb[0].mxu0 %v7363
  %v7464 = vpop.f32.mrb[0].mxu0
  %v7465 = vadd.f32 0.0, %v7464
  %v7466 = vpop.f32.mrb[0].mxu0
  %7467 = vmatprep.mubr.f32.mxu0 0.0
  %7468 = vmatmul.mubr.f32.gmra.mrb[0].mxu0 %v7366
  %v7469 = vpop.f32.mrb[0].mxu0
  %v7470 = vadd.f32 0.0, %v7469
  %v7471 = vpop.f32.mrb[0].mxu0
  %7472 = vdwg.mxu0
  %7473 = vrot.lane.b32.xlu0 %v1376, 94
  %v7474 = vpop.permute.xlu0 %7473
  %7475 = vrot.lane.b32.xlu0 %v1377, 94
  %v7476 = vpop.permute.xlu0 %7475
  %7477 = vrot.lane.b32.xlu0 %v1378, 94
  %v7478 = vpop.permute.xlu0 %7477
  %7479 = vrot.lane.b32.xlu0 %v1379, 94
  %v7480 = vpop.permute.xlu0 %7479
  %7481 = vrot.lane.b32.xlu0 %v1380, 94
  %v7482 = vpop.permute.xlu0 %7481
  %7483 = vrot.lane.b32.xlu0 %v1381, 94
  %v7484 = vpop.permute.xlu0 %7483
  %7485 = vrot.lane.b32.xlu0 %v1382, 94
  %v7486 = vpop.permute.xlu0 %7485
  %7487 = vrot.lane.b32.xlu0 %v1383, 94
  %v7488 = vpop.permute.xlu0 %7487
  %v7498 = vsel %vm2673, %v6387, 0
  %v7501 = vsel %vm2673, %v6389, 0
  %v7504 = vsel %vm2673, %v6391, 0
  %v7507 = vsel %vm2673, %v6393, 0
  %v7510 = vsel %vm2673, %v6395, 0
  %v7513 = vsel %vm2673, %v6397, 0
  %v7516 = vsel %vm2673, %v6399, 0
  %v7519 = vsel %vm2673, %v6401, 0
  %7521 = vmatprep.subr.mxu0 0.0
  %7522 = vmatpush1.msra.mxu0 %v7474
  %7523 = vmatprep.subr.mxu0 0.0
  %7524 = vmatpush1.msra.mxu0 %v7476
  %7525 = vmatprep.subr.mxu0 0.0
  %7526 = vmatpush1.msra.mxu0 %v7478
  %7527 = vmatprep.subr.mxu0 0.0
  %7528 = vmatpush1.msra.mxu0 %v7480
  %7529 = vmatprep.subr.mxu0 0.0
  %7530 = vmatpush1.msra.mxu0 %v7482
  %7531 = vmatprep.subr.mxu0 0.0
  %7532 = vmatpush1.msra.mxu0 %v7484
  %7533 = vmatprep.subr.mxu0 0.0
  %7534 = vmatpush1.msra.mxu0 %v7486
  %7535 = vmatprep.subr.mxu0 0.0
  %7536 = vmatpush1.msra.mxu0 %v7488
  %7537 = vmatprep.subr.mxu0 0.0
  %7538 = vmatpush1.msra.mxu0 0.0
  %7539 = vmatprep.subr.mxu0 0.0
  %7540 = vmatpush1.msra.mxu0 0.0
  %7541 = vmatprep.subr.mxu0 0.0
  %7542 = vmatpush1.msra.mxu0 0.0
  %7543 = vmatprep.subr.mxu0 0.0
  %7544 = vmatpush1.msra.mxu0 0.0
  %7545 = vmatprep.subr.mxu0 0.0
  %7546 = vmatpush1.msra.mxu0 0.0
  %7547 = vmatprep.subr.mxu0 0.0
  %7548 = vmatpush1.msra.mxu0 0.0
  %7549 = vmatprep.subr.mxu0 0.0
  %7550 = vmatpush1.msra.mxu0 0.0
  %7551 = vmatprep.subr.mxu0 0.0
  %7552 = vmatpush1.msra.mxu0 0.0
  %7553 = vmatprep.subr.mxu0 0.0
  %7554 = vmatpush1.msra.mxu0 0.0
  %7555 = vmatprep.subr.mxu0 0.0
  %7556 = vmatpush1.msra.mxu0 0.0
  %7557 = vmatprep.subr.mxu0 0.0
  %7558 = vmatpush1.msra.mxu0 0.0
  %7559 = vmatprep.subr.mxu0 0.0
  %7560 = vmatpush1.msra.mxu0 0.0
  %7561 = vmatprep.subr.mxu0 0.0
  %7562 = vmatpush1.msra.mxu0 0.0
  %7563 = vmatprep.subr.mxu0 0.0
  %7564 = vmatpush1.msra.mxu0 0.0
  %7565 = vmatprep.subr.mxu0 0.0
  %7566 = vmatpush1.msra.mxu0 0.0
  %7567 = vmatprep.subr.mxu0 0.0
  %7568 = vmatpush1.msra.mxu0 0.0
  %7569 = vmatprep.subr.mxu0 0.0
  %7570 = vmatpush1.msra.mxu0 0.0
  %7571 = vmatprep.subr.mxu0 0.0
  %7572 = vmatpush1.msra.mxu0 0.0
  %7573 = vmatprep.subr.mxu0 0.0
  %7574 = vmatpush1.msra.mxu0 0.0
  %7575 = vmatprep.subr.mxu0 0.0
  %7576 = vmatpush1.msra.mxu0 0.0
  %7577 = vmatprep.subr.mxu0 0.0
  %7578 = vmatpush1.msra.mxu0 0.0
  %7579 = vmatprep.subr.mxu0 0.0
  %7580 = vmatpush1.msra.mxu0 0.0
  %7581 = vmatprep.subr.mxu0 0.0
  %7582 = vmatpush1.msra.mxu0 0.0
  %7583 = vmatprep.subr.mxu0 0.0
  %7584 = vmatpush1.msra.mxu0 0.0
  %7585 = vmatprep.mubr.f32.mxu0 0.0
  %7586 = vmatmul.mubr.f32.gmra.mrb[0].mxu0 %v7498
  %v7587 = vpop.f32.mrb[0].mxu0
  %v7588 = vadd.f32 0.0, %v7587
  %v7589 = vpop.f32.mrb[0].mxu0
  %7590 = vmatprep.mubr.f32.mxu0 0.0
  %7591 = vmatmul.mubr.f32.gmra.mrb[0].mxu0 %v7501
  %v7592 = vpop.f32.mrb[0].mxu0
  %v7593 = vadd.f32 0.0, %v7592
  %v7594 = vpop.f32.mrb[0].mxu0
  %7595 = vmatprep.mubr.f32.mxu0 0.0
  %7596 = vmatmul.mubr.f32.gmra.mrb[0].mxu0 %v7504
  %v7597 = vpop.f32.mrb[0].mxu0
  %v7598 = vadd.f32 0.0, %v7597
  %v7599 = vpop.f32.mrb[0].mxu0
  %7600 = vmatprep.mubr.f32.mxu0 0.0
  %7601 = vmatmul.mubr.f32.gmra.mrb[0].mxu0 %v7507
  %v7602 = vpop.f32.mrb[0].mxu0
  %v7603 = vadd.f32 0.0, %v7602
  %v7604 = vpop.f32.mrb[0].mxu0
  %7605 = vmatprep.mubr.f32.mxu0 0.0
  %7606 = vmatmul.mubr.f32.gmra.mrb[0].mxu0 %v7510
  %v7607 = vpop.f32.mrb[0].mxu0
  %v7608 = vadd.f32 0.0, %v7607
  %v7609 = vpop.f32.mrb[0].mxu0
  %7610 = vmatprep.mubr.f32.mxu0 0.0
  %7611 = vmatmul.mubr.f32.gmra.mrb[0].mxu0 %v7513
  %v7612 = vpop.f32.mrb[0].mxu0
  %v7613 = vadd.f32 0.0, %v7612
  %v7614 = vpop.f32.mrb[0].mxu0
  %7615 = vmatprep.mubr.f32.mxu0 0.0
  %7616 = vmatmul.mubr.f32.gmra.mrb[0].mxu0 %v7516
  %v7617 = vpop.f32.mrb[0].mxu0
  %v7618 = vadd.f32 0.0, %v7617
  %v7619 = vpop.f32.mrb[0].mxu0
  %7620 = vmatprep.mubr.f32.mxu0 0.0
  %7621 = vmatmul.mubr.f32.gmra.mrb[0].mxu0 %v7519
  %v7622 = vpop.f32.mrb[0].mxu0
  %v7623 = vadd.f32 0.0, %v7622
  %v7624 = vpop.f32.mrb[0].mxu0
  %7625 = vdwg.mxu0
  %7690 = vrot.lane.b32.xlu0 %v6517, 127
  %v7691 = vpop.permute.xlu0 %7690
  %7692 = vrot.lane.b32.xlu0 %v6522, 127
  %v7693 = vpop.permute.xlu0 %7692
  %7694 = vrot.lane.b32.xlu0 %v6527, 127
  %v7695 = vpop.permute.xlu0 %7694
  %7696 = vrot.lane.b32.xlu0 %v6532, 127
  %v7697 = vpop.permute.xlu0 %7696
  %7698 = vrot.lane.b32.xlu0 %v6537, 127
  %v7699 = vpop.permute.xlu0 %7698
  %7700 = vrot.lane.b32.xlu0 %v6542, 127
  %v7701 = vpop.permute.xlu0 %7700
  %7702 = vrot.lane.b32.xlu0 %v6547, 127
  %v7703 = vpop.permute.xlu0 %7702
  %7704 = vrot.lane.b32.xlu0 %v6552, 127
  %v7705 = vpop.permute.xlu0 %7704
  %7706 = vrot.lane.b32.xlu0 %v6670, 127
  %v7707 = vpop.permute.xlu0 %7706
  %7708 = vrot.lane.b32.xlu0 %v6675, 127
  %v7709 = vpop.permute.xlu0 %7708
  %7710 = vrot.lane.b32.xlu0 %v6680, 127
  %v7711 = vpop.permute.xlu0 %7710
  %7712 = vrot.lane.b32.xlu0 %v6685, 127
  %v7713 = vpop.permute.xlu0 %7712
  %7714 = vrot.lane.b32.xlu0 %v6690, 127
  %v7715 = vpop.permute.xlu0 %7714
  %7716 = vrot.lane.b32.xlu0 %v6695, 127
  %v7717 = vpop.permute.xlu0 %7716
  %7718 = vrot.lane.b32.xlu0 %v6700, 127
  %v7719 = vpop.permute.xlu0 %7718
  %7720 = vrot.lane.b32.xlu0 %v6705, 127
  %v7721 = vpop.permute.xlu0 %7720
  %7722 = vrot.lane.b32.xlu0 %v6823, 127
  %v7723 = vpop.permute.xlu0 %7722
  %7724 = vrot.lane.b32.xlu0 %v6828, 127
  %v7725 = vpop.permute.xlu0 %7724
  %7726 = vrot.lane.b32.xlu0 %v6833, 127
  %v7727 = vpop.permute.xlu0 %7726
  %7728 = vrot.lane.b32.xlu0 %v6838, 127
  %v7729 = vpop.permute.xlu0 %7728
  %7730 = vrot.lane.b32.xlu0 %v6843, 127
  %v7731 = vpop.permute.xlu0 %7730
  %7732 = vrot.lane.b32.xlu0 %v6848, 127
  %v7733 = vpop.permute.xlu0 %7732
  %7734 = vrot.lane.b32.xlu0 %v6853, 127
  %v7735 = vpop.permute.xlu0 %7734
  %7736 = vrot.lane.b32.xlu0 %v6858, 127
  %v7737 = vpop.permute.xlu0 %7736
  %7738 = vrot.lane.b32.xlu0 %v6976, 127
  %v7739 = vpop.permute.xlu0 %7738
  %7740 = vrot.lane.b32.xlu0 %v6981, 127
  %v7741 = vpop.permute.xlu0 %7740
  %7742 = vrot.lane.b32.xlu0 %v6986, 127
  %v7743 = vpop.permute.xlu0 %7742
  %7744 = vrot.lane.b32.xlu0 %v6991, 127
  %v7745 = vpop.permute.xlu0 %7744
  %7746 = vrot.lane.b32.xlu0 %v6996, 127
  %v7747 = vpop.permute.xlu0 %7746
  %7748 = vrot.lane.b32.xlu0 %v7001, 127
  %v7749 = vpop.permute.xlu0 %7748
  %7750 = vrot.lane.b32.xlu0 %v7006, 127
  %v7751 = vpop.permute.xlu0 %7750
  %7752 = vrot.lane.b32.xlu0 %v7011, 127
  %v7753 = vpop.permute.xlu0 %7752
  %7754 = vrot.lane.b32.xlu0 %v7129, 127
  %v7755 = vpop.permute.xlu0 %7754
  %7756 = vrot.lane.b32.xlu0 %v7134, 127
  %v7757 = vpop.permute.xlu0 %7756
  %7758 = vrot.lane.b32.xlu0 %v7139, 127
  %v7759 = vpop.permute.xlu0 %7758
  %7760 = vrot.lane.b32.xlu0 %v7144, 127
  %v7761 = vpop.permute.xlu0 %7760
  %7762 = vrot.lane.b32.xlu0 %v7149, 127
  %v7763 = vpop.permute.xlu0 %7762
  %7764 = vrot.lane.b32.xlu0 %v7154, 127
  %v7765 = vpop.permute.xlu0 %7764
  %7766 = vrot.lane.b32.xlu0 %v7159, 127
  %v7767 = vpop.permute.xlu0 %7766
  %7768 = vrot.lane.b32.xlu0 %v7164, 127
  %v7769 = vpop.permute.xlu0 %7768
  %7770 = vrot.lane.b32.xlu0 %v7282, 127
  %v7771 = vpop.permute.xlu0 %7770
  %7772 = vrot.lane.b32.xlu0 %v7287, 127
  %v7773 = vpop.permute.xlu0 %7772
  %7774 = vrot.lane.b32.xlu0 %v7292, 127
  %v7775 = vpop.permute.xlu0 %7774
  %7776 = vrot.lane.b32.xlu0 %v7297, 127
  %v7777 = vpop.permute.xlu0 %7776
  %7778 = vrot.lane.b32.xlu0 %v7302, 127
  %v7779 = vpop.permute.xlu0 %7778
  %7780 = vrot.lane.b32.xlu0 %v7307, 127
  %v7781 = vpop.permute.xlu0 %7780
  %7782 = vrot.lane.b32.xlu0 %v7312, 127
  %v7783 = vpop.permute.xlu0 %7782
  %7784 = vrot.lane.b32.xlu0 %v7317, 127
  %v7785 = vpop.permute.xlu0 %7784
  %7786 = vrot.lane.b32.xlu0 %v7435, 127
  %v7787 = vpop.permute.xlu0 %7786
  %7788 = vrot.lane.b32.xlu0 %v7440, 127
  %v7789 = vpop.permute.xlu0 %7788
  %7790 = vrot.lane.b32.xlu0 %v7445, 127
  %v7791 = vpop.permute.xlu0 %7790
  %7792 = vrot.lane.b32.xlu0 %v7450, 127
  %v7793 = vpop.permute.xlu0 %7792
  %7794 = vrot.lane.b32.xlu0 %v7455, 127
  %v7795 = vpop.permute.xlu0 %7794
  %7796 = vrot.lane.b32.xlu0 %v7460, 127
  %v7797 = vpop.permute.xlu0 %7796
  %7798 = vrot.lane.b32.xlu0 %v7465, 127
  %v7799 = vpop.permute.xlu0 %7798
  %7800 = vrot.lane.b32.xlu0 %v7470, 127
  %v7801 = vpop.permute.xlu0 %7800
  %7802 = vrot.lane.b32.xlu0 %v7588, 127
  %v7803 = vpop.permute.xlu0 %7802
  %7804 = vrot.lane.b32.xlu0 %v7593, 127
  %v7805 = vpop.permute.xlu0 %7804
  %7806 = vrot.lane.b32.xlu0 %v7598, 127
  %v7807 = vpop.permute.xlu0 %7806
  %7808 = vrot.lane.b32.xlu0 %v7603, 127
  %v7809 = vpop.permute.xlu0 %7808
  %7810 = vrot.lane.b32.xlu0 %v7608, 127
  %v7811 = vpop.permute.xlu0 %7810
  %7812 = vrot.lane.b32.xlu0 %v7613, 127
  %v7813 = vpop.permute.xlu0 %7812
  %7814 = vrot.lane.b32.xlu0 %v7618, 127
  %v7815 = vpop.permute.xlu0 %7814
  %7816 = vrot.lane.b32.xlu0 %v7623, 127
  %v7817 = vpop.permute.xlu0 %7816
  %v7882 = vrcp.pop %v7691
  %v7883 = vmul.f32 %v6517, %v7882
  %v7884 = vrcp.pop %v7693
  %v7885 = vmul.f32 %v6522, %v7884
  %v7886 = vrcp.pop %v7695
  %v7887 = vmul.f32 %v6527, %v7886
  %v7888 = vrcp.pop %v7697
  %v7889 = vmul.f32 %v6532, %v7888
  %v7890 = vrcp.pop %v7699
  %v7891 = vmul.f32 %v6537, %v7890
  %v7892 = vrcp.pop %v7701
  %v7893 = vmul.f32 %v6542, %v7892
  %v7894 = vrcp.pop %v7703
  %v7895 = vmul.f32 %v6547, %v7894
  %v7896 = vrcp.pop %v7705
  %v7897 = vmul.f32 %v6552, %v7896
  %v7898 = vrcp.pop %v7707
  %v7899 = vmul.f32 %v6670, %v7898
  %v7900 = vrcp.pop %v7709
  %v7901 = vmul.f32 %v6675, %v7900
  %v7902 = vrcp.pop %v7711
  %v7903 = vmul.f32 %v6680, %v7902
  %v7904 = vrcp.pop %v7713
  %v7905 = vmul.f32 %v6685, %v7904
  %v7906 = vrcp.pop %v7715
  %v7907 = vmul.f32 %v6690, %v7906
  %v7908 = vrcp.pop %v7717
  %v7909 = vmul.f32 %v6695, %v7908
  %v7910 = vrcp.pop %v7719
  %v7911 = vmul.f32 %v6700, %v7910
  %v7912 = vrcp.pop %v7721
  %v7913 = vmul.f32 %v6705, %v7912
  %v7914 = vrcp.pop %v7723
  %v7915 = vmul.f32 %v6823, %v7914
  %v7916 = vrcp.pop %v7725
  %v7917 = vmul.f32 %v6828, %v7916
  %v7918 = vrcp.pop %v7727
  %v7919 = vmul.f32 %v6833, %v7918
  %v7920 = vrcp.pop %v7729
  %v7921 = vmul.f32 %v6838, %v7920
  %v7922 = vrcp.pop %v7731
  %v7923 = vmul.f32 %v6843, %v7922
  %v7924 = vrcp.pop %v7733
  %v7925 = vmul.f32 %v6848, %v7924
  %v7926 = vrcp.pop %v7735
  %v7927 = vmul.f32 %v6853, %v7926
  %v7928 = vrcp.pop %v7737
  %v7929 = vmul.f32 %v6858, %v7928
  %v7930 = vrcp.pop %v7739
  %v7931 = vmul.f32 %v6976, %v7930
  %v7932 = vrcp.pop %v7741
  %v7933 = vmul.f32 %v6981, %v7932
  %v7934 = vrcp.pop %v7743
  %v7935 = vmul.f32 %v6986, %v7934
  %v7936 = vrcp.pop %v7745
  %v7937 = vmul.f32 %v6991, %v7936
  %v7938 = vrcp.pop %v7747
  %v7939 = vmul.f32 %v6996, %v7938
  %v7940 = vrcp.pop %v7749
  %v7941 = vmul.f32 %v7001, %v7940
  %v7942 = vrcp.pop %v7751
  %v7943 = vmul.f32 %v7006, %v7942
  %v7944 = vrcp.pop %v7753
  %v7945 = vmul.f32 %v7011, %v7944
  %v7946 = vrcp.pop %v7755
  %v7947 = vmul.f32 %v7129, %v7946
  %v7948 = vrcp.pop %v7757
  %v7949 = vmul.f32 %v7134, %v7948
  %v7950 = vrcp.pop %v7759
  %v7951 = vmul.f32 %v7139, %v7950
  %v7952 = vrcp.pop %v7761
  %v7953 = vmul.f32 %v7144, %v7952
  %v7954 = vrcp.pop %v7763
  %v7955 = vmul.f32 %v7149, %v7954
  %v7956 = vrcp.pop %v7765
  %v7957 = vmul.f32 %v7154, %v7956
  %v7958 = vrcp.pop %v7767
  %v7959 = vmul.f32 %v7159, %v7958
  %v7960 = vrcp.pop %v7769
  %v7961 = vmul.f32 %v7164, %v7960
  %v7962 = vrcp.pop %v7771
  %v7963 = vmul.f32 %v7282, %v7962
  %v7964 = vrcp.pop %v7773
  %v7965 = vmul.f32 %v7287, %v7964
  %v7966 = vrcp.pop %v7775
  %v7967 = vmul.f32 %v7292, %v7966
  %v7968 = vrcp.pop %v7777
  %v7969 = vmul.f32 %v7297, %v7968
  %v7970 = vrcp.pop %v7779
  %v7971 = vmul.f32 %v7302, %v7970
  %v7972 = vrcp.pop %v7781
  %v7973 = vmul.f32 %v7307, %v7972
  %v7974 = vrcp.pop %v7783
  %v7975 = vmul.f32 %v7312, %v7974
  %v7976 = vrcp.pop %v7785
  %v7977 = vmul.f32 %v7317, %v7976
  %v7978 = vrcp.pop %v7787
  %v7979 = vmul.f32 %v7435, %v7978
  %v7980 = vrcp.pop %v7789
  %v7981 = vmul.f32 %v7440, %v7980
  %v7982 = vrcp.pop %v7791
  %v7983 = vmul.f32 %v7445, %v7982
  %v7984 = vrcp.pop %v7793
  %v7985 = vmul.f32 %v7450, %v7984
  %v7986 = vrcp.pop %v7795
  %v7987 = vmul.f32 %v7455, %v7986
  %v7988 = vrcp.pop %v7797
  %v7989 = vmul.f32 %v7460, %v7988
  %v7990 = vrcp.pop %v7799
  %v7991 = vmul.f32 %v7465, %v7990
  %v7992 = vrcp.pop %v7801
  %v7993 = vmul.f32 %v7470, %v7992
  %v7994 = vrcp.pop %v7803
  %v7995 = vmul.f32 %v7588, %v7994
  %v7996 = vrcp.pop %v7805
  %v7997 = vmul.f32 %v7593, %v7996
  %v7998 = vrcp.pop %v7807
  %v7999 = vmul.f32 %v7598, %v7998
  %v8000 = vrcp.pop %v7809
  %v8001 = vmul.f32 %v7603, %v8000
  %v8002 = vrcp.pop %v7811
  %v8003 = vmul.f32 %v7608, %v8002
  %v8004 = vrcp.pop %v7813
  %v8005 = vmul.f32 %v7613, %v8004
  %v8006 = vrcp.pop %v7815
  %v8007 = vmul.f32 %v7618, %v8006
  %v8008 = vrcp.pop %v7817
  %v8009 = vmul.f32 %v7623, %v8008
  %v8010 = vmul.f32 %v4539, 1.442695
  %v8011 = vpow.pop %v8010
  %v8012 = vmul.f32 %v4541, 1.442695
  %v8013 = vpow.pop %v8012
  %v8014 = vmul.f32 %v4543, 1.442695
  %v8015 = vpow.pop %v8014
  %v8016 = vmul.f32 %v4545, 1.442695
  %v8017 = vpow.pop %v8016
  %v8018 = vmul.f32 %v4547, 1.442695
  %v8019 = vpow.pop %v8018
  %v8020 = vmul.f32 %v4549, 1.442695
  %v8021 = vpow.pop %v8020
  %v8022 = vmul.f32 %v4551, 1.442695
  %v8023 = vpow.pop %v8022
  %v8024 = vmul.f32 %v4553, 1.442695
  %v8025 = vpow.pop %v8024
  %v8026 = vmul.f32 %v4555, 1.442695
  %v8027 = vpow.pop %v8026
  %v8028 = vmul.f32 %v4557, 1.442695
  %v8029 = vpow.pop %v8028
  %v8030 = vmul.f32 %v4559, 1.442695
  %v8031 = vpow.pop %v8030
  %v8032 = vmul.f32 %v4561, 1.442695
  %v8033 = vpow.pop %v8032
  %v8034 = vmul.f32 %v4563, 1.442695
  %v8035 = vpow.pop %v8034
  %v8036 = vmul.f32 %v4565, 1.442695
  %v8037 = vpow.pop %v8036
  %v8038 = vmul.f32 %v4567, 1.442695
  %v8039 = vpow.pop %v8038
  %v8040 = vmul.f32 %v4569, 1.442695
  %v8041 = vpow.pop %v8040
  %v8042 = vmul.f32 %v4571, 1.442695
  %v8043 = vpow.pop %v8042
  %v8044 = vmul.f32 %v4573, 1.442695
  %v8045 = vpow.pop %v8044
  %v8046 = vmul.f32 %v4575, 1.442695
  %v8047 = vpow.pop %v8046
  %v8048 = vmul.f32 %v4577, 1.442695
  %v8049 = vpow.pop %v8048
  %v8050 = vmul.f32 %v4579, 1.442695
  %v8051 = vpow.pop %v8050
  %v8052 = vmul.f32 %v4581, 1.442695
  %v8053 = vpow.pop %v8052
  %v8054 = vmul.f32 %v4583, 1.442695
  %v8055 = vpow.pop %v8054
  %v8056 = vmul.f32 %v4585, 1.442695
  %v8057 = vpow.pop %v8056
  %v8058 = vmul.f32 %v4587, 1.442695
  %v8059 = vpow.pop %v8058
  %v8060 = vmul.f32 %v4589, 1.442695
  %v8061 = vpow.pop %v8060
  %v8062 = vmul.f32 %v4591, 1.442695
  %v8063 = vpow.pop %v8062
  %v8064 = vmul.f32 %v4593, 1.442695
  %v8065 = vpow.pop %v8064
  %v8066 = vmul.f32 %v4595, 1.442695
  %v8067 = vpow.pop %v8066
  %v8068 = vmul.f32 %v4597, 1.442695
  %v8069 = vpow.pop %v8068
  %v8070 = vmul.f32 %v4599, 1.442695
  %v8071 = vpow.pop %v8070
  %v8072 = vmul.f32 %v4601, 1.442695
  %v8073 = vpow.pop %v8072
  %v8074 = vmul.f32 %v4603, 1.442695
  %v8075 = vpow.pop %v8074
  %v8076 = vmul.f32 %v4605, 1.442695
  %v8077 = vpow.pop %v8076
  %v8078 = vmul.f32 %v4607, 1.442695
  %v8079 = vpow.pop %v8078
  %v8080 = vmul.f32 %v4609, 1.442695
  %v8081 = vpow.pop %v8080
  %v8082 = vmul.f32 %v4611, 1.442695
  %v8083 = vpow.pop %v8082
  %v8084 = vmul.f32 %v4613, 1.442695
  %v8085 = vpow.pop %v8084
  %v8086 = vmul.f32 %v4615, 1.442695
  %v8087 = vpow.pop %v8086
  %v8088 = vmul.f32 %v4617, 1.442695
  %v8089 = vpow.pop %v8088
  %v8090 = vmul.f32 %v4619, 1.442695
  %v8091 = vpow.pop %v8090
  %v8092 = vmul.f32 %v4621, 1.442695
  %v8093 = vpow.pop %v8092
  %v8094 = vmul.f32 %v4623, 1.442695
  %v8095 = vpow.pop %v8094
  %v8096 = vmul.f32 %v4625, 1.442695
  %v8097 = vpow.pop %v8096
  %v8098 = vmul.f32 %v4627, 1.442695
  %v8099 = vpow.pop %v8098
  %v8100 = vmul.f32 %v4629, 1.442695
  %v8101 = vpow.pop %v8100
  %v8102 = vmul.f32 %v4631, 1.442695
  %v8103 = vpow.pop %v8102
  %v8104 = vmul.f32 %v4633, 1.442695
  %v8105 = vpow.pop %v8104
  %v8106 = vmul.f32 %v4635, 1.442695
  %v8107 = vpow.pop %v8106
  %v8108 = vmul.f32 %v4637, 1.442695
  %v8109 = vpow.pop %v8108
  %v8110 = vmul.f32 %v4639, 1.442695
  %v8111 = vpow.pop %v8110
  %v8112 = vmul.f32 %v4641, 1.442695
  %v8113 = vpow.pop %v8112
  %v8114 = vmul.f32 %v4643, 1.442695
  %v8115 = vpow.pop %v8114
  %v8116 = vmul.f32 %v4645, 1.442695
  %v8117 = vpow.pop %v8116
  %v8118 = vmul.f32 %v4647, 1.442695
  %v8119 = vpow.pop %v8118
  %v8120 = vmul.f32 %v4649, 1.442695
  %v8121 = vpow.pop %v8120
  %v8122 = vmul.f32 %v4651, 1.442695
  %v8123 = vpow.pop %v8122
  %v8124 = vmul.f32 %v4653, 1.442695
  %v8125 = vpow.pop %v8124
  %v8126 = vmul.f32 %v4655, 1.442695
  %v8127 = vpow.pop %v8126
  %v8128 = vmul.f32 %v4657, 1.442695
  %v8129 = vpow.pop %v8128
  %v8130 = vmul.f32 %v4659, 1.442695
  %v8131 = vpow.pop %v8130
  %v8132 = vmul.f32 %v4661, 1.442695
  %v8133 = vpow.pop %v8132
  %v8134 = vmul.f32 %v4663, 1.442695
  %v8135 = vpow.pop %v8134
  %v8136 = vmul.f32 %v4665, 1.442695
  %v8137 = vpow.pop %v8136
  %8139 = vset.pattern.permute.xlu0 0
  %8140 = vperm.xlu0 %8139, %v8011
  %v8141 = vpop.permute.xlu0 %8140
  %8144 = vset.pattern.permute.xlu0 0
  %8145 = vperm.xlu0 %8144, %v8013
  %v8146 = vpop.permute.xlu0 %8145
  %8149 = vset.pattern.permute.xlu0 0
  %8150 = vperm.xlu0 %8149, %v8015
  %v8151 = vpop.permute.xlu0 %8150
  %8154 = vset.pattern.permute.xlu0 0
  %8155 = vperm.xlu0 %8154, %v8017
  %v8156 = vpop.permute.xlu0 %8155
  %8159 = vset.pattern.permute.xlu0 0
  %8160 = vperm.xlu0 %8159, %v8019
  %v8161 = vpop.permute.xlu0 %8160
  %8164 = vset.pattern.permute.xlu0 0
  %8165 = vperm.xlu0 %8164, %v8021
  %v8166 = vpop.permute.xlu0 %8165
  %8169 = vset.pattern.permute.xlu0 0
  %8170 = vperm.xlu0 %8169, %v8023
  %v8171 = vpop.permute.xlu0 %8170
  %8174 = vset.pattern.permute.xlu0 0
  %8175 = vperm.xlu0 %8174, %v8025
  %v8176 = vpop.permute.xlu0 %8175
  %8179 = vset.pattern.permute.xlu0 0
  %8180 = vperm.xlu0 %8179, %v8027
  %v8181 = vpop.permute.xlu0 %8180
  %8184 = vset.pattern.permute.xlu0 0
  %8185 = vperm.xlu0 %8184, %v8029
  %v8186 = vpop.permute.xlu0 %8185
  %8189 = vset.pattern.permute.xlu0 0
  %8190 = vperm.xlu0 %8189, %v8031
  %v8191 = vpop.permute.xlu0 %8190
  %8194 = vset.pattern.permute.xlu0 0
  %8195 = vperm.xlu0 %8194, %v8033
  %v8196 = vpop.permute.xlu0 %8195
  %8199 = vset.pattern.permute.xlu0 0
  %8200 = vperm.xlu0 %8199, %v8035
  %v8201 = vpop.permute.xlu0 %8200
  %8204 = vset.pattern.permute.xlu0 0
  %8205 = vperm.xlu0 %8204, %v8037
  %v8206 = vpop.permute.xlu0 %8205
  %8209 = vset.pattern.permute.xlu0 0
  %8210 = vperm.xlu0 %8209, %v8039
  %v8211 = vpop.permute.xlu0 %8210
  %8214 = vset.pattern.permute.xlu0 0
  %8215 = vperm.xlu0 %8214, %v8041
  %v8216 = vpop.permute.xlu0 %8215
  %8219 = vset.pattern.permute.xlu0 0
  %8220 = vperm.xlu0 %8219, %v8043
  %v8221 = vpop.permute.xlu0 %8220
  %8224 = vset.pattern.permute.xlu0 0
  %8225 = vperm.xlu0 %8224, %v8045
  %v8226 = vpop.permute.xlu0 %8225
  %8229 = vset.pattern.permute.xlu0 0
  %8230 = vperm.xlu0 %8229, %v8047
  %v8231 = vpop.permute.xlu0 %8230
  %8234 = vset.pattern.permute.xlu0 0
  %8235 = vperm.xlu0 %8234, %v8049
  %v8236 = vpop.permute.xlu0 %8235
  %8239 = vset.pattern.permute.xlu0 0
  %8240 = vperm.xlu0 %8239, %v8051
  %v8241 = vpop.permute.xlu0 %8240
  %8244 = vset.pattern.permute.xlu0 0
  %8245 = vperm.xlu0 %8244, %v8053
  %v8246 = vpop.permute.xlu0 %8245
  %8249 = vset.pattern.permute.xlu0 0
  %8250 = vperm.xlu0 %8249, %v8055
  %v8251 = vpop.permute.xlu0 %8250
  %8254 = vset.pattern.permute.xlu0 0
  %8255 = vperm.xlu0 %8254, %v8057
  %v8256 = vpop.permute.xlu0 %8255
  %8259 = vset.pattern.permute.xlu0 0
  %8260 = vperm.xlu0 %8259, %v8059
  %v8261 = vpop.permute.xlu0 %8260
  %8264 = vset.pattern.permute.xlu0 0
  %8265 = vperm.xlu0 %8264, %v8061
  %v8266 = vpop.permute.xlu0 %8265
  %8269 = vset.pattern.permute.xlu0 0
  %8270 = vperm.xlu0 %8269, %v8063
  %v8271 = vpop.permute.xlu0 %8270
  %8274 = vset.pattern.permute.xlu0 0
  %8275 = vperm.xlu0 %8274, %v8065
  %v8276 = vpop.permute.xlu0 %8275
  %8279 = vset.pattern.permute.xlu0 0
  %8280 = vperm.xlu0 %8279, %v8067
  %v8281 = vpop.permute.xlu0 %8280
  %8284 = vset.pattern.permute.xlu0 0
  %8285 = vperm.xlu0 %8284, %v8069
  %v8286 = vpop.permute.xlu0 %8285
  %8289 = vset.pattern.permute.xlu0 0
  %8290 = vperm.xlu0 %8289, %v8071
  %v8291 = vpop.permute.xlu0 %8290
  %8294 = vset.pattern.permute.xlu0 0
  %8295 = vperm.xlu0 %8294, %v8073
  %v8296 = vpop.permute.xlu0 %8295
  %8299 = vset.pattern.permute.xlu0 0
  %8300 = vperm.xlu0 %8299, %v8075
  %v8301 = vpop.permute.xlu0 %8300
  %8304 = vset.pattern.permute.xlu0 0
  %8305 = vperm.xlu0 %8304, %v8077
  %v8306 = vpop.permute.xlu0 %8305
  %8309 = vset.pattern.permute.xlu0 0
  %8310 = vperm.xlu0 %8309, %v8079
  %v8311 = vpop.permute.xlu0 %8310
  %8314 = vset.pattern.permute.xlu0 0
  %8315 = vperm.xlu0 %8314, %v8081
  %v8316 = vpop.permute.xlu0 %8315
  %8319 = vset.pattern.permute.xlu0 0
  %8320 = vperm.xlu0 %8319, %v8083
  %v8321 = vpop.permute.xlu0 %8320
  %8324 = vset.pattern.permute.xlu0 0
  %8325 = vperm.xlu0 %8324, %v8085
  %v8326 = vpop.permute.xlu0 %8325
  %8329 = vset.pattern.permute.xlu0 0
  %8330 = vperm.xlu0 %8329, %v8087
  %v8331 = vpop.permute.xlu0 %8330
  %8334 = vset.pattern.permute.xlu0 0
  %8335 = vperm.xlu0 %8334, %v8089
  %v8336 = vpop.permute.xlu0 %8335
  %8339 = vset.pattern.permute.xlu0 0
  %8340 = vperm.xlu0 %8339, %v8091
  %v8341 = vpop.permute.xlu0 %8340
  %8344 = vset.pattern.permute.xlu0 0
  %8345 = vperm.xlu0 %8344, %v8093
  %v8346 = vpop.permute.xlu0 %8345
  %8349 = vset.pattern.permute.xlu0 0
  %8350 = vperm.xlu0 %8349, %v8095
  %v8351 = vpop.permute.xlu0 %8350
  %8354 = vset.pattern.permute.xlu0 0
  %8355 = vperm.xlu0 %8354, %v8097
  %v8356 = vpop.permute.xlu0 %8355
  %8359 = vset.pattern.permute.xlu0 0
  %8360 = vperm.xlu0 %8359, %v8099
  %v8361 = vpop.permute.xlu0 %8360
  %8364 = vset.pattern.permute.xlu0 0
  %8365 = vperm.xlu0 %8364, %v8101
  %v8366 = vpop.permute.xlu0 %8365
  %8369 = vset.pattern.permute.xlu0 0
  %8370 = vperm.xlu0 %8369, %v8103
  %v8371 = vpop.permute.xlu0 %8370
  %8374 = vset.pattern.permute.xlu0 0
  %8375 = vperm.xlu0 %8374, %v8105
  %v8376 = vpop.permute.xlu0 %8375
  %8379 = vset.pattern.permute.xlu0 0
  %8380 = vperm.xlu0 %8379, %v8107
  %v8381 = vpop.permute.xlu0 %8380
  %8384 = vset.pattern.permute.xlu0 0
  %8385 = vperm.xlu0 %8384, %v8109
  %v8386 = vpop.permute.xlu0 %8385
  %8389 = vset.pattern.permute.xlu0 0
  %8390 = vperm.xlu0 %8389, %v8111
  %v8391 = vpop.permute.xlu0 %8390
  %8394 = vset.pattern.permute.xlu0 0
  %8395 = vperm.xlu0 %8394, %v8113
  %v8396 = vpop.permute.xlu0 %8395
  %8399 = vset.pattern.permute.xlu0 0
  %8400 = vperm.xlu0 %8399, %v8115
  %v8401 = vpop.permute.xlu0 %8400
  %8404 = vset.pattern.permute.xlu0 0
  %8405 = vperm.xlu0 %8404, %v8117
  %v8406 = vpop.permute.xlu0 %8405
  %8409 = vset.pattern.permute.xlu0 0
  %8410 = vperm.xlu0 %8409, %v8119
  %v8411 = vpop.permute.xlu0 %8410
  %8414 = vset.pattern.permute.xlu0 0
  %8415 = vperm.xlu0 %8414, %v8121
  %v8416 = vpop.permute.xlu0 %8415
  %8419 = vset.pattern.permute.xlu0 0
  %8420 = vperm.xlu0 %8419, %v8123
  %v8421 = vpop.permute.xlu0 %8420
  %8424 = vset.pattern.permute.xlu0 0
  %8425 = vperm.xlu0 %8424, %v8125
  %v8426 = vpop.permute.xlu0 %8425
  %8429 = vset.pattern.permute.xlu0 0
  %8430 = vperm.xlu0 %8429, %v8127
  %v8431 = vpop.permute.xlu0 %8430
  %8434 = vset.pattern.permute.xlu0 0
  %8435 = vperm.xlu0 %8434, %v8129
  %v8436 = vpop.permute.xlu0 %8435
  %8439 = vset.pattern.permute.xlu0 0
  %8440 = vperm.xlu0 %8439, %v8131
  %v8441 = vpop.permute.xlu0 %8440
  %8444 = vset.pattern.permute.xlu0 0
  %8445 = vperm.xlu0 %8444, %v8133
  %v8446 = vpop.permute.xlu0 %8445
  %8449 = vset.pattern.permute.xlu0 0
  %8450 = vperm.xlu0 %8449, %v8135
  %v8451 = vpop.permute.xlu0 %8450
  %8454 = vset.pattern.permute.xlu0 0
  %8455 = vperm.xlu0 %8454, %v8137
  %v8456 = vpop.permute.xlu0 %8455
  %v8458 = vmul.f32 %v8141, %v19
  %v8459 = vmul.f32 %v8146, %v20
  %v8460 = vmul.f32 %v8151, %v21
  %v8461 = vmul.f32 %v8156, %v22
  %v8462 = vmul.f32 %v8161, %v23
  %v8463 = vmul.f32 %v8166, %v24
  %v8464 = vmul.f32 %v8171, %v25
  %v8465 = vmul.f32 %v8176, %v26
  %v8466 = vmul.f32 %v8181, %v27
  %v8467 = vmul.f32 %v8186, %v28
  %v8468 = vmul.f32 %v8191, %v29
  %v8469 = vmul.f32 %v8196, %v30
  %v8470 = vmul.f32 %v8201, %v31
  %v8471 = vmul.f32 %v8206, %v32
  %v8472 = vmul.f32 %v8211, %v33
  %v8473 = vmul.f32 %v8216, %v34
  %v8474 = vmul.f32 %v8221, %v35
  %v8475 = vmul.f32 %v8226, %v36
  %v8476 = vmul.f32 %v8231, %v37
  %v8477 = vmul.f32 %v8236, %v38
  %v8478 = vmul.f32 %v8241, %v39
  %v8479 = vmul.f32 %v8246, %v40
  %v8480 = vmul.f32 %v8251, %v41
  %v8481 = vmul.f32 %v8256, %v42
  %v8482 = vmul.f32 %v8261, %v43
  %v8483 = vmul.f32 %v8266, %v44
  %v8484 = vmul.f32 %v8271, %v45
  %v8485 = vmul.f32 %v8276, %v46
  %v8486 = vmul.f32 %v8281, %v47
  %v8487 = vmul.f32 %v8286, %v48
  %v8488 = vmul.f32 %v8291, %v49
  %v8489 = vmul.f32 %v8296, %v50
  %v8490 = vmul.f32 %v8301, %v51
  %v8491 = vmul.f32 %v8306, %v52
  %v8492 = vmul.f32 %v8311, %v53
  %v8493 = vmul.f32 %v8316, %v54
  %v8494 = vmul.f32 %v8321, %v55
  %v8495 = vmul.f32 %v8326, %v56
  %v8496 = vmul.f32 %v8331, %v57
  %v8497 = vmul.f32 %v8336, %v58
  %v8498 = vmul.f32 %v8341, %v59
  %v8499 = vmul.f32 %v8346, %v60
  %v8500 = vmul.f32 %v8351, %v61
  %v8501 = vmul.f32 %v8356, %v62
  %v8502 = vmul.f32 %v8361, %v63
  %v8503 = vmul.f32 %v8366, %v64
  %v8504 = vmul.f32 %v8371, %v65
  %v8505 = vmul.f32 %v8376, %v66
  %v8506 = vmul.f32 %v8381, %v67
  %v8507 = vmul.f32 %v8386, %v68
  %v8508 = vmul.f32 %v8391, %v69
  %v8509 = vmul.f32 %v8396, %v70
  %v8510 = vmul.f32 %v8401, %v71
  %v8511 = vmul.f32 %v8406, %v72
  %v8512 = vmul.f32 %v8411, %v73
  %v8513 = vmul.f32 %v8416, %v74
  %v8514 = vmul.f32 %v8421, %v75
  %v8515 = vmul.f32 %v8426, %v76
  %v8516 = vmul.f32 %v8431, %v77
  %v8517 = vmul.f32 %v8436, %v78
  %v8518 = vmul.f32 %v8441, %v79
  %v8519 = vmul.f32 %v8446, %v80
  %v8520 = vmul.f32 %v8451, %v81
  %v8521 = vmul.f32 %v8456, %v82
  %8523 = vset.pattern.permute.xlu0 0
  %8524 = vperm.xlu0 %8523, %v7883
  %v8525 = vpop.permute.xlu0 %8524
  %8528 = vset.pattern.permute.xlu0 0
  %8529 = vperm.xlu0 %8528, %v7885
  %v8530 = vpop.permute.xlu0 %8529
  %8533 = vset.pattern.permute.xlu0 0
  %8534 = vperm.xlu0 %8533, %v7887
  %v8535 = vpop.permute.xlu0 %8534
  %8538 = vset.pattern.permute.xlu0 0
  %8539 = vperm.xlu0 %8538, %v7889
  %v8540 = vpop.permute.xlu0 %8539
  %8543 = vset.pattern.permute.xlu0 0
  %8544 = vperm.xlu0 %8543, %v7891
  %v8545 = vpop.permute.xlu0 %8544
  %8548 = vset.pattern.permute.xlu0 0
  %8549 = vperm.xlu0 %8548, %v7893
  %v8550 = vpop.permute.xlu0 %8549
  %8553 = vset.pattern.permute.xlu0 0
  %8554 = vperm.xlu0 %8553, %v7895
  %v8555 = vpop.permute.xlu0 %8554
  %8558 = vset.pattern.permute.xlu0 0
  %8559 = vperm.xlu0 %8558, %v7897
  %v8560 = vpop.permute.xlu0 %8559
  %8563 = vset.pattern.permute.xlu0 0
  %8564 = vperm.xlu0 %8563, %v7899
  %v8565 = vpop.permute.xlu0 %8564
  %8568 = vset.pattern.permute.xlu0 0
  %8569 = vperm.xlu0 %8568, %v7901
  %v8570 = vpop.permute.xlu0 %8569
  %8573 = vset.pattern.permute.xlu0 0
  %8574 = vperm.xlu0 %8573, %v7903
  %v8575 = vpop.permute.xlu0 %8574
  %8578 = vset.pattern.permute.xlu0 0
  %8579 = vperm.xlu0 %8578, %v7905
  %v8580 = vpop.permute.xlu0 %8579
  %8583 = vset.pattern.permute.xlu0 0
  %8584 = vperm.xlu0 %8583, %v7907
  %v8585 = vpop.permute.xlu0 %8584
  %8588 = vset.pattern.permute.xlu0 0
  %8589 = vperm.xlu0 %8588, %v7909
  %v8590 = vpop.permute.xlu0 %8589
  %8593 = vset.pattern.permute.xlu0 0
  %8594 = vperm.xlu0 %8593, %v7911
  %v8595 = vpop.permute.xlu0 %8594
  %8598 = vset.pattern.permute.xlu0 0
  %8599 = vperm.xlu0 %8598, %v7913
  %v8600 = vpop.permute.xlu0 %8599
  %8603 = vset.pattern.permute.xlu0 0
  %8604 = vperm.xlu0 %8603, %v7915
  %v8605 = vpop.permute.xlu0 %8604
  %8608 = vset.pattern.permute.xlu0 0
  %8609 = vperm.xlu0 %8608, %v7917
  %v8610 = vpop.permute.xlu0 %8609
  %8613 = vset.pattern.permute.xlu0 0
  %8614 = vperm.xlu0 %8613, %v7919
  %v8615 = vpop.permute.xlu0 %8614
  %8618 = vset.pattern.permute.xlu0 0
  %8619 = vperm.xlu0 %8618, %v7921
  %v8620 = vpop.permute.xlu0 %8619
  %8623 = vset.pattern.permute.xlu0 0
  %8624 = vperm.xlu0 %8623, %v7923
  %v8625 = vpop.permute.xlu0 %8624
  %8628 = vset.pattern.permute.xlu0 0
  %8629 = vperm.xlu0 %8628, %v7925
  %v8630 = vpop.permute.xlu0 %8629
  %8633 = vset.pattern.permute.xlu0 0
  %8634 = vperm.xlu0 %8633, %v7927
  %v8635 = vpop.permute.xlu0 %8634
  %8638 = vset.pattern.permute.xlu0 0
  %8639 = vperm.xlu0 %8638, %v7929
  %v8640 = vpop.permute.xlu0 %8639
  %8643 = vset.pattern.permute.xlu0 0
  %8644 = vperm.xlu0 %8643, %v7931
  %v8645 = vpop.permute.xlu0 %8644
  %8648 = vset.pattern.permute.xlu0 0
  %8649 = vperm.xlu0 %8648, %v7933
  %v8650 = vpop.permute.xlu0 %8649
  %8653 = vset.pattern.permute.xlu0 0
  %8654 = vperm.xlu0 %8653, %v7935
  %v8655 = vpop.permute.xlu0 %8654
  %8658 = vset.pattern.permute.xlu0 0
  %8659 = vperm.xlu0 %8658, %v7937
  %v8660 = vpop.permute.xlu0 %8659
  %8663 = vset.pattern.permute.xlu0 0
  %8664 = vperm.xlu0 %8663, %v7939
  %v8665 = vpop.permute.xlu0 %8664
  %8668 = vset.pattern.permute.xlu0 0
  %8669 = vperm.xlu0 %8668, %v7941
  %v8670 = vpop.permute.xlu0 %8669
  %8673 = vset.pattern.permute.xlu0 0
  %8674 = vperm.xlu0 %8673, %v7943
  %v8675 = vpop.permute.xlu0 %8674
  %8678 = vset.pattern.permute.xlu0 0
  %8679 = vperm.xlu0 %8678, %v7945
  %v8680 = vpop.permute.xlu0 %8679
  %8683 = vset.pattern.permute.xlu0 0
  %8684 = vperm.xlu0 %8683, %v7947
  %v8685 = vpop.permute.xlu0 %8684
  %8688 = vset.pattern.permute.xlu0 0
  %8689 = vperm.xlu0 %8688, %v7949
  %v8690 = vpop.permute.xlu0 %8689
  %8693 = vset.pattern.permute.xlu0 0
  %8694 = vperm.xlu0 %8693, %v7951
  %v8695 = vpop.permute.xlu0 %8694
  %8698 = vset.pattern.permute.xlu0 0
  %8699 = vperm.xlu0 %8698, %v7953
  %v8700 = vpop.permute.xlu0 %8699
  %8703 = vset.pattern.permute.xlu0 0
  %8704 = vperm.xlu0 %8703, %v7955
  %v8705 = vpop.permute.xlu0 %8704
  %8708 = vset.pattern.permute.xlu0 0
  %8709 = vperm.xlu0 %8708, %v7957
  %v8710 = vpop.permute.xlu0 %8709
  %8713 = vset.pattern.permute.xlu0 0
  %8714 = vperm.xlu0 %8713, %v7959
  %v8715 = vpop.permute.xlu0 %8714
  %8718 = vset.pattern.permute.xlu0 0
  %8719 = vperm.xlu0 %8718, %v7961
  %v8720 = vpop.permute.xlu0 %8719
  %8723 = vset.pattern.permute.xlu0 0
  %8724 = vperm.xlu0 %8723, %v7963
  %v8725 = vpop.permute.xlu0 %8724
  %8728 = vset.pattern.permute.xlu0 0
  %8729 = vperm.xlu0 %8728, %v7965
  %v8730 = vpop.permute.xlu0 %8729
  %8733 = vset.pattern.permute.xlu0 0
  %8734 = vperm.xlu0 %8733, %v7967
  %v8735 = vpop.permute.xlu0 %8734
  %8738 = vset.pattern.permute.xlu0 0
  %8739 = vperm.xlu0 %8738, %v7969
  %v8740 = vpop.permute.xlu0 %8739
  %8743 = vset.pattern.permute.xlu0 0
  %8744 = vperm.xlu0 %8743, %v7971
  %v8745 = vpop.permute.xlu0 %8744
  %8748 = vset.pattern.permute.xlu0 0
  %8749 = vperm.xlu0 %8748, %v7973
  %v8750 = vpop.permute.xlu0 %8749
  %8753 = vset.pattern.permute.xlu0 0
  %8754 = vperm.xlu0 %8753, %v7975
  %v8755 = vpop.permute.xlu0 %8754
  %8758 = vset.pattern.permute.xlu0 0
  %8759 = vperm.xlu0 %8758, %v7977
  %v8760 = vpop.permute.xlu0 %8759
  %8763 = vset.pattern.permute.xlu0 0
  %8764 = vperm.xlu0 %8763, %v7979
  %v8765 = vpop.permute.xlu0 %8764
  %8768 = vset.pattern.permute.xlu0 0
  %8769 = vperm.xlu0 %8768, %v7981
  %v8770 = vpop.permute.xlu0 %8769
  %8773 = vset.pattern.permute.xlu0 0
  %8774 = vperm.xlu0 %8773, %v7983
  %v8775 = vpop.permute.xlu0 %8774
  %8778 = vset.pattern.permute.xlu0 0
  %8779 = vperm.xlu0 %8778, %v7985
  %v8780 = vpop.permute.xlu0 %8779
  %8783 = vset.pattern.permute.xlu0 0
  %8784 = vperm.xlu0 %8783, %v7987
  %v8785 = vpop.permute.xlu0 %8784
  %8788 = vset.pattern.permute.xlu0 0
  %8789 = vperm.xlu0 %8788, %v7989
  %v8790 = vpop.permute.xlu0 %8789
  %8793 = vset.pattern.permute.xlu0 0
  %8794 = vperm.xlu0 %8793, %v7991
  %v8795 = vpop.permute.xlu0 %8794
  %8798 = vset.pattern.permute.xlu0 0
  %8799 = vperm.xlu0 %8798, %v7993
  %v8800 = vpop.permute.xlu0 %8799
  %8803 = vset.pattern.permute.xlu0 0
  %8804 = vperm.xlu0 %8803, %v7995
  %v8805 = vpop.permute.xlu0 %8804
  %8808 = vset.pattern.permute.xlu0 0
  %8809 = vperm.xlu0 %8808, %v7997
  %v8810 = vpop.permute.xlu0 %8809
  %8813 = vset.pattern.permute.xlu0 0
  %8814 = vperm.xlu0 %8813, %v7999
  %v8815 = vpop.permute.xlu0 %8814
  %8818 = vset.pattern.permute.xlu0 0
  %8819 = vperm.xlu0 %8818, %v8001
  %v8820 = vpop.permute.xlu0 %8819
  %8823 = vset.pattern.permute.xlu0 0
  %8824 = vperm.xlu0 %8823, %v8003
  %v8825 = vpop.permute.xlu0 %8824
  %8828 = vset.pattern.permute.xlu0 0
  %8829 = vperm.xlu0 %8828, %v8005
  %v8830 = vpop.permute.xlu0 %8829
  %8833 = vset.pattern.permute.xlu0 0
  %8834 = vperm.xlu0 %8833, %v8007
  %v8835 = vpop.permute.xlu0 %8834
  %8838 = vset.pattern.permute.xlu0 0
  %8839 = vperm.xlu0 %8838, %v8009
  %v8840 = vpop.permute.xlu0 %8839
  %v8842 = vadd.f32 %v8458, %v8525
  %v8843 = vadd.f32 %v8459, %v8530
  %v8844 = vadd.f32 %v8460, %v8535
  %v8845 = vadd.f32 %v8461, %v8540
  %v8846 = vadd.f32 %v8462, %v8545
  %v8847 = vadd.f32 %v8463, %v8550
  %v8848 = vadd.f32 %v8464, %v8555
  %v8849 = vadd.f32 %v8465, %v8560
  %v8850 = vadd.f32 %v8466, %v8565
  %v8851 = vadd.f32 %v8467, %v8570
  %v8852 = vadd.f32 %v8468, %v8575
  %v8853 = vadd.f32 %v8469, %v8580
  %v8854 = vadd.f32 %v8470, %v8585
  %v8855 = vadd.f32 %v8471, %v8590
  %v8856 = vadd.f32 %v8472, %v8595
  %v8857 = vadd.f32 %v8473, %v8600
  %v8858 = vadd.f32 %v8474, %v8605
  %v8859 = vadd.f32 %v8475, %v8610
  %v8860 = vadd.f32 %v8476, %v8615
  %v8861 = vadd.f32 %v8477, %v8620
  %v8862 = vadd.f32 %v8478, %v8625
  %v8863 = vadd.f32 %v8479, %v8630
  %v8864 = vadd.f32 %v8480, %v8635
  %v8865 = vadd.f32 %v8481, %v8640
  %v8866 = vadd.f32 %v8482, %v8645
  %v8867 = vadd.f32 %v8483, %v8650
  %v8868 = vadd.f32 %v8484, %v8655
  %v8869 = vadd.f32 %v8485, %v8660
  %v8870 = vadd.f32 %v8486, %v8665
  %v8871 = vadd.f32 %v8487, %v8670
  %v8872 = vadd.f32 %v8488, %v8675
  %v8873 = vadd.f32 %v8489, %v8680
  %v8874 = vadd.f32 %v8490, %v8685
  %v8875 = vadd.f32 %v8491, %v8690
  %v8876 = vadd.f32 %v8492, %v8695
  %v8877 = vadd.f32 %v8493, %v8700
  %v8878 = vadd.f32 %v8494, %v8705
  %v8879 = vadd.f32 %v8495, %v8710
  %v8880 = vadd.f32 %v8496, %v8715
  %v8881 = vadd.f32 %v8497, %v8720
  %v8882 = vadd.f32 %v8498, %v8725
  %v8883 = vadd.f32 %v8499, %v8730
  %v8884 = vadd.f32 %v8500, %v8735
  %v8885 = vadd.f32 %v8501, %v8740
  %v8886 = vadd.f32 %v8502, %v8745
  %v8887 = vadd.f32 %v8503, %v8750
  %v8888 = vadd.f32 %v8504, %v8755
  %v8889 = vadd.f32 %v8505, %v8760
  %v8890 = vadd.f32 %v8506, %v8765
  %v8891 = vadd.f32 %v8507, %v8770
  %v8892 = vadd.f32 %v8508, %v8775
  %v8893 = vadd.f32 %v8509, %v8780
  %v8894 = vadd.f32 %v8510, %v8785
  %v8895 = vadd.f32 %v8511, %v8790
  %v8896 = vadd.f32 %v8512, %v8795
  %v8897 = vadd.f32 %v8513, %v8800
  %v8898 = vadd.f32 %v8514, %v8805
  %v8899 = vadd.f32 %v8515, %v8810
  %v8900 = vadd.f32 %v8516, %v8815
  %v8901 = vadd.f32 %v8517, %v8820
  %v8902 = vadd.f32 %v8518, %v8825
  %v8903 = vadd.f32 %v8519, %v8830
  %v8904 = vadd.f32 %v8520, %v8835
  %v8905 = vadd.f32 %v8521, %v8840
  %8906 = vst.msk [vmem:[%s4] sm:$0xff] %vm731, %v19
  %8907 = vst.msk [vmem:[%s4 + $0x8] sm:$0xff] %vm731, %v20
  %8908 = vst.msk [vmem:[%s4 + $0x10] sm:$0xff] %vm731, %v21
  %8909 = vst.msk [vmem:[%s4 + $0x18] sm:$0xff] %vm731, %v22
  %8910 = vst.msk [vmem:[%s4 + $0x20] sm:$0xff] %vm731, %v23
  %8911 = vst.msk [vmem:[%s4 + $0x28] sm:$0xff] %vm731, %v24
  %8912 = vst.msk [vmem:[%s4 + $0x30] sm:$0xff] %vm731, %v25
  %8913 = vst.msk [vmem:[%s4 + $0x38] sm:$0xff] %vm731, %v26
  %8914 = vst.msk [vmem:[%s4 + $0x40] sm:$0xff] %vm731, %v27
  %8915 = vst.msk [vmem:[%s4 + $0x48] sm:$0xff] %vm731, %v28
  %8916 = vst.msk [vmem:[%s4 + $0x50] sm:$0xff] %vm731, %v29
  %8917 = vst.msk [vmem:[%s4 + $0x58] sm:$0xff] %vm731, %v30
  %8918 = vst.msk [vmem:[%s4 + $0x60] sm:$0xff] %vm731, %v31
  %8919 = vst.msk [vmem:[%s4 + $0x68] sm:$0xff] %vm731, %v32
  %8920 = vst.msk [vmem:[%s4 + $0x70] sm:$0xff] %vm731, %v33
  %8921 = vst.msk [vmem:[%s4 + $0x78] sm:$0xff] %vm731, %v34
  %8922 = vst.msk [vmem:[%s4 + $0x80] sm:$0xff] %vm731, %v35
  %8923 = vst.msk [vmem:[%s4 + $0x88] sm:$0xff] %vm731, %v36
  %8924 = vst.msk [vmem:[%s4 + $0x90] sm:$0xff] %vm731, %v37
  %8925 = vst.msk [vmem:[%s4 + $0x98] sm:$0xff] %vm731, %v38
  %8926 = vst.msk [vmem:[%s4 + $0xa0] sm:$0xff] %vm731, %v39
  %8927 = vst.msk [vmem:[%s4 + $0xa8] sm:$0xff] %vm731, %v40
  %8928 = vst.msk [vmem:[%s4 + $0xb0] sm:$0xff] %vm731, %v41
  %8929 = vst.msk [vmem:[%s4 + $0xb8] sm:$0xff] %vm731, %v42
  %8930 = vst.msk [vmem:[%s4 + $0xc0] sm:$0xff] %vm731, %v43
  %8931 = vst.msk [vmem:[%s4 + $0xc8] sm:$0xff] %vm731, %v44
  %8932 = vst.msk [vmem:[%s4 + $0xd0] sm:$0xff] %vm731, %v45
  %8933 = vst.msk [vmem:[%s4 + $0xd8] sm:$0xff] %vm731, %v46
  %8934 = vst.msk [vmem:[%s4 + $0xe0] sm:$0xff] %vm731, %v47
  %8935 = vst.msk [vmem:[%s4 + $0xe8] sm:$0xff] %vm731, %v48
  %8936 = vst.msk [vmem:[%s4 + $0xf0] sm:$0xff] %vm731, %v49
  %8937 = vst.msk [vmem:[%s4 + $0xf8] sm:$0xff] %vm731, %v50
  %8938 = vst.msk [vmem:[%s4 + $0x100] sm:$0xff] %vm731, %v51
  %8939 = vst.msk [vmem:[%s4 + $0x108] sm:$0xff] %vm731, %v52
  %8940 = vst.msk [vmem:[%s4 + $0x110] sm:$0xff] %vm731, %v53
  %8941 = vst.msk [vmem:[%s4 + $0x118] sm:$0xff] %vm731, %v54
  %8942 = vst.msk [vmem:[%s4 + $0x120] sm:$0xff] %vm731, %v55
  %8943 = vst.msk [vmem:[%s4 + $0x128] sm:$0xff] %vm731, %v56
  %8944 = vst.msk [vmem:[%s4 + $0x130] sm:$0xff] %vm731, %v57
  %8945 = vst.msk [vmem:[%s4 + $0x138] sm:$0xff] %vm731, %v58
  %8946 = vst.msk [vmem:[%s4 + $0x140] sm:$0xff] %vm731, %v59
  %8947 = vst.msk [vmem:[%s4 + $0x148] sm:$0xff] %vm731, %v60
  %8948 = vst.msk [vmem:[%s4 + $0x150] sm:$0xff] %vm731, %v61
  %8949 = vst.msk [vmem:[%s4 + $0x158] sm:$0xff] %vm731, %v62
  %8950 = vst.msk [vmem:[%s4 + $0x160] sm:$0xff] %vm731, %v63
  %8951 = vst.msk [vmem:[%s4 + $0x168] sm:$0xff] %vm731, %v64
  %8952 = vst.msk [vmem:[%s4 + $0x170] sm:$0xff] %vm731, %v65
  %8953 = vst.msk [vmem:[%s4 + $0x178] sm:$0xff] %vm731, %v66
  %8954 = vst.msk [vmem:[%s4 + $0x180] sm:$0xff] %vm731, %v67
  %8955 = vst.msk [vmem:[%s4 + $0x188] sm:$0xff] %vm731, %v68
  %8956 = vst.msk [vmem:[%s4 + $0x190] sm:$0xff] %vm731, %v69
  %8957 = vst.msk [vmem:[%s4 + $0x198] sm:$0xff] %vm731, %v70
  %8958 = vst.msk [vmem:[%s4 + $0x1a0] sm:$0xff] %vm731, %v71
  %8959 = vst.msk [vmem:[%s4 + $0x1a8] sm:$0xff] %vm731, %v72
  %8960 = vst.msk [vmem:[%s4 + $0x1b0] sm:$0xff] %vm731, %v73
  %8961 = vst.msk [vmem:[%s4 + $0x1b8] sm:$0xff] %vm731, %v74
  %8962 = vst.msk [vmem:[%s4 + $0x1c0] sm:$0xff] %vm731, %v75
  %8963 = vst.msk [vmem:[%s4 + $0x1c8] sm:$0xff] %vm731, %v76
  %8964 = vst.msk [vmem:[%s4 + $0x1d0] sm:$0xff] %vm731, %v77
  %8965 = vst.msk [vmem:[%s4 + $0x1d8] sm:$0xff] %vm731, %v78
  %8966 = vst.msk [vmem:[%s4 + $0x1e0] sm:$0xff] %vm731, %v79
  %8967 = vst.msk [vmem:[%s4 + $0x1e8] sm:$0xff] %vm731, %v80
  %8968 = vst.msk [vmem:[%s4 + $0x1f0] sm:$0xff] %vm731, %v81
  %8969 = vst.msk [vmem:[%s4 + $0x1f8] sm:$0xff] %vm731, %v82
  %vm8970 = vcmask 31760
  %8971 = vst.msk [vmem:[%s4] sm:$0xff] %vm8970, %v8842
  %8972 = vst.msk [vmem:[%s4 + $0x8] sm:$0xff] %vm8970, %v8843
  %8973 = vst.msk [vmem:[%s4 + $0x10] sm:$0xff] %vm8970, %v8844
  %8974 = vst.msk [vmem:[%s4 + $0x18] sm:$0xff] %vm8970, %v8845
  %8975 = vst.msk [vmem:[%s4 + $0x20] sm:$0xff] %vm8970, %v8846
  %8976 = vst.msk [vmem:[%s4 + $0x28] sm:$0xff] %vm8970, %v8847
  %8977 = vst.msk [vmem:[%s4 + $0x30] sm:$0xff] %vm8970, %v8848
  %8978 = vst.msk [vmem:[%s4 + $0x38] sm:$0xff] %vm8970, %v8849
  %8979 = vst.msk [vmem:[%s4 + $0x40] sm:$0xff] %vm8970, %v8850
  %8980 = vst.msk [vmem:[%s4 + $0x48] sm:$0xff] %vm8970, %v8851
  %8981 = vst.msk [vmem:[%s4 + $0x50] sm:$0xff] %vm8970, %v8852
  %8982 = vst.msk [vmem:[%s4 + $0x58] sm:$0xff] %vm8970, %v8853
  %8983 = vst.msk [vmem:[%s4 + $0x60] sm:$0xff] %vm8970, %v8854
  %8984 = vst.msk [vmem:[%s4 + $0x68] sm:$0xff] %vm8970, %v8855
  %8985 = vst.msk [vmem:[%s4 + $0x70] sm:$0xff] %vm8970, %v8856
  %8986 = vst.msk [vmem:[%s4 + $0x78] sm:$0xff] %vm8970, %v8857
  %8987 = vst.msk [vmem:[%s4 + $0x80] sm:$0xff] %vm8970, %v8858
  %8988 = vst.msk [vmem:[%s4 + $0x88] sm:$0xff] %vm8970, %v8859
  %8989 = vst.msk [vmem:[%s4 + $0x90] sm:$0xff] %vm8970, %v8860
  %8990 = vst.msk [vmem:[%s4 + $0x98] sm:$0xff] %vm8970, %v8861
  %8991 = vst.msk [vmem:[%s4 + $0xa0] sm:$0xff] %vm8970, %v8862
  %8992 = vst.msk [vmem:[%s4 + $0xa8] sm:$0xff] %vm8970, %v8863
  %8993 = vst.msk [vmem:[%s4 + $0xb0] sm:$0xff] %vm8970, %v8864
  %8994 = vst.msk [vmem:[%s4 + $0xb8] sm:$0xff] %vm8970, %v8865
  %8995 = vst.msk [vmem:[%s4 + $0xc0] sm:$0xff] %vm8970, %v8866
  %8996 = vst.msk [vmem:[%s4 + $0xc8] sm:$0xff] %vm8970, %v8867
  %8997 = vst.msk [vmem:[%s4 + $0xd0] sm:$0xff] %vm8970, %v8868
  %8998 = vst.msk [vmem:[%s4 + $0xd8] sm:$0xff] %vm8970, %v8869
  %8999 = vst.msk [vmem:[%s4 + $0xe0] sm:$0xff] %vm8970, %v8870
  %9000 = vst.msk [vmem:[%s4 + $0xe8] sm:$0xff] %vm8970, %v8871
  %9001 = vst.msk [vmem:[%s4 + $0xf0] sm:$0xff] %vm8970, %v8872
  %9002 = vst.msk [vmem:[%s4 + $0xf8] sm:$0xff] %vm8970, %v8873
  %9003 = vst.msk [vmem:[%s4 + $0x100] sm:$0xff] %vm8970, %v8874
  %9004 = vst.msk [vmem:[%s4 + $0x108] sm:$0xff] %vm8970, %v8875
  %9005 = vst.msk [vmem:[%s4 + $0x110] sm:$0xff] %vm8970, %v8876
  %9006 = vst.msk [vmem:[%s4 + $0x118] sm:$0xff] %vm8970, %v8877
  %9007 = vst.msk [vmem:[%s4 + $0x120] sm:$0xff] %vm8970, %v8878
  %9008 = vst.msk [vmem:[%s4 + $0x128] sm:$0xff] %vm8970, %v8879
  %9009 = vst.msk [vmem:[%s4 + $0x130] sm:$0xff] %vm8970, %v8880
  %9010 = vst.msk [vmem:[%s4 + $0x138] sm:$0xff] %vm8970, %v8881
  %9011 = vst.msk [vmem:[%s4 + $0x140] sm:$0xff] %vm8970, %v8882
  %9012 = vst.msk [vmem:[%s4 + $0x148] sm:$0xff] %vm8970, %v8883
  %9013 = vst.msk [vmem:[%s4 + $0x150] sm:$0xff] %vm8970, %v8884
  %9014 = vst.msk [vmem:[%s4 + $0x158] sm:$0xff] %vm8970, %v8885
  %9015 = vst.msk [vmem:[%s4 + $0x160] sm:$0xff] %vm8970, %v8886
  %9016 = vst.msk [vmem:[%s4 + $0x168] sm:$0xff] %vm8970, %v8887
  %9017 = vst.msk [vmem:[%s4 + $0x170] sm:$0xff] %vm8970, %v8888
  %9018 = vst.msk [vmem:[%s4 + $0x178] sm:$0xff] %vm8970, %v8889
  %9019 = vst.msk [vmem:[%s4 + $0x180] sm:$0xff] %vm8970, %v8890
  %9020 = vst.msk [vmem:[%s4 + $0x188] sm:$0xff] %vm8970, %v8891
  %9021 = vst.msk [vmem:[%s4 + $0x190] sm:$0xff] %vm8970, %v8892
  %9022 = vst.msk [vmem:[%s4 + $0x198] sm:$0xff] %vm8970, %v8893
  %9023 = vst.msk [vmem:[%s4 + $0x1a0] sm:$0xff] %vm8970, %v8894
  %9024 = vst.msk [vmem:[%s4 + $0x1a8] sm:$0xff] %vm8970, %v8895
  %9025 = vst.msk [vmem:[%s4 + $0x1b0] sm:$0xff] %vm8970, %v8896
  %9026 = vst.msk [vmem:[%s4 + $0x1b8] sm:$0xff] %vm8970, %v8897
  %9027 = vst.msk [vmem:[%s4 + $0x1c0] sm:$0xff] %vm8970, %v8898
  %9028 = vst.msk [vmem:[%s4 + $0x1c8] sm:$0xff] %vm8970, %v8899
  %9029 = vst.msk [vmem:[%s4 + $0x1d0] sm:$0xff] %vm8970, %v8900
  %9030 = vst.msk [vmem:[%s4 + $0x1d8] sm:$0xff] %vm8970, %v8901
  %9031 = vst.msk [vmem:[%s4 + $0x1e0] sm:$0xff] %vm8970, %v8902
  %9032 = vst.msk [vmem:[%s4 + $0x1e8] sm:$0xff] %vm8970, %v8903
  %9033 = vst.msk [vmem:[%s4 + $0x1f0] sm:$0xff] %vm8970, %v8904
  %9034 = vst.msk [vmem:[%s4 + $0x1f8] sm:$0xff] %vm8970, %v8905
  %v9035 = vmul.f32 %v4539, 2.0
  %v9036 = vmul.f32 %v4541, 2.0
  %v9037 = vmul.f32 %v4543, 2.0
  %v9038 = vmul.f32 %v4545, 2.0
  %v9039 = vmul.f32 %v4547, 2.0
  %v9040 = vmul.f32 %v4549, 2.0
  %v9041 = vmul.f32 %v4551, 2.0
  %v9042 = vmul.f32 %v4553, 2.0
  %v9043 = vmul.f32 %v4555, 2.0
  %v9044 = vmul.f32 %v4557, 2.0
  %v9045 = vmul.f32 %v4559, 2.0
  %v9046 = vmul.f32 %v4561, 2.0
  %v9047 = vmul.f32 %v4563, 2.0
  %v9048 = vmul.f32 %v4565, 2.0
  %v9049 = vmul.f32 %v4567, 2.0
  %v9050 = vmul.f32 %v4569, 2.0
  %v9051 = vmul.f32 %v4571, 2.0
  %v9052 = vmul.f32 %v4573, 2.0
  %v9053 = vmul.f32 %v4575, 2.0
  %v9054 = vmul.f32 %v4577, 2.0
  %v9055 = vmul.f32 %v4579, 2.0
  %v9056 = vmul.f32 %v4581, 2.0
  %v9057 = vmul.f32 %v4583, 2.0
  %v9058 = vmul.f32 %v4585, 2.0
  %v9059 = vmul.f32 %v4587, 2.0
  %v9060 = vmul.f32 %v4589, 2.0
  %v9061 = vmul.f32 %v4591, 2.0
  %v9062 = vmul.f32 %v4593, 2.0
  %v9063 = vmul.f32 %v4595, 2.0
  %v9064 = vmul.f32 %v4597, 2.0
  %v9065 = vmul.f32 %v4599, 2.0
  %v9066 = vmul.f32 %v4601, 2.0
  %v9067 = vmul.f32 %v4603, 2.0
  %v9068 = vmul.f32 %v4605, 2.0
  %v9069 = vmul.f32 %v4607, 2.0
  %v9070 = vmul.f32 %v4609, 2.0
  %v9071 = vmul.f32 %v4611, 2.0
  %v9072 = vmul.f32 %v4613, 2.0
  %v9073 = vmul.f32 %v4615, 2.0
  %v9074 = vmul.f32 %v4617, 2.0
  %v9075 = vmul.f32 %v4619, 2.0
  %v9076 = vmul.f32 %v4621, 2.0
  %v9077 = vmul.f32 %v4623, 2.0
  %v9078 = vmul.f32 %v4625, 2.0
  %v9079 = vmul.f32 %v4627, 2.0
  %v9080 = vmul.f32 %v4629, 2.0
  %v9081 = vmul.f32 %v4631, 2.0
  %v9082 = vmul.f32 %v4633, 2.0
  %v9083 = vmul.f32 %v4635, 2.0
  %v9084 = vmul.f32 %v4637, 2.0
  %v9085 = vmul.f32 %v4639, 2.0
  %v9086 = vmul.f32 %v4641, 2.0
  %v9087 = vmul.f32 %v4643, 2.0
  %v9088 = vmul.f32 %v4645, 2.0
  %v9089 = vmul.f32 %v4647, 2.0
  %v9090 = vmul.f32 %v4649, 2.0
  %v9091 = vmul.f32 %v4651, 2.0
  %v9092 = vmul.f32 %v4653, 2.0
  %v9093 = vmul.f32 %v4655, 2.0
  %v9094 = vmul.f32 %v4657, 2.0
  %v9095 = vmul.f32 %v4659, 2.0
  %v9096 = vmul.f32 %v4661, 2.0
  %v9097 = vmul.f32 %v4663, 2.0
  %v9098 = vmul.f32 %v4665, 2.0
  %vm9099 = vcmask 7168
  %9100 = vst.msk [vmem:[%s5] sm:$0xff] %vm9099, %v9035
  %9101 = vst.msk [vmem:[%s5 + $0x8] sm:$0xff] %vm9099, %v9036
  %9102 = vst.msk [vmem:[%s5 + $0x10] sm:$0xff] %vm9099, %v9037
  %9103 = vst.msk [vmem:[%s5 + $0x18] sm:$0xff] %vm9099, %v9038
  %9104 = vst.msk [vmem:[%s5 + $0x20] sm:$0xff] %vm9099, %v9039
  %9105 = vst.msk [vmem:[%s5 + $0x28] sm:$0xff] %vm9099, %v9040
  %9106 = vst.msk [vmem:[%s5 + $0x30] sm:$0xff] %vm9099, %v9041
  %9107 = vst.msk [vmem:[%s5 + $0x38] sm:$0xff] %vm9099, %v9042
  %9108 = vst.msk [vmem:[%s5 + $0x40] sm:$0xff] %vm9099, %v9043
  %9109 = vst.msk [vmem:[%s5 + $0x48] sm:$0xff] %vm9099, %v9044
  %9110 = vst.msk [vmem:[%s5 + $0x50] sm:$0xff] %vm9099, %v9045
  %9111 = vst.msk [vmem:[%s5 + $0x58] sm:$0xff] %vm9099, %v9046
  %9112 = vst.msk [vmem:[%s5 + $0x60] sm:$0xff] %vm9099, %v9047
  %9113 = vst.msk [vmem:[%s5 + $0x68] sm:$0xff] %vm9099, %v9048
  %9114 = vst.msk [vmem:[%s5 + $0x70] sm:$0xff] %vm9099, %v9049
  %9115 = vst.msk [vmem:[%s5 + $0x78] sm:$0xff] %vm9099, %v9050
  %9116 = vst.msk [vmem:[%s5 + $0x80] sm:$0xff] %vm9099, %v9051
  %9117 = vst.msk [vmem:[%s5 + $0x88] sm:$0xff] %vm9099, %v9052
  %9118 = vst.msk [vmem:[%s5 + $0x90] sm:$0xff] %vm9099, %v9053
  %9119 = vst.msk [vmem:[%s5 + $0x98] sm:$0xff] %vm9099, %v9054
  %9120 = vst.msk [vmem:[%s5 + $0xa0] sm:$0xff] %vm9099, %v9055
  %9121 = vst.msk [vmem:[%s5 + $0xa8] sm:$0xff] %vm9099, %v9056
  %9122 = vst.msk [vmem:[%s5 + $0xb0] sm:$0xff] %vm9099, %v9057
  %9123 = vst.msk [vmem:[%s5 + $0xb8] sm:$0xff] %vm9099, %v9058
  %9124 = vst.msk [vmem:[%s5 + $0xc0] sm:$0xff] %vm9099, %v9059
  %9125 = vst.msk [vmem:[%s5 + $0xc8] sm:$0xff] %vm9099, %v9060
  %9126 = vst.msk [vmem:[%s5 + $0xd0] sm:$0xff] %vm9099, %v9061
  %9127 = vst.msk [vmem:[%s5 + $0xd8] sm:$0xff] %vm9099, %v9062
  %9128 = vst.msk [vmem:[%s5 + $0xe0] sm:$0xff] %vm9099, %v9063
  %9129 = vst.msk [vmem:[%s5 + $0xe8] sm:$0xff] %vm9099, %v9064
  %9130 = vst.msk [vmem:[%s5 + $0xf0] sm:$0xff] %vm9099, %v9065
  %9131 = vst.msk [vmem:[%s5 + $0xf8] sm:$0xff] %vm9099, %v9066
  %9132 = vst.msk [vmem:[%s5 + $0x100] sm:$0xff] %vm9099, %v9067
  %9133 = vst.msk [vmem:[%s5 + $0x108] sm:$0xff] %vm9099, %v9068
  %9134 = vst.msk [vmem:[%s5 + $0x110] sm:$0xff] %vm9099, %v9069
  %9135 = vst.msk [vmem:[%s5 + $0x118] sm:$0xff] %vm9099, %v9070
  %9136 = vst.msk [vmem:[%s5 + $0x120] sm:$0xff] %vm9099, %v9071
  %9137 = vst.msk [vmem:[%s5 + $0x128] sm:$0xff] %vm9099, %v9072
  %9138 = vst.msk [vmem:[%s5 + $0x130] sm:$0xff] %vm9099, %v9073
  %9139 = vst.msk [vmem:[%s5 + $0x138] sm:$0xff] %vm9099, %v9074
  %9140 = vst.msk [vmem:[%s5 + $0x140] sm:$0xff] %vm9099, %v9075
  %9141 = vst.msk [vmem:[%s5 + $0x148] sm:$0xff] %vm9099, %v9076
  %9142 = vst.msk [vmem:[%s5 + $0x150] sm:$0xff] %vm9099, %v9077
  %9143 = vst.msk [vmem:[%s5 + $0x158] sm:$0xff] %vm9099, %v9078
  %9144 = vst.msk [vmem:[%s5 + $0x160] sm:$0xff] %vm9099, %v9079
  %9145 = vst.msk [vmem:[%s5 + $0x168] sm:$0xff] %vm9099, %v9080
  %9146 = vst.msk [vmem:[%s5 + $0x170] sm:$0xff] %vm9099, %v9081
  %9147 = vst.msk [vmem:[%s5 + $0x178] sm:$0xff] %vm9099, %v9082
  %9148 = vst.msk [vmem:[%s5 + $0x180] sm:$0xff] %vm9099, %v9083
  %9149 = vst.msk [vmem:[%s5 + $0x188] sm:$0xff] %vm9099, %v9084
  %9150 = vst.msk [vmem:[%s5 + $0x190] sm:$0xff] %vm9099, %v9085
  %9151 = vst.msk [vmem:[%s5 + $0x198] sm:$0xff] %vm9099, %v9086
  %9152 = vst.msk [vmem:[%s5 + $0x1a0] sm:$0xff] %vm9099, %v9087
  %9153 = vst.msk [vmem:[%s5 + $0x1a8] sm:$0xff] %vm9099, %v9088
  %9154 = vst.msk [vmem:[%s5 + $0x1b0] sm:$0xff] %vm9099, %v9089
  %9155 = vst.msk [vmem:[%s5 + $0x1b8] sm:$0xff] %vm9099, %v9090
  %9156 = vst.msk [vmem:[%s5 + $0x1c0] sm:$0xff] %vm9099, %v9091
  %9157 = vst.msk [vmem:[%s5 + $0x1c8] sm:$0xff] %vm9099, %v9092
  %9158 = vst.msk [vmem:[%s5 + $0x1d0] sm:$0xff] %vm9099, %v9093
  %9159 = vst.msk [vmem:[%s5 + $0x1d8] sm:$0xff] %vm9099, %v9094
  %9160 = vst.msk [vmem:[%s5 + $0x1e0] sm:$0xff] %vm9099, %v9095
  %9161 = vst.msk [vmem:[%s5 + $0x1e8] sm:$0xff] %vm9099, %v9096
  %9162 = vst.msk [vmem:[%s5 + $0x1f0] sm:$0xff] %vm9099, %v9097
  %9163 = vst.msk [vmem:[%s5 + $0x1f8] sm:$0xff] %vm9099, %v9098
  // Predicated region
  $region18: #{invert_isdp_forward.1} parent=0 // pred_check
    _
  $region19: #{invert_isdp_forward.1} parent=0 // pred_check_branch
    %9165 = sbr.rel (0) target = $region21
  $region20: #{invert_isdp_forward.1} parent=0 // pred_region
    _
  $region21: #{invert_isdp_forward.1} parent=0 // pred_fallthru
    _
  // Predicated region
  $region22: #{invert_isdp_forward.1} parent=0 // pred_check
    _
  $region23: #{invert_isdp_forward.1} parent=0 // pred_check_branch
    %9167 = sbr.rel (0) target = $region25
  $region24: #{invert_isdp_forward.1} parent=0 // pred_region
    _
  $region25: #{invert_isdp_forward.1} parent=0 // pred_fallthru
    _
  // Predicated region
  $region26: #{invert_isdp_forward.1} parent=0 // pred_check
    _
  $region27: #{invert_isdp_forward.1} parent=0 // pred_check_branch
    %9169 = sbr.rel (0) target = $region29
  $region28: #{invert_isdp_forward.1} parent=0 // pred_region
    _
  $region29: #{invert_isdp_forward.1} parent=0 // pred_fallthru
    _
  // Predicated region
  $region30: #{invert_isdp_forward.1} parent=0 // pred_check
    _
  $region31: #{invert_isdp_forward.1} parent=0 // pred_check_branch
    %9171 = sbr.rel (0) target = $region33
  $region32: #{invert_isdp_forward.1} parent=0 // pred_region
    _
  $region33: #{invert_isdp_forward.1} parent=0 // pred_fallthru
    _

</llo_original>
